<compile_context>
chip_gen: v5e
topology: v5e:2x2
jax: 0.10.0
libtpu: 0.0.40
codegen_flags: <defaults>
</compile_context>

<pallas_src>
import functools

import numpy as np
import jax
import jax.numpy as jnp
from jax.experimental import pallas as pl
from jax.experimental.pallas import tpu as pltpu

EPS = 1e-12   # matches the module's l2_normalize epsilon (clamps the square-sum)
_LANE = 128


# ----------------------------------------------------------------------------
# Fused forward kernel
# ----------------------------------------------------------------------------
def _fused_prompt_kernel(key_ref, cls_ref, pflat_ref, xflat_hbm,
                         knorm_ref, xnorm_ref, sim_ref, idx_ref,
                         selkey_ref, red_ref, pe_ref, dma_sem, *, top_k):
    P, Dk = key_ref.shape
    B = cls_ref.shape[0]
    LC = pflat_ref.shape[1]          # length * 768
    NC = xflat_hbm.shape[1]          # N * 768
    head = top_k * LC

    # Start the x_embed tail copy on the DMA engine immediately: HBM -> the
    # tail of the prompted_embedding output buffer, fully overlapped with the
    # compute below and never touching vregs / vld-vst slots.
    tail_copy = pltpu.make_async_copy(
        xflat_hbm, pe_ref.at[:, head:head + NC], dma_sem)
    tail_copy.start()

    kmat = key_ref[...]                                        # (P, Dk)
    x = cls_ref[...]                                           # (B, Dk)

    # l2_normalize(dim=1): x * rsqrt(max(sum(x^2), eps)) — same as the module.
    k_n = kmat * jax.lax.rsqrt(
        jnp.maximum(jnp.sum(kmat * kmat, axis=1, keepdims=True), EPS))
    x_n = x * jax.lax.rsqrt(
        jnp.maximum(jnp.sum(x * x, axis=1, keepdims=True), EPS))
    knorm_ref[...] = k_n
    xnorm_ref[...] = x_n

    # similarity = x_norm @ key_norm.T, contracting dim 1 of BOTH operands
    # directly (no transposed operand / relayout). HIGHEST precision so
    # near-tie top-k selection matches a full-f32 reference.
    sim = jax.lax.dot_general(
        x_n, k_n, (((1,), (1,)), ((), ())),
        precision=jax.lax.Precision.HIGHEST,
        preferred_element_type=jnp.float32)                    # (B, P)

    # Lane-dense similarity output buffer (padded columns are zero).
    simw = sim_ref.shape[1]
    if simw > P:
        sim_ref[...] = jnp.zeros(sim_ref.shape, jnp.float32)
        sim_ref[:, :P] = sim
    else:
        sim_ref[...] = sim

    col = jax.lax.broadcasted_iota(jnp.int32, (B, P), 1)
    kcol = jax.lax.broadcasted_iota(jnp.int32, idx_ref.shape, 1)

    pflat = pflat_ref[...]                                     # (P, LC)

    work = sim
    idx_acc = jnp.zeros(idx_ref.shape, jnp.int32)              # (B, 128) dense
    vals = jnp.zeros((B, 1), jnp.float32)

    for k in range(top_k):                       # unrolled (top_k is small)
        vmax = jnp.max(work, axis=1, keepdims=True)                   # (B, 1)
        # lowest index attaining the max (same tie-break as lax.top_k)
        imax = jnp.min(jnp.where(work == vmax, col, P),
                       axis=1, keepdims=True)                         # (B, 1)
        onehot = (col == imax).astype(jnp.float32)                    # (B, P)
        idx_acc = jnp.where(kcol == k, imax, idx_acc)
        vals = vals + vmax
        work = jnp.where(col == imax, -jnp.inf, work)

        # One-hot gather on the MXU (vector-extended slot, VALU stays free).
        # HIGHEST precision with 0/1 weights is exact to ~1 ulp for finite
        # pool values (note: non-finite pool entries would contaminate — fine
        # for real parameters).
        sel_k = jax.lax.dot_general(
            onehot, k_n, (((1,), (0,)), ((), ())),
            precision=jax.lax.Precision.HIGHEST,
            preferred_element_type=jnp.float32)                       # (B, Dk)
        bp_k = jax.lax.dot_general(
            onehot, pflat, (((1,), (0,)), ((), ())),
            precision=jax.lax.Precision.HIGHEST,
            preferred_element_type=jnp.float32)                       # (B, LC)
        selkey_ref[:, k * Dk:(k + 1) * Dk] = sel_k
        pe_ref[:, k * LC:(k + 1) * LC] = bp_k       # prompted_embedding head

    idx_ref[...] = idx_acc

    # reduce_sim == sum(top-k similarity values) / B
    # (identical to sum(prompt_norm[idx] * x_norm[:, None, :]) / B).
    red_ref[...] = jnp.full((1, _LANE), jnp.sum(vals) / float(B), jnp.float32)

    # Make sure the x_embed tail landed before the output is written back.
    tail_copy.wait()


# ----------------------------------------------------------------------------
# Forward pass (prompt_pool=True, embedding_key='cls', prompt_mask=None)
# ----------------------------------------------------------------------------
def prompt_forward(params, x_embed, cls_features, *, top_k):
    prompt = params["prompt"]          # (P, L, 768)
    prompt_key = params["prompt_key"]  # (P, 512)
    B, N, C = x_embed.shape
    P, L, Cp = prompt.shape
    assert Cp == C
    Dk = prompt_key.shape[1]
    LC = L * C
    NC = N * C

    # embedding_key == 'cls' with cls_features provided:
    x_embed_mean = cls_features                                  # (B, 512)
    # TODO(synk): 'mean'/'max'/'mean_max' embedding keys require x_embed's
    # channel dim to equal both 512 and 768 in the source module; only the
    # 'cls' branch is shape-consistent, so only it is implemented.
    # TODO(synk): batchwise_prompt=True (unique/counts) and prompt_mask paths
    # are not implemented (defaults used here: False / None).

    # Metadata-only reshapes so every in-kernel tensor is 2-D and lane-dense.
    prompt_flat = prompt.reshape(P, LC)
    x_flat = x_embed.reshape(B, NC)

    # Lane-dense widths for the tiny ragged outputs.
    simw = max(_LANE, -(-P // _LANE) * _LANE)
    idxw = max(_LANE, -(-top_k // _LANE) * _LANE)

    vmem = pl.BlockSpec(memory_space=pltpu.MemorySpace.VMEM)
    hbm = pl.BlockSpec(memory_space=pl.ANY)      # x_embed stays in HBM (DMA'd)

    (prompt_norm, x_embed_norm, sim_pad, idx_pad, selkey_flat, red_row,
     pe_flat) = pl.pallas_call(
        functools.partial(_fused_prompt_kernel, top_k=top_k),
        out_shape=(
            jax.ShapeDtypeStruct((P, Dk), jnp.float32),            # prompt_norm
            jax.ShapeDtypeStruct((B, Dk), jnp.float32),            # x_embed_norm
            jax.ShapeDtypeStruct((B, simw), jnp.float32),          # similarity (padded)
            jax.ShapeDtypeStruct((B, idxw), jnp.int32),            # prompt_idx (padded)
            jax.ShapeDtypeStruct((B, top_k * Dk), jnp.float32),    # selected_key
            jax.ShapeDtypeStruct((1, _LANE), jnp.float32),         # reduce_sim
            jax.ShapeDtypeStruct((B, top_k * LC + NC), jnp.float32),  # prompted
        ),
        in_specs=[vmem, vmem, vmem, hbm],
        out_specs=(vmem,) * 7,
        scratch_shapes=[pltpu.SemaphoreType.DMA],
    )(prompt_key, x_embed_mean, prompt_flat, x_flat)

    out = {}
    out["prompt_idx"] = idx_pad[:, :top_k]
    out["prompt_norm"] = prompt_norm
    out["x_embed_norm"] = x_embed_norm
    out["similarity"] = sim_pad[:, :P]
    out["selected_key"] = selkey_flat.reshape(B, top_k, Dk)
    out["reduce_sim"] = red_row[0, 0]
    # batched_prompt is exactly the prompted_embedding head — derive it here
    # instead of writing it twice from the kernel.
    out["batched_prompt"] = pe_flat[:, :top_k * LC].reshape(B, top_k * L, C)
    out["total_prompt_len"] = top_k * L
    out["prompted_embedding"] = pe_flat.reshape(B, top_k * L + N, C)
    return out


if __name__ == "__main__":
    # Module hyper-params (small pool, real hard-coded channel dims 768/512)
    LENGTH = 5
    POOL_SIZE = 8
    TOP_K = 2
    C_PROMPT = 768   # hard-coded in the module's prompt_pool_shape
    C_KEY = 512      # hard-coded in the module's key_shape

    # Input sizes
    B, N = 2, 8

    key = jax.random.PRNGKey(0)
    k1, k2, k3, k4 = jax.random.split(key, 4)

    prompt = jax.random.uniform(k1, (POOL_SIZE, LENGTH, C_PROMPT),
                                jnp.float32, -1.0, 1.0)
    prompt_key = jax.random.uniform(k2, (POOL_SIZE, C_KEY),
                                    jnp.float32, -1.0, 1.0)
    x_embed = jax.random.normal(k3, (B, N, C_PROMPT), jnp.float32)
    cls_features = jax.random.normal(k4, (B, C_KEY), jnp.float32)

    fwd = jax.jit(functools.partial(prompt_forward, top_k=TOP_K))
    out = fwd({"prompt": prompt, "prompt_key": prompt_key},
              x_embed, cls_features)
    jax.block_until_ready((out["prompted_embedding"], out["reduce_sim"],
                           out["similarity"], out["selected_key"],
                           out["prompt_idx"]))

    # ---- light self-consistency / reference checks --------------------------
    prompt_np = np.asarray(prompt)
    key_np = np.asarray(prompt_key)
    cls_np = np.asarray(cls_features)
    x_np = np.asarray(x_embed)

    pn_k = np.asarray(out["prompt_norm"])
    xn_k = np.asarray(out["x_embed_norm"])
    sim_k = np.asarray(out["similarity"])
    idx_k = np.asarray(out["prompt_idx"])

    def _l2n(a):
        ss = np.sum(a * a, axis=1, keepdims=True)
        return a * (1.0 / np.sqrt(np.maximum(ss, EPS)))

    np.testing.assert_allclose(pn_k, _l2n(key_np), rtol=1e-5, atol=1e-6)
    np.testing.assert_allclose(xn_k, _l2n(cls_np), rtol=1e-5, atol=1e-6)
    np.testing.assert_allclose(sim_k, _l2n(cls_np) @ _l2n(key_np).T,
                               rtol=1e-4, atol=1e-5)   # HIGHEST-precision MXU

    _, idx_ref = jax.lax.top_k(out["similarity"], TOP_K)
    assert np.array_equal(idx_k, np.asarray(idx_ref))

    # one-hot MXU gather at HIGHEST precision: near-exact w.r.t. a plain gather
    np.testing.assert_allclose(
        np.asarray(out["batched_prompt"]),
        prompt_np[idx_k].reshape(B, TOP_K * LENGTH, C_PROMPT),
        rtol=1e-6, atol=1e-6)
    np.testing.assert_allclose(np.asarray(out["selected_key"]), pn_k[idx_k],
                               rtol=1e-6, atol=1e-6)
    np.testing.assert_allclose(
        np.asarray(out["prompted_embedding"]),
        np.concatenate([np.asarray(out["batched_prompt"]), x_np], axis=1),
        rtol=0, atol=0)
    np.testing.assert_allclose(
        np.asarray(out["reduce_sim"]),
        np.sum(pn_k[idx_k] * xn_k[:, None, :]) / B, rtol=1e-4, atol=2e-5)

    print("KERNEL_OK")
</pallas_src>

<mosaic_0001>
module attributes {stable_mosaic.version = 11 : i64} {
  func.func @_fused_prompt_kernel(%arg0: memref<8x512xf32, #tpu.memory_space<vmem>>, %arg1: memref<2x512xf32, #tpu.memory_space<vmem>>, %arg2: memref<8x3840xf32, #tpu.memory_space<vmem>>, %arg3: memref<2x6144xf32, #tpu.memory_space<any>>, %arg4: memref<8x512xf32, #tpu.memory_space<vmem>>, %arg5: memref<2x512xf32, #tpu.memory_space<vmem>>, %arg6: memref<2x128xf32, #tpu.memory_space<vmem>>, %arg7: memref<2x128xi32, #tpu.memory_space<vmem>>, %arg8: memref<2x1024xf32, #tpu.memory_space<vmem>>, %arg9: memref<1x128xf32, #tpu.memory_space<vmem>>, %arg10: memref<2x13824xf32, #tpu.memory_space<vmem>>, %arg11: memref<!tpu.dma_semaphore, #tpu.memory_space<semaphore_mem>>) attributes {dimension_semantics = [], scalar_prefetch = 0 : i64, scratch_operands = 1 : i64, tpu.core_type = #tpu.core_type<tc>} {
    %c0_i32 = arith.constant 0 : i32
    %c7680_i32 = arith.constant 7680 : i32
    %0 = tpu.memref_slice %arg10[%c0_i32, %c7680_i32] : memref<2x13824xf32, #tpu.memory_space<vmem>> -> memref<2x6144xf32, #tpu.memory_space<vmem>>
    tpu.enqueue_dma source(%arg3 : memref<2x6144xf32, #tpu.memory_space<any>>) target(%0 : memref<2x6144xf32, #tpu.memory_space<vmem>>) target_semaphore(%arg11 : memref<!tpu.dma_semaphore, #tpu.memory_space<semaphore_mem>>)
    %c0 = arith.constant 0 : index
    %c0_0 = arith.constant 0 : index
    %1 = vector.load %arg0[%c0, %c0_0] : memref<8x512xf32, #tpu.memory_space<vmem>>, vector<8x512xf32>
    %c0_1 = arith.constant 0 : index
    %c0_2 = arith.constant 0 : index
    %2 = vector.load %arg1[%c0_1, %c0_2] : memref<2x512xf32, #tpu.memory_space<vmem>>, vector<2x512xf32>
    %3 = arith.mulf %1, %1 : vector<8x512xf32>
    %cst = arith.constant dense<0.000000e+00> : vector<8xf32>
    %4 = vector.multi_reduction <add>, %3, %cst [1] : vector<8x512xf32> to vector<8xf32>
    %5 = vector.shape_cast %4 : vector<8xf32> to vector<8x1xf32>
    %cst_3 = arith.constant 9.99999996E-13 : f32
    %6 = vector.broadcast %cst_3 : f32 to vector<8x1xf32>
    %7 = arith.maximumf %5, %6 : vector<8x1xf32>
    %8 = math.rsqrt %7 : vector<8x1xf32>
    %9 = vector.broadcast %8 : vector<8x1xf32> to vector<8x512xf32>
    %10 = arith.mulf %1, %9 : vector<8x512xf32>
    %11 = arith.mulf %2, %2 : vector<2x512xf32>
    %cst_4 = arith.constant dense<0.000000e+00> : vector<2xf32>
    %12 = vector.multi_reduction <add>, %11, %cst_4 [1] : vector<2x512xf32> to vector<2xf32>
    %13 = vector.shape_cast %12 : vector<2xf32> to vector<2x1xf32>
    %cst_5 = arith.constant 9.99999996E-13 : f32
    %14 = vector.broadcast %cst_5 : f32 to vector<2x1xf32>
    %15 = arith.maximumf %13, %14 : vector<2x1xf32>
    %16 = math.rsqrt %15 : vector<2x1xf32>
    %17 = vector.broadcast %16 : vector<2x1xf32> to vector<2x512xf32>
    %18 = arith.mulf %2, %17 : vector<2x512xf32>
    %c0_6 = arith.constant 0 : index
    %c0_7 = arith.constant 0 : index
    %19 = vector.load %arg4[%c0_6, %c0_7] : memref<8x512xf32, #tpu.memory_space<vmem>>, vector<8x512xf32>
    tpu.vector_store %arg4[%c0_6, %c0_7], %10 {strides = array<i32>} : memref<8x512xf32, #tpu.memory_space<vmem>>, vector<8x512xf32>,
    %c0_8 = arith.constant 0 : index
    %c0_9 = arith.constant 0 : index
    %20 = vector.load %arg5[%c0_8, %c0_9] : memref<2x512xf32, #tpu.memory_space<vmem>>, vector<2x512xf32>
    tpu.vector_store %arg5[%c0_8, %c0_9], %18 {strides = array<i32>} : memref<2x512xf32, #tpu.memory_space<vmem>>, vector<2x512xf32>,
    %cst_10 = arith.constant dense<0.000000e+00> : vector<2x8xf32>
    %21 = tpu.matmul %18, %10, %cst_10 {dimension_numbers = #tpu.dot_dimension_numbers<[1], [1], [0], [0], [0, 0, 1, 0], [], []>, precision = #tpu.contract_precision<fp32>} : vector<2x512xf32>, vector<8x512xf32>, vector<2x8xf32> -> vector<2x8xf32>
    %cst_11 = arith.constant 0.000000e+00 : f32
    %22 = vector.broadcast %cst_11 : f32 to vector<2x128xf32>
    %c0_12 = arith.constant 0 : index
    %c0_13 = arith.constant 0 : index
    %23 = vector.load %arg6[%c0_12, %c0_13] : memref<2x128xf32, #tpu.memory_space<vmem>>, vector<2x128xf32>
    tpu.vector_store %arg6[%c0_12, %c0_13], %22 {strides = array<i32>} : memref<2x128xf32, #tpu.memory_space<vmem>>, vector<2x128xf32>,
    %c0_14 = arith.constant 0 : index
    %c0_15 = arith.constant 0 : index
    %24 = vector.load %arg6[%c0_14, %c0_15] : memref<2x128xf32, #tpu.memory_space<vmem>>, vector<2x8xf32>
    tpu.vector_store %arg6[%c0_14, %c0_15], %21 {strides = array<i32>} : memref<2x128xf32, #tpu.memory_space<vmem>>, vector<2x8xf32>,
    %25 = tpu.iota {dimensions = array<i32: 1>} : vector<2x8xi32>
    %26 = tpu.iota {dimensions = array<i32: 1>} : vector<2x128xi32>
    %c0_16 = arith.constant 0 : index
    %c0_17 = arith.constant 0 : index
    %27 = vector.load %arg2[%c0_16, %c0_17] : memref<8x3840xf32, #tpu.memory_space<vmem>>, vector<8x3840xf32>
    %c0_i32_18 = arith.constant 0 : i32
    %28 = vector.broadcast %c0_i32_18 : i32 to vector<2x128xi32>
    %cst_19 = arith.constant 0.000000e+00 : f32
    %29 = vector.broadcast %cst_19 : f32 to vector<2x1xf32>
    %cst_20 = arith.constant dense<0xFF800000> : vector<2xf32>
    %30 = vector.multi_reduction <maximumf>, %21, %cst_20 [1] : vector<2x8xf32> to vector<2xf32>
    %31 = vector.shape_cast %30 : vector<2xf32> to vector<2x1xf32>
    %32 = vector.broadcast %31 : vector<2x1xf32> to vector<2x8xf32>
    %33 = arith.cmpf oeq, %21, %32 : vector<2x8xf32>
    %c8_i32 = arith.constant 8 : i32
    %34 = vector.broadcast %c8_i32 : i32 to vector<2x8xi32>
    %35 = arith.select %33, %25, %34 : vector<2x8xi1>, vector<2x8xi32>
    %cst_21 = arith.constant dense<2147483647> : vector<2xi32>
    %36 = vector.multi_reduction <minsi>, %35, %cst_21 [1] : vector<2x8xi32> to vector<2xi32>
    %37 = vector.shape_cast %36 : vector<2xi32> to vector<2x1xi32>
    %38 = vector.broadcast %37 : vector<2x1xi32> to vector<2x8xi32>
    %39 = arith.cmpi eq, %25, %38 : vector<2x8xi32>
    %40 = arith.extui %39 : vector<2x8xi1> to vector<2x8xi32>
    %41 = arith.sitofp %40 : vector<2x8xi32> to vector<2x8xf32>
    %c0_i32_22 = arith.constant 0 : i32
    %42 = vector.broadcast %c0_i32_22 : i32 to vector<2x128xi32>
    %43 = arith.cmpi eq, %26, %42 : vector<2x128xi32>
    %44 = vector.shape_cast %37 : vector<2x1xi32> to vector<2x1xi32>
    %45 = vector.broadcast %44 : vector<2x1xi32> to vector<2x128xi32>
    %46 = arith.select %43, %45, %28 : vector<2x128xi1>, vector<2x128xi32>
    %47 = arith.addf %29, %31 : vector<2x1xf32>
    %48 = vector.broadcast %37 : vector<2x1xi32> to vector<2x8xi32>
    %49 = arith.cmpi eq, %25, %48 : vector<2x8xi32>
    %cst_23 = arith.constant 0xFF800000 : f32
    %50 = vector.broadcast %cst_23 : f32 to vector<2x8xf32>
    %51 = arith.select %49, %50, %21 : vector<2x8xi1>, vector<2x8xf32>
    %cst_24 = arith.constant dense<0.000000e+00> : vector<2x512xf32>
    %52 = tpu.matmul %41, %10, %cst_24 {dimension_numbers = #tpu.dot_dimension_numbers<[1], [0], [0], [1], [0, 0, 1, 1], [], []>, precision = #tpu.contract_precision<fp32>} : vector<2x8xf32>, vector<8x512xf32>, vector<2x512xf32> -> vector<2x512xf32>
    %cst_25 = arith.constant dense<0.000000e+00> : vector<2x3840xf32>
    %53 = tpu.matmul %41, %27, %cst_25 {dimension_numbers = #tpu.dot_dimension_numbers<[1], [0], [0], [1], [0, 0, 1, 1], [], []>, precision = #tpu.contract_precision<fp32>} : vector<2x8xf32>, vector<8x3840xf32>, vector<2x3840xf32> -> vector<2x3840xf32>
    %c0_26 = arith.constant 0 : index
    %c0_27 = arith.constant 0 : index
    %54 = vector.load %arg8[%c0_26, %c0_27] : memref<2x1024xf32, #tpu.memory_space<vmem>>, vector<2x512xf32>
    tpu.vector_store %arg8[%c0_26, %c0_27], %52 {strides = array<i32>} : memref<2x1024xf32, #tpu.memory_space<vmem>>, vector<2x512xf32>,
    %c0_28 = arith.constant 0 : index
    %c0_29 = arith.constant 0 : index
    %55 = vector.load %arg10[%c0_28, %c0_29] : memref<2x13824xf32, #tpu.memory_space<vmem>>, vector<2x3840xf32>
    tpu.vector_store %arg10[%c0_28, %c0_29], %53 {strides = array<i32>} : memref<2x13824xf32, #tpu.memory_space<vmem>>, vector<2x3840xf32>,
    %cst_30 = arith.constant dense<0xFF800000> : vector<2xf32>
    %56 = vector.multi_reduction <maximumf>, %51, %cst_30 [1] : vector<2x8xf32> to vector<2xf32>
    %57 = vector.shape_cast %56 : vector<2xf32> to vector<2x1xf32>
    %58 = vector.broadcast %57 : vector<2x1xf32> to vector<2x8xf32>
    %59 = arith.cmpf oeq, %51, %58 : vector<2x8xf32>
    %c8_i32_31 = arith.constant 8 : i32
    %60 = vector.broadcast %c8_i32_31 : i32 to vector<2x8xi32>
    %61 = arith.select %59, %25, %60 : vector<2x8xi1>, vector<2x8xi32>
    %cst_32 = arith.constant dense<2147483647> : vector<2xi32>
    %62 = vector.multi_reduction <minsi>, %61, %cst_32 [1] : vector<2x8xi32> to vector<2xi32>
    %63 = vector.shape_cast %62 : vector<2xi32> to vector<2x1xi32>
    %64 = vector.broadcast %63 : vector<2x1xi32> to vector<2x8xi32>
    %65 = arith.cmpi eq, %25, %64 : vector<2x8xi32>
    %66 = arith.extui %65 : vector<2x8xi1> to vector<2x8xi32>
    %67 = arith.sitofp %66 : vector<2x8xi32> to vector<2x8xf32>
    %c1_i32 = arith.constant 1 : i32
    %68 = vector.broadcast %c1_i32 : i32 to vector<2x128xi32>
    %69 = arith.cmpi eq, %26, %68 : vector<2x128xi32>
    %70 = vector.shape_cast %63 : vector<2x1xi32> to vector<2x1xi32>
    %71 = vector.broadcast %70 : vector<2x1xi32> to vector<2x128xi32>
    %72 = arith.select %69, %71, %46 : vector<2x128xi1>, vector<2x128xi32>
    %73 = arith.addf %47, %57 : vector<2x1xf32>
    %cst_33 = arith.constant dense<0.000000e+00> : vector<2x512xf32>
    %74 = tpu.matmul %67, %10, %cst_33 {dimension_numbers = #tpu.dot_dimension_numbers<[1], [0], [0], [1], [0, 0, 1, 1], [], []>, precision = #tpu.contract_precision<fp32>} : vector<2x8xf32>, vector<8x512xf32>, vector<2x512xf32> -> vector<2x512xf32>
    %cst_34 = arith.constant dense<0.000000e+00> : vector<2x3840xf32>
    %75 = tpu.matmul %67, %27, %cst_34 {dimension_numbers = #tpu.dot_dimension_numbers<[1], [0], [0], [1], [0, 0, 1, 1], [], []>, precision = #tpu.contract_precision<fp32>} : vector<2x8xf32>, vector<8x3840xf32>, vector<2x3840xf32> -> vector<2x3840xf32>
    %c0_35 = arith.constant 0 : index
    %c512 = arith.constant 512 : index
    %76 = vector.load %arg8[%c0_35, %c512] : memref<2x1024xf32, #tpu.memory_space<vmem>>, vector<2x512xf32>
    tpu.vector_store %arg8[%c0_35, %c512], %74 {strides = array<i32>} : memref<2x1024xf32, #tpu.memory_space<vmem>>, vector<2x512xf32>,
    %c0_36 = arith.constant 0 : index
    %c3840 = arith.constant 3840 : index
    %77 = vector.load %arg10[%c0_36, %c3840] : memref<2x13824xf32, #tpu.memory_space<vmem>>, vector<2x3840xf32>
    tpu.vector_store %arg10[%c0_36, %c3840], %75 {strides = array<i32>} : memref<2x13824xf32, #tpu.memory_space<vmem>>, vector<2x3840xf32>,
    %c0_37 = arith.constant 0 : index
    %c0_38 = arith.constant 0 : index
    %78 = vector.load %arg7[%c0_37, %c0_38] : memref<2x128xi32, #tpu.memory_space<vmem>>, vector<2x128xi32>
    tpu.vector_store %arg7[%c0_37, %c0_38], %72 {strides = array<i32>} : memref<2x128xi32, #tpu.memory_space<vmem>>, vector<2x128xi32>,
    %79 = vector.shape_cast %73 : vector<2x1xf32> to vector<1x2x1xf32>
    %cst_39 = arith.constant dense<0.000000e+00> : vector<1xf32>
    %80 = vector.multi_reduction <add>, %79, %cst_39 [1, 2] : vector<1x2x1xf32> to vector<1xf32>
    %81 = vector.shape_cast %80 : vector<1xf32> to vector<1x1x1xf32>
    %82 = vector.extract %81[0, 0, 0] : f32 from vector<1x1x1xf32>
    %cst_40 = arith.constant 2.000000e+00 : f32
    %83 = arith.divf %82, %cst_40 : f32
    %84 = vector.broadcast %83 : f32 to vector<1x128xf32>
    %c0_41 = arith.constant 0 : index
    %c0_42 = arith.constant 0 : index
    %85 = vector.load %arg9[%c0_41, %c0_42] : memref<1x128xf32, #tpu.memory_space<vmem>>, vector<1x128xf32>
    tpu.vector_store %arg9[%c0_41, %c0_42], %84 {strides = array<i32>} : memref<1x128xf32, #tpu.memory_space<vmem>>, vector<1x128xf32>,
    %c0_i32_43 = arith.constant 0 : i32
    %c7680_i32_44 = arith.constant 7680 : i32
    %86 = tpu.memref_slice %arg10[%c0_i32_43, %c7680_i32_44] : memref<2x13824xf32, #tpu.memory_space<vmem>> -> memref<2x6144xf32, #tpu.memory_space<vmem>>
    tpu.wait_dma2 semaphore(%arg11 : memref<!tpu.dma_semaphore, #tpu.memory_space<semaphore_mem>>) src(%arg3 : memref<2x6144xf32, #tpu.memory_space<any>>) dst(%86 : memref<2x6144xf32, #tpu.memory_space<vmem>>)
    return
  }
}

</mosaic_0001>

<llo_original>
// kernel: prompt_forward.1
$region0: #{prompt_forward.1}
  #allocation0 [shape = 'u32[]', space=smem, size = 0x4, offset = 0x4, fixed_abs, tag = 'smem constant byte address 0x4 - core index']
  #allocation1 [shape = 'u32[72,128]{1,0:T(1,128)}', space=vmem, size = 0x9000, scoped, tag = 'internal scratch']
  #allocation2 [shape = 's32[1]{0}', space=sflag, size = 0x4, scoped, tag = 'scratch operand']
  #allocation13 [shape = 's32[]', space=sflag, size = 0x4, offset = 0, fixed_abs, tag = 'sflag constant byte address 0x0 - dummy sync flag']
  %s0 = inlined_call_operand.vmem [shape: f32[8,512], index: 0, kind: input, shape index: {}]
  %s1 = inlined_call_operand.vmem [shape: f32[2,512], index: 1, kind: input, shape index: {}]
  %s2 = inlined_call_operand.hbm [shape: f32[8,3840], index: 2, kind: input, shape index: {}]
  %s3 = inlined_call_operand.vmem [shape: f32[2,6144], index: 3, kind: input, shape index: {}]
  %s4 = inlined_call_operand.hbm [shape: f32[8,512], index: 4, kind: output, shape index: {0}]
  %s5 = inlined_call_operand.hbm [shape: f32[2,512], index: 5, kind: output, shape index: {1}]
  %s6 = inlined_call_operand.hbm [shape: f32[2,128], index: 6, kind: output, shape index: {2}]
  %s7 = inlined_call_operand.hbm [shape: s32[2,128], index: 7, kind: output, shape index: {3}]
  %s8 = inlined_call_operand.vmem [shape: f32[2,1024], index: 8, kind: output, shape index: {4}]
  %s9 = inlined_call_operand.hbm [shape: f32[1,128], index: 9, kind: output, shape index: {5}]
  %s10 = inlined_call_operand.vmem [shape: f32[2,13824], index: 10, kind: output, shape index: {6}]
  %11 = xla_tuple %s4, %s5, %s6, %s7, %s8, %s9, %s10
  %s12 = sld [smem:[#allocation0]]
  $region93: #{prompt_forward.1} parent=0
    _
  %s14 = ssub.s32 1, %s12
  %s15 = scalar_select 0, %s14, %s12
  $region1: #{prompt_forward.1} parent=0
    #allocation3 [shape = 'u8[122880]{0}', space=vmem, size = 0x1e000, scoped, tag = 'input window, operand 2, single buffered']
    #allocation4 [shape = 's32[1]{0}', space=sflag, size = 0x4, scoped, tag = 'scoped memory for prompt_forward.1']
    #allocation5 [shape = 's32[1]{0}', space=sflag, size = 0x4, scoped, tag = 'scoped memory for prompt_forward.1']
    #allocation6 [shape = 'u8[16384]{0}', space=vmem, size = 0x4000, scoped, tag = 'output window, operand 0, single buffered']
    #allocation7 [shape = 'u8[4096]{0}', space=vmem, size = 0x1000, scoped, tag = 'output window, operand 1, single buffered']
    #allocation8 [shape = 's32[1]{0}', space=sflag, size = 0x4, scoped, tag = 'scoped memory for prompt_forward.1']
    #allocation9 [shape = 'u8[1024]{0}', space=vmem, size = 0x400, scoped, tag = 'output window, operand 2, single buffered']
    #allocation10 [shape = 'u8[1024]{0}', space=vmem, size = 0x400, scoped, tag = 'output window, operand 3, single buffered']
    #allocation11 [shape = 's32[1]{0}', space=sflag, size = 0x4, scoped, tag = 'scoped memory for prompt_forward.1']
    #allocation12 [shape = 'u8[512]{0}', space=vmem, size = 0x400, scoped, tag = 'output window, operand 5, single buffered']
    %16 = vsyncpa [#allocation4], 0
    %17 = vsyncpa [#allocation5], 0
    %18 = vsyncpa [#allocation8], 0
    %19 = vsyncpa [#allocation11], 0
    // Predicated region
    $region2: #{prompt_forward.1} parent=1 // pred_check
      _
    $region3: #{prompt_forward.1} parent=1 // pred_check_branch
      %21 = sbr.rel (0) target = $region5
    $region4: #{prompt_forward.1} parent=1 // pred_region
      _
    $region5: #{prompt_forward.1} parent=1 // pred_fallthru
      _
    // Predicated region
    $region6: #{prompt_forward.1} parent=1 // pred_check
      _
    $region7: #{prompt_forward.1} parent=1 // pred_check_branch
      %23 = sbr.rel (0) target = $region9
    $region8: #{prompt_forward.1} parent=1 // pred_region
      _
    $region9: #{prompt_forward.1} parent=1 // pred_fallthru
      _
    // Predicated region
    $region10: #{prompt_forward.1} parent=1 // pred_check
      _
    $region11: #{prompt_forward.1} parent=1 // pred_check_branch
      %25 = sbr.rel (0) target = $region13
    $region12: #{prompt_forward.1} parent=1 // pred_region
      %27 = vsyncadd [#allocation4], 0
      %s29 = sshll.u32 %s2, 4
      %s30 = int_to_ptr.hbm [resolvable:$true] %s29
      %s31 = sshll.u32 [#allocation3], 4
      %s32 = int_to_ptr.vmem [resolvable:$true] %s31
      %34 = dma.hbm_to_vmem [thread:$0]  %s30, 3840, %s32, [#allocation4]
    $region13: #{prompt_forward.1} parent=1 // pred_fallthru
      _
    // Predicated region
    $region14: #{prompt_forward.1} parent=1 // pred_check
      _
    $region15: #{prompt_forward.1} parent=1 // pred_check_branch
      %36 = sbr.rel (0) target = $region17
    $region16: #{prompt_forward.1} parent=1 // pred_region
      %38 = dma.done [#allocation4], 3840
    $region17: #{prompt_forward.1} parent=1 // pred_fallthru
      _
    %s39 = scalar_lea.vmem %s10, 120
    // Predicated region
    $region18: #{prompt_forward.1} parent=1 // pred_check
      _
    $region19: #{prompt_forward.1} parent=1 // pred_check_branch
      %41 = sbr.rel (0) target = $region21
    $region20: #{prompt_forward.1} parent=1 // pred_region
      loop: start=0, step=1, limit=1
      $region22: #{prompt_forward.1} parent=20 // loop_pre_header
        _
      $region23: #{prompt_forward.1} parent=20 // loop_header
        %s43 = sphi 0, %s47
        %p44 = scmp.ge.s32.totalorder %s43, 1
        %s48 = sphi %s3, %s3
        %s49 = sphi %s39, %s39
      $region24: #{prompt_forward.1} parent=20 // loop_header_branch
        %46 = sbr.rel (%p44) target = $region28
      $region25: #{prompt_forward.1} parent=20 // loop_body
        %v50 = vld [vmem:[%s48] sm:$0xff]
        %51 = vst [vmem:[%s49] sm:$0xff] %v50
        %v52 = vld [vmem:[%s48 + $0x8] sm:$0xff]
        %53 = vst [vmem:[%s49 + $0x8] sm:$0xff] %v52
        %v54 = vld [vmem:[%s48 + $0x10] sm:$0xff]
        %55 = vst [vmem:[%s49 + $0x10] sm:$0xff] %v54
        %v56 = vld [vmem:[%s48 + $0x18] sm:$0xff]
        %57 = vst [vmem:[%s49 + $0x18] sm:$0xff] %v56
        %v58 = vld [vmem:[%s48 + $0x20] sm:$0xff]
        %59 = vst [vmem:[%s49 + $0x20] sm:$0xff] %v58
        %v60 = vld [vmem:[%s48 + $0x28] sm:$0xff]
        %61 = vst [vmem:[%s49 + $0x28] sm:$0xff] %v60
        %v62 = vld [vmem:[%s48 + $0x30] sm:$0xff]
        %63 = vst [vmem:[%s49 + $0x30] sm:$0xff] %v62
        %v64 = vld [vmem:[%s48 + $0x38] sm:$0xff]
        %65 = vst [vmem:[%s49 + $0x38] sm:$0xff] %v64
        %v66 = vld [vmem:[%s48 + $0x40] sm:$0xff]
        %67 = vst [vmem:[%s49 + $0x40] sm:$0xff] %v66
        %v68 = vld [vmem:[%s48 + $0x48] sm:$0xff]
        %69 = vst [vmem:[%s49 + $0x48] sm:$0xff] %v68
        %v70 = vld [vmem:[%s48 + $0x50] sm:$0xff]
        %71 = vst [vmem:[%s49 + $0x50] sm:$0xff] %v70
        %v72 = vld [vmem:[%s48 + $0x58] sm:$0xff]
        %73 = vst [vmem:[%s49 + $0x58] sm:$0xff] %v72
      $region26: #{prompt_forward.1} parent=20 // loop_footer
        %s47 = sadd.s32 1, %s43
      $region27: #{prompt_forward.1} parent=20 // loop_footer_branch
        %42 = sbr.rel target = $region23
      $region28: #{prompt_forward.1} parent=20 // loop_exit
        _
    $region21: #{prompt_forward.1} parent=1 // pred_fallthru
      _
    // Predicated region
    $region29: #{prompt_forward.1} parent=1 // pred_check
      _
    $region30: #{prompt_forward.1} parent=1 // pred_check_branch
      %75 = sbr.rel target = $region32
    $region31: #{prompt_forward.1} parent=1 // pred_region
      _
    $region32: #{prompt_forward.1} parent=1 // pred_fallthru
      _
    // Predicated region
    $region33: #{prompt_forward.1} parent=1 // pred_check
      _
    $region34: #{prompt_forward.1} parent=1 // pred_check_branch
      %78 = sbr.rel (0) target = $region36
    $region35: #{prompt_forward.1} parent=1 // pred_region
      %79 = vsyncadd [#allocation2], 1536
    $region36: #{prompt_forward.1} parent=1 // pred_fallthru
      _
    %v80 = vld [vmem:[%s0] sm:$0xff]
    %v81 = vld [vmem:[%s0 + $0x8] sm:$0xff]
    %v82 = vld [vmem:[%s0 + $0x10] sm:$0xff]
    %v83 = vld [vmem:[%s0 + $0x18] sm:$0xff]
    %v84 = vld [vmem:[%s1] sm:$0xff]
    %v85 = vmul.f32 %v80, %v80
    %v86 = vmul.f32 %v81, %v81
    %v87 = vmul.f32 %v82, %v82
    %v88 = vmul.f32 %v83, %v83
    %v89 = vadd.f32 %v85, %v86
    %v90 = vadd.f32 %v89, %v87
    %v91 = vadd.f32 %v90, %v88
    %92 = vadd.xlane.f32.xlu0 %v91
    %v93 = vpop.xlane.xlu0 %92
    %v94 = vmax.f32 %v93, 1e-12
    %v95 = vrsqrt.pop %v94
    %v96 = vmul.f32 %v95, %v94
    %v97 = vmul.f32 %v96, %v95
    %v98 = vmul.f32 0.5, %v97
    %v99 = vsub.f32 1.5, %v98
    %v100 = vmul.f32 %v95, %v99
    %vm101 = vweird.f32 %v94
    %vm102 = vweird.f32 %v95
    %vm103 = vmor %vm101, %vm102
    %v104 = vsel %vm103, %v95, %v100
    %v105 = vmul.f32 %v80, %v104
    %v106 = vmul.f32 %v81, %v104
    %v107 = vmul.f32 %v82, %v104
    %v108 = vmul.f32 %v83, %v104
    %v109 = vmul.f32 %v84, %v84
    %111 = vst [vmem:[#allocation1] ss:$4 sm:$0xff] %v109
    %v112 = vld.sshfl [vmem:[#allocation1] sm:$0xff pattern:$0x73625140]
    %v113 = vld.sshfl [vmem:[#allocation1 + $0x8] sm:$0xff pattern:$0x73625140]
    %v114 = vld.sshfl [vmem:[#allocation1 + $0x10] sm:$0xff pattern:$0x73625140]
    %v115 = vld.sshfl [vmem:[#allocation1 + $0x18] sm:$0xff pattern:$0x73625140]
    %vm120 = vcmask 1041408
    %v121 = vsel %vm120, %v112, 0.0
    %v122 = vsel %vm120, %v113, 0.0
    %v123 = vadd.f32 %v121, %v122
    %v124 = vsel %vm120, %v114, 0.0
    %v125 = vadd.f32 %v123, %v124
    %v126 = vsel %vm120, %v115, 0.0
    %v127 = vadd.f32 %v125, %v126
    %128 = vadd.xlane.f32.xlu0 %v127
    %v129 = vpop.xlane.xlu0 %128
    %v130 = vmax.f32 %v129, 1e-12
    %v131 = vrsqrt.pop %v130
    %v132 = vmul.f32 %v131, %v130
    %v133 = vmul.f32 %v132, %v131
    %v134 = vmul.f32 0.5, %v133
    %v135 = vsub.f32 1.5, %v134
    %v136 = vmul.f32 %v131, %v135
    %vm137 = vweird.f32 %v130
    %vm138 = vweird.f32 %v131
    %vm139 = vmor %vm137, %vm138
    %v140 = vsel %vm139, %v131, %v136
    %v143 = vunpack.c.l.s4 269488144
    %v144 = vunpack.c.0.s8 %v143
    %v145 = vperm.slane %v140, %v144
    %v147 = vmul.f32 %v84, %v145
    %148 = vst [vmem:[#allocation6] sm:$0xff] %v105
    %149 = vst [vmem:[#allocation6 + $0x8] sm:$0xff] %v106
    %150 = vst [vmem:[#allocation6 + $0x10] sm:$0xff] %v107
    %151 = vst [vmem:[#allocation6 + $0x18] sm:$0xff] %v108
    %152 = vst [vmem:[#allocation7] sm:$0xff] %v147
    %154 = vst [vmem:[#allocation1] ss:$4 sm:$0xff] %v147
    %v155 = vld.sshfl [vmem:[#allocation1] sm:$0xff pattern:$0x73625140]
    %v156 = vld.sshfl [vmem:[#allocation1 + $0x8] sm:$0xff pattern:$0x73625140]
    %v157 = vld.sshfl [vmem:[#allocation1 + $0x10] sm:$0xff pattern:$0x73625140]
    %v158 = vld.sshfl [vmem:[#allocation1 + $0x18] sm:$0xff pattern:$0x73625140]
    %163 = vmatpush.xpose.msra.mxu0 0.0
    %164 = vmatpush.xpose.msra.mxu0 0.0
    %165 = vmatpush.xpose.msra.mxu0 0.0
    %166 = vmatpush.xpose.msra.mxu0 0.0
    %167 = vmatpush.xpose.msra.mxu0 0.0
    %168 = vmatpush.xpose.msra.mxu0 0.0
    %169 = vmatpush.xpose.msra.mxu0 0.0
    %170 = vmatpush.xpose.msra.mxu0 0.0
    %171 = vmatpush.xpose.msra.mxu0 0.0
    %172 = vmatpush.xpose.msra.mxu0 0.0
    %173 = vmatpush.xpose.msra.mxu0 0.0
    %174 = vmatpush.xpose.msra.mxu0 0.0
    %175 = vmatpush.xpose.msra.mxu0 0.0
    %176 = vmatpush.xpose.msra.mxu0 0.0
    %177 = vmatpush.xpose.msra.mxu0 0.0
    %v178 = vand.u32 %v105, 4294901760
    %179 = vmatpush.xpose.msra.mxu0 %v178
    %v180 = vand.u32 %v155, 4294901760
    %v181 = vsub.f32 %v155, %v180
    %v182 = vand.u32 %v181, 4294901760
    %v183 = vsub.f32 %v181, %v182
    %v184 = vand.u32 %v183, 4294901760
    %185 = vmatmul.f32.gmra.mxu0 %v184
    %v186 = vpop.f32.mrf.mxu0
    %v187 = vadd.f32 0.0, %v186
    %188 = vdwg.mxu0
    %189 = vmatpush.xpose.msra.mxu0 0.0
    %190 = vmatpush.xpose.msra.mxu0 0.0
    %191 = vmatpush.xpose.msra.mxu0 0.0
    %192 = vmatpush.xpose.msra.mxu0 0.0
    %193 = vmatpush.xpose.msra.mxu0 0.0
    %194 = vmatpush.xpose.msra.mxu0 0.0
    %195 = vmatpush.xpose.msra.mxu0 0.0
    %196 = vmatpush.xpose.msra.mxu0 0.0
    %197 = vmatpush.xpose.msra.mxu0 0.0
    %198 = vmatpush.xpose.msra.mxu0 0.0
    %199 = vmatpush.xpose.msra.mxu0 0.0
    %200 = vmatpush.xpose.msra.mxu0 0.0
    %201 = vmatpush.xpose.msra.mxu0 0.0
    %202 = vmatpush.xpose.msra.mxu0 0.0
    %203 = vmatpush.xpose.msra.mxu0 0.0
    %v204 = vand.u32 %v105, 4294901760
    %v205 = vsub.f32 %v105, %v204
    %v206 = vand.u32 %v205, 4294901760
    %v207 = vsub.f32 %v205, %v206
    %v208 = vand.u32 %v207, 4294901760
    %209 = vmatpush.xpose.msra.mxu0 %v208
    %v210 = vand.u32 %v155, 4294901760
    %211 = vmatmul.f32.gmra.mxu0 %v210
    %v212 = vpop.f32.mrf.mxu0
    %v213 = vadd.f32 %v187, %v212
    %214 = vdwg.mxu0
    %215 = vmatpush.xpose.msra.mxu0 0.0
    %216 = vmatpush.xpose.msra.mxu0 0.0
    %217 = vmatpush.xpose.msra.mxu0 0.0
    %218 = vmatpush.xpose.msra.mxu0 0.0
    %219 = vmatpush.xpose.msra.mxu0 0.0
    %220 = vmatpush.xpose.msra.mxu0 0.0
    %221 = vmatpush.xpose.msra.mxu0 0.0
    %222 = vmatpush.xpose.msra.mxu0 0.0
    %223 = vmatpush.xpose.msra.mxu0 0.0
    %224 = vmatpush.xpose.msra.mxu0 0.0
    %225 = vmatpush.xpose.msra.mxu0 0.0
    %226 = vmatpush.xpose.msra.mxu0 0.0
    %227 = vmatpush.xpose.msra.mxu0 0.0
    %228 = vmatpush.xpose.msra.mxu0 0.0
    %229 = vmatpush.xpose.msra.mxu0 0.0
    %v230 = vand.u32 %v105, 4294901760
    %v231 = vsub.f32 %v105, %v230
    %232 = vmatpush.xpose.msra.mxu0 %v231
    %v233 = vand.u32 %v155, 4294901760
    %v234 = vsub.f32 %v155, %v233
    %235 = vmatmul.f32.gmra.mxu0 %v234
    %v236 = vpop.f32.mrf.mxu0
    %v237 = vadd.f32 %v213, %v236
    %238 = vdwg.mxu0
    %239 = vmatpush.xpose.msra.mxu0 0.0
    %240 = vmatpush.xpose.msra.mxu0 0.0
    %241 = vmatpush.xpose.msra.mxu0 0.0
    %242 = vmatpush.xpose.msra.mxu0 0.0
    %243 = vmatpush.xpose.msra.mxu0 0.0
    %244 = vmatpush.xpose.msra.mxu0 0.0
    %245 = vmatpush.xpose.msra.mxu0 0.0
    %246 = vmatpush.xpose.msra.mxu0 0.0
    %247 = vmatpush.xpose.msra.mxu0 0.0
    %248 = vmatpush.xpose.msra.mxu0 0.0
    %249 = vmatpush.xpose.msra.mxu0 0.0
    %250 = vmatpush.xpose.msra.mxu0 0.0
    %251 = vmatpush.xpose.msra.mxu0 0.0
    %252 = vmatpush.xpose.msra.mxu0 0.0
    %253 = vmatpush.xpose.msra.mxu0 0.0
    %v254 = vand.u32 %v105, 4294901760
    %255 = vmatpush.xpose.msra.mxu0 %v254
    %v256 = vand.u32 %v155, 4294901760
    %v257 = vsub.f32 %v155, %v256
    %v258 = vand.u32 %v257, 4294901760
    %259 = vmatmul.f32.gmra.mxu0 %v258
    %v260 = vpop.f32.mrf.mxu0
    %v261 = vadd.f32 %v237, %v260
    %262 = vdwg.mxu0
    %263 = vmatpush.xpose.msra.mxu0 0.0
    %264 = vmatpush.xpose.msra.mxu0 0.0
    %265 = vmatpush.xpose.msra.mxu0 0.0
    %266 = vmatpush.xpose.msra.mxu0 0.0
    %267 = vmatpush.xpose.msra.mxu0 0.0
    %268 = vmatpush.xpose.msra.mxu0 0.0
    %269 = vmatpush.xpose.msra.mxu0 0.0
    %270 = vmatpush.xpose.msra.mxu0 0.0
    %271 = vmatpush.xpose.msra.mxu0 0.0
    %272 = vmatpush.xpose.msra.mxu0 0.0
    %273 = vmatpush.xpose.msra.mxu0 0.0
    %274 = vmatpush.xpose.msra.mxu0 0.0
    %275 = vmatpush.xpose.msra.mxu0 0.0
    %276 = vmatpush.xpose.msra.mxu0 0.0
    %277 = vmatpush.xpose.msra.mxu0 0.0
    %v278 = vand.u32 %v105, 4294901760
    %v279 = vsub.f32 %v105, %v278
    %v280 = vand.u32 %v279, 4294901760
    %281 = vmatpush.xpose.msra.mxu0 %v280
    %v282 = vand.u32 %v155, 4294901760
    %283 = vmatmul.f32.gmra.mxu0 %v282
    %v284 = vpop.f32.mrf.mxu0
    %v285 = vadd.f32 %v261, %v284
    %286 = vdwg.mxu0
    %287 = vmatpush.xpose.msra.mxu0 0.0
    %288 = vmatpush.xpose.msra.mxu0 0.0
    %289 = vmatpush.xpose.msra.mxu0 0.0
    %290 = vmatpush.xpose.msra.mxu0 0.0
    %291 = vmatpush.xpose.msra.mxu0 0.0
    %292 = vmatpush.xpose.msra.mxu0 0.0
    %293 = vmatpush.xpose.msra.mxu0 0.0
    %294 = vmatpush.xpose.msra.mxu0 0.0
    %295 = vmatpush.xpose.msra.mxu0 0.0
    %296 = vmatpush.xpose.msra.mxu0 0.0
    %297 = vmatpush.xpose.msra.mxu0 0.0
    %298 = vmatpush.xpose.msra.mxu0 0.0
    %299 = vmatpush.xpose.msra.mxu0 0.0
    %300 = vmatpush.xpose.msra.mxu0 0.0
    %301 = vmatpush.xpose.msra.mxu0 0.0
    %v302 = vand.u32 %v105, 4294901760
    %303 = vmatpush.xpose.msra.mxu0 %v302
    %v304 = vand.u32 %v155, 4294901760
    %305 = vmatmul.f32.gmra.mxu0 %v304
    %v306 = vpop.f32.mrf.mxu0
    %v307 = vadd.f32 %v285, %v306
    %308 = vdwg.mxu0
    %309 = vmatpush.xpose.msra.mxu0 0.0
    %310 = vmatpush.xpose.msra.mxu0 0.0
    %311 = vmatpush.xpose.msra.mxu0 0.0
    %312 = vmatpush.xpose.msra.mxu0 0.0
    %313 = vmatpush.xpose.msra.mxu0 0.0
    %314 = vmatpush.xpose.msra.mxu0 0.0
    %315 = vmatpush.xpose.msra.mxu0 0.0
    %316 = vmatpush.xpose.msra.mxu0 0.0
    %317 = vmatpush.xpose.msra.mxu0 0.0
    %318 = vmatpush.xpose.msra.mxu0 0.0
    %319 = vmatpush.xpose.msra.mxu0 0.0
    %320 = vmatpush.xpose.msra.mxu0 0.0
    %321 = vmatpush.xpose.msra.mxu0 0.0
    %322 = vmatpush.xpose.msra.mxu0 0.0
    %323 = vmatpush.xpose.msra.mxu0 0.0
    %v324 = vand.u32 %v106, 4294901760
    %325 = vmatpush.xpose.msra.mxu0 %v324
    %v326 = vand.u32 %v156, 4294901760
    %v327 = vsub.f32 %v156, %v326
    %v328 = vand.u32 %v327, 4294901760
    %v329 = vsub.f32 %v327, %v328
    %v330 = vand.u32 %v329, 4294901760
    %331 = vmatmul.f32.gmra.mxu0 %v330
    %v332 = vpop.f32.mrf.mxu0
    %v333 = vadd.f32 %v307, %v332
    %334 = vdwg.mxu0
    %335 = vmatpush.xpose.msra.mxu0 0.0
    %336 = vmatpush.xpose.msra.mxu0 0.0
    %337 = vmatpush.xpose.msra.mxu0 0.0
    %338 = vmatpush.xpose.msra.mxu0 0.0
    %339 = vmatpush.xpose.msra.mxu0 0.0
    %340 = vmatpush.xpose.msra.mxu0 0.0
    %341 = vmatpush.xpose.msra.mxu0 0.0
    %342 = vmatpush.xpose.msra.mxu0 0.0
    %343 = vmatpush.xpose.msra.mxu0 0.0
    %344 = vmatpush.xpose.msra.mxu0 0.0
    %345 = vmatpush.xpose.msra.mxu0 0.0
    %346 = vmatpush.xpose.msra.mxu0 0.0
    %347 = vmatpush.xpose.msra.mxu0 0.0
    %348 = vmatpush.xpose.msra.mxu0 0.0
    %349 = vmatpush.xpose.msra.mxu0 0.0
    %v350 = vand.u32 %v106, 4294901760
    %v351 = vsub.f32 %v106, %v350
    %v352 = vand.u32 %v351, 4294901760
    %v353 = vsub.f32 %v351, %v352
    %v354 = vand.u32 %v353, 4294901760
    %355 = vmatpush.xpose.msra.mxu0 %v354
    %v356 = vand.u32 %v156, 4294901760
    %357 = vmatmul.f32.gmra.mxu0 %v356
    %v358 = vpop.f32.mrf.mxu0
    %v359 = vadd.f32 %v333, %v358
    %360 = vdwg.mxu0
    %361 = vmatpush.xpose.msra.mxu0 0.0
    %362 = vmatpush.xpose.msra.mxu0 0.0
    %363 = vmatpush.xpose.msra.mxu0 0.0
    %364 = vmatpush.xpose.msra.mxu0 0.0
    %365 = vmatpush.xpose.msra.mxu0 0.0
    %366 = vmatpush.xpose.msra.mxu0 0.0
    %367 = vmatpush.xpose.msra.mxu0 0.0
    %368 = vmatpush.xpose.msra.mxu0 0.0
    %369 = vmatpush.xpose.msra.mxu0 0.0
    %370 = vmatpush.xpose.msra.mxu0 0.0
    %371 = vmatpush.xpose.msra.mxu0 0.0
    %372 = vmatpush.xpose.msra.mxu0 0.0
    %373 = vmatpush.xpose.msra.mxu0 0.0
    %374 = vmatpush.xpose.msra.mxu0 0.0
    %375 = vmatpush.xpose.msra.mxu0 0.0
    %v376 = vand.u32 %v106, 4294901760
    %v377 = vsub.f32 %v106, %v376
    %378 = vmatpush.xpose.msra.mxu0 %v377
    %v379 = vand.u32 %v156, 4294901760
    %v380 = vsub.f32 %v156, %v379
    %381 = vmatmul.f32.gmra.mxu0 %v380
    %v382 = vpop.f32.mrf.mxu0
    %v383 = vadd.f32 %v359, %v382
    %384 = vdwg.mxu0
    %385 = vmatpush.xpose.msra.mxu0 0.0
    %386 = vmatpush.xpose.msra.mxu0 0.0
    %387 = vmatpush.xpose.msra.mxu0 0.0
    %388 = vmatpush.xpose.msra.mxu0 0.0
    %389 = vmatpush.xpose.msra.mxu0 0.0
    %390 = vmatpush.xpose.msra.mxu0 0.0
    %391 = vmatpush.xpose.msra.mxu0 0.0
    %392 = vmatpush.xpose.msra.mxu0 0.0
    %393 = vmatpush.xpose.msra.mxu0 0.0
    %394 = vmatpush.xpose.msra.mxu0 0.0
    %395 = vmatpush.xpose.msra.mxu0 0.0
    %396 = vmatpush.xpose.msra.mxu0 0.0
    %397 = vmatpush.xpose.msra.mxu0 0.0
    %398 = vmatpush.xpose.msra.mxu0 0.0
    %399 = vmatpush.xpose.msra.mxu0 0.0
    %v400 = vand.u32 %v106, 4294901760
    %401 = vmatpush.xpose.msra.mxu0 %v400
    %v402 = vand.u32 %v156, 4294901760
    %v403 = vsub.f32 %v156, %v402
    %v404 = vand.u32 %v403, 4294901760
    %405 = vmatmul.f32.gmra.mxu0 %v404
    %v406 = vpop.f32.mrf.mxu0
    %v407 = vadd.f32 %v383, %v406
    %408 = vdwg.mxu0
    %409 = vmatpush.xpose.msra.mxu0 0.0
    %410 = vmatpush.xpose.msra.mxu0 0.0
    %411 = vmatpush.xpose.msra.mxu0 0.0
    %412 = vmatpush.xpose.msra.mxu0 0.0
    %413 = vmatpush.xpose.msra.mxu0 0.0
    %414 = vmatpush.xpose.msra.mxu0 0.0
    %415 = vmatpush.xpose.msra.mxu0 0.0
    %416 = vmatpush.xpose.msra.mxu0 0.0
    %417 = vmatpush.xpose.msra.mxu0 0.0
    %418 = vmatpush.xpose.msra.mxu0 0.0
    %419 = vmatpush.xpose.msra.mxu0 0.0
    %420 = vmatpush.xpose.msra.mxu0 0.0
    %421 = vmatpush.xpose.msra.mxu0 0.0
    %422 = vmatpush.xpose.msra.mxu0 0.0
    %423 = vmatpush.xpose.msra.mxu0 0.0
    %v424 = vand.u32 %v106, 4294901760
    %v425 = vsub.f32 %v106, %v424
    %v426 = vand.u32 %v425, 4294901760
    %427 = vmatpush.xpose.msra.mxu0 %v426
    %v428 = vand.u32 %v156, 4294901760
    %429 = vmatmul.f32.gmra.mxu0 %v428
    %v430 = vpop.f32.mrf.mxu0
    %v431 = vadd.f32 %v407, %v430
    %432 = vdwg.mxu0
    %433 = vmatpush.xpose.msra.mxu0 0.0
    %434 = vmatpush.xpose.msra.mxu0 0.0
    %435 = vmatpush.xpose.msra.mxu0 0.0
    %436 = vmatpush.xpose.msra.mxu0 0.0
    %437 = vmatpush.xpose.msra.mxu0 0.0
    %438 = vmatpush.xpose.msra.mxu0 0.0
    %439 = vmatpush.xpose.msra.mxu0 0.0
    %440 = vmatpush.xpose.msra.mxu0 0.0
    %441 = vmatpush.xpose.msra.mxu0 0.0
    %442 = vmatpush.xpose.msra.mxu0 0.0
    %443 = vmatpush.xpose.msra.mxu0 0.0
    %444 = vmatpush.xpose.msra.mxu0 0.0
    %445 = vmatpush.xpose.msra.mxu0 0.0
    %446 = vmatpush.xpose.msra.mxu0 0.0
    %447 = vmatpush.xpose.msra.mxu0 0.0
    %v448 = vand.u32 %v106, 4294901760
    %449 = vmatpush.xpose.msra.mxu0 %v448
    %v450 = vand.u32 %v156, 4294901760
    %451 = vmatmul.f32.gmra.mxu0 %v450
    %v452 = vpop.f32.mrf.mxu0
    %v453 = vadd.f32 %v431, %v452
    %454 = vdwg.mxu0
    %455 = vmatpush.xpose.msra.mxu0 0.0
    %456 = vmatpush.xpose.msra.mxu0 0.0
    %457 = vmatpush.xpose.msra.mxu0 0.0
    %458 = vmatpush.xpose.msra.mxu0 0.0
    %459 = vmatpush.xpose.msra.mxu0 0.0
    %460 = vmatpush.xpose.msra.mxu0 0.0
    %461 = vmatpush.xpose.msra.mxu0 0.0
    %462 = vmatpush.xpose.msra.mxu0 0.0
    %463 = vmatpush.xpose.msra.mxu0 0.0
    %464 = vmatpush.xpose.msra.mxu0 0.0
    %465 = vmatpush.xpose.msra.mxu0 0.0
    %466 = vmatpush.xpose.msra.mxu0 0.0
    %467 = vmatpush.xpose.msra.mxu0 0.0
    %468 = vmatpush.xpose.msra.mxu0 0.0
    %469 = vmatpush.xpose.msra.mxu0 0.0
    %v470 = vand.u32 %v107, 4294901760
    %471 = vmatpush.xpose.msra.mxu0 %v470
    %v472 = vand.u32 %v157, 4294901760
    %v473 = vsub.f32 %v157, %v472
    %v474 = vand.u32 %v473, 4294901760
    %v475 = vsub.f32 %v473, %v474
    %v476 = vand.u32 %v475, 4294901760
    %477 = vmatmul.f32.gmra.mxu0 %v476
    %v478 = vpop.f32.mrf.mxu0
    %v479 = vadd.f32 %v453, %v478
    %480 = vdwg.mxu0
    %481 = vmatpush.xpose.msra.mxu0 0.0
    %482 = vmatpush.xpose.msra.mxu0 0.0
    %483 = vmatpush.xpose.msra.mxu0 0.0
    %484 = vmatpush.xpose.msra.mxu0 0.0
    %485 = vmatpush.xpose.msra.mxu0 0.0
    %486 = vmatpush.xpose.msra.mxu0 0.0
    %487 = vmatpush.xpose.msra.mxu0 0.0
    %488 = vmatpush.xpose.msra.mxu0 0.0
    %489 = vmatpush.xpose.msra.mxu0 0.0
    %490 = vmatpush.xpose.msra.mxu0 0.0
    %491 = vmatpush.xpose.msra.mxu0 0.0
    %492 = vmatpush.xpose.msra.mxu0 0.0
    %493 = vmatpush.xpose.msra.mxu0 0.0
    %494 = vmatpush.xpose.msra.mxu0 0.0
    %495 = vmatpush.xpose.msra.mxu0 0.0
    %v496 = vand.u32 %v107, 4294901760
    %v497 = vsub.f32 %v107, %v496
    %v498 = vand.u32 %v497, 4294901760
    %v499 = vsub.f32 %v497, %v498
    %v500 = vand.u32 %v499, 4294901760
    %501 = vmatpush.xpose.msra.mxu0 %v500
    %v502 = vand.u32 %v157, 4294901760
    %503 = vmatmul.f32.gmra.mxu0 %v502
    %v504 = vpop.f32.mrf.mxu0
    %v505 = vadd.f32 %v479, %v504
    %506 = vdwg.mxu0
    %507 = vmatpush.xpose.msra.mxu0 0.0
    %508 = vmatpush.xpose.msra.mxu0 0.0
    %509 = vmatpush.xpose.msra.mxu0 0.0
    %510 = vmatpush.xpose.msra.mxu0 0.0
    %511 = vmatpush.xpose.msra.mxu0 0.0
    %512 = vmatpush.xpose.msra.mxu0 0.0
    %513 = vmatpush.xpose.msra.mxu0 0.0
    %514 = vmatpush.xpose.msra.mxu0 0.0
    %515 = vmatpush.xpose.msra.mxu0 0.0
    %516 = vmatpush.xpose.msra.mxu0 0.0
    %517 = vmatpush.xpose.msra.mxu0 0.0
    %518 = vmatpush.xpose.msra.mxu0 0.0
    %519 = vmatpush.xpose.msra.mxu0 0.0
    %520 = vmatpush.xpose.msra.mxu0 0.0
    %521 = vmatpush.xpose.msra.mxu0 0.0
    %v522 = vand.u32 %v107, 4294901760
    %v523 = vsub.f32 %v107, %v522
    %524 = vmatpush.xpose.msra.mxu0 %v523
    %v525 = vand.u32 %v157, 4294901760
    %v526 = vsub.f32 %v157, %v525
    %527 = vmatmul.f32.gmra.mxu0 %v526
    %v528 = vpop.f32.mrf.mxu0
    %v529 = vadd.f32 %v505, %v528
    %530 = vdwg.mxu0
    %531 = vmatpush.xpose.msra.mxu0 0.0
    %532 = vmatpush.xpose.msra.mxu0 0.0
    %533 = vmatpush.xpose.msra.mxu0 0.0
    %534 = vmatpush.xpose.msra.mxu0 0.0
    %535 = vmatpush.xpose.msra.mxu0 0.0
    %536 = vmatpush.xpose.msra.mxu0 0.0
    %537 = vmatpush.xpose.msra.mxu0 0.0
    %538 = vmatpush.xpose.msra.mxu0 0.0
    %539 = vmatpush.xpose.msra.mxu0 0.0
    %540 = vmatpush.xpose.msra.mxu0 0.0
    %541 = vmatpush.xpose.msra.mxu0 0.0
    %542 = vmatpush.xpose.msra.mxu0 0.0
    %543 = vmatpush.xpose.msra.mxu0 0.0
    %544 = vmatpush.xpose.msra.mxu0 0.0
    %545 = vmatpush.xpose.msra.mxu0 0.0
    %v546 = vand.u32 %v107, 4294901760
    %547 = vmatpush.xpose.msra.mxu0 %v546
    %v548 = vand.u32 %v157, 4294901760
    %v549 = vsub.f32 %v157, %v548
    %v550 = vand.u32 %v549, 4294901760
    %551 = vmatmul.f32.gmra.mxu0 %v550
    %v552 = vpop.f32.mrf.mxu0
    %v553 = vadd.f32 %v529, %v552
    %554 = vdwg.mxu0
    %555 = vmatpush.xpose.msra.mxu0 0.0
    %556 = vmatpush.xpose.msra.mxu0 0.0
    %557 = vmatpush.xpose.msra.mxu0 0.0
    %558 = vmatpush.xpose.msra.mxu0 0.0
    %559 = vmatpush.xpose.msra.mxu0 0.0
    %560 = vmatpush.xpose.msra.mxu0 0.0
    %561 = vmatpush.xpose.msra.mxu0 0.0
    %562 = vmatpush.xpose.msra.mxu0 0.0
    %563 = vmatpush.xpose.msra.mxu0 0.0
    %564 = vmatpush.xpose.msra.mxu0 0.0
    %565 = vmatpush.xpose.msra.mxu0 0.0
    %566 = vmatpush.xpose.msra.mxu0 0.0
    %567 = vmatpush.xpose.msra.mxu0 0.0
    %568 = vmatpush.xpose.msra.mxu0 0.0
    %569 = vmatpush.xpose.msra.mxu0 0.0
    %v570 = vand.u32 %v107, 4294901760
    %v571 = vsub.f32 %v107, %v570
    %v572 = vand.u32 %v571, 4294901760
    %573 = vmatpush.xpose.msra.mxu0 %v572
    %v574 = vand.u32 %v157, 4294901760
    %575 = vmatmul.f32.gmra.mxu0 %v574
    %v576 = vpop.f32.mrf.mxu0
    %v577 = vadd.f32 %v553, %v576
    %578 = vdwg.mxu0
    %579 = vmatpush.xpose.msra.mxu0 0.0
    %580 = vmatpush.xpose.msra.mxu0 0.0
    %581 = vmatpush.xpose.msra.mxu0 0.0
    %582 = vmatpush.xpose.msra.mxu0 0.0
    %583 = vmatpush.xpose.msra.mxu0 0.0
    %584 = vmatpush.xpose.msra.mxu0 0.0
    %585 = vmatpush.xpose.msra.mxu0 0.0
    %586 = vmatpush.xpose.msra.mxu0 0.0
    %587 = vmatpush.xpose.msra.mxu0 0.0
    %588 = vmatpush.xpose.msra.mxu0 0.0
    %589 = vmatpush.xpose.msra.mxu0 0.0
    %590 = vmatpush.xpose.msra.mxu0 0.0
    %591 = vmatpush.xpose.msra.mxu0 0.0
    %592 = vmatpush.xpose.msra.mxu0 0.0
    %593 = vmatpush.xpose.msra.mxu0 0.0
    %v594 = vand.u32 %v107, 4294901760
    %595 = vmatpush.xpose.msra.mxu0 %v594
    %v596 = vand.u32 %v157, 4294901760
    %597 = vmatmul.f32.gmra.mxu0 %v596
    %v598 = vpop.f32.mrf.mxu0
    %v599 = vadd.f32 %v577, %v598
    %600 = vdwg.mxu0
    %601 = vmatpush.xpose.msra.mxu0 0.0
    %602 = vmatpush.xpose.msra.mxu0 0.0
    %603 = vmatpush.xpose.msra.mxu0 0.0
    %604 = vmatpush.xpose.msra.mxu0 0.0
    %605 = vmatpush.xpose.msra.mxu0 0.0
    %606 = vmatpush.xpose.msra.mxu0 0.0
    %607 = vmatpush.xpose.msra.mxu0 0.0
    %608 = vmatpush.xpose.msra.mxu0 0.0
    %609 = vmatpush.xpose.msra.mxu0 0.0
    %610 = vmatpush.xpose.msra.mxu0 0.0
    %611 = vmatpush.xpose.msra.mxu0 0.0
    %612 = vmatpush.xpose.msra.mxu0 0.0
    %613 = vmatpush.xpose.msra.mxu0 0.0
    %614 = vmatpush.xpose.msra.mxu0 0.0
    %615 = vmatpush.xpose.msra.mxu0 0.0
    %v616 = vand.u32 %v108, 4294901760
    %617 = vmatpush.xpose.msra.mxu0 %v616
    %v618 = vand.u32 %v158, 4294901760
    %v619 = vsub.f32 %v158, %v618
    %v620 = vand.u32 %v619, 4294901760
    %v621 = vsub.f32 %v619, %v620
    %v622 = vand.u32 %v621, 4294901760
    %623 = vmatmul.f32.gmra.mxu0 %v622
    %v624 = vpop.f32.mrf.mxu0
    %v625 = vadd.f32 %v599, %v624
    %626 = vdwg.mxu0
    %627 = vmatpush.xpose.msra.mxu0 0.0
    %628 = vmatpush.xpose.msra.mxu0 0.0
    %629 = vmatpush.xpose.msra.mxu0 0.0
    %630 = vmatpush.xpose.msra.mxu0 0.0
    %631 = vmatpush.xpose.msra.mxu0 0.0
    %632 = vmatpush.xpose.msra.mxu0 0.0
    %633 = vmatpush.xpose.msra.mxu0 0.0
    %634 = vmatpush.xpose.msra.mxu0 0.0
    %635 = vmatpush.xpose.msra.mxu0 0.0
    %636 = vmatpush.xpose.msra.mxu0 0.0
    %637 = vmatpush.xpose.msra.mxu0 0.0
    %638 = vmatpush.xpose.msra.mxu0 0.0
    %639 = vmatpush.xpose.msra.mxu0 0.0
    %640 = vmatpush.xpose.msra.mxu0 0.0
    %641 = vmatpush.xpose.msra.mxu0 0.0
    %v642 = vand.u32 %v108, 4294901760
    %v643 = vsub.f32 %v108, %v642
    %v644 = vand.u32 %v643, 4294901760
    %v645 = vsub.f32 %v643, %v644
    %v646 = vand.u32 %v645, 4294901760
    %647 = vmatpush.xpose.msra.mxu0 %v646
    %v648 = vand.u32 %v158, 4294901760
    %649 = vmatmul.f32.gmra.mxu0 %v648
    %v650 = vpop.f32.mrf.mxu0
    %v651 = vadd.f32 %v625, %v650
    %652 = vdwg.mxu0
    %653 = vmatpush.xpose.msra.mxu0 0.0
    %654 = vmatpush.xpose.msra.mxu0 0.0
    %655 = vmatpush.xpose.msra.mxu0 0.0
    %656 = vmatpush.xpose.msra.mxu0 0.0
    %657 = vmatpush.xpose.msra.mxu0 0.0
    %658 = vmatpush.xpose.msra.mxu0 0.0
    %659 = vmatpush.xpose.msra.mxu0 0.0
    %660 = vmatpush.xpose.msra.mxu0 0.0
    %661 = vmatpush.xpose.msra.mxu0 0.0
    %662 = vmatpush.xpose.msra.mxu0 0.0
    %663 = vmatpush.xpose.msra.mxu0 0.0
    %664 = vmatpush.xpose.msra.mxu0 0.0
    %665 = vmatpush.xpose.msra.mxu0 0.0
    %666 = vmatpush.xpose.msra.mxu0 0.0
    %667 = vmatpush.xpose.msra.mxu0 0.0
    %v668 = vand.u32 %v108, 4294901760
    %v669 = vsub.f32 %v108, %v668
    %670 = vmatpush.xpose.msra.mxu0 %v669
    %v671 = vand.u32 %v158, 4294901760
    %v672 = vsub.f32 %v158, %v671
    %673 = vmatmul.f32.gmra.mxu0 %v672
    %v674 = vpop.f32.mrf.mxu0
    %v675 = vadd.f32 %v651, %v674
    %676 = vdwg.mxu0
    %677 = vmatpush.xpose.msra.mxu0 0.0
    %678 = vmatpush.xpose.msra.mxu0 0.0
    %679 = vmatpush.xpose.msra.mxu0 0.0
    %680 = vmatpush.xpose.msra.mxu0 0.0
    %681 = vmatpush.xpose.msra.mxu0 0.0
    %682 = vmatpush.xpose.msra.mxu0 0.0
    %683 = vmatpush.xpose.msra.mxu0 0.0
    %684 = vmatpush.xpose.msra.mxu0 0.0
    %685 = vmatpush.xpose.msra.mxu0 0.0
    %686 = vmatpush.xpose.msra.mxu0 0.0
    %687 = vmatpush.xpose.msra.mxu0 0.0
    %688 = vmatpush.xpose.msra.mxu0 0.0
    %689 = vmatpush.xpose.msra.mxu0 0.0
    %690 = vmatpush.xpose.msra.mxu0 0.0
    %691 = vmatpush.xpose.msra.mxu0 0.0
    %v692 = vand.u32 %v108, 4294901760
    %693 = vmatpush.xpose.msra.mxu0 %v692
    %v694 = vand.u32 %v158, 4294901760
    %v695 = vsub.f32 %v158, %v694
    %v696 = vand.u32 %v695, 4294901760
    %697 = vmatmul.f32.gmra.mxu0 %v696
    %v698 = vpop.f32.mrf.mxu0
    %v699 = vadd.f32 %v675, %v698
    %700 = vdwg.mxu0
    %701 = vmatpush.xpose.msra.mxu0 0.0
    %702 = vmatpush.xpose.msra.mxu0 0.0
    %703 = vmatpush.xpose.msra.mxu0 0.0
    %704 = vmatpush.xpose.msra.mxu0 0.0
    %705 = vmatpush.xpose.msra.mxu0 0.0
    %706 = vmatpush.xpose.msra.mxu0 0.0
    %707 = vmatpush.xpose.msra.mxu0 0.0
    %708 = vmatpush.xpose.msra.mxu0 0.0
    %709 = vmatpush.xpose.msra.mxu0 0.0
    %710 = vmatpush.xpose.msra.mxu0 0.0
    %711 = vmatpush.xpose.msra.mxu0 0.0
    %712 = vmatpush.xpose.msra.mxu0 0.0
    %713 = vmatpush.xpose.msra.mxu0 0.0
    %714 = vmatpush.xpose.msra.mxu0 0.0
    %715 = vmatpush.xpose.msra.mxu0 0.0
    %v716 = vand.u32 %v108, 4294901760
    %v717 = vsub.f32 %v108, %v716
    %v718 = vand.u32 %v717, 4294901760
    %719 = vmatpush.xpose.msra.mxu0 %v718
    %v720 = vand.u32 %v158, 4294901760
    %721 = vmatmul.f32.gmra.mxu0 %v720
    %v722 = vpop.f32.mrf.mxu0
    %v723 = vadd.f32 %v699, %v722
    %724 = vdwg.mxu0
    %725 = vmatpush.xpose.msra.mxu0 0.0
    %726 = vmatpush.xpose.msra.mxu0 0.0
    %727 = vmatpush.xpose.msra.mxu0 0.0
    %728 = vmatpush.xpose.msra.mxu0 0.0
    %729 = vmatpush.xpose.msra.mxu0 0.0
    %730 = vmatpush.xpose.msra.mxu0 0.0
    %731 = vmatpush.xpose.msra.mxu0 0.0
    %732 = vmatpush.xpose.msra.mxu0 0.0
    %733 = vmatpush.xpose.msra.mxu0 0.0
    %734 = vmatpush.xpose.msra.mxu0 0.0
    %735 = vmatpush.xpose.msra.mxu0 0.0
    %736 = vmatpush.xpose.msra.mxu0 0.0
    %737 = vmatpush.xpose.msra.mxu0 0.0
    %738 = vmatpush.xpose.msra.mxu0 0.0
    %739 = vmatpush.xpose.msra.mxu0 0.0
    %v740 = vand.u32 %v108, 4294901760
    %741 = vmatpush.xpose.msra.mxu0 %v740
    %v742 = vand.u32 %v158, 4294901760
    %743 = vmatmul.f32.gmra.mxu0 %v742
    %v744 = vpop.f32.mrf.mxu0
    %v745 = vadd.f32 %v723, %v744
    %746 = vdwg.mxu0
    %747 = vst [vmem:[#allocation9] sm:$0x3] 0.0
    %vm748 = vcmask 58368
    %749 = vst.msk [vmem:[#allocation9] sm:$0x3] %vm748, %v745
    %v750 = vlaneseq
    %v751 = vand.u32 %v750, 127
    %v752 = vld [vmem:[#allocation3] sm:$0xff]
    %v753 = vld [vmem:[#allocation3 + $0x8] sm:$0xff]
    %v754 = vld [vmem:[#allocation3 + $0x10] sm:$0xff]
    %v755 = vld [vmem:[#allocation3 + $0x18] sm:$0xff]
    %v756 = vld [vmem:[#allocation3 + $0x20] sm:$0xff]
    %v757 = vld [vmem:[#allocation3 + $0x28] sm:$0xff]
    %v758 = vld [vmem:[#allocation3 + $0x30] sm:$0xff]
    %v759 = vld [vmem:[#allocation3 + $0x38] sm:$0xff]
    %v760 = vld [vmem:[#allocation3 + $0x40] sm:$0xff]
    %v761 = vld [vmem:[#allocation3 + $0x48] sm:$0xff]
    %v762 = vld [vmem:[#allocation3 + $0x50] sm:$0xff]
    %v763 = vld [vmem:[#allocation3 + $0x58] sm:$0xff]
    %v764 = vld [vmem:[#allocation3 + $0x60] sm:$0xff]
    %v765 = vld [vmem:[#allocation3 + $0x68] sm:$0xff]
    %v766 = vld [vmem:[#allocation3 + $0x70] sm:$0xff]
    %v767 = vld [vmem:[#allocation3 + $0x78] sm:$0xff]
    %v768 = vld [vmem:[#allocation3 + $0x80] sm:$0xff]
    %v769 = vld [vmem:[#allocation3 + $0x88] sm:$0xff]
    %v770 = vld [vmem:[#allocation3 + $0x90] sm:$0xff]
    %v771 = vld [vmem:[#allocation3 + $0x98] sm:$0xff]
    %v772 = vld [vmem:[#allocation3 + $0xa0] sm:$0xff]
    %v773 = vld [vmem:[#allocation3 + $0xa8] sm:$0xff]
    %v774 = vld [vmem:[#allocation3 + $0xb0] sm:$0xff]
    %v775 = vld [vmem:[#allocation3 + $0xb8] sm:$0xff]
    %v776 = vld [vmem:[#allocation3 + $0xc0] sm:$0xff]
    %v777 = vld [vmem:[#allocation3 + $0xc8] sm:$0xff]
    %v778 = vld [vmem:[#allocation3 + $0xd0] sm:$0xff]
    %v779 = vld [vmem:[#allocation3 + $0xd8] sm:$0xff]
    %v780 = vld [vmem:[#allocation3 + $0xe0] sm:$0xff]
    %v781 = vld [vmem:[#allocation3 + $0xe8] sm:$0xff]
    %v782 = vsel %vm748, %v745, -inf
    %783 = vmax.xlane.f32.xlu0 %v782
    %v784 = vpop.xlane.xlu0 %783
    %vm785 = vcmp.eq.f32.partialorder %v745, %v784
    %v786 = vsel %vm785, %v751, 8
    %v787 = vsel %vm748, %v786, 2147483647
    %v788 = vand.u32 %v787, 65535
    %v789 = vshra.s32 %v787, 16
    %v790 = vcvt.s32.f32 %v788
    %v791 = vcvt.s32.f32 %v789
    %792 = vmin.xlane.f32.xlu0 %v791
    %v793 = vpop.xlane.xlu0 %792
    %vm794 = vcmp.eq.f32.partialorder %v791, %v793
    %v795 = vsel %vm794, %v790, inf
    %796 = vmin.xlane.f32.xlu0 %v795
    %v797 = vpop.xlane.xlu0 %796
    %v798 = vcvt.f32.s32 %v797
    %v799 = vcvt.f32.s32 %v793
    %v800 = vshll.u32 %v799, 16
    %v801 = vadd.s32 %v800, %v798
    %vm802 = vcmp.eq.s32.totalorder %v751, %v801
    %v803 = vsel %vm802, 1, 0
    %v804 = vcvt.s32.f32 %v803
    %vm805 = vcmp.eq.s32.totalorder %v751, 0
    %v806 = vsel %vm805, %v801, 0
    %v807 = vadd.f32 %v784, 0.0
    %v808 = vsel %vm802, -inf, %v745
    %vm809 = vcmask 64512
    %v811 = vsel %vm809, %v804, 0
    %813 = vmatpush.msra.mxu0 0.0
    %814 = vmatpush.msra.mxu0 0.0
    %815 = vmatpush.msra.mxu0 0.0
    %816 = vmatpush.msra.mxu0 0.0
    %817 = vmatpush.msra.mxu0 0.0
    %818 = vmatpush.msra.mxu0 0.0
    %819 = vmatpush.msra.mxu0 0.0
    %820 = vmatpush.msra.mxu0 0.0
    %821 = vmatpush.msra.mxu0 0.0
    %822 = vmatpush.msra.mxu0 0.0
    %823 = vmatpush.msra.mxu0 0.0
    %824 = vmatpush.msra.mxu0 0.0
    %825 = vmatpush.msra.mxu0 0.0
    %826 = vmatpush.msra.mxu0 0.0
    %827 = vmatpush.msra.mxu0 0.0
    %v828 = vand.u32 %v105, 4294901760
    %829 = vmatpush.msra.mxu0 %v828
    %v830 = vand.u32 %v811, 4294901760
    %v831 = vsub.f32 %v811, %v830
    %v832 = vand.u32 %v831, 4294901760
    %v833 = vsub.f32 %v831, %v832
    %v834 = vand.u32 %v833, 4294901760
    %835 = vmatmul.f32.gmra.mxu0 %v834
    %v836 = vpop.f32.mrf.mxu0
    %v837 = vadd.f32 0.0, %v836
    %838 = vdwg.mxu0
    %839 = vmatpush.msra.mxu0 0.0
    %840 = vmatpush.msra.mxu0 0.0
    %841 = vmatpush.msra.mxu0 0.0
    %842 = vmatpush.msra.mxu0 0.0
    %843 = vmatpush.msra.mxu0 0.0
    %844 = vmatpush.msra.mxu0 0.0
    %845 = vmatpush.msra.mxu0 0.0
    %846 = vmatpush.msra.mxu0 0.0
    %847 = vmatpush.msra.mxu0 0.0
    %848 = vmatpush.msra.mxu0 0.0
    %849 = vmatpush.msra.mxu0 0.0
    %850 = vmatpush.msra.mxu0 0.0
    %851 = vmatpush.msra.mxu0 0.0
    %852 = vmatpush.msra.mxu0 0.0
    %853 = vmatpush.msra.mxu0 0.0
    %v854 = vand.u32 %v105, 4294901760
    %v855 = vsub.f32 %v105, %v854
    %v856 = vand.u32 %v855, 4294901760
    %v857 = vsub.f32 %v855, %v856
    %v858 = vand.u32 %v857, 4294901760
    %859 = vmatpush.msra.mxu0 %v858
    %v860 = vand.u32 %v811, 4294901760
    %861 = vmatmul.f32.gmra.mxu0 %v860
    %v862 = vpop.f32.mrf.mxu0
    %v863 = vadd.f32 %v837, %v862
    %864 = vdwg.mxu0
    %865 = vmatpush.msra.mxu0 0.0
    %866 = vmatpush.msra.mxu0 0.0
    %867 = vmatpush.msra.mxu0 0.0
    %868 = vmatpush.msra.mxu0 0.0
    %869 = vmatpush.msra.mxu0 0.0
    %870 = vmatpush.msra.mxu0 0.0
    %871 = vmatpush.msra.mxu0 0.0
    %872 = vmatpush.msra.mxu0 0.0
    %873 = vmatpush.msra.mxu0 0.0
    %874 = vmatpush.msra.mxu0 0.0
    %875 = vmatpush.msra.mxu0 0.0
    %876 = vmatpush.msra.mxu0 0.0
    %877 = vmatpush.msra.mxu0 0.0
    %878 = vmatpush.msra.mxu0 0.0
    %879 = vmatpush.msra.mxu0 0.0
    %v880 = vand.u32 %v105, 4294901760
    %v881 = vsub.f32 %v105, %v880
    %882 = vmatpush.msra.mxu0 %v881
    %v883 = vand.u32 %v811, 4294901760
    %v884 = vsub.f32 %v811, %v883
    %885 = vmatmul.f32.gmra.mxu0 %v884
    %v886 = vpop.f32.mrf.mxu0
    %v887 = vadd.f32 %v863, %v886
    %888 = vdwg.mxu0
    %889 = vmatpush.msra.mxu0 0.0
    %890 = vmatpush.msra.mxu0 0.0
    %891 = vmatpush.msra.mxu0 0.0
    %892 = vmatpush.msra.mxu0 0.0
    %893 = vmatpush.msra.mxu0 0.0
    %894 = vmatpush.msra.mxu0 0.0
    %895 = vmatpush.msra.mxu0 0.0
    %896 = vmatpush.msra.mxu0 0.0
    %897 = vmatpush.msra.mxu0 0.0
    %898 = vmatpush.msra.mxu0 0.0
    %899 = vmatpush.msra.mxu0 0.0
    %900 = vmatpush.msra.mxu0 0.0
    %901 = vmatpush.msra.mxu0 0.0
    %902 = vmatpush.msra.mxu0 0.0
    %903 = vmatpush.msra.mxu0 0.0
    %v904 = vand.u32 %v105, 4294901760
    %905 = vmatpush.msra.mxu0 %v904
    %v906 = vand.u32 %v811, 4294901760
    %v907 = vsub.f32 %v811, %v906
    %v908 = vand.u32 %v907, 4294901760
    %909 = vmatmul.f32.gmra.mxu0 %v908
    %v910 = vpop.f32.mrf.mxu0
    %v911 = vadd.f32 %v887, %v910
    %912 = vdwg.mxu0
    %913 = vmatpush.msra.mxu0 0.0
    %914 = vmatpush.msra.mxu0 0.0
    %915 = vmatpush.msra.mxu0 0.0
    %916 = vmatpush.msra.mxu0 0.0
    %917 = vmatpush.msra.mxu0 0.0
    %918 = vmatpush.msra.mxu0 0.0
    %919 = vmatpush.msra.mxu0 0.0
    %920 = vmatpush.msra.mxu0 0.0
    %921 = vmatpush.msra.mxu0 0.0
    %922 = vmatpush.msra.mxu0 0.0
    %923 = vmatpush.msra.mxu0 0.0
    %924 = vmatpush.msra.mxu0 0.0
    %925 = vmatpush.msra.mxu0 0.0
    %926 = vmatpush.msra.mxu0 0.0
    %927 = vmatpush.msra.mxu0 0.0
    %v928 = vand.u32 %v105, 4294901760
    %v929 = vsub.f32 %v105, %v928
    %v930 = vand.u32 %v929, 4294901760
    %931 = vmatpush.msra.mxu0 %v930
    %v932 = vand.u32 %v811, 4294901760
    %933 = vmatmul.f32.gmra.mxu0 %v932
    %v934 = vpop.f32.mrf.mxu0
    %v935 = vadd.f32 %v911, %v934
    %936 = vdwg.mxu0
    %937 = vmatpush.msra.mxu0 0.0
    %938 = vmatpush.msra.mxu0 0.0
    %939 = vmatpush.msra.mxu0 0.0
    %940 = vmatpush.msra.mxu0 0.0
    %941 = vmatpush.msra.mxu0 0.0
    %942 = vmatpush.msra.mxu0 0.0
    %943 = vmatpush.msra.mxu0 0.0
    %944 = vmatpush.msra.mxu0 0.0
    %945 = vmatpush.msra.mxu0 0.0
    %946 = vmatpush.msra.mxu0 0.0
    %947 = vmatpush.msra.mxu0 0.0
    %948 = vmatpush.msra.mxu0 0.0
    %949 = vmatpush.msra.mxu0 0.0
    %950 = vmatpush.msra.mxu0 0.0
    %951 = vmatpush.msra.mxu0 0.0
    %v952 = vand.u32 %v105, 4294901760
    %953 = vmatpush.msra.mxu0 %v952
    %v954 = vand.u32 %v811, 4294901760
    %955 = vmatmul.f32.gmra.mxu0 %v954
    %v956 = vpop.f32.mrf.mxu0
    %v957 = vadd.f32 %v935, %v956
    %958 = vdwg.mxu0
    %959 = vmatpush.msra.mxu0 0.0
    %960 = vmatpush.msra.mxu0 0.0
    %961 = vmatpush.msra.mxu0 0.0
    %962 = vmatpush.msra.mxu0 0.0
    %963 = vmatpush.msra.mxu0 0.0
    %964 = vmatpush.msra.mxu0 0.0
    %965 = vmatpush.msra.mxu0 0.0
    %966 = vmatpush.msra.mxu0 0.0
    %967 = vmatpush.msra.mxu0 0.0
    %968 = vmatpush.msra.mxu0 0.0
    %969 = vmatpush.msra.mxu0 0.0
    %970 = vmatpush.msra.mxu0 0.0
    %971 = vmatpush.msra.mxu0 0.0
    %972 = vmatpush.msra.mxu0 0.0
    %973 = vmatpush.msra.mxu0 0.0
    %v974 = vand.u32 %v106, 4294901760
    %975 = vmatpush.msra.mxu0 %v974
    %v976 = vand.u32 %v811, 4294901760
    %v977 = vsub.f32 %v811, %v976
    %v978 = vand.u32 %v977, 4294901760
    %v979 = vsub.f32 %v977, %v978
    %v980 = vand.u32 %v979, 4294901760
    %981 = vmatmul.f32.gmra.mxu0 %v980
    %v982 = vpop.f32.mrf.mxu0
    %v983 = vadd.f32 0.0, %v982
    %984 = vdwg.mxu0
    %985 = vmatpush.msra.mxu0 0.0
    %986 = vmatpush.msra.mxu0 0.0
    %987 = vmatpush.msra.mxu0 0.0
    %988 = vmatpush.msra.mxu0 0.0
    %989 = vmatpush.msra.mxu0 0.0
    %990 = vmatpush.msra.mxu0 0.0
    %991 = vmatpush.msra.mxu0 0.0
    %992 = vmatpush.msra.mxu0 0.0
    %993 = vmatpush.msra.mxu0 0.0
    %994 = vmatpush.msra.mxu0 0.0
    %995 = vmatpush.msra.mxu0 0.0
    %996 = vmatpush.msra.mxu0 0.0
    %997 = vmatpush.msra.mxu0 0.0
    %998 = vmatpush.msra.mxu0 0.0
    %999 = vmatpush.msra.mxu0 0.0
    %v1000 = vand.u32 %v106, 4294901760
    %v1001 = vsub.f32 %v106, %v1000
    %v1002 = vand.u32 %v1001, 4294901760
    %v1003 = vsub.f32 %v1001, %v1002
    %v1004 = vand.u32 %v1003, 4294901760
    %1005 = vmatpush.msra.mxu0 %v1004
    %v1006 = vand.u32 %v811, 4294901760
    %1007 = vmatmul.f32.gmra.mxu0 %v1006
    %v1008 = vpop.f32.mrf.mxu0
    %v1009 = vadd.f32 %v983, %v1008
    %1010 = vdwg.mxu0
    %1011 = vmatpush.msra.mxu0 0.0
    %1012 = vmatpush.msra.mxu0 0.0
    %1013 = vmatpush.msra.mxu0 0.0
    %1014 = vmatpush.msra.mxu0 0.0
    %1015 = vmatpush.msra.mxu0 0.0
    %1016 = vmatpush.msra.mxu0 0.0
    %1017 = vmatpush.msra.mxu0 0.0
    %1018 = vmatpush.msra.mxu0 0.0
    %1019 = vmatpush.msra.mxu0 0.0
    %1020 = vmatpush.msra.mxu0 0.0
    %1021 = vmatpush.msra.mxu0 0.0
    %1022 = vmatpush.msra.mxu0 0.0
    %1023 = vmatpush.msra.mxu0 0.0
    %1024 = vmatpush.msra.mxu0 0.0
    %1025 = vmatpush.msra.mxu0 0.0
    %v1026 = vand.u32 %v106, 4294901760
    %v1027 = vsub.f32 %v106, %v1026
    %1028 = vmatpush.msra.mxu0 %v1027
    %v1029 = vand.u32 %v811, 4294901760
    %v1030 = vsub.f32 %v811, %v1029
    %1031 = vmatmul.f32.gmra.mxu0 %v1030
    %v1032 = vpop.f32.mrf.mxu0
    %v1033 = vadd.f32 %v1009, %v1032
    %1034 = vdwg.mxu0
    %1035 = vmatpush.msra.mxu0 0.0
    %1036 = vmatpush.msra.mxu0 0.0
    %1037 = vmatpush.msra.mxu0 0.0
    %1038 = vmatpush.msra.mxu0 0.0
    %1039 = vmatpush.msra.mxu0 0.0
    %1040 = vmatpush.msra.mxu0 0.0
    %1041 = vmatpush.msra.mxu0 0.0
    %1042 = vmatpush.msra.mxu0 0.0
    %1043 = vmatpush.msra.mxu0 0.0
    %1044 = vmatpush.msra.mxu0 0.0
    %1045 = vmatpush.msra.mxu0 0.0
    %1046 = vmatpush.msra.mxu0 0.0
    %1047 = vmatpush.msra.mxu0 0.0
    %1048 = vmatpush.msra.mxu0 0.0
    %1049 = vmatpush.msra.mxu0 0.0
    %v1050 = vand.u32 %v106, 4294901760
    %1051 = vmatpush.msra.mxu0 %v1050
    %v1052 = vand.u32 %v811, 4294901760
    %v1053 = vsub.f32 %v811, %v1052
    %v1054 = vand.u32 %v1053, 4294901760
    %1055 = vmatmul.f32.gmra.mxu0 %v1054
    %v1056 = vpop.f32.mrf.mxu0
    %v1057 = vadd.f32 %v1033, %v1056
    %1058 = vdwg.mxu0
    %1059 = vmatpush.msra.mxu0 0.0
    %1060 = vmatpush.msra.mxu0 0.0
    %1061 = vmatpush.msra.mxu0 0.0
    %1062 = vmatpush.msra.mxu0 0.0
    %1063 = vmatpush.msra.mxu0 0.0
    %1064 = vmatpush.msra.mxu0 0.0
    %1065 = vmatpush.msra.mxu0 0.0
    %1066 = vmatpush.msra.mxu0 0.0
    %1067 = vmatpush.msra.mxu0 0.0
    %1068 = vmatpush.msra.mxu0 0.0
    %1069 = vmatpush.msra.mxu0 0.0
    %1070 = vmatpush.msra.mxu0 0.0
    %1071 = vmatpush.msra.mxu0 0.0
    %1072 = vmatpush.msra.mxu0 0.0
    %1073 = vmatpush.msra.mxu0 0.0
    %v1074 = vand.u32 %v106, 4294901760
    %v1075 = vsub.f32 %v106, %v1074
    %v1076 = vand.u32 %v1075, 4294901760
    %1077 = vmatpush.msra.mxu0 %v1076
    %v1078 = vand.u32 %v811, 4294901760
    %1079 = vmatmul.f32.gmra.mxu0 %v1078
    %v1080 = vpop.f32.mrf.mxu0
    %v1081 = vadd.f32 %v1057, %v1080
    %1082 = vdwg.mxu0
    %1083 = vmatpush.msra.mxu0 0.0
    %1084 = vmatpush.msra.mxu0 0.0
    %1085 = vmatpush.msra.mxu0 0.0
    %1086 = vmatpush.msra.mxu0 0.0
    %1087 = vmatpush.msra.mxu0 0.0
    %1088 = vmatpush.msra.mxu0 0.0
    %1089 = vmatpush.msra.mxu0 0.0
    %1090 = vmatpush.msra.mxu0 0.0
    %1091 = vmatpush.msra.mxu0 0.0
    %1092 = vmatpush.msra.mxu0 0.0
    %1093 = vmatpush.msra.mxu0 0.0
    %1094 = vmatpush.msra.mxu0 0.0
    %1095 = vmatpush.msra.mxu0 0.0
    %1096 = vmatpush.msra.mxu0 0.0
    %1097 = vmatpush.msra.mxu0 0.0
    %v1098 = vand.u32 %v106, 4294901760
    %1099 = vmatpush.msra.mxu0 %v1098
    %v1100 = vand.u32 %v811, 4294901760
    %1101 = vmatmul.f32.gmra.mxu0 %v1100
    %v1102 = vpop.f32.mrf.mxu0
    %v1103 = vadd.f32 %v1081, %v1102
    %1104 = vdwg.mxu0
    %1105 = vmatpush.msra.mxu0 0.0
    %1106 = vmatpush.msra.mxu0 0.0
    %1107 = vmatpush.msra.mxu0 0.0
    %1108 = vmatpush.msra.mxu0 0.0
    %1109 = vmatpush.msra.mxu0 0.0
    %1110 = vmatpush.msra.mxu0 0.0
    %1111 = vmatpush.msra.mxu0 0.0
    %1112 = vmatpush.msra.mxu0 0.0
    %1113 = vmatpush.msra.mxu0 0.0
    %1114 = vmatpush.msra.mxu0 0.0
    %1115 = vmatpush.msra.mxu0 0.0
    %1116 = vmatpush.msra.mxu0 0.0
    %1117 = vmatpush.msra.mxu0 0.0
    %1118 = vmatpush.msra.mxu0 0.0
    %1119 = vmatpush.msra.mxu0 0.0
    %v1120 = vand.u32 %v107, 4294901760
    %1121 = vmatpush.msra.mxu0 %v1120
    %v1122 = vand.u32 %v811, 4294901760
    %v1123 = vsub.f32 %v811, %v1122
    %v1124 = vand.u32 %v1123, 4294901760
    %v1125 = vsub.f32 %v1123, %v1124
    %v1126 = vand.u32 %v1125, 4294901760
    %1127 = vmatmul.f32.gmra.mxu0 %v1126
    %v1128 = vpop.f32.mrf.mxu0
    %v1129 = vadd.f32 0.0, %v1128
    %1130 = vdwg.mxu0
    %1131 = vmatpush.msra.mxu0 0.0
    %1132 = vmatpush.msra.mxu0 0.0
    %1133 = vmatpush.msra.mxu0 0.0
    %1134 = vmatpush.msra.mxu0 0.0
    %1135 = vmatpush.msra.mxu0 0.0
    %1136 = vmatpush.msra.mxu0 0.0
    %1137 = vmatpush.msra.mxu0 0.0
    %1138 = vmatpush.msra.mxu0 0.0
    %1139 = vmatpush.msra.mxu0 0.0
    %1140 = vmatpush.msra.mxu0 0.0
    %1141 = vmatpush.msra.mxu0 0.0
    %1142 = vmatpush.msra.mxu0 0.0
    %1143 = vmatpush.msra.mxu0 0.0
    %1144 = vmatpush.msra.mxu0 0.0
    %1145 = vmatpush.msra.mxu0 0.0
    %v1146 = vand.u32 %v107, 4294901760
    %v1147 = vsub.f32 %v107, %v1146
    %v1148 = vand.u32 %v1147, 4294901760
    %v1149 = vsub.f32 %v1147, %v1148
    %v1150 = vand.u32 %v1149, 4294901760
    %1151 = vmatpush.msra.mxu0 %v1150
    %v1152 = vand.u32 %v811, 4294901760
    %1153 = vmatmul.f32.gmra.mxu0 %v1152
    %v1154 = vpop.f32.mrf.mxu0
    %v1155 = vadd.f32 %v1129, %v1154
    %1156 = vdwg.mxu0
    %1157 = vmatpush.msra.mxu0 0.0
    %1158 = vmatpush.msra.mxu0 0.0
    %1159 = vmatpush.msra.mxu0 0.0
    %1160 = vmatpush.msra.mxu0 0.0
    %1161 = vmatpush.msra.mxu0 0.0
    %1162 = vmatpush.msra.mxu0 0.0
    %1163 = vmatpush.msra.mxu0 0.0
    %1164 = vmatpush.msra.mxu0 0.0
    %1165 = vmatpush.msra.mxu0 0.0
    %1166 = vmatpush.msra.mxu0 0.0
    %1167 = vmatpush.msra.mxu0 0.0
    %1168 = vmatpush.msra.mxu0 0.0
    %1169 = vmatpush.msra.mxu0 0.0
    %1170 = vmatpush.msra.mxu0 0.0
    %1171 = vmatpush.msra.mxu0 0.0
    %v1172 = vand.u32 %v107, 4294901760
    %v1173 = vsub.f32 %v107, %v1172
    %1174 = vmatpush.msra.mxu0 %v1173
    %v1175 = vand.u32 %v811, 4294901760
    %v1176 = vsub.f32 %v811, %v1175
    %1177 = vmatmul.f32.gmra.mxu0 %v1176
    %v1178 = vpop.f32.mrf.mxu0
    %v1179 = vadd.f32 %v1155, %v1178
    %1180 = vdwg.mxu0
    %1181 = vmatpush.msra.mxu0 0.0
    %1182 = vmatpush.msra.mxu0 0.0
    %1183 = vmatpush.msra.mxu0 0.0
    %1184 = vmatpush.msra.mxu0 0.0
    %1185 = vmatpush.msra.mxu0 0.0
    %1186 = vmatpush.msra.mxu0 0.0
    %1187 = vmatpush.msra.mxu0 0.0
    %1188 = vmatpush.msra.mxu0 0.0
    %1189 = vmatpush.msra.mxu0 0.0
    %1190 = vmatpush.msra.mxu0 0.0
    %1191 = vmatpush.msra.mxu0 0.0
    %1192 = vmatpush.msra.mxu0 0.0
    %1193 = vmatpush.msra.mxu0 0.0
    %1194 = vmatpush.msra.mxu0 0.0
    %1195 = vmatpush.msra.mxu0 0.0
    %v1196 = vand.u32 %v107, 4294901760
    %1197 = vmatpush.msra.mxu0 %v1196
    %v1198 = vand.u32 %v811, 4294901760
    %v1199 = vsub.f32 %v811, %v1198
    %v1200 = vand.u32 %v1199, 4294901760
    %1201 = vmatmul.f32.gmra.mxu0 %v1200
    %v1202 = vpop.f32.mrf.mxu0
    %v1203 = vadd.f32 %v1179, %v1202
    %1204 = vdwg.mxu0
    %1205 = vmatpush.msra.mxu0 0.0
    %1206 = vmatpush.msra.mxu0 0.0
    %1207 = vmatpush.msra.mxu0 0.0
    %1208 = vmatpush.msra.mxu0 0.0
    %1209 = vmatpush.msra.mxu0 0.0
    %1210 = vmatpush.msra.mxu0 0.0
    %1211 = vmatpush.msra.mxu0 0.0
    %1212 = vmatpush.msra.mxu0 0.0
    %1213 = vmatpush.msra.mxu0 0.0
    %1214 = vmatpush.msra.mxu0 0.0
    %1215 = vmatpush.msra.mxu0 0.0
    %1216 = vmatpush.msra.mxu0 0.0
    %1217 = vmatpush.msra.mxu0 0.0
    %1218 = vmatpush.msra.mxu0 0.0
    %1219 = vmatpush.msra.mxu0 0.0
    %v1220 = vand.u32 %v107, 4294901760
    %v1221 = vsub.f32 %v107, %v1220
    %v1222 = vand.u32 %v1221, 4294901760
    %1223 = vmatpush.msra.mxu0 %v1222
    %v1224 = vand.u32 %v811, 4294901760
    %1225 = vmatmul.f32.gmra.mxu0 %v1224
    %v1226 = vpop.f32.mrf.mxu0
    %v1227 = vadd.f32 %v1203, %v1226
    %1228 = vdwg.mxu0
    %1229 = vmatpush.msra.mxu0 0.0
    %1230 = vmatpush.msra.mxu0 0.0
    %1231 = vmatpush.msra.mxu0 0.0
    %1232 = vmatpush.msra.mxu0 0.0
    %1233 = vmatpush.msra.mxu0 0.0
    %1234 = vmatpush.msra.mxu0 0.0
    %1235 = vmatpush.msra.mxu0 0.0
    %1236 = vmatpush.msra.mxu0 0.0
    %1237 = vmatpush.msra.mxu0 0.0
    %1238 = vmatpush.msra.mxu0 0.0
    %1239 = vmatpush.msra.mxu0 0.0
    %1240 = vmatpush.msra.mxu0 0.0
    %1241 = vmatpush.msra.mxu0 0.0
    %1242 = vmatpush.msra.mxu0 0.0
    %1243 = vmatpush.msra.mxu0 0.0
    %v1244 = vand.u32 %v107, 4294901760
    %1245 = vmatpush.msra.mxu0 %v1244
    %v1246 = vand.u32 %v811, 4294901760
    %1247 = vmatmul.f32.gmra.mxu0 %v1246
    %v1248 = vpop.f32.mrf.mxu0
    %v1249 = vadd.f32 %v1227, %v1248
    %1250 = vdwg.mxu0
    %1251 = vmatpush.msra.mxu0 0.0
    %1252 = vmatpush.msra.mxu0 0.0
    %1253 = vmatpush.msra.mxu0 0.0
    %1254 = vmatpush.msra.mxu0 0.0
    %1255 = vmatpush.msra.mxu0 0.0
    %1256 = vmatpush.msra.mxu0 0.0
    %1257 = vmatpush.msra.mxu0 0.0
    %1258 = vmatpush.msra.mxu0 0.0
    %1259 = vmatpush.msra.mxu0 0.0
    %1260 = vmatpush.msra.mxu0 0.0
    %1261 = vmatpush.msra.mxu0 0.0
    %1262 = vmatpush.msra.mxu0 0.0
    %1263 = vmatpush.msra.mxu0 0.0
    %1264 = vmatpush.msra.mxu0 0.0
    %1265 = vmatpush.msra.mxu0 0.0
    %v1266 = vand.u32 %v108, 4294901760
    %1267 = vmatpush.msra.mxu0 %v1266
    %v1268 = vand.u32 %v811, 4294901760
    %v1269 = vsub.f32 %v811, %v1268
    %v1270 = vand.u32 %v1269, 4294901760
    %v1271 = vsub.f32 %v1269, %v1270
    %v1272 = vand.u32 %v1271, 4294901760
    %1273 = vmatmul.f32.gmra.mxu0 %v1272
    %v1274 = vpop.f32.mrf.mxu0
    %v1275 = vadd.f32 0.0, %v1274
    %1276 = vdwg.mxu0
    %1277 = vmatpush.msra.mxu0 0.0
    %1278 = vmatpush.msra.mxu0 0.0
    %1279 = vmatpush.msra.mxu0 0.0
    %1280 = vmatpush.msra.mxu0 0.0
    %1281 = vmatpush.msra.mxu0 0.0
    %1282 = vmatpush.msra.mxu0 0.0
    %1283 = vmatpush.msra.mxu0 0.0
    %1284 = vmatpush.msra.mxu0 0.0
    %1285 = vmatpush.msra.mxu0 0.0
    %1286 = vmatpush.msra.mxu0 0.0
    %1287 = vmatpush.msra.mxu0 0.0
    %1288 = vmatpush.msra.mxu0 0.0
    %1289 = vmatpush.msra.mxu0 0.0
    %1290 = vmatpush.msra.mxu0 0.0
    %1291 = vmatpush.msra.mxu0 0.0
    %v1292 = vand.u32 %v108, 4294901760
    %v1293 = vsub.f32 %v108, %v1292
    %v1294 = vand.u32 %v1293, 4294901760
    %v1295 = vsub.f32 %v1293, %v1294
    %v1296 = vand.u32 %v1295, 4294901760
    %1297 = vmatpush.msra.mxu0 %v1296
    %v1298 = vand.u32 %v811, 4294901760
    %1299 = vmatmul.f32.gmra.mxu0 %v1298
    %v1300 = vpop.f32.mrf.mxu0
    %v1301 = vadd.f32 %v1275, %v1300
    %1302 = vdwg.mxu0
    %1303 = vmatpush.msra.mxu0 0.0
    %1304 = vmatpush.msra.mxu0 0.0
    %1305 = vmatpush.msra.mxu0 0.0
    %1306 = vmatpush.msra.mxu0 0.0
    %1307 = vmatpush.msra.mxu0 0.0
    %1308 = vmatpush.msra.mxu0 0.0
    %1309 = vmatpush.msra.mxu0 0.0
    %1310 = vmatpush.msra.mxu0 0.0
    %1311 = vmatpush.msra.mxu0 0.0
    %1312 = vmatpush.msra.mxu0 0.0
    %1313 = vmatpush.msra.mxu0 0.0
    %1314 = vmatpush.msra.mxu0 0.0
    %1315 = vmatpush.msra.mxu0 0.0
    %1316 = vmatpush.msra.mxu0 0.0
    %1317 = vmatpush.msra.mxu0 0.0
    %v1318 = vand.u32 %v108, 4294901760
    %v1319 = vsub.f32 %v108, %v1318
    %1320 = vmatpush.msra.mxu0 %v1319
    %v1321 = vand.u32 %v811, 4294901760
    %v1322 = vsub.f32 %v811, %v1321
    %1323 = vmatmul.f32.gmra.mxu0 %v1322
    %v1324 = vpop.f32.mrf.mxu0
    %v1325 = vadd.f32 %v1301, %v1324
    %1326 = vdwg.mxu0
    %1327 = vmatpush.msra.mxu0 0.0
    %1328 = vmatpush.msra.mxu0 0.0
    %1329 = vmatpush.msra.mxu0 0.0
    %1330 = vmatpush.msra.mxu0 0.0
    %1331 = vmatpush.msra.mxu0 0.0
    %1332 = vmatpush.msra.mxu0 0.0
    %1333 = vmatpush.msra.mxu0 0.0
    %1334 = vmatpush.msra.mxu0 0.0
    %1335 = vmatpush.msra.mxu0 0.0
    %1336 = vmatpush.msra.mxu0 0.0
    %1337 = vmatpush.msra.mxu0 0.0
    %1338 = vmatpush.msra.mxu0 0.0
    %1339 = vmatpush.msra.mxu0 0.0
    %1340 = vmatpush.msra.mxu0 0.0
    %1341 = vmatpush.msra.mxu0 0.0
    %v1342 = vand.u32 %v108, 4294901760
    %1343 = vmatpush.msra.mxu0 %v1342
    %v1344 = vand.u32 %v811, 4294901760
    %v1345 = vsub.f32 %v811, %v1344
    %v1346 = vand.u32 %v1345, 4294901760
    %1347 = vmatmul.f32.gmra.mxu0 %v1346
    %v1348 = vpop.f32.mrf.mxu0
    %v1349 = vadd.f32 %v1325, %v1348
    %1350 = vdwg.mxu0
    %1351 = vmatpush.msra.mxu0 0.0
    %1352 = vmatpush.msra.mxu0 0.0
    %1353 = vmatpush.msra.mxu0 0.0
    %1354 = vmatpush.msra.mxu0 0.0
    %1355 = vmatpush.msra.mxu0 0.0
    %1356 = vmatpush.msra.mxu0 0.0
    %1357 = vmatpush.msra.mxu0 0.0
    %1358 = vmatpush.msra.mxu0 0.0
    %1359 = vmatpush.msra.mxu0 0.0
    %1360 = vmatpush.msra.mxu0 0.0
    %1361 = vmatpush.msra.mxu0 0.0
    %1362 = vmatpush.msra.mxu0 0.0
    %1363 = vmatpush.msra.mxu0 0.0
    %1364 = vmatpush.msra.mxu0 0.0
    %1365 = vmatpush.msra.mxu0 0.0
    %v1366 = vand.u32 %v108, 4294901760
    %v1367 = vsub.f32 %v108, %v1366
    %v1368 = vand.u32 %v1367, 4294901760
    %1369 = vmatpush.msra.mxu0 %v1368
    %v1370 = vand.u32 %v811, 4294901760
    %1371 = vmatmul.f32.gmra.mxu0 %v1370
    %v1372 = vpop.f32.mrf.mxu0
    %v1373 = vadd.f32 %v1349, %v1372
    %1374 = vdwg.mxu0
    %1375 = vmatpush.msra.mxu0 0.0
    %1376 = vmatpush.msra.mxu0 0.0
    %1377 = vmatpush.msra.mxu0 0.0
    %1378 = vmatpush.msra.mxu0 0.0
    %1379 = vmatpush.msra.mxu0 0.0
    %1380 = vmatpush.msra.mxu0 0.0
    %1381 = vmatpush.msra.mxu0 0.0
    %1382 = vmatpush.msra.mxu0 0.0
    %1383 = vmatpush.msra.mxu0 0.0
    %1384 = vmatpush.msra.mxu0 0.0
    %1385 = vmatpush.msra.mxu0 0.0
    %1386 = vmatpush.msra.mxu0 0.0
    %1387 = vmatpush.msra.mxu0 0.0
    %1388 = vmatpush.msra.mxu0 0.0
    %1389 = vmatpush.msra.mxu0 0.0
    %v1390 = vand.u32 %v108, 4294901760
    %1391 = vmatpush.msra.mxu0 %v1390
    %v1392 = vand.u32 %v811, 4294901760
    %1393 = vmatmul.f32.gmra.mxu0 %v1392
    %v1394 = vpop.f32.mrf.mxu0
    %v1395 = vadd.f32 %v1373, %v1394
    %1396 = vdwg.mxu0
    %1397 = vmatpush.msra.mxu0 0.0
    %1398 = vmatpush.msra.mxu0 0.0
    %1399 = vmatpush.msra.mxu0 0.0
    %1400 = vmatpush.msra.mxu0 0.0
    %1401 = vmatpush.msra.mxu0 0.0
    %1402 = vmatpush.msra.mxu0 0.0
    %1403 = vmatpush.msra.mxu0 0.0
    %1404 = vmatpush.msra.mxu0 0.0
    %1405 = vmatpush.msra.mxu0 0.0
    %1406 = vmatpush.msra.mxu0 0.0
    %1407 = vmatpush.msra.mxu0 0.0
    %1408 = vmatpush.msra.mxu0 0.0
    %1409 = vmatpush.msra.mxu0 0.0
    %1410 = vmatpush.msra.mxu0 0.0
    %1411 = vmatpush.msra.mxu0 0.0
    %v1412 = vand.u32 %v752, 4294901760
    %1413 = vmatpush.msra.mxu0 %v1412
    %v1414 = vand.u32 %v811, 4294901760
    %v1415 = vsub.f32 %v811, %v1414
    %v1416 = vand.u32 %v1415, 4294901760
    %v1417 = vsub.f32 %v1415, %v1416
    %v1418 = vand.u32 %v1417, 4294901760
    %1419 = vmatmul.f32.gmra.mxu0 %v1418
    %v1420 = vpop.f32.mrf.mxu0
    %v1421 = vadd.f32 0.0, %v1420
    %1422 = vdwg.mxu0
    %1423 = vmatpush.msra.mxu0 0.0
    %1424 = vmatpush.msra.mxu0 0.0
    %1425 = vmatpush.msra.mxu0 0.0
    %1426 = vmatpush.msra.mxu0 0.0
    %1427 = vmatpush.msra.mxu0 0.0
    %1428 = vmatpush.msra.mxu0 0.0
    %1429 = vmatpush.msra.mxu0 0.0
    %1430 = vmatpush.msra.mxu0 0.0
    %1431 = vmatpush.msra.mxu0 0.0
    %1432 = vmatpush.msra.mxu0 0.0
    %1433 = vmatpush.msra.mxu0 0.0
    %1434 = vmatpush.msra.mxu0 0.0
    %1435 = vmatpush.msra.mxu0 0.0
    %1436 = vmatpush.msra.mxu0 0.0
    %1437 = vmatpush.msra.mxu0 0.0
    %v1438 = vand.u32 %v752, 4294901760
    %v1439 = vsub.f32 %v752, %v1438
    %v1440 = vand.u32 %v1439, 4294901760
    %v1441 = vsub.f32 %v1439, %v1440
    %v1442 = vand.u32 %v1441, 4294901760
    %1443 = vmatpush.msra.mxu0 %v1442
    %v1444 = vand.u32 %v811, 4294901760
    %1445 = vmatmul.f32.gmra.mxu0 %v1444
    %v1446 = vpop.f32.mrf.mxu0
    %v1447 = vadd.f32 %v1421, %v1446
    %1448 = vdwg.mxu0
    %1449 = vmatpush.msra.mxu0 0.0
    %1450 = vmatpush.msra.mxu0 0.0
    %1451 = vmatpush.msra.mxu0 0.0
    %1452 = vmatpush.msra.mxu0 0.0
    %1453 = vmatpush.msra.mxu0 0.0
    %1454 = vmatpush.msra.mxu0 0.0
    %1455 = vmatpush.msra.mxu0 0.0
    %1456 = vmatpush.msra.mxu0 0.0
    %1457 = vmatpush.msra.mxu0 0.0
    %1458 = vmatpush.msra.mxu0 0.0
    %1459 = vmatpush.msra.mxu0 0.0
    %1460 = vmatpush.msra.mxu0 0.0
    %1461 = vmatpush.msra.mxu0 0.0
    %1462 = vmatpush.msra.mxu0 0.0
    %1463 = vmatpush.msra.mxu0 0.0
    %v1464 = vand.u32 %v752, 4294901760
    %v1465 = vsub.f32 %v752, %v1464
    %1466 = vmatpush.msra.mxu0 %v1465
    %v1467 = vand.u32 %v811, 4294901760
    %v1468 = vsub.f32 %v811, %v1467
    %1469 = vmatmul.f32.gmra.mxu0 %v1468
    %v1470 = vpop.f32.mrf.mxu0
    %v1471 = vadd.f32 %v1447, %v1470
    %1472 = vdwg.mxu0
    %1473 = vmatpush.msra.mxu0 0.0
    %1474 = vmatpush.msra.mxu0 0.0
    %1475 = vmatpush.msra.mxu0 0.0
    %1476 = vmatpush.msra.mxu0 0.0
    %1477 = vmatpush.msra.mxu0 0.0
    %1478 = vmatpush.msra.mxu0 0.0
    %1479 = vmatpush.msra.mxu0 0.0
    %1480 = vmatpush.msra.mxu0 0.0
    %1481 = vmatpush.msra.mxu0 0.0
    %1482 = vmatpush.msra.mxu0 0.0
    %1483 = vmatpush.msra.mxu0 0.0
    %1484 = vmatpush.msra.mxu0 0.0
    %1485 = vmatpush.msra.mxu0 0.0
    %1486 = vmatpush.msra.mxu0 0.0
    %1487 = vmatpush.msra.mxu0 0.0
    %v1488 = vand.u32 %v752, 4294901760
    %1489 = vmatpush.msra.mxu0 %v1488
    %v1490 = vand.u32 %v811, 4294901760
    %v1491 = vsub.f32 %v811, %v1490
    %v1492 = vand.u32 %v1491, 4294901760
    %1493 = vmatmul.f32.gmra.mxu0 %v1492
    %v1494 = vpop.f32.mrf.mxu0
    %v1495 = vadd.f32 %v1471, %v1494
    %1496 = vdwg.mxu0
    %1497 = vmatpush.msra.mxu0 0.0
    %1498 = vmatpush.msra.mxu0 0.0
    %1499 = vmatpush.msra.mxu0 0.0
    %1500 = vmatpush.msra.mxu0 0.0
    %1501 = vmatpush.msra.mxu0 0.0
    %1502 = vmatpush.msra.mxu0 0.0
    %1503 = vmatpush.msra.mxu0 0.0
    %1504 = vmatpush.msra.mxu0 0.0
    %1505 = vmatpush.msra.mxu0 0.0
    %1506 = vmatpush.msra.mxu0 0.0
    %1507 = vmatpush.msra.mxu0 0.0
    %1508 = vmatpush.msra.mxu0 0.0
    %1509 = vmatpush.msra.mxu0 0.0
    %1510 = vmatpush.msra.mxu0 0.0
    %1511 = vmatpush.msra.mxu0 0.0
    %v1512 = vand.u32 %v752, 4294901760
    %v1513 = vsub.f32 %v752, %v1512
    %v1514 = vand.u32 %v1513, 4294901760
    %1515 = vmatpush.msra.mxu0 %v1514
    %v1516 = vand.u32 %v811, 4294901760
    %1517 = vmatmul.f32.gmra.mxu0 %v1516
    %v1518 = vpop.f32.mrf.mxu0
    %v1519 = vadd.f32 %v1495, %v1518
    %1520 = vdwg.mxu0
    %1521 = vmatpush.msra.mxu0 0.0
    %1522 = vmatpush.msra.mxu0 0.0
    %1523 = vmatpush.msra.mxu0 0.0
    %1524 = vmatpush.msra.mxu0 0.0
    %1525 = vmatpush.msra.mxu0 0.0
    %1526 = vmatpush.msra.mxu0 0.0
    %1527 = vmatpush.msra.mxu0 0.0
    %1528 = vmatpush.msra.mxu0 0.0
    %1529 = vmatpush.msra.mxu0 0.0
    %1530 = vmatpush.msra.mxu0 0.0
    %1531 = vmatpush.msra.mxu0 0.0
    %1532 = vmatpush.msra.mxu0 0.0
    %1533 = vmatpush.msra.mxu0 0.0
    %1534 = vmatpush.msra.mxu0 0.0
    %1535 = vmatpush.msra.mxu0 0.0
    %v1536 = vand.u32 %v752, 4294901760
    %1537 = vmatpush.msra.mxu0 %v1536
    %v1538 = vand.u32 %v811, 4294901760
    %1539 = vmatmul.f32.gmra.mxu0 %v1538
    %v1540 = vpop.f32.mrf.mxu0
    %v1541 = vadd.f32 %v1519, %v1540
    %1542 = vdwg.mxu0
    %1543 = vmatpush.msra.mxu0 0.0
    %1544 = vmatpush.msra.mxu0 0.0
    %1545 = vmatpush.msra.mxu0 0.0
    %1546 = vmatpush.msra.mxu0 0.0
    %1547 = vmatpush.msra.mxu0 0.0
    %1548 = vmatpush.msra.mxu0 0.0
    %1549 = vmatpush.msra.mxu0 0.0
    %1550 = vmatpush.msra.mxu0 0.0
    %1551 = vmatpush.msra.mxu0 0.0
    %1552 = vmatpush.msra.mxu0 0.0
    %1553 = vmatpush.msra.mxu0 0.0
    %1554 = vmatpush.msra.mxu0 0.0
    %1555 = vmatpush.msra.mxu0 0.0
    %1556 = vmatpush.msra.mxu0 0.0
    %1557 = vmatpush.msra.mxu0 0.0
    %v1558 = vand.u32 %v753, 4294901760
    %1559 = vmatpush.msra.mxu0 %v1558
    %v1560 = vand.u32 %v811, 4294901760
    %v1561 = vsub.f32 %v811, %v1560
    %v1562 = vand.u32 %v1561, 4294901760
    %v1563 = vsub.f32 %v1561, %v1562
    %v1564 = vand.u32 %v1563, 4294901760
    %1565 = vmatmul.f32.gmra.mxu0 %v1564
    %v1566 = vpop.f32.mrf.mxu0
    %v1567 = vadd.f32 0.0, %v1566
    %1568 = vdwg.mxu0
    %1569 = vmatpush.msra.mxu0 0.0
    %1570 = vmatpush.msra.mxu0 0.0
    %1571 = vmatpush.msra.mxu0 0.0
    %1572 = vmatpush.msra.mxu0 0.0
    %1573 = vmatpush.msra.mxu0 0.0
    %1574 = vmatpush.msra.mxu0 0.0
    %1575 = vmatpush.msra.mxu0 0.0
    %1576 = vmatpush.msra.mxu0 0.0
    %1577 = vmatpush.msra.mxu0 0.0
    %1578 = vmatpush.msra.mxu0 0.0
    %1579 = vmatpush.msra.mxu0 0.0
    %1580 = vmatpush.msra.mxu0 0.0
    %1581 = vmatpush.msra.mxu0 0.0
    %1582 = vmatpush.msra.mxu0 0.0
    %1583 = vmatpush.msra.mxu0 0.0
    %v1584 = vand.u32 %v753, 4294901760
    %v1585 = vsub.f32 %v753, %v1584
    %v1586 = vand.u32 %v1585, 4294901760
    %v1587 = vsub.f32 %v1585, %v1586
    %v1588 = vand.u32 %v1587, 4294901760
    %1589 = vmatpush.msra.mxu0 %v1588
    %v1590 = vand.u32 %v811, 4294901760
    %1591 = vmatmul.f32.gmra.mxu0 %v1590
    %v1592 = vpop.f32.mrf.mxu0
    %v1593 = vadd.f32 %v1567, %v1592
    %1594 = vdwg.mxu0
    %1595 = vmatpush.msra.mxu0 0.0
    %1596 = vmatpush.msra.mxu0 0.0
    %1597 = vmatpush.msra.mxu0 0.0
    %1598 = vmatpush.msra.mxu0 0.0
    %1599 = vmatpush.msra.mxu0 0.0
    %1600 = vmatpush.msra.mxu0 0.0
    %1601 = vmatpush.msra.mxu0 0.0
    %1602 = vmatpush.msra.mxu0 0.0
    %1603 = vmatpush.msra.mxu0 0.0
    %1604 = vmatpush.msra.mxu0 0.0
    %1605 = vmatpush.msra.mxu0 0.0
    %1606 = vmatpush.msra.mxu0 0.0
    %1607 = vmatpush.msra.mxu0 0.0
    %1608 = vmatpush.msra.mxu0 0.0
    %1609 = vmatpush.msra.mxu0 0.0
    %v1610 = vand.u32 %v753, 4294901760
    %v1611 = vsub.f32 %v753, %v1610
    %1612 = vmatpush.msra.mxu0 %v1611
    %v1613 = vand.u32 %v811, 4294901760
    %v1614 = vsub.f32 %v811, %v1613
    %1615 = vmatmul.f32.gmra.mxu0 %v1614
    %v1616 = vpop.f32.mrf.mxu0
    %v1617 = vadd.f32 %v1593, %v1616
    %1618 = vdwg.mxu0
    %1619 = vmatpush.msra.mxu0 0.0
    %1620 = vmatpush.msra.mxu0 0.0
    %1621 = vmatpush.msra.mxu0 0.0
    %1622 = vmatpush.msra.mxu0 0.0
    %1623 = vmatpush.msra.mxu0 0.0
    %1624 = vmatpush.msra.mxu0 0.0
    %1625 = vmatpush.msra.mxu0 0.0
    %1626 = vmatpush.msra.mxu0 0.0
    %1627 = vmatpush.msra.mxu0 0.0
    %1628 = vmatpush.msra.mxu0 0.0
    %1629 = vmatpush.msra.mxu0 0.0
    %1630 = vmatpush.msra.mxu0 0.0
    %1631 = vmatpush.msra.mxu0 0.0
    %1632 = vmatpush.msra.mxu0 0.0
    %1633 = vmatpush.msra.mxu0 0.0
    %v1634 = vand.u32 %v753, 4294901760
    %1635 = vmatpush.msra.mxu0 %v1634
    %v1636 = vand.u32 %v811, 4294901760
    %v1637 = vsub.f32 %v811, %v1636
    %v1638 = vand.u32 %v1637, 4294901760
    %1639 = vmatmul.f32.gmra.mxu0 %v1638
    %v1640 = vpop.f32.mrf.mxu0
    %v1641 = vadd.f32 %v1617, %v1640
    %1642 = vdwg.mxu0
    %1643 = vmatpush.msra.mxu0 0.0
    %1644 = vmatpush.msra.mxu0 0.0
    %1645 = vmatpush.msra.mxu0 0.0
    %1646 = vmatpush.msra.mxu0 0.0
    %1647 = vmatpush.msra.mxu0 0.0
    %1648 = vmatpush.msra.mxu0 0.0
    %1649 = vmatpush.msra.mxu0 0.0
    %1650 = vmatpush.msra.mxu0 0.0
    %1651 = vmatpush.msra.mxu0 0.0
    %1652 = vmatpush.msra.mxu0 0.0
    %1653 = vmatpush.msra.mxu0 0.0
    %1654 = vmatpush.msra.mxu0 0.0
    %1655 = vmatpush.msra.mxu0 0.0
    %1656 = vmatpush.msra.mxu0 0.0
    %1657 = vmatpush.msra.mxu0 0.0
    %v1658 = vand.u32 %v753, 4294901760
    %v1659 = vsub.f32 %v753, %v1658
    %v1660 = vand.u32 %v1659, 4294901760
    %1661 = vmatpush.msra.mxu0 %v1660
    %v1662 = vand.u32 %v811, 4294901760
    %1663 = vmatmul.f32.gmra.mxu0 %v1662
    %v1664 = vpop.f32.mrf.mxu0
    %v1665 = vadd.f32 %v1641, %v1664
    %1666 = vdwg.mxu0
    %1667 = vmatpush.msra.mxu0 0.0
    %1668 = vmatpush.msra.mxu0 0.0
    %1669 = vmatpush.msra.mxu0 0.0
    %1670 = vmatpush.msra.mxu0 0.0
    %1671 = vmatpush.msra.mxu0 0.0
    %1672 = vmatpush.msra.mxu0 0.0
    %1673 = vmatpush.msra.mxu0 0.0
    %1674 = vmatpush.msra.mxu0 0.0
    %1675 = vmatpush.msra.mxu0 0.0
    %1676 = vmatpush.msra.mxu0 0.0
    %1677 = vmatpush.msra.mxu0 0.0
    %1678 = vmatpush.msra.mxu0 0.0
    %1679 = vmatpush.msra.mxu0 0.0
    %1680 = vmatpush.msra.mxu0 0.0
    %1681 = vmatpush.msra.mxu0 0.0
    %v1682 = vand.u32 %v753, 4294901760
    %1683 = vmatpush.msra.mxu0 %v1682
    %v1684 = vand.u32 %v811, 4294901760
    %1685 = vmatmul.f32.gmra.mxu0 %v1684
    %v1686 = vpop.f32.mrf.mxu0
    %v1687 = vadd.f32 %v1665, %v1686
    %1688 = vdwg.mxu0
    %1689 = vmatpush.msra.mxu0 0.0
    %1690 = vmatpush.msra.mxu0 0.0
    %1691 = vmatpush.msra.mxu0 0.0
    %1692 = vmatpush.msra.mxu0 0.0
    %1693 = vmatpush.msra.mxu0 0.0
    %1694 = vmatpush.msra.mxu0 0.0
    %1695 = vmatpush.msra.mxu0 0.0
    %1696 = vmatpush.msra.mxu0 0.0
    %1697 = vmatpush.msra.mxu0 0.0
    %1698 = vmatpush.msra.mxu0 0.0
    %1699 = vmatpush.msra.mxu0 0.0
    %1700 = vmatpush.msra.mxu0 0.0
    %1701 = vmatpush.msra.mxu0 0.0
    %1702 = vmatpush.msra.mxu0 0.0
    %1703 = vmatpush.msra.mxu0 0.0
    %v1704 = vand.u32 %v754, 4294901760
    %1705 = vmatpush.msra.mxu0 %v1704
    %v1706 = vand.u32 %v811, 4294901760
    %v1707 = vsub.f32 %v811, %v1706
    %v1708 = vand.u32 %v1707, 4294901760
    %v1709 = vsub.f32 %v1707, %v1708
    %v1710 = vand.u32 %v1709, 4294901760
    %1711 = vmatmul.f32.gmra.mxu0 %v1710
    %v1712 = vpop.f32.mrf.mxu0
    %v1713 = vadd.f32 0.0, %v1712
    %1714 = vdwg.mxu0
    %1715 = vmatpush.msra.mxu0 0.0
    %1716 = vmatpush.msra.mxu0 0.0
    %1717 = vmatpush.msra.mxu0 0.0
    %1718 = vmatpush.msra.mxu0 0.0
    %1719 = vmatpush.msra.mxu0 0.0
    %1720 = vmatpush.msra.mxu0 0.0
    %1721 = vmatpush.msra.mxu0 0.0
    %1722 = vmatpush.msra.mxu0 0.0
    %1723 = vmatpush.msra.mxu0 0.0
    %1724 = vmatpush.msra.mxu0 0.0
    %1725 = vmatpush.msra.mxu0 0.0
    %1726 = vmatpush.msra.mxu0 0.0
    %1727 = vmatpush.msra.mxu0 0.0
    %1728 = vmatpush.msra.mxu0 0.0
    %1729 = vmatpush.msra.mxu0 0.0
    %v1730 = vand.u32 %v754, 4294901760
    %v1731 = vsub.f32 %v754, %v1730
    %v1732 = vand.u32 %v1731, 4294901760
    %v1733 = vsub.f32 %v1731, %v1732
    %v1734 = vand.u32 %v1733, 4294901760
    %1735 = vmatpush.msra.mxu0 %v1734
    %v1736 = vand.u32 %v811, 4294901760
    %1737 = vmatmul.f32.gmra.mxu0 %v1736
    %v1738 = vpop.f32.mrf.mxu0
    %v1739 = vadd.f32 %v1713, %v1738
    %1740 = vdwg.mxu0
    %1741 = vmatpush.msra.mxu0 0.0
    %1742 = vmatpush.msra.mxu0 0.0
    %1743 = vmatpush.msra.mxu0 0.0
    %1744 = vmatpush.msra.mxu0 0.0
    %1745 = vmatpush.msra.mxu0 0.0
    %1746 = vmatpush.msra.mxu0 0.0
    %1747 = vmatpush.msra.mxu0 0.0
    %1748 = vmatpush.msra.mxu0 0.0
    %1749 = vmatpush.msra.mxu0 0.0
    %1750 = vmatpush.msra.mxu0 0.0
    %1751 = vmatpush.msra.mxu0 0.0
    %1752 = vmatpush.msra.mxu0 0.0
    %1753 = vmatpush.msra.mxu0 0.0
    %1754 = vmatpush.msra.mxu0 0.0
    %1755 = vmatpush.msra.mxu0 0.0
    %v1756 = vand.u32 %v754, 4294901760
    %v1757 = vsub.f32 %v754, %v1756
    %1758 = vmatpush.msra.mxu0 %v1757
    %v1759 = vand.u32 %v811, 4294901760
    %v1760 = vsub.f32 %v811, %v1759
    %1761 = vmatmul.f32.gmra.mxu0 %v1760
    %v1762 = vpop.f32.mrf.mxu0
    %v1763 = vadd.f32 %v1739, %v1762
    %1764 = vdwg.mxu0
    %1765 = vmatpush.msra.mxu0 0.0
    %1766 = vmatpush.msra.mxu0 0.0
    %1767 = vmatpush.msra.mxu0 0.0
    %1768 = vmatpush.msra.mxu0 0.0
    %1769 = vmatpush.msra.mxu0 0.0
    %1770 = vmatpush.msra.mxu0 0.0
    %1771 = vmatpush.msra.mxu0 0.0
    %1772 = vmatpush.msra.mxu0 0.0
    %1773 = vmatpush.msra.mxu0 0.0
    %1774 = vmatpush.msra.mxu0 0.0
    %1775 = vmatpush.msra.mxu0 0.0
    %1776 = vmatpush.msra.mxu0 0.0
    %1777 = vmatpush.msra.mxu0 0.0
    %1778 = vmatpush.msra.mxu0 0.0
    %1779 = vmatpush.msra.mxu0 0.0
    %v1780 = vand.u32 %v754, 4294901760
    %1781 = vmatpush.msra.mxu0 %v1780
    %v1782 = vand.u32 %v811, 4294901760
    %v1783 = vsub.f32 %v811, %v1782
    %v1784 = vand.u32 %v1783, 4294901760
    %1785 = vmatmul.f32.gmra.mxu0 %v1784
    %v1786 = vpop.f32.mrf.mxu0
    %v1787 = vadd.f32 %v1763, %v1786
    %1788 = vdwg.mxu0
    %1789 = vmatpush.msra.mxu0 0.0
    %1790 = vmatpush.msra.mxu0 0.0
    %1791 = vmatpush.msra.mxu0 0.0
    %1792 = vmatpush.msra.mxu0 0.0
    %1793 = vmatpush.msra.mxu0 0.0
    %1794 = vmatpush.msra.mxu0 0.0
    %1795 = vmatpush.msra.mxu0 0.0
    %1796 = vmatpush.msra.mxu0 0.0
    %1797 = vmatpush.msra.mxu0 0.0
    %1798 = vmatpush.msra.mxu0 0.0
    %1799 = vmatpush.msra.mxu0 0.0
    %1800 = vmatpush.msra.mxu0 0.0
    %1801 = vmatpush.msra.mxu0 0.0
    %1802 = vmatpush.msra.mxu0 0.0
    %1803 = vmatpush.msra.mxu0 0.0
    %v1804 = vand.u32 %v754, 4294901760
    %v1805 = vsub.f32 %v754, %v1804
    %v1806 = vand.u32 %v1805, 4294901760
    %1807 = vmatpush.msra.mxu0 %v1806
    %v1808 = vand.u32 %v811, 4294901760
    %1809 = vmatmul.f32.gmra.mxu0 %v1808
    %v1810 = vpop.f32.mrf.mxu0
    %v1811 = vadd.f32 %v1787, %v1810
    %1812 = vdwg.mxu0
    %1813 = vmatpush.msra.mxu0 0.0
    %1814 = vmatpush.msra.mxu0 0.0
    %1815 = vmatpush.msra.mxu0 0.0
    %1816 = vmatpush.msra.mxu0 0.0
    %1817 = vmatpush.msra.mxu0 0.0
    %1818 = vmatpush.msra.mxu0 0.0
    %1819 = vmatpush.msra.mxu0 0.0
    %1820 = vmatpush.msra.mxu0 0.0
    %1821 = vmatpush.msra.mxu0 0.0
    %1822 = vmatpush.msra.mxu0 0.0
    %1823 = vmatpush.msra.mxu0 0.0
    %1824 = vmatpush.msra.mxu0 0.0
    %1825 = vmatpush.msra.mxu0 0.0
    %1826 = vmatpush.msra.mxu0 0.0
    %1827 = vmatpush.msra.mxu0 0.0
    %v1828 = vand.u32 %v754, 4294901760
    %1829 = vmatpush.msra.mxu0 %v1828
    %v1830 = vand.u32 %v811, 4294901760
    %1831 = vmatmul.f32.gmra.mxu0 %v1830
    %v1832 = vpop.f32.mrf.mxu0
    %v1833 = vadd.f32 %v1811, %v1832
    %1834 = vdwg.mxu0
    %1835 = vmatpush.msra.mxu0 0.0
    %1836 = vmatpush.msra.mxu0 0.0
    %1837 = vmatpush.msra.mxu0 0.0
    %1838 = vmatpush.msra.mxu0 0.0
    %1839 = vmatpush.msra.mxu0 0.0
    %1840 = vmatpush.msra.mxu0 0.0
    %1841 = vmatpush.msra.mxu0 0.0
    %1842 = vmatpush.msra.mxu0 0.0
    %1843 = vmatpush.msra.mxu0 0.0
    %1844 = vmatpush.msra.mxu0 0.0
    %1845 = vmatpush.msra.mxu0 0.0
    %1846 = vmatpush.msra.mxu0 0.0
    %1847 = vmatpush.msra.mxu0 0.0
    %1848 = vmatpush.msra.mxu0 0.0
    %1849 = vmatpush.msra.mxu0 0.0
    %v1850 = vand.u32 %v755, 4294901760
    %1851 = vmatpush.msra.mxu0 %v1850
    %v1852 = vand.u32 %v811, 4294901760
    %v1853 = vsub.f32 %v811, %v1852
    %v1854 = vand.u32 %v1853, 4294901760
    %v1855 = vsub.f32 %v1853, %v1854
    %v1856 = vand.u32 %v1855, 4294901760
    %1857 = vmatmul.f32.gmra.mxu0 %v1856
    %v1858 = vpop.f32.mrf.mxu0
    %v1859 = vadd.f32 0.0, %v1858
    %1860 = vdwg.mxu0
    %1861 = vmatpush.msra.mxu0 0.0
    %1862 = vmatpush.msra.mxu0 0.0
    %1863 = vmatpush.msra.mxu0 0.0
    %1864 = vmatpush.msra.mxu0 0.0
    %1865 = vmatpush.msra.mxu0 0.0
    %1866 = vmatpush.msra.mxu0 0.0
    %1867 = vmatpush.msra.mxu0 0.0
    %1868 = vmatpush.msra.mxu0 0.0
    %1869 = vmatpush.msra.mxu0 0.0
    %1870 = vmatpush.msra.mxu0 0.0
    %1871 = vmatpush.msra.mxu0 0.0
    %1872 = vmatpush.msra.mxu0 0.0
    %1873 = vmatpush.msra.mxu0 0.0
    %1874 = vmatpush.msra.mxu0 0.0
    %1875 = vmatpush.msra.mxu0 0.0
    %v1876 = vand.u32 %v755, 4294901760
    %v1877 = vsub.f32 %v755, %v1876
    %v1878 = vand.u32 %v1877, 4294901760
    %v1879 = vsub.f32 %v1877, %v1878
    %v1880 = vand.u32 %v1879, 4294901760
    %1881 = vmatpush.msra.mxu0 %v1880
    %v1882 = vand.u32 %v811, 4294901760
    %1883 = vmatmul.f32.gmra.mxu0 %v1882
    %v1884 = vpop.f32.mrf.mxu0
    %v1885 = vadd.f32 %v1859, %v1884
    %1886 = vdwg.mxu0
    %1887 = vmatpush.msra.mxu0 0.0
    %1888 = vmatpush.msra.mxu0 0.0
    %1889 = vmatpush.msra.mxu0 0.0
    %1890 = vmatpush.msra.mxu0 0.0
    %1891 = vmatpush.msra.mxu0 0.0
    %1892 = vmatpush.msra.mxu0 0.0
    %1893 = vmatpush.msra.mxu0 0.0
    %1894 = vmatpush.msra.mxu0 0.0
    %1895 = vmatpush.msra.mxu0 0.0
    %1896 = vmatpush.msra.mxu0 0.0
    %1897 = vmatpush.msra.mxu0 0.0
    %1898 = vmatpush.msra.mxu0 0.0
    %1899 = vmatpush.msra.mxu0 0.0
    %1900 = vmatpush.msra.mxu0 0.0
    %1901 = vmatpush.msra.mxu0 0.0
    %v1902 = vand.u32 %v755, 4294901760
    %v1903 = vsub.f32 %v755, %v1902
    %1904 = vmatpush.msra.mxu0 %v1903
    %v1905 = vand.u32 %v811, 4294901760
    %v1906 = vsub.f32 %v811, %v1905
    %1907 = vmatmul.f32.gmra.mxu0 %v1906
    %v1908 = vpop.f32.mrf.mxu0
    %v1909 = vadd.f32 %v1885, %v1908
    %1910 = vdwg.mxu0
    %1911 = vmatpush.msra.mxu0 0.0
    %1912 = vmatpush.msra.mxu0 0.0
    %1913 = vmatpush.msra.mxu0 0.0
    %1914 = vmatpush.msra.mxu0 0.0
    %1915 = vmatpush.msra.mxu0 0.0
    %1916 = vmatpush.msra.mxu0 0.0
    %1917 = vmatpush.msra.mxu0 0.0
    %1918 = vmatpush.msra.mxu0 0.0
    %1919 = vmatpush.msra.mxu0 0.0
    %1920 = vmatpush.msra.mxu0 0.0
    %1921 = vmatpush.msra.mxu0 0.0
    %1922 = vmatpush.msra.mxu0 0.0
    %1923 = vmatpush.msra.mxu0 0.0
    %1924 = vmatpush.msra.mxu0 0.0
    %1925 = vmatpush.msra.mxu0 0.0
    %v1926 = vand.u32 %v755, 4294901760
    %1927 = vmatpush.msra.mxu0 %v1926
    %v1928 = vand.u32 %v811, 4294901760
    %v1929 = vsub.f32 %v811, %v1928
    %v1930 = vand.u32 %v1929, 4294901760
    %1931 = vmatmul.f32.gmra.mxu0 %v1930
    %v1932 = vpop.f32.mrf.mxu0
    %v1933 = vadd.f32 %v1909, %v1932
    %1934 = vdwg.mxu0
    %1935 = vmatpush.msra.mxu0 0.0
    %1936 = vmatpush.msra.mxu0 0.0
    %1937 = vmatpush.msra.mxu0 0.0
    %1938 = vmatpush.msra.mxu0 0.0
    %1939 = vmatpush.msra.mxu0 0.0
    %1940 = vmatpush.msra.mxu0 0.0
    %1941 = vmatpush.msra.mxu0 0.0
    %1942 = vmatpush.msra.mxu0 0.0
    %1943 = vmatpush.msra.mxu0 0.0
    %1944 = vmatpush.msra.mxu0 0.0
    %1945 = vmatpush.msra.mxu0 0.0
    %1946 = vmatpush.msra.mxu0 0.0
    %1947 = vmatpush.msra.mxu0 0.0
    %1948 = vmatpush.msra.mxu0 0.0
    %1949 = vmatpush.msra.mxu0 0.0
    %v1950 = vand.u32 %v755, 4294901760
    %v1951 = vsub.f32 %v755, %v1950
    %v1952 = vand.u32 %v1951, 4294901760
    %1953 = vmatpush.msra.mxu0 %v1952
    %v1954 = vand.u32 %v811, 4294901760
    %1955 = vmatmul.f32.gmra.mxu0 %v1954
    %v1956 = vpop.f32.mrf.mxu0
    %v1957 = vadd.f32 %v1933, %v1956
    %1958 = vdwg.mxu0
    %1959 = vmatpush.msra.mxu0 0.0
    %1960 = vmatpush.msra.mxu0 0.0
    %1961 = vmatpush.msra.mxu0 0.0
    %1962 = vmatpush.msra.mxu0 0.0
    %1963 = vmatpush.msra.mxu0 0.0
    %1964 = vmatpush.msra.mxu0 0.0
    %1965 = vmatpush.msra.mxu0 0.0
    %1966 = vmatpush.msra.mxu0 0.0
    %1967 = vmatpush.msra.mxu0 0.0
    %1968 = vmatpush.msra.mxu0 0.0
    %1969 = vmatpush.msra.mxu0 0.0
    %1970 = vmatpush.msra.mxu0 0.0
    %1971 = vmatpush.msra.mxu0 0.0
    %1972 = vmatpush.msra.mxu0 0.0
    %1973 = vmatpush.msra.mxu0 0.0
    %v1974 = vand.u32 %v755, 4294901760
    %1975 = vmatpush.msra.mxu0 %v1974
    %v1976 = vand.u32 %v811, 4294901760
    %1977 = vmatmul.f32.gmra.mxu0 %v1976
    %v1978 = vpop.f32.mrf.mxu0
    %v1979 = vadd.f32 %v1957, %v1978
    %1980 = vdwg.mxu0
    %1981 = vmatpush.msra.mxu0 0.0
    %1982 = vmatpush.msra.mxu0 0.0
    %1983 = vmatpush.msra.mxu0 0.0
    %1984 = vmatpush.msra.mxu0 0.0
    %1985 = vmatpush.msra.mxu0 0.0
    %1986 = vmatpush.msra.mxu0 0.0
    %1987 = vmatpush.msra.mxu0 0.0
    %1988 = vmatpush.msra.mxu0 0.0
    %1989 = vmatpush.msra.mxu0 0.0
    %1990 = vmatpush.msra.mxu0 0.0
    %1991 = vmatpush.msra.mxu0 0.0
    %1992 = vmatpush.msra.mxu0 0.0
    %1993 = vmatpush.msra.mxu0 0.0
    %1994 = vmatpush.msra.mxu0 0.0
    %1995 = vmatpush.msra.mxu0 0.0
    %v1996 = vand.u32 %v756, 4294901760
    %1997 = vmatpush.msra.mxu0 %v1996
    %v1998 = vand.u32 %v811, 4294901760
    %v1999 = vsub.f32 %v811, %v1998
    %v2000 = vand.u32 %v1999, 4294901760
    %v2001 = vsub.f32 %v1999, %v2000
    %v2002 = vand.u32 %v2001, 4294901760
    %2003 = vmatmul.f32.gmra.mxu0 %v2002
    %v2004 = vpop.f32.mrf.mxu0
    %v2005 = vadd.f32 0.0, %v2004
    %2006 = vdwg.mxu0
    %2007 = vmatpush.msra.mxu0 0.0
    %2008 = vmatpush.msra.mxu0 0.0
    %2009 = vmatpush.msra.mxu0 0.0
    %2010 = vmatpush.msra.mxu0 0.0
    %2011 = vmatpush.msra.mxu0 0.0
    %2012 = vmatpush.msra.mxu0 0.0
    %2013 = vmatpush.msra.mxu0 0.0
    %2014 = vmatpush.msra.mxu0 0.0
    %2015 = vmatpush.msra.mxu0 0.0
    %2016 = vmatpush.msra.mxu0 0.0
    %2017 = vmatpush.msra.mxu0 0.0
    %2018 = vmatpush.msra.mxu0 0.0
    %2019 = vmatpush.msra.mxu0 0.0
    %2020 = vmatpush.msra.mxu0 0.0
    %2021 = vmatpush.msra.mxu0 0.0
    %v2022 = vand.u32 %v756, 4294901760
    %v2023 = vsub.f32 %v756, %v2022
    %v2024 = vand.u32 %v2023, 4294901760
    %v2025 = vsub.f32 %v2023, %v2024
    %v2026 = vand.u32 %v2025, 4294901760
    %2027 = vmatpush.msra.mxu0 %v2026
    %v2028 = vand.u32 %v811, 4294901760
    %2029 = vmatmul.f32.gmra.mxu0 %v2028
    %v2030 = vpop.f32.mrf.mxu0
    %v2031 = vadd.f32 %v2005, %v2030
    %2032 = vdwg.mxu0
    %2033 = vmatpush.msra.mxu0 0.0
    %2034 = vmatpush.msra.mxu0 0.0
    %2035 = vmatpush.msra.mxu0 0.0
    %2036 = vmatpush.msra.mxu0 0.0
    %2037 = vmatpush.msra.mxu0 0.0
    %2038 = vmatpush.msra.mxu0 0.0
    %2039 = vmatpush.msra.mxu0 0.0
    %2040 = vmatpush.msra.mxu0 0.0
    %2041 = vmatpush.msra.mxu0 0.0
    %2042 = vmatpush.msra.mxu0 0.0
    %2043 = vmatpush.msra.mxu0 0.0
    %2044 = vmatpush.msra.mxu0 0.0
    %2045 = vmatpush.msra.mxu0 0.0
    %2046 = vmatpush.msra.mxu0 0.0
    %2047 = vmatpush.msra.mxu0 0.0
    %v2048 = vand.u32 %v756, 4294901760
    %v2049 = vsub.f32 %v756, %v2048
    %2050 = vmatpush.msra.mxu0 %v2049
    %v2051 = vand.u32 %v811, 4294901760
    %v2052 = vsub.f32 %v811, %v2051
    %2053 = vmatmul.f32.gmra.mxu0 %v2052
    %v2054 = vpop.f32.mrf.mxu0
    %v2055 = vadd.f32 %v2031, %v2054
    %2056 = vdwg.mxu0
    %2057 = vmatpush.msra.mxu0 0.0
    %2058 = vmatpush.msra.mxu0 0.0
    %2059 = vmatpush.msra.mxu0 0.0
    %2060 = vmatpush.msra.mxu0 0.0
    %2061 = vmatpush.msra.mxu0 0.0
    %2062 = vmatpush.msra.mxu0 0.0
    %2063 = vmatpush.msra.mxu0 0.0
    %2064 = vmatpush.msra.mxu0 0.0
    %2065 = vmatpush.msra.mxu0 0.0
    %2066 = vmatpush.msra.mxu0 0.0
    %2067 = vmatpush.msra.mxu0 0.0
    %2068 = vmatpush.msra.mxu0 0.0
    %2069 = vmatpush.msra.mxu0 0.0
    %2070 = vmatpush.msra.mxu0 0.0
    %2071 = vmatpush.msra.mxu0 0.0
    %v2072 = vand.u32 %v756, 4294901760
    %2073 = vmatpush.msra.mxu0 %v2072
    %v2074 = vand.u32 %v811, 4294901760
    %v2075 = vsub.f32 %v811, %v2074
    %v2076 = vand.u32 %v2075, 4294901760
    %2077 = vmatmul.f32.gmra.mxu0 %v2076
    %v2078 = vpop.f32.mrf.mxu0
    %v2079 = vadd.f32 %v2055, %v2078
    %2080 = vdwg.mxu0
    %2081 = vmatpush.msra.mxu0 0.0
    %2082 = vmatpush.msra.mxu0 0.0
    %2083 = vmatpush.msra.mxu0 0.0
    %2084 = vmatpush.msra.mxu0 0.0
    %2085 = vmatpush.msra.mxu0 0.0
    %2086 = vmatpush.msra.mxu0 0.0
    %2087 = vmatpush.msra.mxu0 0.0
    %2088 = vmatpush.msra.mxu0 0.0
    %2089 = vmatpush.msra.mxu0 0.0
    %2090 = vmatpush.msra.mxu0 0.0
    %2091 = vmatpush.msra.mxu0 0.0
    %2092 = vmatpush.msra.mxu0 0.0
    %2093 = vmatpush.msra.mxu0 0.0
    %2094 = vmatpush.msra.mxu0 0.0
    %2095 = vmatpush.msra.mxu0 0.0
    %v2096 = vand.u32 %v756, 4294901760
    %v2097 = vsub.f32 %v756, %v2096
    %v2098 = vand.u32 %v2097, 4294901760
    %2099 = vmatpush.msra.mxu0 %v2098
    %v2100 = vand.u32 %v811, 4294901760
    %2101 = vmatmul.f32.gmra.mxu0 %v2100
    %v2102 = vpop.f32.mrf.mxu0
    %v2103 = vadd.f32 %v2079, %v2102
    %2104 = vdwg.mxu0
    %2105 = vmatpush.msra.mxu0 0.0
    %2106 = vmatpush.msra.mxu0 0.0
    %2107 = vmatpush.msra.mxu0 0.0
    %2108 = vmatpush.msra.mxu0 0.0
    %2109 = vmatpush.msra.mxu0 0.0
    %2110 = vmatpush.msra.mxu0 0.0
    %2111 = vmatpush.msra.mxu0 0.0
    %2112 = vmatpush.msra.mxu0 0.0
    %2113 = vmatpush.msra.mxu0 0.0
    %2114 = vmatpush.msra.mxu0 0.0
    %2115 = vmatpush.msra.mxu0 0.0
    %2116 = vmatpush.msra.mxu0 0.0
    %2117 = vmatpush.msra.mxu0 0.0
    %2118 = vmatpush.msra.mxu0 0.0
    %2119 = vmatpush.msra.mxu0 0.0
    %v2120 = vand.u32 %v756, 4294901760
    %2121 = vmatpush.msra.mxu0 %v2120
    %v2122 = vand.u32 %v811, 4294901760
    %2123 = vmatmul.f32.gmra.mxu0 %v2122
    %v2124 = vpop.f32.mrf.mxu0
    %v2125 = vadd.f32 %v2103, %v2124
    %2126 = vdwg.mxu0
    %2127 = vmatpush.msra.mxu0 0.0
    %2128 = vmatpush.msra.mxu0 0.0
    %2129 = vmatpush.msra.mxu0 0.0
    %2130 = vmatpush.msra.mxu0 0.0
    %2131 = vmatpush.msra.mxu0 0.0
    %2132 = vmatpush.msra.mxu0 0.0
    %2133 = vmatpush.msra.mxu0 0.0
    %2134 = vmatpush.msra.mxu0 0.0
    %2135 = vmatpush.msra.mxu0 0.0
    %2136 = vmatpush.msra.mxu0 0.0
    %2137 = vmatpush.msra.mxu0 0.0
    %2138 = vmatpush.msra.mxu0 0.0
    %2139 = vmatpush.msra.mxu0 0.0
    %2140 = vmatpush.msra.mxu0 0.0
    %2141 = vmatpush.msra.mxu0 0.0
    %v2142 = vand.u32 %v757, 4294901760
    %2143 = vmatpush.msra.mxu0 %v2142
    %v2144 = vand.u32 %v811, 4294901760
    %v2145 = vsub.f32 %v811, %v2144
    %v2146 = vand.u32 %v2145, 4294901760
    %v2147 = vsub.f32 %v2145, %v2146
    %v2148 = vand.u32 %v2147, 4294901760
    %2149 = vmatmul.f32.gmra.mxu0 %v2148
    %v2150 = vpop.f32.mrf.mxu0
    %v2151 = vadd.f32 0.0, %v2150
    %2152 = vdwg.mxu0
    %2153 = vmatpush.msra.mxu0 0.0
    %2154 = vmatpush.msra.mxu0 0.0
    %2155 = vmatpush.msra.mxu0 0.0
    %2156 = vmatpush.msra.mxu0 0.0
    %2157 = vmatpush.msra.mxu0 0.0
    %2158 = vmatpush.msra.mxu0 0.0
    %2159 = vmatpush.msra.mxu0 0.0
    %2160 = vmatpush.msra.mxu0 0.0
    %2161 = vmatpush.msra.mxu0 0.0
    %2162 = vmatpush.msra.mxu0 0.0
    %2163 = vmatpush.msra.mxu0 0.0
    %2164 = vmatpush.msra.mxu0 0.0
    %2165 = vmatpush.msra.mxu0 0.0
    %2166 = vmatpush.msra.mxu0 0.0
    %2167 = vmatpush.msra.mxu0 0.0
    %v2168 = vand.u32 %v757, 4294901760
    %v2169 = vsub.f32 %v757, %v2168
    %v2170 = vand.u32 %v2169, 4294901760
    %v2171 = vsub.f32 %v2169, %v2170
    %v2172 = vand.u32 %v2171, 4294901760
    %2173 = vmatpush.msra.mxu0 %v2172
    %v2174 = vand.u32 %v811, 4294901760
    %2175 = vmatmul.f32.gmra.mxu0 %v2174
    %v2176 = vpop.f32.mrf.mxu0
    %v2177 = vadd.f32 %v2151, %v2176
    %2178 = vdwg.mxu0
    %2179 = vmatpush.msra.mxu0 0.0
    %2180 = vmatpush.msra.mxu0 0.0
    %2181 = vmatpush.msra.mxu0 0.0
    %2182 = vmatpush.msra.mxu0 0.0
    %2183 = vmatpush.msra.mxu0 0.0
    %2184 = vmatpush.msra.mxu0 0.0
    %2185 = vmatpush.msra.mxu0 0.0
    %2186 = vmatpush.msra.mxu0 0.0
    %2187 = vmatpush.msra.mxu0 0.0
    %2188 = vmatpush.msra.mxu0 0.0
    %2189 = vmatpush.msra.mxu0 0.0
    %2190 = vmatpush.msra.mxu0 0.0
    %2191 = vmatpush.msra.mxu0 0.0
    %2192 = vmatpush.msra.mxu0 0.0
    %2193 = vmatpush.msra.mxu0 0.0
    %v2194 = vand.u32 %v757, 4294901760
    %v2195 = vsub.f32 %v757, %v2194
    %2196 = vmatpush.msra.mxu0 %v2195
    %v2197 = vand.u32 %v811, 4294901760
    %v2198 = vsub.f32 %v811, %v2197
    %2199 = vmatmul.f32.gmra.mxu0 %v2198
    %v2200 = vpop.f32.mrf.mxu0
    %v2201 = vadd.f32 %v2177, %v2200
    %2202 = vdwg.mxu0
    %2203 = vmatpush.msra.mxu0 0.0
    %2204 = vmatpush.msra.mxu0 0.0
    %2205 = vmatpush.msra.mxu0 0.0
    %2206 = vmatpush.msra.mxu0 0.0
    %2207 = vmatpush.msra.mxu0 0.0
    %2208 = vmatpush.msra.mxu0 0.0
    %2209 = vmatpush.msra.mxu0 0.0
    %2210 = vmatpush.msra.mxu0 0.0
    %2211 = vmatpush.msra.mxu0 0.0
    %2212 = vmatpush.msra.mxu0 0.0
    %2213 = vmatpush.msra.mxu0 0.0
    %2214 = vmatpush.msra.mxu0 0.0
    %2215 = vmatpush.msra.mxu0 0.0
    %2216 = vmatpush.msra.mxu0 0.0
    %2217 = vmatpush.msra.mxu0 0.0
    %v2218 = vand.u32 %v757, 4294901760
    %2219 = vmatpush.msra.mxu0 %v2218
    %v2220 = vand.u32 %v811, 4294901760
    %v2221 = vsub.f32 %v811, %v2220
    %v2222 = vand.u32 %v2221, 4294901760
    %2223 = vmatmul.f32.gmra.mxu0 %v2222
    %v2224 = vpop.f32.mrf.mxu0
    %v2225 = vadd.f32 %v2201, %v2224
    %2226 = vdwg.mxu0
    %2227 = vmatpush.msra.mxu0 0.0
    %2228 = vmatpush.msra.mxu0 0.0
    %2229 = vmatpush.msra.mxu0 0.0
    %2230 = vmatpush.msra.mxu0 0.0
    %2231 = vmatpush.msra.mxu0 0.0
    %2232 = vmatpush.msra.mxu0 0.0
    %2233 = vmatpush.msra.mxu0 0.0
    %2234 = vmatpush.msra.mxu0 0.0
    %2235 = vmatpush.msra.mxu0 0.0
    %2236 = vmatpush.msra.mxu0 0.0
    %2237 = vmatpush.msra.mxu0 0.0
    %2238 = vmatpush.msra.mxu0 0.0
    %2239 = vmatpush.msra.mxu0 0.0
    %2240 = vmatpush.msra.mxu0 0.0
    %2241 = vmatpush.msra.mxu0 0.0
    %v2242 = vand.u32 %v757, 4294901760
    %v2243 = vsub.f32 %v757, %v2242
    %v2244 = vand.u32 %v2243, 4294901760
    %2245 = vmatpush.msra.mxu0 %v2244
    %v2246 = vand.u32 %v811, 4294901760
    %2247 = vmatmul.f32.gmra.mxu0 %v2246
    %v2248 = vpop.f32.mrf.mxu0
    %v2249 = vadd.f32 %v2225, %v2248
    %2250 = vdwg.mxu0
    %2251 = vmatpush.msra.mxu0 0.0
    %2252 = vmatpush.msra.mxu0 0.0
    %2253 = vmatpush.msra.mxu0 0.0
    %2254 = vmatpush.msra.mxu0 0.0
    %2255 = vmatpush.msra.mxu0 0.0
    %2256 = vmatpush.msra.mxu0 0.0
    %2257 = vmatpush.msra.mxu0 0.0
    %2258 = vmatpush.msra.mxu0 0.0
    %2259 = vmatpush.msra.mxu0 0.0
    %2260 = vmatpush.msra.mxu0 0.0
    %2261 = vmatpush.msra.mxu0 0.0
    %2262 = vmatpush.msra.mxu0 0.0
    %2263 = vmatpush.msra.mxu0 0.0
    %2264 = vmatpush.msra.mxu0 0.0
    %2265 = vmatpush.msra.mxu0 0.0
    %v2266 = vand.u32 %v757, 4294901760
    %2267 = vmatpush.msra.mxu0 %v2266
    %v2268 = vand.u32 %v811, 4294901760
    %2269 = vmatmul.f32.gmra.mxu0 %v2268
    %v2270 = vpop.f32.mrf.mxu0
    %v2271 = vadd.f32 %v2249, %v2270
    %2272 = vdwg.mxu0
    %2273 = vmatpush.msra.mxu0 0.0
    %2274 = vmatpush.msra.mxu0 0.0
    %2275 = vmatpush.msra.mxu0 0.0
    %2276 = vmatpush.msra.mxu0 0.0
    %2277 = vmatpush.msra.mxu0 0.0
    %2278 = vmatpush.msra.mxu0 0.0
    %2279 = vmatpush.msra.mxu0 0.0
    %2280 = vmatpush.msra.mxu0 0.0
    %2281 = vmatpush.msra.mxu0 0.0
    %2282 = vmatpush.msra.mxu0 0.0
    %2283 = vmatpush.msra.mxu0 0.0
    %2284 = vmatpush.msra.mxu0 0.0
    %2285 = vmatpush.msra.mxu0 0.0
    %2286 = vmatpush.msra.mxu0 0.0
    %2287 = vmatpush.msra.mxu0 0.0
    %v2288 = vand.u32 %v758, 4294901760
    %2289 = vmatpush.msra.mxu0 %v2288
    %v2290 = vand.u32 %v811, 4294901760
    %v2291 = vsub.f32 %v811, %v2290
    %v2292 = vand.u32 %v2291, 4294901760
    %v2293 = vsub.f32 %v2291, %v2292
    %v2294 = vand.u32 %v2293, 4294901760
    %2295 = vmatmul.f32.gmra.mxu0 %v2294
    %v2296 = vpop.f32.mrf.mxu0
    %v2297 = vadd.f32 0.0, %v2296
    %2298 = vdwg.mxu0
    %2299 = vmatpush.msra.mxu0 0.0
    %2300 = vmatpush.msra.mxu0 0.0
    %2301 = vmatpush.msra.mxu0 0.0
    %2302 = vmatpush.msra.mxu0 0.0
    %2303 = vmatpush.msra.mxu0 0.0
    %2304 = vmatpush.msra.mxu0 0.0
    %2305 = vmatpush.msra.mxu0 0.0
    %2306 = vmatpush.msra.mxu0 0.0
    %2307 = vmatpush.msra.mxu0 0.0
    %2308 = vmatpush.msra.mxu0 0.0
    %2309 = vmatpush.msra.mxu0 0.0
    %2310 = vmatpush.msra.mxu0 0.0
    %2311 = vmatpush.msra.mxu0 0.0
    %2312 = vmatpush.msra.mxu0 0.0
    %2313 = vmatpush.msra.mxu0 0.0
    %v2314 = vand.u32 %v758, 4294901760
    %v2315 = vsub.f32 %v758, %v2314
    %v2316 = vand.u32 %v2315, 4294901760
    %v2317 = vsub.f32 %v2315, %v2316
    %v2318 = vand.u32 %v2317, 4294901760
    %2319 = vmatpush.msra.mxu0 %v2318
    %v2320 = vand.u32 %v811, 4294901760
    %2321 = vmatmul.f32.gmra.mxu0 %v2320
    %v2322 = vpop.f32.mrf.mxu0
    %v2323 = vadd.f32 %v2297, %v2322
    %2324 = vdwg.mxu0
    %2325 = vmatpush.msra.mxu0 0.0
    %2326 = vmatpush.msra.mxu0 0.0
    %2327 = vmatpush.msra.mxu0 0.0
    %2328 = vmatpush.msra.mxu0 0.0
    %2329 = vmatpush.msra.mxu0 0.0
    %2330 = vmatpush.msra.mxu0 0.0
    %2331 = vmatpush.msra.mxu0 0.0
    %2332 = vmatpush.msra.mxu0 0.0
    %2333 = vmatpush.msra.mxu0 0.0
    %2334 = vmatpush.msra.mxu0 0.0
    %2335 = vmatpush.msra.mxu0 0.0
    %2336 = vmatpush.msra.mxu0 0.0
    %2337 = vmatpush.msra.mxu0 0.0
    %2338 = vmatpush.msra.mxu0 0.0
    %2339 = vmatpush.msra.mxu0 0.0
    %v2340 = vand.u32 %v758, 4294901760
    %v2341 = vsub.f32 %v758, %v2340
    %2342 = vmatpush.msra.mxu0 %v2341
    %v2343 = vand.u32 %v811, 4294901760
    %v2344 = vsub.f32 %v811, %v2343
    %2345 = vmatmul.f32.gmra.mxu0 %v2344
    %v2346 = vpop.f32.mrf.mxu0
    %v2347 = vadd.f32 %v2323, %v2346
    %2348 = vdwg.mxu0
    %2349 = vmatpush.msra.mxu0 0.0
    %2350 = vmatpush.msra.mxu0 0.0
    %2351 = vmatpush.msra.mxu0 0.0
    %2352 = vmatpush.msra.mxu0 0.0
    %2353 = vmatpush.msra.mxu0 0.0
    %2354 = vmatpush.msra.mxu0 0.0
    %2355 = vmatpush.msra.mxu0 0.0
    %2356 = vmatpush.msra.mxu0 0.0
    %2357 = vmatpush.msra.mxu0 0.0
    %2358 = vmatpush.msra.mxu0 0.0
    %2359 = vmatpush.msra.mxu0 0.0
    %2360 = vmatpush.msra.mxu0 0.0
    %2361 = vmatpush.msra.mxu0 0.0
    %2362 = vmatpush.msra.mxu0 0.0
    %2363 = vmatpush.msra.mxu0 0.0
    %v2364 = vand.u32 %v758, 4294901760
    %2365 = vmatpush.msra.mxu0 %v2364
    %v2366 = vand.u32 %v811, 4294901760
    %v2367 = vsub.f32 %v811, %v2366
    %v2368 = vand.u32 %v2367, 4294901760
    %2369 = vmatmul.f32.gmra.mxu0 %v2368
    %v2370 = vpop.f32.mrf.mxu0
    %v2371 = vadd.f32 %v2347, %v2370
    %2372 = vdwg.mxu0
    %2373 = vmatpush.msra.mxu0 0.0
    %2374 = vmatpush.msra.mxu0 0.0
    %2375 = vmatpush.msra.mxu0 0.0
    %2376 = vmatpush.msra.mxu0 0.0
    %2377 = vmatpush.msra.mxu0 0.0
    %2378 = vmatpush.msra.mxu0 0.0
    %2379 = vmatpush.msra.mxu0 0.0
    %2380 = vmatpush.msra.mxu0 0.0
    %2381 = vmatpush.msra.mxu0 0.0
    %2382 = vmatpush.msra.mxu0 0.0
    %2383 = vmatpush.msra.mxu0 0.0
    %2384 = vmatpush.msra.mxu0 0.0
    %2385 = vmatpush.msra.mxu0 0.0
    %2386 = vmatpush.msra.mxu0 0.0
    %2387 = vmatpush.msra.mxu0 0.0
    %v2388 = vand.u32 %v758, 4294901760
    %v2389 = vsub.f32 %v758, %v2388
    %v2390 = vand.u32 %v2389, 4294901760
    %2391 = vmatpush.msra.mxu0 %v2390
    %v2392 = vand.u32 %v811, 4294901760
    %2393 = vmatmul.f32.gmra.mxu0 %v2392
    %v2394 = vpop.f32.mrf.mxu0
    %v2395 = vadd.f32 %v2371, %v2394
    %2396 = vdwg.mxu0
    %2397 = vmatpush.msra.mxu0 0.0
    %2398 = vmatpush.msra.mxu0 0.0
    %2399 = vmatpush.msra.mxu0 0.0
    %2400 = vmatpush.msra.mxu0 0.0
    %2401 = vmatpush.msra.mxu0 0.0
    %2402 = vmatpush.msra.mxu0 0.0
    %2403 = vmatpush.msra.mxu0 0.0
    %2404 = vmatpush.msra.mxu0 0.0
    %2405 = vmatpush.msra.mxu0 0.0
    %2406 = vmatpush.msra.mxu0 0.0
    %2407 = vmatpush.msra.mxu0 0.0
    %2408 = vmatpush.msra.mxu0 0.0
    %2409 = vmatpush.msra.mxu0 0.0
    %2410 = vmatpush.msra.mxu0 0.0
    %2411 = vmatpush.msra.mxu0 0.0
    %v2412 = vand.u32 %v758, 4294901760
    %2413 = vmatpush.msra.mxu0 %v2412
    %v2414 = vand.u32 %v811, 4294901760
    %2415 = vmatmul.f32.gmra.mxu0 %v2414
    %v2416 = vpop.f32.mrf.mxu0
    %v2417 = vadd.f32 %v2395, %v2416
    %2418 = vdwg.mxu0
    %2419 = vmatpush.msra.mxu0 0.0
    %2420 = vmatpush.msra.mxu0 0.0
    %2421 = vmatpush.msra.mxu0 0.0
    %2422 = vmatpush.msra.mxu0 0.0
    %2423 = vmatpush.msra.mxu0 0.0
    %2424 = vmatpush.msra.mxu0 0.0
    %2425 = vmatpush.msra.mxu0 0.0
    %2426 = vmatpush.msra.mxu0 0.0
    %2427 = vmatpush.msra.mxu0 0.0
    %2428 = vmatpush.msra.mxu0 0.0
    %2429 = vmatpush.msra.mxu0 0.0
    %2430 = vmatpush.msra.mxu0 0.0
    %2431 = vmatpush.msra.mxu0 0.0
    %2432 = vmatpush.msra.mxu0 0.0
    %2433 = vmatpush.msra.mxu0 0.0
    %v2434 = vand.u32 %v759, 4294901760
    %2435 = vmatpush.msra.mxu0 %v2434
    %v2436 = vand.u32 %v811, 4294901760
    %v2437 = vsub.f32 %v811, %v2436
    %v2438 = vand.u32 %v2437, 4294901760
    %v2439 = vsub.f32 %v2437, %v2438
    %v2440 = vand.u32 %v2439, 4294901760
    %2441 = vmatmul.f32.gmra.mxu0 %v2440
    %v2442 = vpop.f32.mrf.mxu0
    %v2443 = vadd.f32 0.0, %v2442
    %2444 = vdwg.mxu0
    %2445 = vmatpush.msra.mxu0 0.0
    %2446 = vmatpush.msra.mxu0 0.0
    %2447 = vmatpush.msra.mxu0 0.0
    %2448 = vmatpush.msra.mxu0 0.0
    %2449 = vmatpush.msra.mxu0 0.0
    %2450 = vmatpush.msra.mxu0 0.0
    %2451 = vmatpush.msra.mxu0 0.0
    %2452 = vmatpush.msra.mxu0 0.0
    %2453 = vmatpush.msra.mxu0 0.0
    %2454 = vmatpush.msra.mxu0 0.0
    %2455 = vmatpush.msra.mxu0 0.0
    %2456 = vmatpush.msra.mxu0 0.0
    %2457 = vmatpush.msra.mxu0 0.0
    %2458 = vmatpush.msra.mxu0 0.0
    %2459 = vmatpush.msra.mxu0 0.0
    %v2460 = vand.u32 %v759, 4294901760
    %v2461 = vsub.f32 %v759, %v2460
    %v2462 = vand.u32 %v2461, 4294901760
    %v2463 = vsub.f32 %v2461, %v2462
    %v2464 = vand.u32 %v2463, 4294901760
    %2465 = vmatpush.msra.mxu0 %v2464
    %v2466 = vand.u32 %v811, 4294901760
    %2467 = vmatmul.f32.gmra.mxu0 %v2466
    %v2468 = vpop.f32.mrf.mxu0
    %v2469 = vadd.f32 %v2443, %v2468
    %2470 = vdwg.mxu0
    %2471 = vmatpush.msra.mxu0 0.0
    %2472 = vmatpush.msra.mxu0 0.0
    %2473 = vmatpush.msra.mxu0 0.0
    %2474 = vmatpush.msra.mxu0 0.0
    %2475 = vmatpush.msra.mxu0 0.0
    %2476 = vmatpush.msra.mxu0 0.0
    %2477 = vmatpush.msra.mxu0 0.0
    %2478 = vmatpush.msra.mxu0 0.0
    %2479 = vmatpush.msra.mxu0 0.0
    %2480 = vmatpush.msra.mxu0 0.0
    %2481 = vmatpush.msra.mxu0 0.0
    %2482 = vmatpush.msra.mxu0 0.0
    %2483 = vmatpush.msra.mxu0 0.0
    %2484 = vmatpush.msra.mxu0 0.0
    %2485 = vmatpush.msra.mxu0 0.0
    %v2486 = vand.u32 %v759, 4294901760
    %v2487 = vsub.f32 %v759, %v2486
    %2488 = vmatpush.msra.mxu0 %v2487
    %v2489 = vand.u32 %v811, 4294901760
    %v2490 = vsub.f32 %v811, %v2489
    %2491 = vmatmul.f32.gmra.mxu0 %v2490
    %v2492 = vpop.f32.mrf.mxu0
    %v2493 = vadd.f32 %v2469, %v2492
    %2494 = vdwg.mxu0
    %2495 = vmatpush.msra.mxu0 0.0
    %2496 = vmatpush.msra.mxu0 0.0
    %2497 = vmatpush.msra.mxu0 0.0
    %2498 = vmatpush.msra.mxu0 0.0
    %2499 = vmatpush.msra.mxu0 0.0
    %2500 = vmatpush.msra.mxu0 0.0
    %2501 = vmatpush.msra.mxu0 0.0
    %2502 = vmatpush.msra.mxu0 0.0
    %2503 = vmatpush.msra.mxu0 0.0
    %2504 = vmatpush.msra.mxu0 0.0
    %2505 = vmatpush.msra.mxu0 0.0
    %2506 = vmatpush.msra.mxu0 0.0
    %2507 = vmatpush.msra.mxu0 0.0
    %2508 = vmatpush.msra.mxu0 0.0
    %2509 = vmatpush.msra.mxu0 0.0
    %v2510 = vand.u32 %v759, 4294901760
    %2511 = vmatpush.msra.mxu0 %v2510
    %v2512 = vand.u32 %v811, 4294901760
    %v2513 = vsub.f32 %v811, %v2512
    %v2514 = vand.u32 %v2513, 4294901760
    %2515 = vmatmul.f32.gmra.mxu0 %v2514
    %v2516 = vpop.f32.mrf.mxu0
    %v2517 = vadd.f32 %v2493, %v2516
    %2518 = vdwg.mxu0
    %2519 = vmatpush.msra.mxu0 0.0
    %2520 = vmatpush.msra.mxu0 0.0
    %2521 = vmatpush.msra.mxu0 0.0
    %2522 = vmatpush.msra.mxu0 0.0
    %2523 = vmatpush.msra.mxu0 0.0
    %2524 = vmatpush.msra.mxu0 0.0
    %2525 = vmatpush.msra.mxu0 0.0
    %2526 = vmatpush.msra.mxu0 0.0
    %2527 = vmatpush.msra.mxu0 0.0
    %2528 = vmatpush.msra.mxu0 0.0
    %2529 = vmatpush.msra.mxu0 0.0
    %2530 = vmatpush.msra.mxu0 0.0
    %2531 = vmatpush.msra.mxu0 0.0
    %2532 = vmatpush.msra.mxu0 0.0
    %2533 = vmatpush.msra.mxu0 0.0
    %v2534 = vand.u32 %v759, 4294901760
    %v2535 = vsub.f32 %v759, %v2534
    %v2536 = vand.u32 %v2535, 4294901760
    %2537 = vmatpush.msra.mxu0 %v2536
    %v2538 = vand.u32 %v811, 4294901760
    %2539 = vmatmul.f32.gmra.mxu0 %v2538
    %v2540 = vpop.f32.mrf.mxu0
    %v2541 = vadd.f32 %v2517, %v2540
    %2542 = vdwg.mxu0
    %2543 = vmatpush.msra.mxu0 0.0
    %2544 = vmatpush.msra.mxu0 0.0
    %2545 = vmatpush.msra.mxu0 0.0
    %2546 = vmatpush.msra.mxu0 0.0
    %2547 = vmatpush.msra.mxu0 0.0
    %2548 = vmatpush.msra.mxu0 0.0
    %2549 = vmatpush.msra.mxu0 0.0
    %2550 = vmatpush.msra.mxu0 0.0
    %2551 = vmatpush.msra.mxu0 0.0
    %2552 = vmatpush.msra.mxu0 0.0
    %2553 = vmatpush.msra.mxu0 0.0
    %2554 = vmatpush.msra.mxu0 0.0
    %2555 = vmatpush.msra.mxu0 0.0
    %2556 = vmatpush.msra.mxu0 0.0
    %2557 = vmatpush.msra.mxu0 0.0
    %v2558 = vand.u32 %v759, 4294901760
    %2559 = vmatpush.msra.mxu0 %v2558
    %v2560 = vand.u32 %v811, 4294901760
    %2561 = vmatmul.f32.gmra.mxu0 %v2560
    %v2562 = vpop.f32.mrf.mxu0
    %v2563 = vadd.f32 %v2541, %v2562
    %2564 = vdwg.mxu0
    %2565 = vmatpush.msra.mxu0 0.0
    %2566 = vmatpush.msra.mxu0 0.0
    %2567 = vmatpush.msra.mxu0 0.0
    %2568 = vmatpush.msra.mxu0 0.0
    %2569 = vmatpush.msra.mxu0 0.0
    %2570 = vmatpush.msra.mxu0 0.0
    %2571 = vmatpush.msra.mxu0 0.0
    %2572 = vmatpush.msra.mxu0 0.0
    %2573 = vmatpush.msra.mxu0 0.0
    %2574 = vmatpush.msra.mxu0 0.0
    %2575 = vmatpush.msra.mxu0 0.0
    %2576 = vmatpush.msra.mxu0 0.0
    %2577 = vmatpush.msra.mxu0 0.0
    %2578 = vmatpush.msra.mxu0 0.0
    %2579 = vmatpush.msra.mxu0 0.0
    %v2580 = vand.u32 %v760, 4294901760
    %2581 = vmatpush.msra.mxu0 %v2580
    %v2582 = vand.u32 %v811, 4294901760
    %v2583 = vsub.f32 %v811, %v2582
    %v2584 = vand.u32 %v2583, 4294901760
    %v2585 = vsub.f32 %v2583, %v2584
    %v2586 = vand.u32 %v2585, 4294901760
    %2587 = vmatmul.f32.gmra.mxu0 %v2586
    %v2588 = vpop.f32.mrf.mxu0
    %v2589 = vadd.f32 0.0, %v2588
    %2590 = vdwg.mxu0
    %2591 = vmatpush.msra.mxu0 0.0
    %2592 = vmatpush.msra.mxu0 0.0
    %2593 = vmatpush.msra.mxu0 0.0
    %2594 = vmatpush.msra.mxu0 0.0
    %2595 = vmatpush.msra.mxu0 0.0
    %2596 = vmatpush.msra.mxu0 0.0
    %2597 = vmatpush.msra.mxu0 0.0
    %2598 = vmatpush.msra.mxu0 0.0
    %2599 = vmatpush.msra.mxu0 0.0
    %2600 = vmatpush.msra.mxu0 0.0
    %2601 = vmatpush.msra.mxu0 0.0
    %2602 = vmatpush.msra.mxu0 0.0
    %2603 = vmatpush.msra.mxu0 0.0
    %2604 = vmatpush.msra.mxu0 0.0
    %2605 = vmatpush.msra.mxu0 0.0
    %v2606 = vand.u32 %v760, 4294901760
    %v2607 = vsub.f32 %v760, %v2606
    %v2608 = vand.u32 %v2607, 4294901760
    %v2609 = vsub.f32 %v2607, %v2608
    %v2610 = vand.u32 %v2609, 4294901760
    %2611 = vmatpush.msra.mxu0 %v2610
    %v2612 = vand.u32 %v811, 4294901760
    %2613 = vmatmul.f32.gmra.mxu0 %v2612
    %v2614 = vpop.f32.mrf.mxu0
    %v2615 = vadd.f32 %v2589, %v2614
    %2616 = vdwg.mxu0
    %2617 = vmatpush.msra.mxu0 0.0
    %2618 = vmatpush.msra.mxu0 0.0
    %2619 = vmatpush.msra.mxu0 0.0
    %2620 = vmatpush.msra.mxu0 0.0
    %2621 = vmatpush.msra.mxu0 0.0
    %2622 = vmatpush.msra.mxu0 0.0
    %2623 = vmatpush.msra.mxu0 0.0
    %2624 = vmatpush.msra.mxu0 0.0
    %2625 = vmatpush.msra.mxu0 0.0
    %2626 = vmatpush.msra.mxu0 0.0
    %2627 = vmatpush.msra.mxu0 0.0
    %2628 = vmatpush.msra.mxu0 0.0
    %2629 = vmatpush.msra.mxu0 0.0
    %2630 = vmatpush.msra.mxu0 0.0
    %2631 = vmatpush.msra.mxu0 0.0
    %v2632 = vand.u32 %v760, 4294901760
    %v2633 = vsub.f32 %v760, %v2632
    %2634 = vmatpush.msra.mxu0 %v2633
    %v2635 = vand.u32 %v811, 4294901760
    %v2636 = vsub.f32 %v811, %v2635
    %2637 = vmatmul.f32.gmra.mxu0 %v2636
    %v2638 = vpop.f32.mrf.mxu0
    %v2639 = vadd.f32 %v2615, %v2638
    %2640 = vdwg.mxu0
    %2641 = vmatpush.msra.mxu0 0.0
    %2642 = vmatpush.msra.mxu0 0.0
    %2643 = vmatpush.msra.mxu0 0.0
    %2644 = vmatpush.msra.mxu0 0.0
    %2645 = vmatpush.msra.mxu0 0.0
    %2646 = vmatpush.msra.mxu0 0.0
    %2647 = vmatpush.msra.mxu0 0.0
    %2648 = vmatpush.msra.mxu0 0.0
    %2649 = vmatpush.msra.mxu0 0.0
    %2650 = vmatpush.msra.mxu0 0.0
    %2651 = vmatpush.msra.mxu0 0.0
    %2652 = vmatpush.msra.mxu0 0.0
    %2653 = vmatpush.msra.mxu0 0.0
    %2654 = vmatpush.msra.mxu0 0.0
    %2655 = vmatpush.msra.mxu0 0.0
    %v2656 = vand.u32 %v760, 4294901760
    %2657 = vmatpush.msra.mxu0 %v2656
    %v2658 = vand.u32 %v811, 4294901760
    %v2659 = vsub.f32 %v811, %v2658
    %v2660 = vand.u32 %v2659, 4294901760
    %2661 = vmatmul.f32.gmra.mxu0 %v2660
    %v2662 = vpop.f32.mrf.mxu0
    %v2663 = vadd.f32 %v2639, %v2662
    %2664 = vdwg.mxu0
    %2665 = vmatpush.msra.mxu0 0.0
    %2666 = vmatpush.msra.mxu0 0.0
    %2667 = vmatpush.msra.mxu0 0.0
    %2668 = vmatpush.msra.mxu0 0.0
    %2669 = vmatpush.msra.mxu0 0.0
    %2670 = vmatpush.msra.mxu0 0.0
    %2671 = vmatpush.msra.mxu0 0.0
    %2672 = vmatpush.msra.mxu0 0.0
    %2673 = vmatpush.msra.mxu0 0.0
    %2674 = vmatpush.msra.mxu0 0.0
    %2675 = vmatpush.msra.mxu0 0.0
    %2676 = vmatpush.msra.mxu0 0.0
    %2677 = vmatpush.msra.mxu0 0.0
    %2678 = vmatpush.msra.mxu0 0.0
    %2679 = vmatpush.msra.mxu0 0.0
    %v2680 = vand.u32 %v760, 4294901760
    %v2681 = vsub.f32 %v760, %v2680
    %v2682 = vand.u32 %v2681, 4294901760
    %2683 = vmatpush.msra.mxu0 %v2682
    %v2684 = vand.u32 %v811, 4294901760
    %2685 = vmatmul.f32.gmra.mxu0 %v2684
    %v2686 = vpop.f32.mrf.mxu0
    %v2687 = vadd.f32 %v2663, %v2686
    %2688 = vdwg.mxu0
    %2689 = vmatpush.msra.mxu0 0.0
    %2690 = vmatpush.msra.mxu0 0.0
    %2691 = vmatpush.msra.mxu0 0.0
    %2692 = vmatpush.msra.mxu0 0.0
    %2693 = vmatpush.msra.mxu0 0.0
    %2694 = vmatpush.msra.mxu0 0.0
    %2695 = vmatpush.msra.mxu0 0.0
    %2696 = vmatpush.msra.mxu0 0.0
    %2697 = vmatpush.msra.mxu0 0.0
    %2698 = vmatpush.msra.mxu0 0.0
    %2699 = vmatpush.msra.mxu0 0.0
    %2700 = vmatpush.msra.mxu0 0.0
    %2701 = vmatpush.msra.mxu0 0.0
    %2702 = vmatpush.msra.mxu0 0.0
    %2703 = vmatpush.msra.mxu0 0.0
    %v2704 = vand.u32 %v760, 4294901760
    %2705 = vmatpush.msra.mxu0 %v2704
    %v2706 = vand.u32 %v811, 4294901760
    %2707 = vmatmul.f32.gmra.mxu0 %v2706
    %v2708 = vpop.f32.mrf.mxu0
    %v2709 = vadd.f32 %v2687, %v2708
    %2710 = vdwg.mxu0
    %2711 = vmatpush.msra.mxu0 0.0
    %2712 = vmatpush.msra.mxu0 0.0
    %2713 = vmatpush.msra.mxu0 0.0
    %2714 = vmatpush.msra.mxu0 0.0
    %2715 = vmatpush.msra.mxu0 0.0
    %2716 = vmatpush.msra.mxu0 0.0
    %2717 = vmatpush.msra.mxu0 0.0
    %2718 = vmatpush.msra.mxu0 0.0
    %2719 = vmatpush.msra.mxu0 0.0
    %2720 = vmatpush.msra.mxu0 0.0
    %2721 = vmatpush.msra.mxu0 0.0
    %2722 = vmatpush.msra.mxu0 0.0
    %2723 = vmatpush.msra.mxu0 0.0
    %2724 = vmatpush.msra.mxu0 0.0
    %2725 = vmatpush.msra.mxu0 0.0
    %v2726 = vand.u32 %v761, 4294901760
    %2727 = vmatpush.msra.mxu0 %v2726
    %v2728 = vand.u32 %v811, 4294901760
    %v2729 = vsub.f32 %v811, %v2728
    %v2730 = vand.u32 %v2729, 4294901760
    %v2731 = vsub.f32 %v2729, %v2730
    %v2732 = vand.u32 %v2731, 4294901760
    %2733 = vmatmul.f32.gmra.mxu0 %v2732
    %v2734 = vpop.f32.mrf.mxu0
    %v2735 = vadd.f32 0.0, %v2734
    %2736 = vdwg.mxu0
    %2737 = vmatpush.msra.mxu0 0.0
    %2738 = vmatpush.msra.mxu0 0.0
    %2739 = vmatpush.msra.mxu0 0.0
    %2740 = vmatpush.msra.mxu0 0.0
    %2741 = vmatpush.msra.mxu0 0.0
    %2742 = vmatpush.msra.mxu0 0.0
    %2743 = vmatpush.msra.mxu0 0.0
    %2744 = vmatpush.msra.mxu0 0.0
    %2745 = vmatpush.msra.mxu0 0.0
    %2746 = vmatpush.msra.mxu0 0.0
    %2747 = vmatpush.msra.mxu0 0.0
    %2748 = vmatpush.msra.mxu0 0.0
    %2749 = vmatpush.msra.mxu0 0.0
    %2750 = vmatpush.msra.mxu0 0.0
    %2751 = vmatpush.msra.mxu0 0.0
    %v2752 = vand.u32 %v761, 4294901760
    %v2753 = vsub.f32 %v761, %v2752
    %v2754 = vand.u32 %v2753, 4294901760
    %v2755 = vsub.f32 %v2753, %v2754
    %v2756 = vand.u32 %v2755, 4294901760
    %2757 = vmatpush.msra.mxu0 %v2756
    %v2758 = vand.u32 %v811, 4294901760
    %2759 = vmatmul.f32.gmra.mxu0 %v2758
    %v2760 = vpop.f32.mrf.mxu0
    %v2761 = vadd.f32 %v2735, %v2760
    %2762 = vdwg.mxu0
    %2763 = vmatpush.msra.mxu0 0.0
    %2764 = vmatpush.msra.mxu0 0.0
    %2765 = vmatpush.msra.mxu0 0.0
    %2766 = vmatpush.msra.mxu0 0.0
    %2767 = vmatpush.msra.mxu0 0.0
    %2768 = vmatpush.msra.mxu0 0.0
    %2769 = vmatpush.msra.mxu0 0.0
    %2770 = vmatpush.msra.mxu0 0.0
    %2771 = vmatpush.msra.mxu0 0.0
    %2772 = vmatpush.msra.mxu0 0.0
    %2773 = vmatpush.msra.mxu0 0.0
    %2774 = vmatpush.msra.mxu0 0.0
    %2775 = vmatpush.msra.mxu0 0.0
    %2776 = vmatpush.msra.mxu0 0.0
    %2777 = vmatpush.msra.mxu0 0.0
    %v2778 = vand.u32 %v761, 4294901760
    %v2779 = vsub.f32 %v761, %v2778
    %2780 = vmatpush.msra.mxu0 %v2779
    %v2781 = vand.u32 %v811, 4294901760
    %v2782 = vsub.f32 %v811, %v2781
    %2783 = vmatmul.f32.gmra.mxu0 %v2782
    %v2784 = vpop.f32.mrf.mxu0
    %v2785 = vadd.f32 %v2761, %v2784
    %2786 = vdwg.mxu0
    %2787 = vmatpush.msra.mxu0 0.0
    %2788 = vmatpush.msra.mxu0 0.0
    %2789 = vmatpush.msra.mxu0 0.0
    %2790 = vmatpush.msra.mxu0 0.0
    %2791 = vmatpush.msra.mxu0 0.0
    %2792 = vmatpush.msra.mxu0 0.0
    %2793 = vmatpush.msra.mxu0 0.0
    %2794 = vmatpush.msra.mxu0 0.0
    %2795 = vmatpush.msra.mxu0 0.0
    %2796 = vmatpush.msra.mxu0 0.0
    %2797 = vmatpush.msra.mxu0 0.0
    %2798 = vmatpush.msra.mxu0 0.0
    %2799 = vmatpush.msra.mxu0 0.0
    %2800 = vmatpush.msra.mxu0 0.0
    %2801 = vmatpush.msra.mxu0 0.0
    %v2802 = vand.u32 %v761, 4294901760
    %2803 = vmatpush.msra.mxu0 %v2802
    %v2804 = vand.u32 %v811, 4294901760
    %v2805 = vsub.f32 %v811, %v2804
    %v2806 = vand.u32 %v2805, 4294901760
    %2807 = vmatmul.f32.gmra.mxu0 %v2806
    %v2808 = vpop.f32.mrf.mxu0
    %v2809 = vadd.f32 %v2785, %v2808
    %2810 = vdwg.mxu0
    %2811 = vmatpush.msra.mxu0 0.0
    %2812 = vmatpush.msra.mxu0 0.0
    %2813 = vmatpush.msra.mxu0 0.0
    %2814 = vmatpush.msra.mxu0 0.0
    %2815 = vmatpush.msra.mxu0 0.0
    %2816 = vmatpush.msra.mxu0 0.0
    %2817 = vmatpush.msra.mxu0 0.0
    %2818 = vmatpush.msra.mxu0 0.0
    %2819 = vmatpush.msra.mxu0 0.0
    %2820 = vmatpush.msra.mxu0 0.0
    %2821 = vmatpush.msra.mxu0 0.0
    %2822 = vmatpush.msra.mxu0 0.0
    %2823 = vmatpush.msra.mxu0 0.0
    %2824 = vmatpush.msra.mxu0 0.0
    %2825 = vmatpush.msra.mxu0 0.0
    %v2826 = vand.u32 %v761, 4294901760
    %v2827 = vsub.f32 %v761, %v2826
    %v2828 = vand.u32 %v2827, 4294901760
    %2829 = vmatpush.msra.mxu0 %v2828
    %v2830 = vand.u32 %v811, 4294901760
    %2831 = vmatmul.f32.gmra.mxu0 %v2830
    %v2832 = vpop.f32.mrf.mxu0
    %v2833 = vadd.f32 %v2809, %v2832
    %2834 = vdwg.mxu0
    %2835 = vmatpush.msra.mxu0 0.0
    %2836 = vmatpush.msra.mxu0 0.0
    %2837 = vmatpush.msra.mxu0 0.0
    %2838 = vmatpush.msra.mxu0 0.0
    %2839 = vmatpush.msra.mxu0 0.0
    %2840 = vmatpush.msra.mxu0 0.0
    %2841 = vmatpush.msra.mxu0 0.0
    %2842 = vmatpush.msra.mxu0 0.0
    %2843 = vmatpush.msra.mxu0 0.0
    %2844 = vmatpush.msra.mxu0 0.0
    %2845 = vmatpush.msra.mxu0 0.0
    %2846 = vmatpush.msra.mxu0 0.0
    %2847 = vmatpush.msra.mxu0 0.0
    %2848 = vmatpush.msra.mxu0 0.0
    %2849 = vmatpush.msra.mxu0 0.0
    %v2850 = vand.u32 %v761, 4294901760
    %2851 = vmatpush.msra.mxu0 %v2850
    %v2852 = vand.u32 %v811, 4294901760
    %2853 = vmatmul.f32.gmra.mxu0 %v2852
    %v2854 = vpop.f32.mrf.mxu0
    %v2855 = vadd.f32 %v2833, %v2854
    %2856 = vdwg.mxu0
    %2857 = vmatpush.msra.mxu0 0.0
    %2858 = vmatpush.msra.mxu0 0.0
    %2859 = vmatpush.msra.mxu0 0.0
    %2860 = vmatpush.msra.mxu0 0.0
    %2861 = vmatpush.msra.mxu0 0.0
    %2862 = vmatpush.msra.mxu0 0.0
    %2863 = vmatpush.msra.mxu0 0.0
    %2864 = vmatpush.msra.mxu0 0.0
    %2865 = vmatpush.msra.mxu0 0.0
    %2866 = vmatpush.msra.mxu0 0.0
    %2867 = vmatpush.msra.mxu0 0.0
    %2868 = vmatpush.msra.mxu0 0.0
    %2869 = vmatpush.msra.mxu0 0.0
    %2870 = vmatpush.msra.mxu0 0.0
    %2871 = vmatpush.msra.mxu0 0.0
    %v2872 = vand.u32 %v762, 4294901760
    %2873 = vmatpush.msra.mxu0 %v2872
    %v2874 = vand.u32 %v811, 4294901760
    %v2875 = vsub.f32 %v811, %v2874
    %v2876 = vand.u32 %v2875, 4294901760
    %v2877 = vsub.f32 %v2875, %v2876
    %v2878 = vand.u32 %v2877, 4294901760
    %2879 = vmatmul.f32.gmra.mxu0 %v2878
    %v2880 = vpop.f32.mrf.mxu0
    %v2881 = vadd.f32 0.0, %v2880
    %2882 = vdwg.mxu0
    %2883 = vmatpush.msra.mxu0 0.0
    %2884 = vmatpush.msra.mxu0 0.0
    %2885 = vmatpush.msra.mxu0 0.0
    %2886 = vmatpush.msra.mxu0 0.0
    %2887 = vmatpush.msra.mxu0 0.0
    %2888 = vmatpush.msra.mxu0 0.0
    %2889 = vmatpush.msra.mxu0 0.0
    %2890 = vmatpush.msra.mxu0 0.0
    %2891 = vmatpush.msra.mxu0 0.0
    %2892 = vmatpush.msra.mxu0 0.0
    %2893 = vmatpush.msra.mxu0 0.0
    %2894 = vmatpush.msra.mxu0 0.0
    %2895 = vmatpush.msra.mxu0 0.0
    %2896 = vmatpush.msra.mxu0 0.0
    %2897 = vmatpush.msra.mxu0 0.0
    %v2898 = vand.u32 %v762, 4294901760
    %v2899 = vsub.f32 %v762, %v2898
    %v2900 = vand.u32 %v2899, 4294901760
    %v2901 = vsub.f32 %v2899, %v2900
    %v2902 = vand.u32 %v2901, 4294901760
    %2903 = vmatpush.msra.mxu0 %v2902
    %v2904 = vand.u32 %v811, 4294901760
    %2905 = vmatmul.f32.gmra.mxu0 %v2904
    %v2906 = vpop.f32.mrf.mxu0
    %v2907 = vadd.f32 %v2881, %v2906
    %2908 = vdwg.mxu0
    %2909 = vmatpush.msra.mxu0 0.0
    %2910 = vmatpush.msra.mxu0 0.0
    %2911 = vmatpush.msra.mxu0 0.0
    %2912 = vmatpush.msra.mxu0 0.0
    %2913 = vmatpush.msra.mxu0 0.0
    %2914 = vmatpush.msra.mxu0 0.0
    %2915 = vmatpush.msra.mxu0 0.0
    %2916 = vmatpush.msra.mxu0 0.0
    %2917 = vmatpush.msra.mxu0 0.0
    %2918 = vmatpush.msra.mxu0 0.0
    %2919 = vmatpush.msra.mxu0 0.0
    %2920 = vmatpush.msra.mxu0 0.0
    %2921 = vmatpush.msra.mxu0 0.0
    %2922 = vmatpush.msra.mxu0 0.0
    %2923 = vmatpush.msra.mxu0 0.0
    %v2924 = vand.u32 %v762, 4294901760
    %v2925 = vsub.f32 %v762, %v2924
    %2926 = vmatpush.msra.mxu0 %v2925
    %v2927 = vand.u32 %v811, 4294901760
    %v2928 = vsub.f32 %v811, %v2927
    %2929 = vmatmul.f32.gmra.mxu0 %v2928
    %v2930 = vpop.f32.mrf.mxu0
    %v2931 = vadd.f32 %v2907, %v2930
    %2932 = vdwg.mxu0
    %2933 = vmatpush.msra.mxu0 0.0
    %2934 = vmatpush.msra.mxu0 0.0
    %2935 = vmatpush.msra.mxu0 0.0
    %2936 = vmatpush.msra.mxu0 0.0
    %2937 = vmatpush.msra.mxu0 0.0
    %2938 = vmatpush.msra.mxu0 0.0
    %2939 = vmatpush.msra.mxu0 0.0
    %2940 = vmatpush.msra.mxu0 0.0
    %2941 = vmatpush.msra.mxu0 0.0
    %2942 = vmatpush.msra.mxu0 0.0
    %2943 = vmatpush.msra.mxu0 0.0
    %2944 = vmatpush.msra.mxu0 0.0
    %2945 = vmatpush.msra.mxu0 0.0
    %2946 = vmatpush.msra.mxu0 0.0
    %2947 = vmatpush.msra.mxu0 0.0
    %v2948 = vand.u32 %v762, 4294901760
    %2949 = vmatpush.msra.mxu0 %v2948
    %v2950 = vand.u32 %v811, 4294901760
    %v2951 = vsub.f32 %v811, %v2950
    %v2952 = vand.u32 %v2951, 4294901760
    %2953 = vmatmul.f32.gmra.mxu0 %v2952
    %v2954 = vpop.f32.mrf.mxu0
    %v2955 = vadd.f32 %v2931, %v2954
    %2956 = vdwg.mxu0
    %2957 = vmatpush.msra.mxu0 0.0
    %2958 = vmatpush.msra.mxu0 0.0
    %2959 = vmatpush.msra.mxu0 0.0
    %2960 = vmatpush.msra.mxu0 0.0
    %2961 = vmatpush.msra.mxu0 0.0
    %2962 = vmatpush.msra.mxu0 0.0
    %2963 = vmatpush.msra.mxu0 0.0
    %2964 = vmatpush.msra.mxu0 0.0
    %2965 = vmatpush.msra.mxu0 0.0
    %2966 = vmatpush.msra.mxu0 0.0
    %2967 = vmatpush.msra.mxu0 0.0
    %2968 = vmatpush.msra.mxu0 0.0
    %2969 = vmatpush.msra.mxu0 0.0
    %2970 = vmatpush.msra.mxu0 0.0
    %2971 = vmatpush.msra.mxu0 0.0
    %v2972 = vand.u32 %v762, 4294901760
    %v2973 = vsub.f32 %v762, %v2972
    %v2974 = vand.u32 %v2973, 4294901760
    %2975 = vmatpush.msra.mxu0 %v2974
    %v2976 = vand.u32 %v811, 4294901760
    %2977 = vmatmul.f32.gmra.mxu0 %v2976
    %v2978 = vpop.f32.mrf.mxu0
    %v2979 = vadd.f32 %v2955, %v2978
    %2980 = vdwg.mxu0
    %2981 = vmatpush.msra.mxu0 0.0
    %2982 = vmatpush.msra.mxu0 0.0
    %2983 = vmatpush.msra.mxu0 0.0
    %2984 = vmatpush.msra.mxu0 0.0
    %2985 = vmatpush.msra.mxu0 0.0
    %2986 = vmatpush.msra.mxu0 0.0
    %2987 = vmatpush.msra.mxu0 0.0
    %2988 = vmatpush.msra.mxu0 0.0
    %2989 = vmatpush.msra.mxu0 0.0
    %2990 = vmatpush.msra.mxu0 0.0
    %2991 = vmatpush.msra.mxu0 0.0
    %2992 = vmatpush.msra.mxu0 0.0
    %2993 = vmatpush.msra.mxu0 0.0
    %2994 = vmatpush.msra.mxu0 0.0
    %2995 = vmatpush.msra.mxu0 0.0
    %v2996 = vand.u32 %v762, 4294901760
    %2997 = vmatpush.msra.mxu0 %v2996
    %v2998 = vand.u32 %v811, 4294901760
    %2999 = vmatmul.f32.gmra.mxu0 %v2998
    %v3000 = vpop.f32.mrf.mxu0
    %v3001 = vadd.f32 %v2979, %v3000
    %3002 = vdwg.mxu0
    %3003 = vmatpush.msra.mxu0 0.0
    %3004 = vmatpush.msra.mxu0 0.0
    %3005 = vmatpush.msra.mxu0 0.0
    %3006 = vmatpush.msra.mxu0 0.0
    %3007 = vmatpush.msra.mxu0 0.0
    %3008 = vmatpush.msra.mxu0 0.0
    %3009 = vmatpush.msra.mxu0 0.0
    %3010 = vmatpush.msra.mxu0 0.0
    %3011 = vmatpush.msra.mxu0 0.0
    %3012 = vmatpush.msra.mxu0 0.0
    %3013 = vmatpush.msra.mxu0 0.0
    %3014 = vmatpush.msra.mxu0 0.0
    %3015 = vmatpush.msra.mxu0 0.0
    %3016 = vmatpush.msra.mxu0 0.0
    %3017 = vmatpush.msra.mxu0 0.0
    %v3018 = vand.u32 %v763, 4294901760
    %3019 = vmatpush.msra.mxu0 %v3018
    %v3020 = vand.u32 %v811, 4294901760
    %v3021 = vsub.f32 %v811, %v3020
    %v3022 = vand.u32 %v3021, 4294901760
    %v3023 = vsub.f32 %v3021, %v3022
    %v3024 = vand.u32 %v3023, 4294901760
    %3025 = vmatmul.f32.gmra.mxu0 %v3024
    %v3026 = vpop.f32.mrf.mxu0
    %v3027 = vadd.f32 0.0, %v3026
    %3028 = vdwg.mxu0
    %3029 = vmatpush.msra.mxu0 0.0
    %3030 = vmatpush.msra.mxu0 0.0
    %3031 = vmatpush.msra.mxu0 0.0
    %3032 = vmatpush.msra.mxu0 0.0
    %3033 = vmatpush.msra.mxu0 0.0
    %3034 = vmatpush.msra.mxu0 0.0
    %3035 = vmatpush.msra.mxu0 0.0
    %3036 = vmatpush.msra.mxu0 0.0
    %3037 = vmatpush.msra.mxu0 0.0
    %3038 = vmatpush.msra.mxu0 0.0
    %3039 = vmatpush.msra.mxu0 0.0
    %3040 = vmatpush.msra.mxu0 0.0
    %3041 = vmatpush.msra.mxu0 0.0
    %3042 = vmatpush.msra.mxu0 0.0
    %3043 = vmatpush.msra.mxu0 0.0
    %v3044 = vand.u32 %v763, 4294901760
    %v3045 = vsub.f32 %v763, %v3044
    %v3046 = vand.u32 %v3045, 4294901760
    %v3047 = vsub.f32 %v3045, %v3046
    %v3048 = vand.u32 %v3047, 4294901760
    %3049 = vmatpush.msra.mxu0 %v3048
    %v3050 = vand.u32 %v811, 4294901760
    %3051 = vmatmul.f32.gmra.mxu0 %v3050
    %v3052 = vpop.f32.mrf.mxu0
    %v3053 = vadd.f32 %v3027, %v3052
    %3054 = vdwg.mxu0
    %3055 = vmatpush.msra.mxu0 0.0
    %3056 = vmatpush.msra.mxu0 0.0
    %3057 = vmatpush.msra.mxu0 0.0
    %3058 = vmatpush.msra.mxu0 0.0
    %3059 = vmatpush.msra.mxu0 0.0
    %3060 = vmatpush.msra.mxu0 0.0
    %3061 = vmatpush.msra.mxu0 0.0
    %3062 = vmatpush.msra.mxu0 0.0
    %3063 = vmatpush.msra.mxu0 0.0
    %3064 = vmatpush.msra.mxu0 0.0
    %3065 = vmatpush.msra.mxu0 0.0
    %3066 = vmatpush.msra.mxu0 0.0
    %3067 = vmatpush.msra.mxu0 0.0
    %3068 = vmatpush.msra.mxu0 0.0
    %3069 = vmatpush.msra.mxu0 0.0
    %v3070 = vand.u32 %v763, 4294901760
    %v3071 = vsub.f32 %v763, %v3070
    %3072 = vmatpush.msra.mxu0 %v3071
    %v3073 = vand.u32 %v811, 4294901760
    %v3074 = vsub.f32 %v811, %v3073
    %3075 = vmatmul.f32.gmra.mxu0 %v3074
    %v3076 = vpop.f32.mrf.mxu0
    %v3077 = vadd.f32 %v3053, %v3076
    %3078 = vdwg.mxu0
    %3079 = vmatpush.msra.mxu0 0.0
    %3080 = vmatpush.msra.mxu0 0.0
    %3081 = vmatpush.msra.mxu0 0.0
    %3082 = vmatpush.msra.mxu0 0.0
    %3083 = vmatpush.msra.mxu0 0.0
    %3084 = vmatpush.msra.mxu0 0.0
    %3085 = vmatpush.msra.mxu0 0.0
    %3086 = vmatpush.msra.mxu0 0.0
    %3087 = vmatpush.msra.mxu0 0.0
    %3088 = vmatpush.msra.mxu0 0.0
    %3089 = vmatpush.msra.mxu0 0.0
    %3090 = vmatpush.msra.mxu0 0.0
    %3091 = vmatpush.msra.mxu0 0.0
    %3092 = vmatpush.msra.mxu0 0.0
    %3093 = vmatpush.msra.mxu0 0.0
    %v3094 = vand.u32 %v763, 4294901760
    %3095 = vmatpush.msra.mxu0 %v3094
    %v3096 = vand.u32 %v811, 4294901760
    %v3097 = vsub.f32 %v811, %v3096
    %v3098 = vand.u32 %v3097, 4294901760
    %3099 = vmatmul.f32.gmra.mxu0 %v3098
    %v3100 = vpop.f32.mrf.mxu0
    %v3101 = vadd.f32 %v3077, %v3100
    %3102 = vdwg.mxu0
    %3103 = vmatpush.msra.mxu0 0.0
    %3104 = vmatpush.msra.mxu0 0.0
    %3105 = vmatpush.msra.mxu0 0.0
    %3106 = vmatpush.msra.mxu0 0.0
    %3107 = vmatpush.msra.mxu0 0.0
    %3108 = vmatpush.msra.mxu0 0.0
    %3109 = vmatpush.msra.mxu0 0.0
    %3110 = vmatpush.msra.mxu0 0.0
    %3111 = vmatpush.msra.mxu0 0.0
    %3112 = vmatpush.msra.mxu0 0.0
    %3113 = vmatpush.msra.mxu0 0.0
    %3114 = vmatpush.msra.mxu0 0.0
    %3115 = vmatpush.msra.mxu0 0.0
    %3116 = vmatpush.msra.mxu0 0.0
    %3117 = vmatpush.msra.mxu0 0.0
    %v3118 = vand.u32 %v763, 4294901760
    %v3119 = vsub.f32 %v763, %v3118
    %v3120 = vand.u32 %v3119, 4294901760
    %3121 = vmatpush.msra.mxu0 %v3120
    %v3122 = vand.u32 %v811, 4294901760
    %3123 = vmatmul.f32.gmra.mxu0 %v3122
    %v3124 = vpop.f32.mrf.mxu0
    %v3125 = vadd.f32 %v3101, %v3124
    %3126 = vdwg.mxu0
    %3127 = vmatpush.msra.mxu0 0.0
    %3128 = vmatpush.msra.mxu0 0.0
    %3129 = vmatpush.msra.mxu0 0.0
    %3130 = vmatpush.msra.mxu0 0.0
    %3131 = vmatpush.msra.mxu0 0.0
    %3132 = vmatpush.msra.mxu0 0.0
    %3133 = vmatpush.msra.mxu0 0.0
    %3134 = vmatpush.msra.mxu0 0.0
    %3135 = vmatpush.msra.mxu0 0.0
    %3136 = vmatpush.msra.mxu0 0.0
    %3137 = vmatpush.msra.mxu0 0.0
    %3138 = vmatpush.msra.mxu0 0.0
    %3139 = vmatpush.msra.mxu0 0.0
    %3140 = vmatpush.msra.mxu0 0.0
    %3141 = vmatpush.msra.mxu0 0.0
    %v3142 = vand.u32 %v763, 4294901760
    %3143 = vmatpush.msra.mxu0 %v3142
    %v3144 = vand.u32 %v811, 4294901760
    %3145 = vmatmul.f32.gmra.mxu0 %v3144
    %v3146 = vpop.f32.mrf.mxu0
    %v3147 = vadd.f32 %v3125, %v3146
    %3148 = vdwg.mxu0
    %3149 = vmatpush.msra.mxu0 0.0
    %3150 = vmatpush.msra.mxu0 0.0
    %3151 = vmatpush.msra.mxu0 0.0
    %3152 = vmatpush.msra.mxu0 0.0
    %3153 = vmatpush.msra.mxu0 0.0
    %3154 = vmatpush.msra.mxu0 0.0
    %3155 = vmatpush.msra.mxu0 0.0
    %3156 = vmatpush.msra.mxu0 0.0
    %3157 = vmatpush.msra.mxu0 0.0
    %3158 = vmatpush.msra.mxu0 0.0
    %3159 = vmatpush.msra.mxu0 0.0
    %3160 = vmatpush.msra.mxu0 0.0
    %3161 = vmatpush.msra.mxu0 0.0
    %3162 = vmatpush.msra.mxu0 0.0
    %3163 = vmatpush.msra.mxu0 0.0
    %v3164 = vand.u32 %v764, 4294901760
    %3165 = vmatpush.msra.mxu0 %v3164
    %v3166 = vand.u32 %v811, 4294901760
    %v3167 = vsub.f32 %v811, %v3166
    %v3168 = vand.u32 %v3167, 4294901760
    %v3169 = vsub.f32 %v3167, %v3168
    %v3170 = vand.u32 %v3169, 4294901760
    %3171 = vmatmul.f32.gmra.mxu0 %v3170
    %v3172 = vpop.f32.mrf.mxu0
    %v3173 = vadd.f32 0.0, %v3172
    %3174 = vdwg.mxu0
    %3175 = vmatpush.msra.mxu0 0.0
    %3176 = vmatpush.msra.mxu0 0.0
    %3177 = vmatpush.msra.mxu0 0.0
    %3178 = vmatpush.msra.mxu0 0.0
    %3179 = vmatpush.msra.mxu0 0.0
    %3180 = vmatpush.msra.mxu0 0.0
    %3181 = vmatpush.msra.mxu0 0.0
    %3182 = vmatpush.msra.mxu0 0.0
    %3183 = vmatpush.msra.mxu0 0.0
    %3184 = vmatpush.msra.mxu0 0.0
    %3185 = vmatpush.msra.mxu0 0.0
    %3186 = vmatpush.msra.mxu0 0.0
    %3187 = vmatpush.msra.mxu0 0.0
    %3188 = vmatpush.msra.mxu0 0.0
    %3189 = vmatpush.msra.mxu0 0.0
    %v3190 = vand.u32 %v764, 4294901760
    %v3191 = vsub.f32 %v764, %v3190
    %v3192 = vand.u32 %v3191, 4294901760
    %v3193 = vsub.f32 %v3191, %v3192
    %v3194 = vand.u32 %v3193, 4294901760
    %3195 = vmatpush.msra.mxu0 %v3194
    %v3196 = vand.u32 %v811, 4294901760
    %3197 = vmatmul.f32.gmra.mxu0 %v3196
    %v3198 = vpop.f32.mrf.mxu0
    %v3199 = vadd.f32 %v3173, %v3198
    %3200 = vdwg.mxu0
    %3201 = vmatpush.msra.mxu0 0.0
    %3202 = vmatpush.msra.mxu0 0.0
    %3203 = vmatpush.msra.mxu0 0.0
    %3204 = vmatpush.msra.mxu0 0.0
    %3205 = vmatpush.msra.mxu0 0.0
    %3206 = vmatpush.msra.mxu0 0.0
    %3207 = vmatpush.msra.mxu0 0.0
    %3208 = vmatpush.msra.mxu0 0.0
    %3209 = vmatpush.msra.mxu0 0.0
    %3210 = vmatpush.msra.mxu0 0.0
    %3211 = vmatpush.msra.mxu0 0.0
    %3212 = vmatpush.msra.mxu0 0.0
    %3213 = vmatpush.msra.mxu0 0.0
    %3214 = vmatpush.msra.mxu0 0.0
    %3215 = vmatpush.msra.mxu0 0.0
    %v3216 = vand.u32 %v764, 4294901760
    %v3217 = vsub.f32 %v764, %v3216
    %3218 = vmatpush.msra.mxu0 %v3217
    %v3219 = vand.u32 %v811, 4294901760
    %v3220 = vsub.f32 %v811, %v3219
    %3221 = vmatmul.f32.gmra.mxu0 %v3220
    %v3222 = vpop.f32.mrf.mxu0
    %v3223 = vadd.f32 %v3199, %v3222
    %3224 = vdwg.mxu0
    %3225 = vmatpush.msra.mxu0 0.0
    %3226 = vmatpush.msra.mxu0 0.0
    %3227 = vmatpush.msra.mxu0 0.0
    %3228 = vmatpush.msra.mxu0 0.0
    %3229 = vmatpush.msra.mxu0 0.0
    %3230 = vmatpush.msra.mxu0 0.0
    %3231 = vmatpush.msra.mxu0 0.0
    %3232 = vmatpush.msra.mxu0 0.0
    %3233 = vmatpush.msra.mxu0 0.0
    %3234 = vmatpush.msra.mxu0 0.0
    %3235 = vmatpush.msra.mxu0 0.0
    %3236 = vmatpush.msra.mxu0 0.0
    %3237 = vmatpush.msra.mxu0 0.0
    %3238 = vmatpush.msra.mxu0 0.0
    %3239 = vmatpush.msra.mxu0 0.0
    %v3240 = vand.u32 %v764, 4294901760
    %3241 = vmatpush.msra.mxu0 %v3240
    %v3242 = vand.u32 %v811, 4294901760
    %v3243 = vsub.f32 %v811, %v3242
    %v3244 = vand.u32 %v3243, 4294901760
    %3245 = vmatmul.f32.gmra.mxu0 %v3244
    %v3246 = vpop.f32.mrf.mxu0
    %v3247 = vadd.f32 %v3223, %v3246
    %3248 = vdwg.mxu0
    %3249 = vmatpush.msra.mxu0 0.0
    %3250 = vmatpush.msra.mxu0 0.0
    %3251 = vmatpush.msra.mxu0 0.0
    %3252 = vmatpush.msra.mxu0 0.0
    %3253 = vmatpush.msra.mxu0 0.0
    %3254 = vmatpush.msra.mxu0 0.0
    %3255 = vmatpush.msra.mxu0 0.0
    %3256 = vmatpush.msra.mxu0 0.0
    %3257 = vmatpush.msra.mxu0 0.0
    %3258 = vmatpush.msra.mxu0 0.0
    %3259 = vmatpush.msra.mxu0 0.0
    %3260 = vmatpush.msra.mxu0 0.0
    %3261 = vmatpush.msra.mxu0 0.0
    %3262 = vmatpush.msra.mxu0 0.0
    %3263 = vmatpush.msra.mxu0 0.0
    %v3264 = vand.u32 %v764, 4294901760
    %v3265 = vsub.f32 %v764, %v3264
    %v3266 = vand.u32 %v3265, 4294901760
    %3267 = vmatpush.msra.mxu0 %v3266
    %v3268 = vand.u32 %v811, 4294901760
    %3269 = vmatmul.f32.gmra.mxu0 %v3268
    %v3270 = vpop.f32.mrf.mxu0
    %v3271 = vadd.f32 %v3247, %v3270
    %3272 = vdwg.mxu0
    %3273 = vmatpush.msra.mxu0 0.0
    %3274 = vmatpush.msra.mxu0 0.0
    %3275 = vmatpush.msra.mxu0 0.0
    %3276 = vmatpush.msra.mxu0 0.0
    %3277 = vmatpush.msra.mxu0 0.0
    %3278 = vmatpush.msra.mxu0 0.0
    %3279 = vmatpush.msra.mxu0 0.0
    %3280 = vmatpush.msra.mxu0 0.0
    %3281 = vmatpush.msra.mxu0 0.0
    %3282 = vmatpush.msra.mxu0 0.0
    %3283 = vmatpush.msra.mxu0 0.0
    %3284 = vmatpush.msra.mxu0 0.0
    %3285 = vmatpush.msra.mxu0 0.0
    %3286 = vmatpush.msra.mxu0 0.0
    %3287 = vmatpush.msra.mxu0 0.0
    %v3288 = vand.u32 %v764, 4294901760
    %3289 = vmatpush.msra.mxu0 %v3288
    %v3290 = vand.u32 %v811, 4294901760
    %3291 = vmatmul.f32.gmra.mxu0 %v3290
    %v3292 = vpop.f32.mrf.mxu0
    %v3293 = vadd.f32 %v3271, %v3292
    %3294 = vdwg.mxu0
    %3295 = vmatpush.msra.mxu0 0.0
    %3296 = vmatpush.msra.mxu0 0.0
    %3297 = vmatpush.msra.mxu0 0.0
    %3298 = vmatpush.msra.mxu0 0.0
    %3299 = vmatpush.msra.mxu0 0.0
    %3300 = vmatpush.msra.mxu0 0.0
    %3301 = vmatpush.msra.mxu0 0.0
    %3302 = vmatpush.msra.mxu0 0.0
    %3303 = vmatpush.msra.mxu0 0.0
    %3304 = vmatpush.msra.mxu0 0.0
    %3305 = vmatpush.msra.mxu0 0.0
    %3306 = vmatpush.msra.mxu0 0.0
    %3307 = vmatpush.msra.mxu0 0.0
    %3308 = vmatpush.msra.mxu0 0.0
    %3309 = vmatpush.msra.mxu0 0.0
    %v3310 = vand.u32 %v765, 4294901760
    %3311 = vmatpush.msra.mxu0 %v3310
    %v3312 = vand.u32 %v811, 4294901760
    %v3313 = vsub.f32 %v811, %v3312
    %v3314 = vand.u32 %v3313, 4294901760
    %v3315 = vsub.f32 %v3313, %v3314
    %v3316 = vand.u32 %v3315, 4294901760
    %3317 = vmatmul.f32.gmra.mxu0 %v3316
    %v3318 = vpop.f32.mrf.mxu0
    %v3319 = vadd.f32 0.0, %v3318
    %3320 = vdwg.mxu0
    %3321 = vmatpush.msra.mxu0 0.0
    %3322 = vmatpush.msra.mxu0 0.0
    %3323 = vmatpush.msra.mxu0 0.0
    %3324 = vmatpush.msra.mxu0 0.0
    %3325 = vmatpush.msra.mxu0 0.0
    %3326 = vmatpush.msra.mxu0 0.0
    %3327 = vmatpush.msra.mxu0 0.0
    %3328 = vmatpush.msra.mxu0 0.0
    %3329 = vmatpush.msra.mxu0 0.0
    %3330 = vmatpush.msra.mxu0 0.0
    %3331 = vmatpush.msra.mxu0 0.0
    %3332 = vmatpush.msra.mxu0 0.0
    %3333 = vmatpush.msra.mxu0 0.0
    %3334 = vmatpush.msra.mxu0 0.0
    %3335 = vmatpush.msra.mxu0 0.0
    %v3336 = vand.u32 %v765, 4294901760
    %v3337 = vsub.f32 %v765, %v3336
    %v3338 = vand.u32 %v3337, 4294901760
    %v3339 = vsub.f32 %v3337, %v3338
    %v3340 = vand.u32 %v3339, 4294901760
    %3341 = vmatpush.msra.mxu0 %v3340
    %v3342 = vand.u32 %v811, 4294901760
    %3343 = vmatmul.f32.gmra.mxu0 %v3342
    %v3344 = vpop.f32.mrf.mxu0
    %v3345 = vadd.f32 %v3319, %v3344
    %3346 = vdwg.mxu0
    %3347 = vmatpush.msra.mxu0 0.0
    %3348 = vmatpush.msra.mxu0 0.0
    %3349 = vmatpush.msra.mxu0 0.0
    %3350 = vmatpush.msra.mxu0 0.0
    %3351 = vmatpush.msra.mxu0 0.0
    %3352 = vmatpush.msra.mxu0 0.0
    %3353 = vmatpush.msra.mxu0 0.0
    %3354 = vmatpush.msra.mxu0 0.0
    %3355 = vmatpush.msra.mxu0 0.0
    %3356 = vmatpush.msra.mxu0 0.0
    %3357 = vmatpush.msra.mxu0 0.0
    %3358 = vmatpush.msra.mxu0 0.0
    %3359 = vmatpush.msra.mxu0 0.0
    %3360 = vmatpush.msra.mxu0 0.0
    %3361 = vmatpush.msra.mxu0 0.0
    %v3362 = vand.u32 %v765, 4294901760
    %v3363 = vsub.f32 %v765, %v3362
    %3364 = vmatpush.msra.mxu0 %v3363
    %v3365 = vand.u32 %v811, 4294901760
    %v3366 = vsub.f32 %v811, %v3365
    %3367 = vmatmul.f32.gmra.mxu0 %v3366
    %v3368 = vpop.f32.mrf.mxu0
    %v3369 = vadd.f32 %v3345, %v3368
    %3370 = vdwg.mxu0
    %3371 = vmatpush.msra.mxu0 0.0
    %3372 = vmatpush.msra.mxu0 0.0
    %3373 = vmatpush.msra.mxu0 0.0
    %3374 = vmatpush.msra.mxu0 0.0
    %3375 = vmatpush.msra.mxu0 0.0
    %3376 = vmatpush.msra.mxu0 0.0
    %3377 = vmatpush.msra.mxu0 0.0
    %3378 = vmatpush.msra.mxu0 0.0
    %3379 = vmatpush.msra.mxu0 0.0
    %3380 = vmatpush.msra.mxu0 0.0
    %3381 = vmatpush.msra.mxu0 0.0
    %3382 = vmatpush.msra.mxu0 0.0
    %3383 = vmatpush.msra.mxu0 0.0
    %3384 = vmatpush.msra.mxu0 0.0
    %3385 = vmatpush.msra.mxu0 0.0
    %v3386 = vand.u32 %v765, 4294901760
    %3387 = vmatpush.msra.mxu0 %v3386
    %v3388 = vand.u32 %v811, 4294901760
    %v3389 = vsub.f32 %v811, %v3388
    %v3390 = vand.u32 %v3389, 4294901760
    %3391 = vmatmul.f32.gmra.mxu0 %v3390
    %v3392 = vpop.f32.mrf.mxu0
    %v3393 = vadd.f32 %v3369, %v3392
    %3394 = vdwg.mxu0
    %3395 = vmatpush.msra.mxu0 0.0
    %3396 = vmatpush.msra.mxu0 0.0
    %3397 = vmatpush.msra.mxu0 0.0
    %3398 = vmatpush.msra.mxu0 0.0
    %3399 = vmatpush.msra.mxu0 0.0
    %3400 = vmatpush.msra.mxu0 0.0
    %3401 = vmatpush.msra.mxu0 0.0
    %3402 = vmatpush.msra.mxu0 0.0
    %3403 = vmatpush.msra.mxu0 0.0
    %3404 = vmatpush.msra.mxu0 0.0
    %3405 = vmatpush.msra.mxu0 0.0
    %3406 = vmatpush.msra.mxu0 0.0
    %3407 = vmatpush.msra.mxu0 0.0
    %3408 = vmatpush.msra.mxu0 0.0
    %3409 = vmatpush.msra.mxu0 0.0
    %v3410 = vand.u32 %v765, 4294901760
    %v3411 = vsub.f32 %v765, %v3410
    %v3412 = vand.u32 %v3411, 4294901760
    %3413 = vmatpush.msra.mxu0 %v3412
    %v3414 = vand.u32 %v811, 4294901760
    %3415 = vmatmul.f32.gmra.mxu0 %v3414
    %v3416 = vpop.f32.mrf.mxu0
    %v3417 = vadd.f32 %v3393, %v3416
    %3418 = vdwg.mxu0
    %3419 = vmatpush.msra.mxu0 0.0
    %3420 = vmatpush.msra.mxu0 0.0
    %3421 = vmatpush.msra.mxu0 0.0
    %3422 = vmatpush.msra.mxu0 0.0
    %3423 = vmatpush.msra.mxu0 0.0
    %3424 = vmatpush.msra.mxu0 0.0
    %3425 = vmatpush.msra.mxu0 0.0
    %3426 = vmatpush.msra.mxu0 0.0
    %3427 = vmatpush.msra.mxu0 0.0
    %3428 = vmatpush.msra.mxu0 0.0
    %3429 = vmatpush.msra.mxu0 0.0
    %3430 = vmatpush.msra.mxu0 0.0
    %3431 = vmatpush.msra.mxu0 0.0
    %3432 = vmatpush.msra.mxu0 0.0
    %3433 = vmatpush.msra.mxu0 0.0
    %v3434 = vand.u32 %v765, 4294901760
    %3435 = vmatpush.msra.mxu0 %v3434
    %v3436 = vand.u32 %v811, 4294901760
    %3437 = vmatmul.f32.gmra.mxu0 %v3436
    %v3438 = vpop.f32.mrf.mxu0
    %v3439 = vadd.f32 %v3417, %v3438
    %3440 = vdwg.mxu0
    %3441 = vmatpush.msra.mxu0 0.0
    %3442 = vmatpush.msra.mxu0 0.0
    %3443 = vmatpush.msra.mxu0 0.0
    %3444 = vmatpush.msra.mxu0 0.0
    %3445 = vmatpush.msra.mxu0 0.0
    %3446 = vmatpush.msra.mxu0 0.0
    %3447 = vmatpush.msra.mxu0 0.0
    %3448 = vmatpush.msra.mxu0 0.0
    %3449 = vmatpush.msra.mxu0 0.0
    %3450 = vmatpush.msra.mxu0 0.0
    %3451 = vmatpush.msra.mxu0 0.0
    %3452 = vmatpush.msra.mxu0 0.0
    %3453 = vmatpush.msra.mxu0 0.0
    %3454 = vmatpush.msra.mxu0 0.0
    %3455 = vmatpush.msra.mxu0 0.0
    %v3456 = vand.u32 %v766, 4294901760
    %3457 = vmatpush.msra.mxu0 %v3456
    %v3458 = vand.u32 %v811, 4294901760
    %v3459 = vsub.f32 %v811, %v3458
    %v3460 = vand.u32 %v3459, 4294901760
    %v3461 = vsub.f32 %v3459, %v3460
    %v3462 = vand.u32 %v3461, 4294901760
    %3463 = vmatmul.f32.gmra.mxu0 %v3462
    %v3464 = vpop.f32.mrf.mxu0
    %v3465 = vadd.f32 0.0, %v3464
    %3466 = vdwg.mxu0
    %3467 = vmatpush.msra.mxu0 0.0
    %3468 = vmatpush.msra.mxu0 0.0
    %3469 = vmatpush.msra.mxu0 0.0
    %3470 = vmatpush.msra.mxu0 0.0
    %3471 = vmatpush.msra.mxu0 0.0
    %3472 = vmatpush.msra.mxu0 0.0
    %3473 = vmatpush.msra.mxu0 0.0
    %3474 = vmatpush.msra.mxu0 0.0
    %3475 = vmatpush.msra.mxu0 0.0
    %3476 = vmatpush.msra.mxu0 0.0
    %3477 = vmatpush.msra.mxu0 0.0
    %3478 = vmatpush.msra.mxu0 0.0
    %3479 = vmatpush.msra.mxu0 0.0
    %3480 = vmatpush.msra.mxu0 0.0
    %3481 = vmatpush.msra.mxu0 0.0
    %v3482 = vand.u32 %v766, 4294901760
    %v3483 = vsub.f32 %v766, %v3482
    %v3484 = vand.u32 %v3483, 4294901760
    %v3485 = vsub.f32 %v3483, %v3484
    %v3486 = vand.u32 %v3485, 4294901760
    %3487 = vmatpush.msra.mxu0 %v3486
    %v3488 = vand.u32 %v811, 4294901760
    %3489 = vmatmul.f32.gmra.mxu0 %v3488
    %v3490 = vpop.f32.mrf.mxu0
    %v3491 = vadd.f32 %v3465, %v3490
    %3492 = vdwg.mxu0
    %3493 = vmatpush.msra.mxu0 0.0
    %3494 = vmatpush.msra.mxu0 0.0
    %3495 = vmatpush.msra.mxu0 0.0
    %3496 = vmatpush.msra.mxu0 0.0
    %3497 = vmatpush.msra.mxu0 0.0
    %3498 = vmatpush.msra.mxu0 0.0
    %3499 = vmatpush.msra.mxu0 0.0
    %3500 = vmatpush.msra.mxu0 0.0
    %3501 = vmatpush.msra.mxu0 0.0
    %3502 = vmatpush.msra.mxu0 0.0
    %3503 = vmatpush.msra.mxu0 0.0
    %3504 = vmatpush.msra.mxu0 0.0
    %3505 = vmatpush.msra.mxu0 0.0
    %3506 = vmatpush.msra.mxu0 0.0
    %3507 = vmatpush.msra.mxu0 0.0
    %v3508 = vand.u32 %v766, 4294901760
    %v3509 = vsub.f32 %v766, %v3508
    %3510 = vmatpush.msra.mxu0 %v3509
    %v3511 = vand.u32 %v811, 4294901760
    %v3512 = vsub.f32 %v811, %v3511
    %3513 = vmatmul.f32.gmra.mxu0 %v3512
    %v3514 = vpop.f32.mrf.mxu0
    %v3515 = vadd.f32 %v3491, %v3514
    %3516 = vdwg.mxu0
    %3517 = vmatpush.msra.mxu0 0.0
    %3518 = vmatpush.msra.mxu0 0.0
    %3519 = vmatpush.msra.mxu0 0.0
    %3520 = vmatpush.msra.mxu0 0.0
    %3521 = vmatpush.msra.mxu0 0.0
    %3522 = vmatpush.msra.mxu0 0.0
    %3523 = vmatpush.msra.mxu0 0.0
    %3524 = vmatpush.msra.mxu0 0.0
    %3525 = vmatpush.msra.mxu0 0.0
    %3526 = vmatpush.msra.mxu0 0.0
    %3527 = vmatpush.msra.mxu0 0.0
    %3528 = vmatpush.msra.mxu0 0.0
    %3529 = vmatpush.msra.mxu0 0.0
    %3530 = vmatpush.msra.mxu0 0.0
    %3531 = vmatpush.msra.mxu0 0.0
    %v3532 = vand.u32 %v766, 4294901760
    %3533 = vmatpush.msra.mxu0 %v3532
    %v3534 = vand.u32 %v811, 4294901760
    %v3535 = vsub.f32 %v811, %v3534
    %v3536 = vand.u32 %v3535, 4294901760
    %3537 = vmatmul.f32.gmra.mxu0 %v3536
    %v3538 = vpop.f32.mrf.mxu0
    %v3539 = vadd.f32 %v3515, %v3538
    %3540 = vdwg.mxu0
    %3541 = vmatpush.msra.mxu0 0.0
    %3542 = vmatpush.msra.mxu0 0.0
    %3543 = vmatpush.msra.mxu0 0.0
    %3544 = vmatpush.msra.mxu0 0.0
    %3545 = vmatpush.msra.mxu0 0.0
    %3546 = vmatpush.msra.mxu0 0.0
    %3547 = vmatpush.msra.mxu0 0.0
    %3548 = vmatpush.msra.mxu0 0.0
    %3549 = vmatpush.msra.mxu0 0.0
    %3550 = vmatpush.msra.mxu0 0.0
    %3551 = vmatpush.msra.mxu0 0.0
    %3552 = vmatpush.msra.mxu0 0.0
    %3553 = vmatpush.msra.mxu0 0.0
    %3554 = vmatpush.msra.mxu0 0.0
    %3555 = vmatpush.msra.mxu0 0.0
    %v3556 = vand.u32 %v766, 4294901760
    %v3557 = vsub.f32 %v766, %v3556
    %v3558 = vand.u32 %v3557, 4294901760
    %3559 = vmatpush.msra.mxu0 %v3558
    %v3560 = vand.u32 %v811, 4294901760
    %3561 = vmatmul.f32.gmra.mxu0 %v3560
    %v3562 = vpop.f32.mrf.mxu0
    %v3563 = vadd.f32 %v3539, %v3562
    %3564 = vdwg.mxu0
    %3565 = vmatpush.msra.mxu0 0.0
    %3566 = vmatpush.msra.mxu0 0.0
    %3567 = vmatpush.msra.mxu0 0.0
    %3568 = vmatpush.msra.mxu0 0.0
    %3569 = vmatpush.msra.mxu0 0.0
    %3570 = vmatpush.msra.mxu0 0.0
    %3571 = vmatpush.msra.mxu0 0.0
    %3572 = vmatpush.msra.mxu0 0.0
    %3573 = vmatpush.msra.mxu0 0.0
    %3574 = vmatpush.msra.mxu0 0.0
    %3575 = vmatpush.msra.mxu0 0.0
    %3576 = vmatpush.msra.mxu0 0.0
    %3577 = vmatpush.msra.mxu0 0.0
    %3578 = vmatpush.msra.mxu0 0.0
    %3579 = vmatpush.msra.mxu0 0.0
    %v3580 = vand.u32 %v766, 4294901760
    %3581 = vmatpush.msra.mxu0 %v3580
    %v3582 = vand.u32 %v811, 4294901760
    %3583 = vmatmul.f32.gmra.mxu0 %v3582
    %v3584 = vpop.f32.mrf.mxu0
    %v3585 = vadd.f32 %v3563, %v3584
    %3586 = vdwg.mxu0
    %3587 = vmatpush.msra.mxu0 0.0
    %3588 = vmatpush.msra.mxu0 0.0
    %3589 = vmatpush.msra.mxu0 0.0
    %3590 = vmatpush.msra.mxu0 0.0
    %3591 = vmatpush.msra.mxu0 0.0
    %3592 = vmatpush.msra.mxu0 0.0
    %3593 = vmatpush.msra.mxu0 0.0
    %3594 = vmatpush.msra.mxu0 0.0
    %3595 = vmatpush.msra.mxu0 0.0
    %3596 = vmatpush.msra.mxu0 0.0
    %3597 = vmatpush.msra.mxu0 0.0
    %3598 = vmatpush.msra.mxu0 0.0
    %3599 = vmatpush.msra.mxu0 0.0
    %3600 = vmatpush.msra.mxu0 0.0
    %3601 = vmatpush.msra.mxu0 0.0
    %v3602 = vand.u32 %v767, 4294901760
    %3603 = vmatpush.msra.mxu0 %v3602
    %v3604 = vand.u32 %v811, 4294901760
    %v3605 = vsub.f32 %v811, %v3604
    %v3606 = vand.u32 %v3605, 4294901760
    %v3607 = vsub.f32 %v3605, %v3606
    %v3608 = vand.u32 %v3607, 4294901760
    %3609 = vmatmul.f32.gmra.mxu0 %v3608
    %v3610 = vpop.f32.mrf.mxu0
    %v3611 = vadd.f32 0.0, %v3610
    %3612 = vdwg.mxu0
    %3613 = vmatpush.msra.mxu0 0.0
    %3614 = vmatpush.msra.mxu0 0.0
    %3615 = vmatpush.msra.mxu0 0.0
    %3616 = vmatpush.msra.mxu0 0.0
    %3617 = vmatpush.msra.mxu0 0.0
    %3618 = vmatpush.msra.mxu0 0.0
    %3619 = vmatpush.msra.mxu0 0.0
    %3620 = vmatpush.msra.mxu0 0.0
    %3621 = vmatpush.msra.mxu0 0.0
    %3622 = vmatpush.msra.mxu0 0.0
    %3623 = vmatpush.msra.mxu0 0.0
    %3624 = vmatpush.msra.mxu0 0.0
    %3625 = vmatpush.msra.mxu0 0.0
    %3626 = vmatpush.msra.mxu0 0.0
    %3627 = vmatpush.msra.mxu0 0.0
    %v3628 = vand.u32 %v767, 4294901760
    %v3629 = vsub.f32 %v767, %v3628
    %v3630 = vand.u32 %v3629, 4294901760
    %v3631 = vsub.f32 %v3629, %v3630
    %v3632 = vand.u32 %v3631, 4294901760
    %3633 = vmatpush.msra.mxu0 %v3632
    %v3634 = vand.u32 %v811, 4294901760
    %3635 = vmatmul.f32.gmra.mxu0 %v3634
    %v3636 = vpop.f32.mrf.mxu0
    %v3637 = vadd.f32 %v3611, %v3636
    %3638 = vdwg.mxu0
    %3639 = vmatpush.msra.mxu0 0.0
    %3640 = vmatpush.msra.mxu0 0.0
    %3641 = vmatpush.msra.mxu0 0.0
    %3642 = vmatpush.msra.mxu0 0.0
    %3643 = vmatpush.msra.mxu0 0.0
    %3644 = vmatpush.msra.mxu0 0.0
    %3645 = vmatpush.msra.mxu0 0.0
    %3646 = vmatpush.msra.mxu0 0.0
    %3647 = vmatpush.msra.mxu0 0.0
    %3648 = vmatpush.msra.mxu0 0.0
    %3649 = vmatpush.msra.mxu0 0.0
    %3650 = vmatpush.msra.mxu0 0.0
    %3651 = vmatpush.msra.mxu0 0.0
    %3652 = vmatpush.msra.mxu0 0.0
    %3653 = vmatpush.msra.mxu0 0.0
    %v3654 = vand.u32 %v767, 4294901760
    %v3655 = vsub.f32 %v767, %v3654
    %3656 = vmatpush.msra.mxu0 %v3655
    %v3657 = vand.u32 %v811, 4294901760
    %v3658 = vsub.f32 %v811, %v3657
    %3659 = vmatmul.f32.gmra.mxu0 %v3658
    %v3660 = vpop.f32.mrf.mxu0
    %v3661 = vadd.f32 %v3637, %v3660
    %3662 = vdwg.mxu0
    %3663 = vmatpush.msra.mxu0 0.0
    %3664 = vmatpush.msra.mxu0 0.0
    %3665 = vmatpush.msra.mxu0 0.0
    %3666 = vmatpush.msra.mxu0 0.0
    %3667 = vmatpush.msra.mxu0 0.0
    %3668 = vmatpush.msra.mxu0 0.0
    %3669 = vmatpush.msra.mxu0 0.0
    %3670 = vmatpush.msra.mxu0 0.0
    %3671 = vmatpush.msra.mxu0 0.0
    %3672 = vmatpush.msra.mxu0 0.0
    %3673 = vmatpush.msra.mxu0 0.0
    %3674 = vmatpush.msra.mxu0 0.0
    %3675 = vmatpush.msra.mxu0 0.0
    %3676 = vmatpush.msra.mxu0 0.0
    %3677 = vmatpush.msra.mxu0 0.0
    %v3678 = vand.u32 %v767, 4294901760
    %3679 = vmatpush.msra.mxu0 %v3678
    %v3680 = vand.u32 %v811, 4294901760
    %v3681 = vsub.f32 %v811, %v3680
    %v3682 = vand.u32 %v3681, 4294901760
    %3683 = vmatmul.f32.gmra.mxu0 %v3682
    %v3684 = vpop.f32.mrf.mxu0
    %v3685 = vadd.f32 %v3661, %v3684
    %3686 = vdwg.mxu0
    %3687 = vmatpush.msra.mxu0 0.0
    %3688 = vmatpush.msra.mxu0 0.0
    %3689 = vmatpush.msra.mxu0 0.0
    %3690 = vmatpush.msra.mxu0 0.0
    %3691 = vmatpush.msra.mxu0 0.0
    %3692 = vmatpush.msra.mxu0 0.0
    %3693 = vmatpush.msra.mxu0 0.0
    %3694 = vmatpush.msra.mxu0 0.0
    %3695 = vmatpush.msra.mxu0 0.0
    %3696 = vmatpush.msra.mxu0 0.0
    %3697 = vmatpush.msra.mxu0 0.0
    %3698 = vmatpush.msra.mxu0 0.0
    %3699 = vmatpush.msra.mxu0 0.0
    %3700 = vmatpush.msra.mxu0 0.0
    %3701 = vmatpush.msra.mxu0 0.0
    %v3702 = vand.u32 %v767, 4294901760
    %v3703 = vsub.f32 %v767, %v3702
    %v3704 = vand.u32 %v3703, 4294901760
    %3705 = vmatpush.msra.mxu0 %v3704
    %v3706 = vand.u32 %v811, 4294901760
    %3707 = vmatmul.f32.gmra.mxu0 %v3706
    %v3708 = vpop.f32.mrf.mxu0
    %v3709 = vadd.f32 %v3685, %v3708
    %3710 = vdwg.mxu0
    %3711 = vmatpush.msra.mxu0 0.0
    %3712 = vmatpush.msra.mxu0 0.0
    %3713 = vmatpush.msra.mxu0 0.0
    %3714 = vmatpush.msra.mxu0 0.0
    %3715 = vmatpush.msra.mxu0 0.0
    %3716 = vmatpush.msra.mxu0 0.0
    %3717 = vmatpush.msra.mxu0 0.0
    %3718 = vmatpush.msra.mxu0 0.0
    %3719 = vmatpush.msra.mxu0 0.0
    %3720 = vmatpush.msra.mxu0 0.0
    %3721 = vmatpush.msra.mxu0 0.0
    %3722 = vmatpush.msra.mxu0 0.0
    %3723 = vmatpush.msra.mxu0 0.0
    %3724 = vmatpush.msra.mxu0 0.0
    %3725 = vmatpush.msra.mxu0 0.0
    %v3726 = vand.u32 %v767, 4294901760
    %3727 = vmatpush.msra.mxu0 %v3726
    %v3728 = vand.u32 %v811, 4294901760
    %3729 = vmatmul.f32.gmra.mxu0 %v3728
    %v3730 = vpop.f32.mrf.mxu0
    %v3731 = vadd.f32 %v3709, %v3730
    %3732 = vdwg.mxu0
    %3733 = vmatpush.msra.mxu0 0.0
    %3734 = vmatpush.msra.mxu0 0.0
    %3735 = vmatpush.msra.mxu0 0.0
    %3736 = vmatpush.msra.mxu0 0.0
    %3737 = vmatpush.msra.mxu0 0.0
    %3738 = vmatpush.msra.mxu0 0.0
    %3739 = vmatpush.msra.mxu0 0.0
    %3740 = vmatpush.msra.mxu0 0.0
    %3741 = vmatpush.msra.mxu0 0.0
    %3742 = vmatpush.msra.mxu0 0.0
    %3743 = vmatpush.msra.mxu0 0.0
    %3744 = vmatpush.msra.mxu0 0.0
    %3745 = vmatpush.msra.mxu0 0.0
    %3746 = vmatpush.msra.mxu0 0.0
    %3747 = vmatpush.msra.mxu0 0.0
    %v3748 = vand.u32 %v768, 4294901760
    %3749 = vmatpush.msra.mxu0 %v3748
    %v3750 = vand.u32 %v811, 4294901760
    %v3751 = vsub.f32 %v811, %v3750
    %v3752 = vand.u32 %v3751, 4294901760
    %v3753 = vsub.f32 %v3751, %v3752
    %v3754 = vand.u32 %v3753, 4294901760
    %3755 = vmatmul.f32.gmra.mxu0 %v3754
    %v3756 = vpop.f32.mrf.mxu0
    %v3757 = vadd.f32 0.0, %v3756
    %3758 = vdwg.mxu0
    %3759 = vmatpush.msra.mxu0 0.0
    %3760 = vmatpush.msra.mxu0 0.0
    %3761 = vmatpush.msra.mxu0 0.0
    %3762 = vmatpush.msra.mxu0 0.0
    %3763 = vmatpush.msra.mxu0 0.0
    %3764 = vmatpush.msra.mxu0 0.0
    %3765 = vmatpush.msra.mxu0 0.0
    %3766 = vmatpush.msra.mxu0 0.0
    %3767 = vmatpush.msra.mxu0 0.0
    %3768 = vmatpush.msra.mxu0 0.0
    %3769 = vmatpush.msra.mxu0 0.0
    %3770 = vmatpush.msra.mxu0 0.0
    %3771 = vmatpush.msra.mxu0 0.0
    %3772 = vmatpush.msra.mxu0 0.0
    %3773 = vmatpush.msra.mxu0 0.0
    %v3774 = vand.u32 %v768, 4294901760
    %v3775 = vsub.f32 %v768, %v3774
    %v3776 = vand.u32 %v3775, 4294901760
    %v3777 = vsub.f32 %v3775, %v3776
    %v3778 = vand.u32 %v3777, 4294901760
    %3779 = vmatpush.msra.mxu0 %v3778
    %v3780 = vand.u32 %v811, 4294901760
    %3781 = vmatmul.f32.gmra.mxu0 %v3780
    %v3782 = vpop.f32.mrf.mxu0
    %v3783 = vadd.f32 %v3757, %v3782
    %3784 = vdwg.mxu0
    %3785 = vmatpush.msra.mxu0 0.0
    %3786 = vmatpush.msra.mxu0 0.0
    %3787 = vmatpush.msra.mxu0 0.0
    %3788 = vmatpush.msra.mxu0 0.0
    %3789 = vmatpush.msra.mxu0 0.0
    %3790 = vmatpush.msra.mxu0 0.0
    %3791 = vmatpush.msra.mxu0 0.0
    %3792 = vmatpush.msra.mxu0 0.0
    %3793 = vmatpush.msra.mxu0 0.0
    %3794 = vmatpush.msra.mxu0 0.0
    %3795 = vmatpush.msra.mxu0 0.0
    %3796 = vmatpush.msra.mxu0 0.0
    %3797 = vmatpush.msra.mxu0 0.0
    %3798 = vmatpush.msra.mxu0 0.0
    %3799 = vmatpush.msra.mxu0 0.0
    %v3800 = vand.u32 %v768, 4294901760
    %v3801 = vsub.f32 %v768, %v3800
    %3802 = vmatpush.msra.mxu0 %v3801
    %v3803 = vand.u32 %v811, 4294901760
    %v3804 = vsub.f32 %v811, %v3803
    %3805 = vmatmul.f32.gmra.mxu0 %v3804
    %v3806 = vpop.f32.mrf.mxu0
    %v3807 = vadd.f32 %v3783, %v3806
    %3808 = vdwg.mxu0
    %3809 = vmatpush.msra.mxu0 0.0
    %3810 = vmatpush.msra.mxu0 0.0
    %3811 = vmatpush.msra.mxu0 0.0
    %3812 = vmatpush.msra.mxu0 0.0
    %3813 = vmatpush.msra.mxu0 0.0
    %3814 = vmatpush.msra.mxu0 0.0
    %3815 = vmatpush.msra.mxu0 0.0
    %3816 = vmatpush.msra.mxu0 0.0
    %3817 = vmatpush.msra.mxu0 0.0
    %3818 = vmatpush.msra.mxu0 0.0
    %3819 = vmatpush.msra.mxu0 0.0
    %3820 = vmatpush.msra.mxu0 0.0
    %3821 = vmatpush.msra.mxu0 0.0
    %3822 = vmatpush.msra.mxu0 0.0
    %3823 = vmatpush.msra.mxu0 0.0
    %v3824 = vand.u32 %v768, 4294901760
    %3825 = vmatpush.msra.mxu0 %v3824
    %v3826 = vand.u32 %v811, 4294901760
    %v3827 = vsub.f32 %v811, %v3826
    %v3828 = vand.u32 %v3827, 4294901760
    %3829 = vmatmul.f32.gmra.mxu0 %v3828
    %v3830 = vpop.f32.mrf.mxu0
    %v3831 = vadd.f32 %v3807, %v3830
    %3832 = vdwg.mxu0
    %3833 = vmatpush.msra.mxu0 0.0
    %3834 = vmatpush.msra.mxu0 0.0
    %3835 = vmatpush.msra.mxu0 0.0
    %3836 = vmatpush.msra.mxu0 0.0
    %3837 = vmatpush.msra.mxu0 0.0
    %3838 = vmatpush.msra.mxu0 0.0
    %3839 = vmatpush.msra.mxu0 0.0
    %3840 = vmatpush.msra.mxu0 0.0
    %3841 = vmatpush.msra.mxu0 0.0
    %3842 = vmatpush.msra.mxu0 0.0
    %3843 = vmatpush.msra.mxu0 0.0
    %3844 = vmatpush.msra.mxu0 0.0
    %3845 = vmatpush.msra.mxu0 0.0
    %3846 = vmatpush.msra.mxu0 0.0
    %3847 = vmatpush.msra.mxu0 0.0
    %v3848 = vand.u32 %v768, 4294901760
    %v3849 = vsub.f32 %v768, %v3848
    %v3850 = vand.u32 %v3849, 4294901760
    %3851 = vmatpush.msra.mxu0 %v3850
    %v3852 = vand.u32 %v811, 4294901760
    %3853 = vmatmul.f32.gmra.mxu0 %v3852
    %v3854 = vpop.f32.mrf.mxu0
    %v3855 = vadd.f32 %v3831, %v3854
    %3856 = vdwg.mxu0
    %3857 = vmatpush.msra.mxu0 0.0
    %3858 = vmatpush.msra.mxu0 0.0
    %3859 = vmatpush.msra.mxu0 0.0
    %3860 = vmatpush.msra.mxu0 0.0
    %3861 = vmatpush.msra.mxu0 0.0
    %3862 = vmatpush.msra.mxu0 0.0
    %3863 = vmatpush.msra.mxu0 0.0
    %3864 = vmatpush.msra.mxu0 0.0
    %3865 = vmatpush.msra.mxu0 0.0
    %3866 = vmatpush.msra.mxu0 0.0
    %3867 = vmatpush.msra.mxu0 0.0
    %3868 = vmatpush.msra.mxu0 0.0
    %3869 = vmatpush.msra.mxu0 0.0
    %3870 = vmatpush.msra.mxu0 0.0
    %3871 = vmatpush.msra.mxu0 0.0
    %v3872 = vand.u32 %v768, 4294901760
    %3873 = vmatpush.msra.mxu0 %v3872
    %v3874 = vand.u32 %v811, 4294901760
    %3875 = vmatmul.f32.gmra.mxu0 %v3874
    %v3876 = vpop.f32.mrf.mxu0
    %v3877 = vadd.f32 %v3855, %v3876
    %3878 = vdwg.mxu0
    %3879 = vmatpush.msra.mxu0 0.0
    %3880 = vmatpush.msra.mxu0 0.0
    %3881 = vmatpush.msra.mxu0 0.0
    %3882 = vmatpush.msra.mxu0 0.0
    %3883 = vmatpush.msra.mxu0 0.0
    %3884 = vmatpush.msra.mxu0 0.0
    %3885 = vmatpush.msra.mxu0 0.0
    %3886 = vmatpush.msra.mxu0 0.0
    %3887 = vmatpush.msra.mxu0 0.0
    %3888 = vmatpush.msra.mxu0 0.0
    %3889 = vmatpush.msra.mxu0 0.0
    %3890 = vmatpush.msra.mxu0 0.0
    %3891 = vmatpush.msra.mxu0 0.0
    %3892 = vmatpush.msra.mxu0 0.0
    %3893 = vmatpush.msra.mxu0 0.0
    %v3894 = vand.u32 %v769, 4294901760
    %3895 = vmatpush.msra.mxu0 %v3894
    %v3896 = vand.u32 %v811, 4294901760
    %v3897 = vsub.f32 %v811, %v3896
    %v3898 = vand.u32 %v3897, 4294901760
    %v3899 = vsub.f32 %v3897, %v3898
    %v3900 = vand.u32 %v3899, 4294901760
    %3901 = vmatmul.f32.gmra.mxu0 %v3900
    %v3902 = vpop.f32.mrf.mxu0
    %v3903 = vadd.f32 0.0, %v3902
    %3904 = vdwg.mxu0
    %3905 = vmatpush.msra.mxu0 0.0
    %3906 = vmatpush.msra.mxu0 0.0
    %3907 = vmatpush.msra.mxu0 0.0
    %3908 = vmatpush.msra.mxu0 0.0
    %3909 = vmatpush.msra.mxu0 0.0
    %3910 = vmatpush.msra.mxu0 0.0
    %3911 = vmatpush.msra.mxu0 0.0
    %3912 = vmatpush.msra.mxu0 0.0
    %3913 = vmatpush.msra.mxu0 0.0
    %3914 = vmatpush.msra.mxu0 0.0
    %3915 = vmatpush.msra.mxu0 0.0
    %3916 = vmatpush.msra.mxu0 0.0
    %3917 = vmatpush.msra.mxu0 0.0
    %3918 = vmatpush.msra.mxu0 0.0
    %3919 = vmatpush.msra.mxu0 0.0
    %v3920 = vand.u32 %v769, 4294901760
    %v3921 = vsub.f32 %v769, %v3920
    %v3922 = vand.u32 %v3921, 4294901760
    %v3923 = vsub.f32 %v3921, %v3922
    %v3924 = vand.u32 %v3923, 4294901760
    %3925 = vmatpush.msra.mxu0 %v3924
    %v3926 = vand.u32 %v811, 4294901760
    %3927 = vmatmul.f32.gmra.mxu0 %v3926
    %v3928 = vpop.f32.mrf.mxu0
    %v3929 = vadd.f32 %v3903, %v3928
    %3930 = vdwg.mxu0
    %3931 = vmatpush.msra.mxu0 0.0
    %3932 = vmatpush.msra.mxu0 0.0
    %3933 = vmatpush.msra.mxu0 0.0
    %3934 = vmatpush.msra.mxu0 0.0
    %3935 = vmatpush.msra.mxu0 0.0
    %3936 = vmatpush.msra.mxu0 0.0
    %3937 = vmatpush.msra.mxu0 0.0
    %3938 = vmatpush.msra.mxu0 0.0
    %3939 = vmatpush.msra.mxu0 0.0
    %3940 = vmatpush.msra.mxu0 0.0
    %3941 = vmatpush.msra.mxu0 0.0
    %3942 = vmatpush.msra.mxu0 0.0
    %3943 = vmatpush.msra.mxu0 0.0
    %3944 = vmatpush.msra.mxu0 0.0
    %3945 = vmatpush.msra.mxu0 0.0
    %v3946 = vand.u32 %v769, 4294901760
    %v3947 = vsub.f32 %v769, %v3946
    %3948 = vmatpush.msra.mxu0 %v3947
    %v3949 = vand.u32 %v811, 4294901760
    %v3950 = vsub.f32 %v811, %v3949
    %3951 = vmatmul.f32.gmra.mxu0 %v3950
    %v3952 = vpop.f32.mrf.mxu0
    %v3953 = vadd.f32 %v3929, %v3952
    %3954 = vdwg.mxu0
    %3955 = vmatpush.msra.mxu0 0.0
    %3956 = vmatpush.msra.mxu0 0.0
    %3957 = vmatpush.msra.mxu0 0.0
    %3958 = vmatpush.msra.mxu0 0.0
    %3959 = vmatpush.msra.mxu0 0.0
    %3960 = vmatpush.msra.mxu0 0.0
    %3961 = vmatpush.msra.mxu0 0.0
    %3962 = vmatpush.msra.mxu0 0.0
    %3963 = vmatpush.msra.mxu0 0.0
    %3964 = vmatpush.msra.mxu0 0.0
    %3965 = vmatpush.msra.mxu0 0.0
    %3966 = vmatpush.msra.mxu0 0.0
    %3967 = vmatpush.msra.mxu0 0.0
    %3968 = vmatpush.msra.mxu0 0.0
    %3969 = vmatpush.msra.mxu0 0.0
    %v3970 = vand.u32 %v769, 4294901760
    %3971 = vmatpush.msra.mxu0 %v3970
    %v3972 = vand.u32 %v811, 4294901760
    %v3973 = vsub.f32 %v811, %v3972
    %v3974 = vand.u32 %v3973, 4294901760
    %3975 = vmatmul.f32.gmra.mxu0 %v3974
    %v3976 = vpop.f32.mrf.mxu0
    %v3977 = vadd.f32 %v3953, %v3976
    %3978 = vdwg.mxu0
    %3979 = vmatpush.msra.mxu0 0.0
    %3980 = vmatpush.msra.mxu0 0.0
    %3981 = vmatpush.msra.mxu0 0.0
    %3982 = vmatpush.msra.mxu0 0.0
    %3983 = vmatpush.msra.mxu0 0.0
    %3984 = vmatpush.msra.mxu0 0.0
    %3985 = vmatpush.msra.mxu0 0.0
    %3986 = vmatpush.msra.mxu0 0.0
    %3987 = vmatpush.msra.mxu0 0.0
    %3988 = vmatpush.msra.mxu0 0.0
    %3989 = vmatpush.msra.mxu0 0.0
    %3990 = vmatpush.msra.mxu0 0.0
    %3991 = vmatpush.msra.mxu0 0.0
    %3992 = vmatpush.msra.mxu0 0.0
    %3993 = vmatpush.msra.mxu0 0.0
    %v3994 = vand.u32 %v769, 4294901760
    %v3995 = vsub.f32 %v769, %v3994
    %v3996 = vand.u32 %v3995, 4294901760
    %3997 = vmatpush.msra.mxu0 %v3996
    %v3998 = vand.u32 %v811, 4294901760
    %3999 = vmatmul.f32.gmra.mxu0 %v3998
    %v4000 = vpop.f32.mrf.mxu0
    %v4001 = vadd.f32 %v3977, %v4000
    %4002 = vdwg.mxu0
    %4003 = vmatpush.msra.mxu0 0.0
    %4004 = vmatpush.msra.mxu0 0.0
    %4005 = vmatpush.msra.mxu0 0.0
    %4006 = vmatpush.msra.mxu0 0.0
    %4007 = vmatpush.msra.mxu0 0.0
    %4008 = vmatpush.msra.mxu0 0.0
    %4009 = vmatpush.msra.mxu0 0.0
    %4010 = vmatpush.msra.mxu0 0.0
    %4011 = vmatpush.msra.mxu0 0.0
    %4012 = vmatpush.msra.mxu0 0.0
    %4013 = vmatpush.msra.mxu0 0.0
    %4014 = vmatpush.msra.mxu0 0.0
    %4015 = vmatpush.msra.mxu0 0.0
    %4016 = vmatpush.msra.mxu0 0.0
    %4017 = vmatpush.msra.mxu0 0.0
    %v4018 = vand.u32 %v769, 4294901760
    %4019 = vmatpush.msra.mxu0 %v4018
    %v4020 = vand.u32 %v811, 4294901760
    %4021 = vmatmul.f32.gmra.mxu0 %v4020
    %v4022 = vpop.f32.mrf.mxu0
    %v4023 = vadd.f32 %v4001, %v4022
    %4024 = vdwg.mxu0
    %4025 = vmatpush.msra.mxu0 0.0
    %4026 = vmatpush.msra.mxu0 0.0
    %4027 = vmatpush.msra.mxu0 0.0
    %4028 = vmatpush.msra.mxu0 0.0
    %4029 = vmatpush.msra.mxu0 0.0
    %4030 = vmatpush.msra.mxu0 0.0
    %4031 = vmatpush.msra.mxu0 0.0
    %4032 = vmatpush.msra.mxu0 0.0
    %4033 = vmatpush.msra.mxu0 0.0
    %4034 = vmatpush.msra.mxu0 0.0
    %4035 = vmatpush.msra.mxu0 0.0
    %4036 = vmatpush.msra.mxu0 0.0
    %4037 = vmatpush.msra.mxu0 0.0
    %4038 = vmatpush.msra.mxu0 0.0
    %4039 = vmatpush.msra.mxu0 0.0
    %v4040 = vand.u32 %v770, 4294901760
    %4041 = vmatpush.msra.mxu0 %v4040
    %v4042 = vand.u32 %v811, 4294901760
    %v4043 = vsub.f32 %v811, %v4042
    %v4044 = vand.u32 %v4043, 4294901760
    %v4045 = vsub.f32 %v4043, %v4044
    %v4046 = vand.u32 %v4045, 4294901760
    %4047 = vmatmul.f32.gmra.mxu0 %v4046
    %v4048 = vpop.f32.mrf.mxu0
    %v4049 = vadd.f32 0.0, %v4048
    %4050 = vdwg.mxu0
    %4051 = vmatpush.msra.mxu0 0.0
    %4052 = vmatpush.msra.mxu0 0.0
    %4053 = vmatpush.msra.mxu0 0.0
    %4054 = vmatpush.msra.mxu0 0.0
    %4055 = vmatpush.msra.mxu0 0.0
    %4056 = vmatpush.msra.mxu0 0.0
    %4057 = vmatpush.msra.mxu0 0.0
    %4058 = vmatpush.msra.mxu0 0.0
    %4059 = vmatpush.msra.mxu0 0.0
    %4060 = vmatpush.msra.mxu0 0.0
    %4061 = vmatpush.msra.mxu0 0.0
    %4062 = vmatpush.msra.mxu0 0.0
    %4063 = vmatpush.msra.mxu0 0.0
    %4064 = vmatpush.msra.mxu0 0.0
    %4065 = vmatpush.msra.mxu0 0.0
    %v4066 = vand.u32 %v770, 4294901760
    %v4067 = vsub.f32 %v770, %v4066
    %v4068 = vand.u32 %v4067, 4294901760
    %v4069 = vsub.f32 %v4067, %v4068
    %v4070 = vand.u32 %v4069, 4294901760
    %4071 = vmatpush.msra.mxu0 %v4070
    %v4072 = vand.u32 %v811, 4294901760
    %4073 = vmatmul.f32.gmra.mxu0 %v4072
    %v4074 = vpop.f32.mrf.mxu0
    %v4075 = vadd.f32 %v4049, %v4074
    %4076 = vdwg.mxu0
    %4077 = vmatpush.msra.mxu0 0.0
    %4078 = vmatpush.msra.mxu0 0.0
    %4079 = vmatpush.msra.mxu0 0.0
    %4080 = vmatpush.msra.mxu0 0.0
    %4081 = vmatpush.msra.mxu0 0.0
    %4082 = vmatpush.msra.mxu0 0.0
    %4083 = vmatpush.msra.mxu0 0.0
    %4084 = vmatpush.msra.mxu0 0.0
    %4085 = vmatpush.msra.mxu0 0.0
    %4086 = vmatpush.msra.mxu0 0.0
    %4087 = vmatpush.msra.mxu0 0.0
    %4088 = vmatpush.msra.mxu0 0.0
    %4089 = vmatpush.msra.mxu0 0.0
    %4090 = vmatpush.msra.mxu0 0.0
    %4091 = vmatpush.msra.mxu0 0.0
    %v4092 = vand.u32 %v770, 4294901760
    %v4093 = vsub.f32 %v770, %v4092
    %4094 = vmatpush.msra.mxu0 %v4093
    %v4095 = vand.u32 %v811, 4294901760
    %v4096 = vsub.f32 %v811, %v4095
    %4097 = vmatmul.f32.gmra.mxu0 %v4096
    %v4098 = vpop.f32.mrf.mxu0
    %v4099 = vadd.f32 %v4075, %v4098
    %4100 = vdwg.mxu0
    %4101 = vmatpush.msra.mxu0 0.0
    %4102 = vmatpush.msra.mxu0 0.0
    %4103 = vmatpush.msra.mxu0 0.0
    %4104 = vmatpush.msra.mxu0 0.0
    %4105 = vmatpush.msra.mxu0 0.0
    %4106 = vmatpush.msra.mxu0 0.0
    %4107 = vmatpush.msra.mxu0 0.0
    %4108 = vmatpush.msra.mxu0 0.0
    %4109 = vmatpush.msra.mxu0 0.0
    %4110 = vmatpush.msra.mxu0 0.0
    %4111 = vmatpush.msra.mxu0 0.0
    %4112 = vmatpush.msra.mxu0 0.0
    %4113 = vmatpush.msra.mxu0 0.0
    %4114 = vmatpush.msra.mxu0 0.0
    %4115 = vmatpush.msra.mxu0 0.0
    %v4116 = vand.u32 %v770, 4294901760
    %4117 = vmatpush.msra.mxu0 %v4116
    %v4118 = vand.u32 %v811, 4294901760
    %v4119 = vsub.f32 %v811, %v4118
    %v4120 = vand.u32 %v4119, 4294901760
    %4121 = vmatmul.f32.gmra.mxu0 %v4120
    %v4122 = vpop.f32.mrf.mxu0
    %v4123 = vadd.f32 %v4099, %v4122
    %4124 = vdwg.mxu0
    %4125 = vmatpush.msra.mxu0 0.0
    %4126 = vmatpush.msra.mxu0 0.0
    %4127 = vmatpush.msra.mxu0 0.0
    %4128 = vmatpush.msra.mxu0 0.0
    %4129 = vmatpush.msra.mxu0 0.0
    %4130 = vmatpush.msra.mxu0 0.0
    %4131 = vmatpush.msra.mxu0 0.0
    %4132 = vmatpush.msra.mxu0 0.0
    %4133 = vmatpush.msra.mxu0 0.0
    %4134 = vmatpush.msra.mxu0 0.0
    %4135 = vmatpush.msra.mxu0 0.0
    %4136 = vmatpush.msra.mxu0 0.0
    %4137 = vmatpush.msra.mxu0 0.0
    %4138 = vmatpush.msra.mxu0 0.0
    %4139 = vmatpush.msra.mxu0 0.0
    %v4140 = vand.u32 %v770, 4294901760
    %v4141 = vsub.f32 %v770, %v4140
    %v4142 = vand.u32 %v4141, 4294901760
    %4143 = vmatpush.msra.mxu0 %v4142
    %v4144 = vand.u32 %v811, 4294901760
    %4145 = vmatmul.f32.gmra.mxu0 %v4144
    %v4146 = vpop.f32.mrf.mxu0
    %v4147 = vadd.f32 %v4123, %v4146
    %4148 = vdwg.mxu0
    %4149 = vmatpush.msra.mxu0 0.0
    %4150 = vmatpush.msra.mxu0 0.0
    %4151 = vmatpush.msra.mxu0 0.0
    %4152 = vmatpush.msra.mxu0 0.0
    %4153 = vmatpush.msra.mxu0 0.0
    %4154 = vmatpush.msra.mxu0 0.0
    %4155 = vmatpush.msra.mxu0 0.0
    %4156 = vmatpush.msra.mxu0 0.0
    %4157 = vmatpush.msra.mxu0 0.0
    %4158 = vmatpush.msra.mxu0 0.0
    %4159 = vmatpush.msra.mxu0 0.0
    %4160 = vmatpush.msra.mxu0 0.0
    %4161 = vmatpush.msra.mxu0 0.0
    %4162 = vmatpush.msra.mxu0 0.0
    %4163 = vmatpush.msra.mxu0 0.0
    %v4164 = vand.u32 %v770, 4294901760
    %4165 = vmatpush.msra.mxu0 %v4164
    %v4166 = vand.u32 %v811, 4294901760
    %4167 = vmatmul.f32.gmra.mxu0 %v4166
    %v4168 = vpop.f32.mrf.mxu0
    %v4169 = vadd.f32 %v4147, %v4168
    %4170 = vdwg.mxu0
    %4171 = vmatpush.msra.mxu0 0.0
    %4172 = vmatpush.msra.mxu0 0.0
    %4173 = vmatpush.msra.mxu0 0.0
    %4174 = vmatpush.msra.mxu0 0.0
    %4175 = vmatpush.msra.mxu0 0.0
    %4176 = vmatpush.msra.mxu0 0.0
    %4177 = vmatpush.msra.mxu0 0.0
    %4178 = vmatpush.msra.mxu0 0.0
    %4179 = vmatpush.msra.mxu0 0.0
    %4180 = vmatpush.msra.mxu0 0.0
    %4181 = vmatpush.msra.mxu0 0.0
    %4182 = vmatpush.msra.mxu0 0.0
    %4183 = vmatpush.msra.mxu0 0.0
    %4184 = vmatpush.msra.mxu0 0.0
    %4185 = vmatpush.msra.mxu0 0.0
    %v4186 = vand.u32 %v771, 4294901760
    %4187 = vmatpush.msra.mxu0 %v4186
    %v4188 = vand.u32 %v811, 4294901760
    %v4189 = vsub.f32 %v811, %v4188
    %v4190 = vand.u32 %v4189, 4294901760
    %v4191 = vsub.f32 %v4189, %v4190
    %v4192 = vand.u32 %v4191, 4294901760
    %4193 = vmatmul.f32.gmra.mxu0 %v4192
    %v4194 = vpop.f32.mrf.mxu0
    %v4195 = vadd.f32 0.0, %v4194
    %4196 = vdwg.mxu0
    %4197 = vmatpush.msra.mxu0 0.0
    %4198 = vmatpush.msra.mxu0 0.0
    %4199 = vmatpush.msra.mxu0 0.0
    %4200 = vmatpush.msra.mxu0 0.0
    %4201 = vmatpush.msra.mxu0 0.0
    %4202 = vmatpush.msra.mxu0 0.0
    %4203 = vmatpush.msra.mxu0 0.0
    %4204 = vmatpush.msra.mxu0 0.0
    %4205 = vmatpush.msra.mxu0 0.0
    %4206 = vmatpush.msra.mxu0 0.0
    %4207 = vmatpush.msra.mxu0 0.0
    %4208 = vmatpush.msra.mxu0 0.0
    %4209 = vmatpush.msra.mxu0 0.0
    %4210 = vmatpush.msra.mxu0 0.0
    %4211 = vmatpush.msra.mxu0 0.0
    %v4212 = vand.u32 %v771, 4294901760
    %v4213 = vsub.f32 %v771, %v4212
    %v4214 = vand.u32 %v4213, 4294901760
    %v4215 = vsub.f32 %v4213, %v4214
    %v4216 = vand.u32 %v4215, 4294901760
    %4217 = vmatpush.msra.mxu0 %v4216
    %v4218 = vand.u32 %v811, 4294901760
    %4219 = vmatmul.f32.gmra.mxu0 %v4218
    %v4220 = vpop.f32.mrf.mxu0
    %v4221 = vadd.f32 %v4195, %v4220
    %4222 = vdwg.mxu0
    %4223 = vmatpush.msra.mxu0 0.0
    %4224 = vmatpush.msra.mxu0 0.0
    %4225 = vmatpush.msra.mxu0 0.0
    %4226 = vmatpush.msra.mxu0 0.0
    %4227 = vmatpush.msra.mxu0 0.0
    %4228 = vmatpush.msra.mxu0 0.0
    %4229 = vmatpush.msra.mxu0 0.0
    %4230 = vmatpush.msra.mxu0 0.0
    %4231 = vmatpush.msra.mxu0 0.0
    %4232 = vmatpush.msra.mxu0 0.0
    %4233 = vmatpush.msra.mxu0 0.0
    %4234 = vmatpush.msra.mxu0 0.0
    %4235 = vmatpush.msra.mxu0 0.0
    %4236 = vmatpush.msra.mxu0 0.0
    %4237 = vmatpush.msra.mxu0 0.0
    %v4238 = vand.u32 %v771, 4294901760
    %v4239 = vsub.f32 %v771, %v4238
    %4240 = vmatpush.msra.mxu0 %v4239
    %v4241 = vand.u32 %v811, 4294901760
    %v4242 = vsub.f32 %v811, %v4241
    %4243 = vmatmul.f32.gmra.mxu0 %v4242
    %v4244 = vpop.f32.mrf.mxu0
    %v4245 = vadd.f32 %v4221, %v4244
    %4246 = vdwg.mxu0
    %4247 = vmatpush.msra.mxu0 0.0
    %4248 = vmatpush.msra.mxu0 0.0
    %4249 = vmatpush.msra.mxu0 0.0
    %4250 = vmatpush.msra.mxu0 0.0
    %4251 = vmatpush.msra.mxu0 0.0
    %4252 = vmatpush.msra.mxu0 0.0
    %4253 = vmatpush.msra.mxu0 0.0
    %4254 = vmatpush.msra.mxu0 0.0
    %4255 = vmatpush.msra.mxu0 0.0
    %4256 = vmatpush.msra.mxu0 0.0
    %4257 = vmatpush.msra.mxu0 0.0
    %4258 = vmatpush.msra.mxu0 0.0
    %4259 = vmatpush.msra.mxu0 0.0
    %4260 = vmatpush.msra.mxu0 0.0
    %4261 = vmatpush.msra.mxu0 0.0
    %v4262 = vand.u32 %v771, 4294901760
    %4263 = vmatpush.msra.mxu0 %v4262
    %v4264 = vand.u32 %v811, 4294901760
    %v4265 = vsub.f32 %v811, %v4264
    %v4266 = vand.u32 %v4265, 4294901760
    %4267 = vmatmul.f32.gmra.mxu0 %v4266
    %v4268 = vpop.f32.mrf.mxu0
    %v4269 = vadd.f32 %v4245, %v4268
    %4270 = vdwg.mxu0
    %4271 = vmatpush.msra.mxu0 0.0
    %4272 = vmatpush.msra.mxu0 0.0
    %4273 = vmatpush.msra.mxu0 0.0
    %4274 = vmatpush.msra.mxu0 0.0
    %4275 = vmatpush.msra.mxu0 0.0
    %4276 = vmatpush.msra.mxu0 0.0
    %4277 = vmatpush.msra.mxu0 0.0
    %4278 = vmatpush.msra.mxu0 0.0
    %4279 = vmatpush.msra.mxu0 0.0
    %4280 = vmatpush.msra.mxu0 0.0
    %4281 = vmatpush.msra.mxu0 0.0
    %4282 = vmatpush.msra.mxu0 0.0
    %4283 = vmatpush.msra.mxu0 0.0
    %4284 = vmatpush.msra.mxu0 0.0
    %4285 = vmatpush.msra.mxu0 0.0
    %v4286 = vand.u32 %v771, 4294901760
    %v4287 = vsub.f32 %v771, %v4286
    %v4288 = vand.u32 %v4287, 4294901760
    %4289 = vmatpush.msra.mxu0 %v4288
    %v4290 = vand.u32 %v811, 4294901760
    %4291 = vmatmul.f32.gmra.mxu0 %v4290
    %v4292 = vpop.f32.mrf.mxu0
    %v4293 = vadd.f32 %v4269, %v4292
    %4294 = vdwg.mxu0
    %4295 = vmatpush.msra.mxu0 0.0
    %4296 = vmatpush.msra.mxu0 0.0
    %4297 = vmatpush.msra.mxu0 0.0
    %4298 = vmatpush.msra.mxu0 0.0
    %4299 = vmatpush.msra.mxu0 0.0
    %4300 = vmatpush.msra.mxu0 0.0
    %4301 = vmatpush.msra.mxu0 0.0
    %4302 = vmatpush.msra.mxu0 0.0
    %4303 = vmatpush.msra.mxu0 0.0
    %4304 = vmatpush.msra.mxu0 0.0
    %4305 = vmatpush.msra.mxu0 0.0
    %4306 = vmatpush.msra.mxu0 0.0
    %4307 = vmatpush.msra.mxu0 0.0
    %4308 = vmatpush.msra.mxu0 0.0
    %4309 = vmatpush.msra.mxu0 0.0
    %v4310 = vand.u32 %v771, 4294901760
    %4311 = vmatpush.msra.mxu0 %v4310
    %v4312 = vand.u32 %v811, 4294901760
    %4313 = vmatmul.f32.gmra.mxu0 %v4312
    %v4314 = vpop.f32.mrf.mxu0
    %v4315 = vadd.f32 %v4293, %v4314
    %4316 = vdwg.mxu0
    %4317 = vmatpush.msra.mxu0 0.0
    %4318 = vmatpush.msra.mxu0 0.0
    %4319 = vmatpush.msra.mxu0 0.0
    %4320 = vmatpush.msra.mxu0 0.0
    %4321 = vmatpush.msra.mxu0 0.0
    %4322 = vmatpush.msra.mxu0 0.0
    %4323 = vmatpush.msra.mxu0 0.0
    %4324 = vmatpush.msra.mxu0 0.0
    %4325 = vmatpush.msra.mxu0 0.0
    %4326 = vmatpush.msra.mxu0 0.0
    %4327 = vmatpush.msra.mxu0 0.0
    %4328 = vmatpush.msra.mxu0 0.0
    %4329 = vmatpush.msra.mxu0 0.0
    %4330 = vmatpush.msra.mxu0 0.0
    %4331 = vmatpush.msra.mxu0 0.0
    %v4332 = vand.u32 %v772, 4294901760
    %4333 = vmatpush.msra.mxu0 %v4332
    %v4334 = vand.u32 %v811, 4294901760
    %v4335 = vsub.f32 %v811, %v4334
    %v4336 = vand.u32 %v4335, 4294901760
    %v4337 = vsub.f32 %v4335, %v4336
    %v4338 = vand.u32 %v4337, 4294901760
    %4339 = vmatmul.f32.gmra.mxu0 %v4338
    %v4340 = vpop.f32.mrf.mxu0
    %v4341 = vadd.f32 0.0, %v4340
    %4342 = vdwg.mxu0
    %4343 = vmatpush.msra.mxu0 0.0
    %4344 = vmatpush.msra.mxu0 0.0
    %4345 = vmatpush.msra.mxu0 0.0
    %4346 = vmatpush.msra.mxu0 0.0
    %4347 = vmatpush.msra.mxu0 0.0
    %4348 = vmatpush.msra.mxu0 0.0
    %4349 = vmatpush.msra.mxu0 0.0
    %4350 = vmatpush.msra.mxu0 0.0
    %4351 = vmatpush.msra.mxu0 0.0
    %4352 = vmatpush.msra.mxu0 0.0
    %4353 = vmatpush.msra.mxu0 0.0
    %4354 = vmatpush.msra.mxu0 0.0
    %4355 = vmatpush.msra.mxu0 0.0
    %4356 = vmatpush.msra.mxu0 0.0
    %4357 = vmatpush.msra.mxu0 0.0
    %v4358 = vand.u32 %v772, 4294901760
    %v4359 = vsub.f32 %v772, %v4358
    %v4360 = vand.u32 %v4359, 4294901760
    %v4361 = vsub.f32 %v4359, %v4360
    %v4362 = vand.u32 %v4361, 4294901760
    %4363 = vmatpush.msra.mxu0 %v4362
    %v4364 = vand.u32 %v811, 4294901760
    %4365 = vmatmul.f32.gmra.mxu0 %v4364
    %v4366 = vpop.f32.mrf.mxu0
    %v4367 = vadd.f32 %v4341, %v4366
    %4368 = vdwg.mxu0
    %4369 = vmatpush.msra.mxu0 0.0
    %4370 = vmatpush.msra.mxu0 0.0
    %4371 = vmatpush.msra.mxu0 0.0
    %4372 = vmatpush.msra.mxu0 0.0
    %4373 = vmatpush.msra.mxu0 0.0
    %4374 = vmatpush.msra.mxu0 0.0
    %4375 = vmatpush.msra.mxu0 0.0
    %4376 = vmatpush.msra.mxu0 0.0
    %4377 = vmatpush.msra.mxu0 0.0
    %4378 = vmatpush.msra.mxu0 0.0
    %4379 = vmatpush.msra.mxu0 0.0
    %4380 = vmatpush.msra.mxu0 0.0
    %4381 = vmatpush.msra.mxu0 0.0
    %4382 = vmatpush.msra.mxu0 0.0
    %4383 = vmatpush.msra.mxu0 0.0
    %v4384 = vand.u32 %v772, 4294901760
    %v4385 = vsub.f32 %v772, %v4384
    %4386 = vmatpush.msra.mxu0 %v4385
    %v4387 = vand.u32 %v811, 4294901760
    %v4388 = vsub.f32 %v811, %v4387
    %4389 = vmatmul.f32.gmra.mxu0 %v4388
    %v4390 = vpop.f32.mrf.mxu0
    %v4391 = vadd.f32 %v4367, %v4390
    %4392 = vdwg.mxu0
    %4393 = vmatpush.msra.mxu0 0.0
    %4394 = vmatpush.msra.mxu0 0.0
    %4395 = vmatpush.msra.mxu0 0.0
    %4396 = vmatpush.msra.mxu0 0.0
    %4397 = vmatpush.msra.mxu0 0.0
    %4398 = vmatpush.msra.mxu0 0.0
    %4399 = vmatpush.msra.mxu0 0.0
    %4400 = vmatpush.msra.mxu0 0.0
    %4401 = vmatpush.msra.mxu0 0.0
    %4402 = vmatpush.msra.mxu0 0.0
    %4403 = vmatpush.msra.mxu0 0.0
    %4404 = vmatpush.msra.mxu0 0.0
    %4405 = vmatpush.msra.mxu0 0.0
    %4406 = vmatpush.msra.mxu0 0.0
    %4407 = vmatpush.msra.mxu0 0.0
    %v4408 = vand.u32 %v772, 4294901760
    %4409 = vmatpush.msra.mxu0 %v4408
    %v4410 = vand.u32 %v811, 4294901760
    %v4411 = vsub.f32 %v811, %v4410
    %v4412 = vand.u32 %v4411, 4294901760
    %4413 = vmatmul.f32.gmra.mxu0 %v4412
    %v4414 = vpop.f32.mrf.mxu0
    %v4415 = vadd.f32 %v4391, %v4414
    %4416 = vdwg.mxu0
    %4417 = vmatpush.msra.mxu0 0.0
    %4418 = vmatpush.msra.mxu0 0.0
    %4419 = vmatpush.msra.mxu0 0.0
    %4420 = vmatpush.msra.mxu0 0.0
    %4421 = vmatpush.msra.mxu0 0.0
    %4422 = vmatpush.msra.mxu0 0.0
    %4423 = vmatpush.msra.mxu0 0.0
    %4424 = vmatpush.msra.mxu0 0.0
    %4425 = vmatpush.msra.mxu0 0.0
    %4426 = vmatpush.msra.mxu0 0.0
    %4427 = vmatpush.msra.mxu0 0.0
    %4428 = vmatpush.msra.mxu0 0.0
    %4429 = vmatpush.msra.mxu0 0.0
    %4430 = vmatpush.msra.mxu0 0.0
    %4431 = vmatpush.msra.mxu0 0.0
    %v4432 = vand.u32 %v772, 4294901760
    %v4433 = vsub.f32 %v772, %v4432
    %v4434 = vand.u32 %v4433, 4294901760
    %4435 = vmatpush.msra.mxu0 %v4434
    %v4436 = vand.u32 %v811, 4294901760
    %4437 = vmatmul.f32.gmra.mxu0 %v4436
    %v4438 = vpop.f32.mrf.mxu0
    %v4439 = vadd.f32 %v4415, %v4438
    %4440 = vdwg.mxu0
    %4441 = vmatpush.msra.mxu0 0.0
    %4442 = vmatpush.msra.mxu0 0.0
    %4443 = vmatpush.msra.mxu0 0.0
    %4444 = vmatpush.msra.mxu0 0.0
    %4445 = vmatpush.msra.mxu0 0.0
    %4446 = vmatpush.msra.mxu0 0.0
    %4447 = vmatpush.msra.mxu0 0.0
    %4448 = vmatpush.msra.mxu0 0.0
    %4449 = vmatpush.msra.mxu0 0.0
    %4450 = vmatpush.msra.mxu0 0.0
    %4451 = vmatpush.msra.mxu0 0.0
    %4452 = vmatpush.msra.mxu0 0.0
    %4453 = vmatpush.msra.mxu0 0.0
    %4454 = vmatpush.msra.mxu0 0.0
    %4455 = vmatpush.msra.mxu0 0.0
    %v4456 = vand.u32 %v772, 4294901760
    %4457 = vmatpush.msra.mxu0 %v4456
    %v4458 = vand.u32 %v811, 4294901760
    %4459 = vmatmul.f32.gmra.mxu0 %v4458
    %v4460 = vpop.f32.mrf.mxu0
    %v4461 = vadd.f32 %v4439, %v4460
    %4462 = vdwg.mxu0
    %4463 = vmatpush.msra.mxu0 0.0
    %4464 = vmatpush.msra.mxu0 0.0
    %4465 = vmatpush.msra.mxu0 0.0
    %4466 = vmatpush.msra.mxu0 0.0
    %4467 = vmatpush.msra.mxu0 0.0
    %4468 = vmatpush.msra.mxu0 0.0
    %4469 = vmatpush.msra.mxu0 0.0
    %4470 = vmatpush.msra.mxu0 0.0
    %4471 = vmatpush.msra.mxu0 0.0
    %4472 = vmatpush.msra.mxu0 0.0
    %4473 = vmatpush.msra.mxu0 0.0
    %4474 = vmatpush.msra.mxu0 0.0
    %4475 = vmatpush.msra.mxu0 0.0
    %4476 = vmatpush.msra.mxu0 0.0
    %4477 = vmatpush.msra.mxu0 0.0
    %v4478 = vand.u32 %v773, 4294901760
    %4479 = vmatpush.msra.mxu0 %v4478
    %v4480 = vand.u32 %v811, 4294901760
    %v4481 = vsub.f32 %v811, %v4480
    %v4482 = vand.u32 %v4481, 4294901760
    %v4483 = vsub.f32 %v4481, %v4482
    %v4484 = vand.u32 %v4483, 4294901760
    %4485 = vmatmul.f32.gmra.mxu0 %v4484
    %v4486 = vpop.f32.mrf.mxu0
    %v4487 = vadd.f32 0.0, %v4486
    %4488 = vdwg.mxu0
    %4489 = vmatpush.msra.mxu0 0.0
    %4490 = vmatpush.msra.mxu0 0.0
    %4491 = vmatpush.msra.mxu0 0.0
    %4492 = vmatpush.msra.mxu0 0.0
    %4493 = vmatpush.msra.mxu0 0.0
    %4494 = vmatpush.msra.mxu0 0.0
    %4495 = vmatpush.msra.mxu0 0.0
    %4496 = vmatpush.msra.mxu0 0.0
    %4497 = vmatpush.msra.mxu0 0.0
    %4498 = vmatpush.msra.mxu0 0.0
    %4499 = vmatpush.msra.mxu0 0.0
    %4500 = vmatpush.msra.mxu0 0.0
    %4501 = vmatpush.msra.mxu0 0.0
    %4502 = vmatpush.msra.mxu0 0.0
    %4503 = vmatpush.msra.mxu0 0.0
    %v4504 = vand.u32 %v773, 4294901760
    %v4505 = vsub.f32 %v773, %v4504
    %v4506 = vand.u32 %v4505, 4294901760
    %v4507 = vsub.f32 %v4505, %v4506
    %v4508 = vand.u32 %v4507, 4294901760
    %4509 = vmatpush.msra.mxu0 %v4508
    %v4510 = vand.u32 %v811, 4294901760
    %4511 = vmatmul.f32.gmra.mxu0 %v4510
    %v4512 = vpop.f32.mrf.mxu0
    %v4513 = vadd.f32 %v4487, %v4512
    %4514 = vdwg.mxu0
    %4515 = vmatpush.msra.mxu0 0.0
    %4516 = vmatpush.msra.mxu0 0.0
    %4517 = vmatpush.msra.mxu0 0.0
    %4518 = vmatpush.msra.mxu0 0.0
    %4519 = vmatpush.msra.mxu0 0.0
    %4520 = vmatpush.msra.mxu0 0.0
    %4521 = vmatpush.msra.mxu0 0.0
    %4522 = vmatpush.msra.mxu0 0.0
    %4523 = vmatpush.msra.mxu0 0.0
    %4524 = vmatpush.msra.mxu0 0.0
    %4525 = vmatpush.msra.mxu0 0.0
    %4526 = vmatpush.msra.mxu0 0.0
    %4527 = vmatpush.msra.mxu0 0.0
    %4528 = vmatpush.msra.mxu0 0.0
    %4529 = vmatpush.msra.mxu0 0.0
    %v4530 = vand.u32 %v773, 4294901760
    %v4531 = vsub.f32 %v773, %v4530
    %4532 = vmatpush.msra.mxu0 %v4531
    %v4533 = vand.u32 %v811, 4294901760
    %v4534 = vsub.f32 %v811, %v4533
    %4535 = vmatmul.f32.gmra.mxu0 %v4534
    %v4536 = vpop.f32.mrf.mxu0
    %v4537 = vadd.f32 %v4513, %v4536
    %4538 = vdwg.mxu0
    %4539 = vmatpush.msra.mxu0 0.0
    %4540 = vmatpush.msra.mxu0 0.0
    %4541 = vmatpush.msra.mxu0 0.0
    %4542 = vmatpush.msra.mxu0 0.0
    %4543 = vmatpush.msra.mxu0 0.0
    %4544 = vmatpush.msra.mxu0 0.0
    %4545 = vmatpush.msra.mxu0 0.0
    %4546 = vmatpush.msra.mxu0 0.0
    %4547 = vmatpush.msra.mxu0 0.0
    %4548 = vmatpush.msra.mxu0 0.0
    %4549 = vmatpush.msra.mxu0 0.0
    %4550 = vmatpush.msra.mxu0 0.0
    %4551 = vmatpush.msra.mxu0 0.0
    %4552 = vmatpush.msra.mxu0 0.0
    %4553 = vmatpush.msra.mxu0 0.0
    %v4554 = vand.u32 %v773, 4294901760
    %4555 = vmatpush.msra.mxu0 %v4554
    %v4556 = vand.u32 %v811, 4294901760
    %v4557 = vsub.f32 %v811, %v4556
    %v4558 = vand.u32 %v4557, 4294901760
    %4559 = vmatmul.f32.gmra.mxu0 %v4558
    %v4560 = vpop.f32.mrf.mxu0
    %v4561 = vadd.f32 %v4537, %v4560
    %4562 = vdwg.mxu0
    %4563 = vmatpush.msra.mxu0 0.0
    %4564 = vmatpush.msra.mxu0 0.0
    %4565 = vmatpush.msra.mxu0 0.0
    %4566 = vmatpush.msra.mxu0 0.0
    %4567 = vmatpush.msra.mxu0 0.0
    %4568 = vmatpush.msra.mxu0 0.0
    %4569 = vmatpush.msra.mxu0 0.0
    %4570 = vmatpush.msra.mxu0 0.0
    %4571 = vmatpush.msra.mxu0 0.0
    %4572 = vmatpush.msra.mxu0 0.0
    %4573 = vmatpush.msra.mxu0 0.0
    %4574 = vmatpush.msra.mxu0 0.0
    %4575 = vmatpush.msra.mxu0 0.0
    %4576 = vmatpush.msra.mxu0 0.0
    %4577 = vmatpush.msra.mxu0 0.0
    %v4578 = vand.u32 %v773, 4294901760
    %v4579 = vsub.f32 %v773, %v4578
    %v4580 = vand.u32 %v4579, 4294901760
    %4581 = vmatpush.msra.mxu0 %v4580
    %v4582 = vand.u32 %v811, 4294901760
    %4583 = vmatmul.f32.gmra.mxu0 %v4582
    %v4584 = vpop.f32.mrf.mxu0
    %v4585 = vadd.f32 %v4561, %v4584
    %4586 = vdwg.mxu0
    %4587 = vmatpush.msra.mxu0 0.0
    %4588 = vmatpush.msra.mxu0 0.0
    %4589 = vmatpush.msra.mxu0 0.0
    %4590 = vmatpush.msra.mxu0 0.0
    %4591 = vmatpush.msra.mxu0 0.0
    %4592 = vmatpush.msra.mxu0 0.0
    %4593 = vmatpush.msra.mxu0 0.0
    %4594 = vmatpush.msra.mxu0 0.0
    %4595 = vmatpush.msra.mxu0 0.0
    %4596 = vmatpush.msra.mxu0 0.0
    %4597 = vmatpush.msra.mxu0 0.0
    %4598 = vmatpush.msra.mxu0 0.0
    %4599 = vmatpush.msra.mxu0 0.0
    %4600 = vmatpush.msra.mxu0 0.0
    %4601 = vmatpush.msra.mxu0 0.0
    %v4602 = vand.u32 %v773, 4294901760
    %4603 = vmatpush.msra.mxu0 %v4602
    %v4604 = vand.u32 %v811, 4294901760
    %4605 = vmatmul.f32.gmra.mxu0 %v4604
    %v4606 = vpop.f32.mrf.mxu0
    %v4607 = vadd.f32 %v4585, %v4606
    %4608 = vdwg.mxu0
    %4609 = vmatpush.msra.mxu0 0.0
    %4610 = vmatpush.msra.mxu0 0.0
    %4611 = vmatpush.msra.mxu0 0.0
    %4612 = vmatpush.msra.mxu0 0.0
    %4613 = vmatpush.msra.mxu0 0.0
    %4614 = vmatpush.msra.mxu0 0.0
    %4615 = vmatpush.msra.mxu0 0.0
    %4616 = vmatpush.msra.mxu0 0.0
    %4617 = vmatpush.msra.mxu0 0.0
    %4618 = vmatpush.msra.mxu0 0.0
    %4619 = vmatpush.msra.mxu0 0.0
    %4620 = vmatpush.msra.mxu0 0.0
    %4621 = vmatpush.msra.mxu0 0.0
    %4622 = vmatpush.msra.mxu0 0.0
    %4623 = vmatpush.msra.mxu0 0.0
    %v4624 = vand.u32 %v774, 4294901760
    %4625 = vmatpush.msra.mxu0 %v4624
    %v4626 = vand.u32 %v811, 4294901760
    %v4627 = vsub.f32 %v811, %v4626
    %v4628 = vand.u32 %v4627, 4294901760
    %v4629 = vsub.f32 %v4627, %v4628
    %v4630 = vand.u32 %v4629, 4294901760
    %4631 = vmatmul.f32.gmra.mxu0 %v4630
    %v4632 = vpop.f32.mrf.mxu0
    %v4633 = vadd.f32 0.0, %v4632
    %4634 = vdwg.mxu0
    %4635 = vmatpush.msra.mxu0 0.0
    %4636 = vmatpush.msra.mxu0 0.0
    %4637 = vmatpush.msra.mxu0 0.0
    %4638 = vmatpush.msra.mxu0 0.0
    %4639 = vmatpush.msra.mxu0 0.0
    %4640 = vmatpush.msra.mxu0 0.0
    %4641 = vmatpush.msra.mxu0 0.0
    %4642 = vmatpush.msra.mxu0 0.0
    %4643 = vmatpush.msra.mxu0 0.0
    %4644 = vmatpush.msra.mxu0 0.0
    %4645 = vmatpush.msra.mxu0 0.0
    %4646 = vmatpush.msra.mxu0 0.0
    %4647 = vmatpush.msra.mxu0 0.0
    %4648 = vmatpush.msra.mxu0 0.0
    %4649 = vmatpush.msra.mxu0 0.0
    %v4650 = vand.u32 %v774, 4294901760
    %v4651 = vsub.f32 %v774, %v4650
    %v4652 = vand.u32 %v4651, 4294901760
    %v4653 = vsub.f32 %v4651, %v4652
    %v4654 = vand.u32 %v4653, 4294901760
    %4655 = vmatpush.msra.mxu0 %v4654
    %v4656 = vand.u32 %v811, 4294901760
    %4657 = vmatmul.f32.gmra.mxu0 %v4656
    %v4658 = vpop.f32.mrf.mxu0
    %v4659 = vadd.f32 %v4633, %v4658
    %4660 = vdwg.mxu0
    %4661 = vmatpush.msra.mxu0 0.0
    %4662 = vmatpush.msra.mxu0 0.0
    %4663 = vmatpush.msra.mxu0 0.0
    %4664 = vmatpush.msra.mxu0 0.0
    %4665 = vmatpush.msra.mxu0 0.0
    %4666 = vmatpush.msra.mxu0 0.0
    %4667 = vmatpush.msra.mxu0 0.0
    %4668 = vmatpush.msra.mxu0 0.0
    %4669 = vmatpush.msra.mxu0 0.0
    %4670 = vmatpush.msra.mxu0 0.0
    %4671 = vmatpush.msra.mxu0 0.0
    %4672 = vmatpush.msra.mxu0 0.0
    %4673 = vmatpush.msra.mxu0 0.0
    %4674 = vmatpush.msra.mxu0 0.0
    %4675 = vmatpush.msra.mxu0 0.0
    %v4676 = vand.u32 %v774, 4294901760
    %v4677 = vsub.f32 %v774, %v4676
    %4678 = vmatpush.msra.mxu0 %v4677
    %v4679 = vand.u32 %v811, 4294901760
    %v4680 = vsub.f32 %v811, %v4679
    %4681 = vmatmul.f32.gmra.mxu0 %v4680
    %v4682 = vpop.f32.mrf.mxu0
    %v4683 = vadd.f32 %v4659, %v4682
    %4684 = vdwg.mxu0
    %4685 = vmatpush.msra.mxu0 0.0
    %4686 = vmatpush.msra.mxu0 0.0
    %4687 = vmatpush.msra.mxu0 0.0
    %4688 = vmatpush.msra.mxu0 0.0
    %4689 = vmatpush.msra.mxu0 0.0
    %4690 = vmatpush.msra.mxu0 0.0
    %4691 = vmatpush.msra.mxu0 0.0
    %4692 = vmatpush.msra.mxu0 0.0
    %4693 = vmatpush.msra.mxu0 0.0
    %4694 = vmatpush.msra.mxu0 0.0
    %4695 = vmatpush.msra.mxu0 0.0
    %4696 = vmatpush.msra.mxu0 0.0
    %4697 = vmatpush.msra.mxu0 0.0
    %4698 = vmatpush.msra.mxu0 0.0
    %4699 = vmatpush.msra.mxu0 0.0
    %v4700 = vand.u32 %v774, 4294901760
    %4701 = vmatpush.msra.mxu0 %v4700
    %v4702 = vand.u32 %v811, 4294901760
    %v4703 = vsub.f32 %v811, %v4702
    %v4704 = vand.u32 %v4703, 4294901760
    %4705 = vmatmul.f32.gmra.mxu0 %v4704
    %v4706 = vpop.f32.mrf.mxu0
    %v4707 = vadd.f32 %v4683, %v4706
    %4708 = vdwg.mxu0
    %4709 = vmatpush.msra.mxu0 0.0
    %4710 = vmatpush.msra.mxu0 0.0
    %4711 = vmatpush.msra.mxu0 0.0
    %4712 = vmatpush.msra.mxu0 0.0
    %4713 = vmatpush.msra.mxu0 0.0
    %4714 = vmatpush.msra.mxu0 0.0
    %4715 = vmatpush.msra.mxu0 0.0
    %4716 = vmatpush.msra.mxu0 0.0
    %4717 = vmatpush.msra.mxu0 0.0
    %4718 = vmatpush.msra.mxu0 0.0
    %4719 = vmatpush.msra.mxu0 0.0
    %4720 = vmatpush.msra.mxu0 0.0
    %4721 = vmatpush.msra.mxu0 0.0
    %4722 = vmatpush.msra.mxu0 0.0
    %4723 = vmatpush.msra.mxu0 0.0
    %v4724 = vand.u32 %v774, 4294901760
    %v4725 = vsub.f32 %v774, %v4724
    %v4726 = vand.u32 %v4725, 4294901760
    %4727 = vmatpush.msra.mxu0 %v4726
    %v4728 = vand.u32 %v811, 4294901760
    %4729 = vmatmul.f32.gmra.mxu0 %v4728
    %v4730 = vpop.f32.mrf.mxu0
    %v4731 = vadd.f32 %v4707, %v4730
    %4732 = vdwg.mxu0
    %4733 = vmatpush.msra.mxu0 0.0
    %4734 = vmatpush.msra.mxu0 0.0
    %4735 = vmatpush.msra.mxu0 0.0
    %4736 = vmatpush.msra.mxu0 0.0
    %4737 = vmatpush.msra.mxu0 0.0
    %4738 = vmatpush.msra.mxu0 0.0
    %4739 = vmatpush.msra.mxu0 0.0
    %4740 = vmatpush.msra.mxu0 0.0
    %4741 = vmatpush.msra.mxu0 0.0
    %4742 = vmatpush.msra.mxu0 0.0
    %4743 = vmatpush.msra.mxu0 0.0
    %4744 = vmatpush.msra.mxu0 0.0
    %4745 = vmatpush.msra.mxu0 0.0
    %4746 = vmatpush.msra.mxu0 0.0
    %4747 = vmatpush.msra.mxu0 0.0
    %v4748 = vand.u32 %v774, 4294901760
    %4749 = vmatpush.msra.mxu0 %v4748
    %v4750 = vand.u32 %v811, 4294901760
    %4751 = vmatmul.f32.gmra.mxu0 %v4750
    %v4752 = vpop.f32.mrf.mxu0
    %v4753 = vadd.f32 %v4731, %v4752
    %4754 = vdwg.mxu0
    %4755 = vmatpush.msra.mxu0 0.0
    %4756 = vmatpush.msra.mxu0 0.0
    %4757 = vmatpush.msra.mxu0 0.0
    %4758 = vmatpush.msra.mxu0 0.0
    %4759 = vmatpush.msra.mxu0 0.0
    %4760 = vmatpush.msra.mxu0 0.0
    %4761 = vmatpush.msra.mxu0 0.0
    %4762 = vmatpush.msra.mxu0 0.0
    %4763 = vmatpush.msra.mxu0 0.0
    %4764 = vmatpush.msra.mxu0 0.0
    %4765 = vmatpush.msra.mxu0 0.0
    %4766 = vmatpush.msra.mxu0 0.0
    %4767 = vmatpush.msra.mxu0 0.0
    %4768 = vmatpush.msra.mxu0 0.0
    %4769 = vmatpush.msra.mxu0 0.0
    %v4770 = vand.u32 %v775, 4294901760
    %4771 = vmatpush.msra.mxu0 %v4770
    %v4772 = vand.u32 %v811, 4294901760
    %v4773 = vsub.f32 %v811, %v4772
    %v4774 = vand.u32 %v4773, 4294901760
    %v4775 = vsub.f32 %v4773, %v4774
    %v4776 = vand.u32 %v4775, 4294901760
    %4777 = vmatmul.f32.gmra.mxu0 %v4776
    %v4778 = vpop.f32.mrf.mxu0
    %v4779 = vadd.f32 0.0, %v4778
    %4780 = vdwg.mxu0
    %4781 = vmatpush.msra.mxu0 0.0
    %4782 = vmatpush.msra.mxu0 0.0
    %4783 = vmatpush.msra.mxu0 0.0
    %4784 = vmatpush.msra.mxu0 0.0
    %4785 = vmatpush.msra.mxu0 0.0
    %4786 = vmatpush.msra.mxu0 0.0
    %4787 = vmatpush.msra.mxu0 0.0
    %4788 = vmatpush.msra.mxu0 0.0
    %4789 = vmatpush.msra.mxu0 0.0
    %4790 = vmatpush.msra.mxu0 0.0
    %4791 = vmatpush.msra.mxu0 0.0
    %4792 = vmatpush.msra.mxu0 0.0
    %4793 = vmatpush.msra.mxu0 0.0
    %4794 = vmatpush.msra.mxu0 0.0
    %4795 = vmatpush.msra.mxu0 0.0
    %v4796 = vand.u32 %v775, 4294901760
    %v4797 = vsub.f32 %v775, %v4796
    %v4798 = vand.u32 %v4797, 4294901760
    %v4799 = vsub.f32 %v4797, %v4798
    %v4800 = vand.u32 %v4799, 4294901760
    %4801 = vmatpush.msra.mxu0 %v4800
    %v4802 = vand.u32 %v811, 4294901760
    %4803 = vmatmul.f32.gmra.mxu0 %v4802
    %v4804 = vpop.f32.mrf.mxu0
    %v4805 = vadd.f32 %v4779, %v4804
    %4806 = vdwg.mxu0
    %4807 = vmatpush.msra.mxu0 0.0
    %4808 = vmatpush.msra.mxu0 0.0
    %4809 = vmatpush.msra.mxu0 0.0
    %4810 = vmatpush.msra.mxu0 0.0
    %4811 = vmatpush.msra.mxu0 0.0
    %4812 = vmatpush.msra.mxu0 0.0
    %4813 = vmatpush.msra.mxu0 0.0
    %4814 = vmatpush.msra.mxu0 0.0
    %4815 = vmatpush.msra.mxu0 0.0
    %4816 = vmatpush.msra.mxu0 0.0
    %4817 = vmatpush.msra.mxu0 0.0
    %4818 = vmatpush.msra.mxu0 0.0
    %4819 = vmatpush.msra.mxu0 0.0
    %4820 = vmatpush.msra.mxu0 0.0
    %4821 = vmatpush.msra.mxu0 0.0
    %v4822 = vand.u32 %v775, 4294901760
    %v4823 = vsub.f32 %v775, %v4822
    %4824 = vmatpush.msra.mxu0 %v4823
    %v4825 = vand.u32 %v811, 4294901760
    %v4826 = vsub.f32 %v811, %v4825
    %4827 = vmatmul.f32.gmra.mxu0 %v4826
    %v4828 = vpop.f32.mrf.mxu0
    %v4829 = vadd.f32 %v4805, %v4828
    %4830 = vdwg.mxu0
    %4831 = vmatpush.msra.mxu0 0.0
    %4832 = vmatpush.msra.mxu0 0.0
    %4833 = vmatpush.msra.mxu0 0.0
    %4834 = vmatpush.msra.mxu0 0.0
    %4835 = vmatpush.msra.mxu0 0.0
    %4836 = vmatpush.msra.mxu0 0.0
    %4837 = vmatpush.msra.mxu0 0.0
    %4838 = vmatpush.msra.mxu0 0.0
    %4839 = vmatpush.msra.mxu0 0.0
    %4840 = vmatpush.msra.mxu0 0.0
    %4841 = vmatpush.msra.mxu0 0.0
    %4842 = vmatpush.msra.mxu0 0.0
    %4843 = vmatpush.msra.mxu0 0.0
    %4844 = vmatpush.msra.mxu0 0.0
    %4845 = vmatpush.msra.mxu0 0.0
    %v4846 = vand.u32 %v775, 4294901760
    %4847 = vmatpush.msra.mxu0 %v4846
    %v4848 = vand.u32 %v811, 4294901760
    %v4849 = vsub.f32 %v811, %v4848
    %v4850 = vand.u32 %v4849, 4294901760
    %4851 = vmatmul.f32.gmra.mxu0 %v4850
    %v4852 = vpop.f32.mrf.mxu0
    %v4853 = vadd.f32 %v4829, %v4852
    %4854 = vdwg.mxu0
    %4855 = vmatpush.msra.mxu0 0.0
    %4856 = vmatpush.msra.mxu0 0.0
    %4857 = vmatpush.msra.mxu0 0.0
    %4858 = vmatpush.msra.mxu0 0.0
    %4859 = vmatpush.msra.mxu0 0.0
    %4860 = vmatpush.msra.mxu0 0.0
    %4861 = vmatpush.msra.mxu0 0.0
    %4862 = vmatpush.msra.mxu0 0.0
    %4863 = vmatpush.msra.mxu0 0.0
    %4864 = vmatpush.msra.mxu0 0.0
    %4865 = vmatpush.msra.mxu0 0.0
    %4866 = vmatpush.msra.mxu0 0.0
    %4867 = vmatpush.msra.mxu0 0.0
    %4868 = vmatpush.msra.mxu0 0.0
    %4869 = vmatpush.msra.mxu0 0.0
    %v4870 = vand.u32 %v775, 4294901760
    %v4871 = vsub.f32 %v775, %v4870
    %v4872 = vand.u32 %v4871, 4294901760
    %4873 = vmatpush.msra.mxu0 %v4872
    %v4874 = vand.u32 %v811, 4294901760
    %4875 = vmatmul.f32.gmra.mxu0 %v4874
    %v4876 = vpop.f32.mrf.mxu0
    %v4877 = vadd.f32 %v4853, %v4876
    %4878 = vdwg.mxu0
    %4879 = vmatpush.msra.mxu0 0.0
    %4880 = vmatpush.msra.mxu0 0.0
    %4881 = vmatpush.msra.mxu0 0.0
    %4882 = vmatpush.msra.mxu0 0.0
    %4883 = vmatpush.msra.mxu0 0.0
    %4884 = vmatpush.msra.mxu0 0.0
    %4885 = vmatpush.msra.mxu0 0.0
    %4886 = vmatpush.msra.mxu0 0.0
    %4887 = vmatpush.msra.mxu0 0.0
    %4888 = vmatpush.msra.mxu0 0.0
    %4889 = vmatpush.msra.mxu0 0.0
    %4890 = vmatpush.msra.mxu0 0.0
    %4891 = vmatpush.msra.mxu0 0.0
    %4892 = vmatpush.msra.mxu0 0.0
    %4893 = vmatpush.msra.mxu0 0.0
    %v4894 = vand.u32 %v775, 4294901760
    %4895 = vmatpush.msra.mxu0 %v4894
    %v4896 = vand.u32 %v811, 4294901760
    %4897 = vmatmul.f32.gmra.mxu0 %v4896
    %v4898 = vpop.f32.mrf.mxu0
    %v4899 = vadd.f32 %v4877, %v4898
    %4900 = vdwg.mxu0
    %4901 = vmatpush.msra.mxu0 0.0
    %4902 = vmatpush.msra.mxu0 0.0
    %4903 = vmatpush.msra.mxu0 0.0
    %4904 = vmatpush.msra.mxu0 0.0
    %4905 = vmatpush.msra.mxu0 0.0
    %4906 = vmatpush.msra.mxu0 0.0
    %4907 = vmatpush.msra.mxu0 0.0
    %4908 = vmatpush.msra.mxu0 0.0
    %4909 = vmatpush.msra.mxu0 0.0
    %4910 = vmatpush.msra.mxu0 0.0
    %4911 = vmatpush.msra.mxu0 0.0
    %4912 = vmatpush.msra.mxu0 0.0
    %4913 = vmatpush.msra.mxu0 0.0
    %4914 = vmatpush.msra.mxu0 0.0
    %4915 = vmatpush.msra.mxu0 0.0
    %v4916 = vand.u32 %v776, 4294901760
    %4917 = vmatpush.msra.mxu0 %v4916
    %v4918 = vand.u32 %v811, 4294901760
    %v4919 = vsub.f32 %v811, %v4918
    %v4920 = vand.u32 %v4919, 4294901760
    %v4921 = vsub.f32 %v4919, %v4920
    %v4922 = vand.u32 %v4921, 4294901760
    %4923 = vmatmul.f32.gmra.mxu0 %v4922
    %v4924 = vpop.f32.mrf.mxu0
    %v4925 = vadd.f32 0.0, %v4924
    %4926 = vdwg.mxu0
    %4927 = vmatpush.msra.mxu0 0.0
    %4928 = vmatpush.msra.mxu0 0.0
    %4929 = vmatpush.msra.mxu0 0.0
    %4930 = vmatpush.msra.mxu0 0.0
    %4931 = vmatpush.msra.mxu0 0.0
    %4932 = vmatpush.msra.mxu0 0.0
    %4933 = vmatpush.msra.mxu0 0.0
    %4934 = vmatpush.msra.mxu0 0.0
    %4935 = vmatpush.msra.mxu0 0.0
    %4936 = vmatpush.msra.mxu0 0.0
    %4937 = vmatpush.msra.mxu0 0.0
    %4938 = vmatpush.msra.mxu0 0.0
    %4939 = vmatpush.msra.mxu0 0.0
    %4940 = vmatpush.msra.mxu0 0.0
    %4941 = vmatpush.msra.mxu0 0.0
    %v4942 = vand.u32 %v776, 4294901760
    %v4943 = vsub.f32 %v776, %v4942
    %v4944 = vand.u32 %v4943, 4294901760
    %v4945 = vsub.f32 %v4943, %v4944
    %v4946 = vand.u32 %v4945, 4294901760
    %4947 = vmatpush.msra.mxu0 %v4946
    %v4948 = vand.u32 %v811, 4294901760
    %4949 = vmatmul.f32.gmra.mxu0 %v4948
    %v4950 = vpop.f32.mrf.mxu0
    %v4951 = vadd.f32 %v4925, %v4950
    %4952 = vdwg.mxu0
    %4953 = vmatpush.msra.mxu0 0.0
    %4954 = vmatpush.msra.mxu0 0.0
    %4955 = vmatpush.msra.mxu0 0.0
    %4956 = vmatpush.msra.mxu0 0.0
    %4957 = vmatpush.msra.mxu0 0.0
    %4958 = vmatpush.msra.mxu0 0.0
    %4959 = vmatpush.msra.mxu0 0.0
    %4960 = vmatpush.msra.mxu0 0.0
    %4961 = vmatpush.msra.mxu0 0.0
    %4962 = vmatpush.msra.mxu0 0.0
    %4963 = vmatpush.msra.mxu0 0.0
    %4964 = vmatpush.msra.mxu0 0.0
    %4965 = vmatpush.msra.mxu0 0.0
    %4966 = vmatpush.msra.mxu0 0.0
    %4967 = vmatpush.msra.mxu0 0.0
    %v4968 = vand.u32 %v776, 4294901760
    %v4969 = vsub.f32 %v776, %v4968
    %4970 = vmatpush.msra.mxu0 %v4969
    %v4971 = vand.u32 %v811, 4294901760
    %v4972 = vsub.f32 %v811, %v4971
    %4973 = vmatmul.f32.gmra.mxu0 %v4972
    %v4974 = vpop.f32.mrf.mxu0
    %v4975 = vadd.f32 %v4951, %v4974
    %4976 = vdwg.mxu0
    %4977 = vmatpush.msra.mxu0 0.0
    %4978 = vmatpush.msra.mxu0 0.0
    %4979 = vmatpush.msra.mxu0 0.0
    %4980 = vmatpush.msra.mxu0 0.0
    %4981 = vmatpush.msra.mxu0 0.0
    %4982 = vmatpush.msra.mxu0 0.0
    %4983 = vmatpush.msra.mxu0 0.0
    %4984 = vmatpush.msra.mxu0 0.0
    %4985 = vmatpush.msra.mxu0 0.0
    %4986 = vmatpush.msra.mxu0 0.0
    %4987 = vmatpush.msra.mxu0 0.0
    %4988 = vmatpush.msra.mxu0 0.0
    %4989 = vmatpush.msra.mxu0 0.0
    %4990 = vmatpush.msra.mxu0 0.0
    %4991 = vmatpush.msra.mxu0 0.0
    %v4992 = vand.u32 %v776, 4294901760
    %4993 = vmatpush.msra.mxu0 %v4992
    %v4994 = vand.u32 %v811, 4294901760
    %v4995 = vsub.f32 %v811, %v4994
    %v4996 = vand.u32 %v4995, 4294901760
    %4997 = vmatmul.f32.gmra.mxu0 %v4996
    %v4998 = vpop.f32.mrf.mxu0
    %v4999 = vadd.f32 %v4975, %v4998
    %5000 = vdwg.mxu0
    %5001 = vmatpush.msra.mxu0 0.0
    %5002 = vmatpush.msra.mxu0 0.0
    %5003 = vmatpush.msra.mxu0 0.0
    %5004 = vmatpush.msra.mxu0 0.0
    %5005 = vmatpush.msra.mxu0 0.0
    %5006 = vmatpush.msra.mxu0 0.0
    %5007 = vmatpush.msra.mxu0 0.0
    %5008 = vmatpush.msra.mxu0 0.0
    %5009 = vmatpush.msra.mxu0 0.0
    %5010 = vmatpush.msra.mxu0 0.0
    %5011 = vmatpush.msra.mxu0 0.0
    %5012 = vmatpush.msra.mxu0 0.0
    %5013 = vmatpush.msra.mxu0 0.0
    %5014 = vmatpush.msra.mxu0 0.0
    %5015 = vmatpush.msra.mxu0 0.0
    %v5016 = vand.u32 %v776, 4294901760
    %v5017 = vsub.f32 %v776, %v5016
    %v5018 = vand.u32 %v5017, 4294901760
    %5019 = vmatpush.msra.mxu0 %v5018
    %v5020 = vand.u32 %v811, 4294901760
    %5021 = vmatmul.f32.gmra.mxu0 %v5020
    %v5022 = vpop.f32.mrf.mxu0
    %v5023 = vadd.f32 %v4999, %v5022
    %5024 = vdwg.mxu0
    %5025 = vmatpush.msra.mxu0 0.0
    %5026 = vmatpush.msra.mxu0 0.0
    %5027 = vmatpush.msra.mxu0 0.0
    %5028 = vmatpush.msra.mxu0 0.0
    %5029 = vmatpush.msra.mxu0 0.0
    %5030 = vmatpush.msra.mxu0 0.0
    %5031 = vmatpush.msra.mxu0 0.0
    %5032 = vmatpush.msra.mxu0 0.0
    %5033 = vmatpush.msra.mxu0 0.0
    %5034 = vmatpush.msra.mxu0 0.0
    %5035 = vmatpush.msra.mxu0 0.0
    %5036 = vmatpush.msra.mxu0 0.0
    %5037 = vmatpush.msra.mxu0 0.0
    %5038 = vmatpush.msra.mxu0 0.0
    %5039 = vmatpush.msra.mxu0 0.0
    %v5040 = vand.u32 %v776, 4294901760
    %5041 = vmatpush.msra.mxu0 %v5040
    %v5042 = vand.u32 %v811, 4294901760
    %5043 = vmatmul.f32.gmra.mxu0 %v5042
    %v5044 = vpop.f32.mrf.mxu0
    %v5045 = vadd.f32 %v5023, %v5044
    %5046 = vdwg.mxu0
    %5047 = vmatpush.msra.mxu0 0.0
    %5048 = vmatpush.msra.mxu0 0.0
    %5049 = vmatpush.msra.mxu0 0.0
    %5050 = vmatpush.msra.mxu0 0.0
    %5051 = vmatpush.msra.mxu0 0.0
    %5052 = vmatpush.msra.mxu0 0.0
    %5053 = vmatpush.msra.mxu0 0.0
    %5054 = vmatpush.msra.mxu0 0.0
    %5055 = vmatpush.msra.mxu0 0.0
    %5056 = vmatpush.msra.mxu0 0.0
    %5057 = vmatpush.msra.mxu0 0.0
    %5058 = vmatpush.msra.mxu0 0.0
    %5059 = vmatpush.msra.mxu0 0.0
    %5060 = vmatpush.msra.mxu0 0.0
    %5061 = vmatpush.msra.mxu0 0.0
    %v5062 = vand.u32 %v777, 4294901760
    %5063 = vmatpush.msra.mxu0 %v5062
    %v5064 = vand.u32 %v811, 4294901760
    %v5065 = vsub.f32 %v811, %v5064
    %v5066 = vand.u32 %v5065, 4294901760
    %v5067 = vsub.f32 %v5065, %v5066
    %v5068 = vand.u32 %v5067, 4294901760
    %5069 = vmatmul.f32.gmra.mxu0 %v5068
    %v5070 = vpop.f32.mrf.mxu0
    %v5071 = vadd.f32 0.0, %v5070
    %5072 = vdwg.mxu0
    %5073 = vmatpush.msra.mxu0 0.0
    %5074 = vmatpush.msra.mxu0 0.0
    %5075 = vmatpush.msra.mxu0 0.0
    %5076 = vmatpush.msra.mxu0 0.0
    %5077 = vmatpush.msra.mxu0 0.0
    %5078 = vmatpush.msra.mxu0 0.0
    %5079 = vmatpush.msra.mxu0 0.0
    %5080 = vmatpush.msra.mxu0 0.0
    %5081 = vmatpush.msra.mxu0 0.0
    %5082 = vmatpush.msra.mxu0 0.0
    %5083 = vmatpush.msra.mxu0 0.0
    %5084 = vmatpush.msra.mxu0 0.0
    %5085 = vmatpush.msra.mxu0 0.0
    %5086 = vmatpush.msra.mxu0 0.0
    %5087 = vmatpush.msra.mxu0 0.0
    %v5088 = vand.u32 %v777, 4294901760
    %v5089 = vsub.f32 %v777, %v5088
    %v5090 = vand.u32 %v5089, 4294901760
    %v5091 = vsub.f32 %v5089, %v5090
    %v5092 = vand.u32 %v5091, 4294901760
    %5093 = vmatpush.msra.mxu0 %v5092
    %v5094 = vand.u32 %v811, 4294901760
    %5095 = vmatmul.f32.gmra.mxu0 %v5094
    %v5096 = vpop.f32.mrf.mxu0
    %v5097 = vadd.f32 %v5071, %v5096
    %5098 = vdwg.mxu0
    %5099 = vmatpush.msra.mxu0 0.0
    %5100 = vmatpush.msra.mxu0 0.0
    %5101 = vmatpush.msra.mxu0 0.0
    %5102 = vmatpush.msra.mxu0 0.0
    %5103 = vmatpush.msra.mxu0 0.0
    %5104 = vmatpush.msra.mxu0 0.0
    %5105 = vmatpush.msra.mxu0 0.0
    %5106 = vmatpush.msra.mxu0 0.0
    %5107 = vmatpush.msra.mxu0 0.0
    %5108 = vmatpush.msra.mxu0 0.0
    %5109 = vmatpush.msra.mxu0 0.0
    %5110 = vmatpush.msra.mxu0 0.0
    %5111 = vmatpush.msra.mxu0 0.0
    %5112 = vmatpush.msra.mxu0 0.0
    %5113 = vmatpush.msra.mxu0 0.0
    %v5114 = vand.u32 %v777, 4294901760
    %v5115 = vsub.f32 %v777, %v5114
    %5116 = vmatpush.msra.mxu0 %v5115
    %v5117 = vand.u32 %v811, 4294901760
    %v5118 = vsub.f32 %v811, %v5117
    %5119 = vmatmul.f32.gmra.mxu0 %v5118
    %v5120 = vpop.f32.mrf.mxu0
    %v5121 = vadd.f32 %v5097, %v5120
    %5122 = vdwg.mxu0
    %5123 = vmatpush.msra.mxu0 0.0
    %5124 = vmatpush.msra.mxu0 0.0
    %5125 = vmatpush.msra.mxu0 0.0
    %5126 = vmatpush.msra.mxu0 0.0
    %5127 = vmatpush.msra.mxu0 0.0
    %5128 = vmatpush.msra.mxu0 0.0
    %5129 = vmatpush.msra.mxu0 0.0
    %5130 = vmatpush.msra.mxu0 0.0
    %5131 = vmatpush.msra.mxu0 0.0
    %5132 = vmatpush.msra.mxu0 0.0
    %5133 = vmatpush.msra.mxu0 0.0
    %5134 = vmatpush.msra.mxu0 0.0
    %5135 = vmatpush.msra.mxu0 0.0
    %5136 = vmatpush.msra.mxu0 0.0
    %5137 = vmatpush.msra.mxu0 0.0
    %v5138 = vand.u32 %v777, 4294901760
    %5139 = vmatpush.msra.mxu0 %v5138
    %v5140 = vand.u32 %v811, 4294901760
    %v5141 = vsub.f32 %v811, %v5140
    %v5142 = vand.u32 %v5141, 4294901760
    %5143 = vmatmul.f32.gmra.mxu0 %v5142
    %v5144 = vpop.f32.mrf.mxu0
    %v5145 = vadd.f32 %v5121, %v5144
    %5146 = vdwg.mxu0
    %5147 = vmatpush.msra.mxu0 0.0
    %5148 = vmatpush.msra.mxu0 0.0
    %5149 = vmatpush.msra.mxu0 0.0
    %5150 = vmatpush.msra.mxu0 0.0
    %5151 = vmatpush.msra.mxu0 0.0
    %5152 = vmatpush.msra.mxu0 0.0
    %5153 = vmatpush.msra.mxu0 0.0
    %5154 = vmatpush.msra.mxu0 0.0
    %5155 = vmatpush.msra.mxu0 0.0
    %5156 = vmatpush.msra.mxu0 0.0
    %5157 = vmatpush.msra.mxu0 0.0
    %5158 = vmatpush.msra.mxu0 0.0
    %5159 = vmatpush.msra.mxu0 0.0
    %5160 = vmatpush.msra.mxu0 0.0
    %5161 = vmatpush.msra.mxu0 0.0
    %v5162 = vand.u32 %v777, 4294901760
    %v5163 = vsub.f32 %v777, %v5162
    %v5164 = vand.u32 %v5163, 4294901760
    %5165 = vmatpush.msra.mxu0 %v5164
    %v5166 = vand.u32 %v811, 4294901760
    %5167 = vmatmul.f32.gmra.mxu0 %v5166
    %v5168 = vpop.f32.mrf.mxu0
    %v5169 = vadd.f32 %v5145, %v5168
    %5170 = vdwg.mxu0
    %5171 = vmatpush.msra.mxu0 0.0
    %5172 = vmatpush.msra.mxu0 0.0
    %5173 = vmatpush.msra.mxu0 0.0
    %5174 = vmatpush.msra.mxu0 0.0
    %5175 = vmatpush.msra.mxu0 0.0
    %5176 = vmatpush.msra.mxu0 0.0
    %5177 = vmatpush.msra.mxu0 0.0
    %5178 = vmatpush.msra.mxu0 0.0
    %5179 = vmatpush.msra.mxu0 0.0
    %5180 = vmatpush.msra.mxu0 0.0
    %5181 = vmatpush.msra.mxu0 0.0
    %5182 = vmatpush.msra.mxu0 0.0
    %5183 = vmatpush.msra.mxu0 0.0
    %5184 = vmatpush.msra.mxu0 0.0
    %5185 = vmatpush.msra.mxu0 0.0
    %v5186 = vand.u32 %v777, 4294901760
    %5187 = vmatpush.msra.mxu0 %v5186
    %v5188 = vand.u32 %v811, 4294901760
    %5189 = vmatmul.f32.gmra.mxu0 %v5188
    %v5190 = vpop.f32.mrf.mxu0
    %v5191 = vadd.f32 %v5169, %v5190
    %5192 = vdwg.mxu0
    %5193 = vmatpush.msra.mxu0 0.0
    %5194 = vmatpush.msra.mxu0 0.0
    %5195 = vmatpush.msra.mxu0 0.0
    %5196 = vmatpush.msra.mxu0 0.0
    %5197 = vmatpush.msra.mxu0 0.0
    %5198 = vmatpush.msra.mxu0 0.0
    %5199 = vmatpush.msra.mxu0 0.0
    %5200 = vmatpush.msra.mxu0 0.0
    %5201 = vmatpush.msra.mxu0 0.0
    %5202 = vmatpush.msra.mxu0 0.0
    %5203 = vmatpush.msra.mxu0 0.0
    %5204 = vmatpush.msra.mxu0 0.0
    %5205 = vmatpush.msra.mxu0 0.0
    %5206 = vmatpush.msra.mxu0 0.0
    %5207 = vmatpush.msra.mxu0 0.0
    %v5208 = vand.u32 %v778, 4294901760
    %5209 = vmatpush.msra.mxu0 %v5208
    %v5210 = vand.u32 %v811, 4294901760
    %v5211 = vsub.f32 %v811, %v5210
    %v5212 = vand.u32 %v5211, 4294901760
    %v5213 = vsub.f32 %v5211, %v5212
    %v5214 = vand.u32 %v5213, 4294901760
    %5215 = vmatmul.f32.gmra.mxu0 %v5214
    %v5216 = vpop.f32.mrf.mxu0
    %v5217 = vadd.f32 0.0, %v5216
    %5218 = vdwg.mxu0
    %5219 = vmatpush.msra.mxu0 0.0
    %5220 = vmatpush.msra.mxu0 0.0
    %5221 = vmatpush.msra.mxu0 0.0
    %5222 = vmatpush.msra.mxu0 0.0
    %5223 = vmatpush.msra.mxu0 0.0
    %5224 = vmatpush.msra.mxu0 0.0
    %5225 = vmatpush.msra.mxu0 0.0
    %5226 = vmatpush.msra.mxu0 0.0
    %5227 = vmatpush.msra.mxu0 0.0
    %5228 = vmatpush.msra.mxu0 0.0
    %5229 = vmatpush.msra.mxu0 0.0
    %5230 = vmatpush.msra.mxu0 0.0
    %5231 = vmatpush.msra.mxu0 0.0
    %5232 = vmatpush.msra.mxu0 0.0
    %5233 = vmatpush.msra.mxu0 0.0
    %v5234 = vand.u32 %v778, 4294901760
    %v5235 = vsub.f32 %v778, %v5234
    %v5236 = vand.u32 %v5235, 4294901760
    %v5237 = vsub.f32 %v5235, %v5236
    %v5238 = vand.u32 %v5237, 4294901760
    %5239 = vmatpush.msra.mxu0 %v5238
    %v5240 = vand.u32 %v811, 4294901760
    %5241 = vmatmul.f32.gmra.mxu0 %v5240
    %v5242 = vpop.f32.mrf.mxu0
    %v5243 = vadd.f32 %v5217, %v5242
    %5244 = vdwg.mxu0
    %5245 = vmatpush.msra.mxu0 0.0
    %5246 = vmatpush.msra.mxu0 0.0
    %5247 = vmatpush.msra.mxu0 0.0
    %5248 = vmatpush.msra.mxu0 0.0
    %5249 = vmatpush.msra.mxu0 0.0
    %5250 = vmatpush.msra.mxu0 0.0
    %5251 = vmatpush.msra.mxu0 0.0
    %5252 = vmatpush.msra.mxu0 0.0
    %5253 = vmatpush.msra.mxu0 0.0
    %5254 = vmatpush.msra.mxu0 0.0
    %5255 = vmatpush.msra.mxu0 0.0
    %5256 = vmatpush.msra.mxu0 0.0
    %5257 = vmatpush.msra.mxu0 0.0
    %5258 = vmatpush.msra.mxu0 0.0
    %5259 = vmatpush.msra.mxu0 0.0
    %v5260 = vand.u32 %v778, 4294901760
    %v5261 = vsub.f32 %v778, %v5260
    %5262 = vmatpush.msra.mxu0 %v5261
    %v5263 = vand.u32 %v811, 4294901760
    %v5264 = vsub.f32 %v811, %v5263
    %5265 = vmatmul.f32.gmra.mxu0 %v5264
    %v5266 = vpop.f32.mrf.mxu0
    %v5267 = vadd.f32 %v5243, %v5266
    %5268 = vdwg.mxu0
    %5269 = vmatpush.msra.mxu0 0.0
    %5270 = vmatpush.msra.mxu0 0.0
    %5271 = vmatpush.msra.mxu0 0.0
    %5272 = vmatpush.msra.mxu0 0.0
    %5273 = vmatpush.msra.mxu0 0.0
    %5274 = vmatpush.msra.mxu0 0.0
    %5275 = vmatpush.msra.mxu0 0.0
    %5276 = vmatpush.msra.mxu0 0.0
    %5277 = vmatpush.msra.mxu0 0.0
    %5278 = vmatpush.msra.mxu0 0.0
    %5279 = vmatpush.msra.mxu0 0.0
    %5280 = vmatpush.msra.mxu0 0.0
    %5281 = vmatpush.msra.mxu0 0.0
    %5282 = vmatpush.msra.mxu0 0.0
    %5283 = vmatpush.msra.mxu0 0.0
    %v5284 = vand.u32 %v778, 4294901760
    %5285 = vmatpush.msra.mxu0 %v5284
    %v5286 = vand.u32 %v811, 4294901760
    %v5287 = vsub.f32 %v811, %v5286
    %v5288 = vand.u32 %v5287, 4294901760
    %5289 = vmatmul.f32.gmra.mxu0 %v5288
    %v5290 = vpop.f32.mrf.mxu0
    %v5291 = vadd.f32 %v5267, %v5290
    %5292 = vdwg.mxu0
    %5293 = vmatpush.msra.mxu0 0.0
    %5294 = vmatpush.msra.mxu0 0.0
    %5295 = vmatpush.msra.mxu0 0.0
    %5296 = vmatpush.msra.mxu0 0.0
    %5297 = vmatpush.msra.mxu0 0.0
    %5298 = vmatpush.msra.mxu0 0.0
    %5299 = vmatpush.msra.mxu0 0.0
    %5300 = vmatpush.msra.mxu0 0.0
    %5301 = vmatpush.msra.mxu0 0.0
    %5302 = vmatpush.msra.mxu0 0.0
    %5303 = vmatpush.msra.mxu0 0.0
    %5304 = vmatpush.msra.mxu0 0.0
    %5305 = vmatpush.msra.mxu0 0.0
    %5306 = vmatpush.msra.mxu0 0.0
    %5307 = vmatpush.msra.mxu0 0.0
    %v5308 = vand.u32 %v778, 4294901760
    %v5309 = vsub.f32 %v778, %v5308
    %v5310 = vand.u32 %v5309, 4294901760
    %5311 = vmatpush.msra.mxu0 %v5310
    %v5312 = vand.u32 %v811, 4294901760
    %5313 = vmatmul.f32.gmra.mxu0 %v5312
    %v5314 = vpop.f32.mrf.mxu0
    %v5315 = vadd.f32 %v5291, %v5314
    %5316 = vdwg.mxu0
    %5317 = vmatpush.msra.mxu0 0.0
    %5318 = vmatpush.msra.mxu0 0.0
    %5319 = vmatpush.msra.mxu0 0.0
    %5320 = vmatpush.msra.mxu0 0.0
    %5321 = vmatpush.msra.mxu0 0.0
    %5322 = vmatpush.msra.mxu0 0.0
    %5323 = vmatpush.msra.mxu0 0.0
    %5324 = vmatpush.msra.mxu0 0.0
    %5325 = vmatpush.msra.mxu0 0.0
    %5326 = vmatpush.msra.mxu0 0.0
    %5327 = vmatpush.msra.mxu0 0.0
    %5328 = vmatpush.msra.mxu0 0.0
    %5329 = vmatpush.msra.mxu0 0.0
    %5330 = vmatpush.msra.mxu0 0.0
    %5331 = vmatpush.msra.mxu0 0.0
    %v5332 = vand.u32 %v778, 4294901760
    %5333 = vmatpush.msra.mxu0 %v5332
    %v5334 = vand.u32 %v811, 4294901760
    %5335 = vmatmul.f32.gmra.mxu0 %v5334
    %v5336 = vpop.f32.mrf.mxu0
    %v5337 = vadd.f32 %v5315, %v5336
    %5338 = vdwg.mxu0
    %5339 = vmatpush.msra.mxu0 0.0
    %5340 = vmatpush.msra.mxu0 0.0
    %5341 = vmatpush.msra.mxu0 0.0
    %5342 = vmatpush.msra.mxu0 0.0
    %5343 = vmatpush.msra.mxu0 0.0
    %5344 = vmatpush.msra.mxu0 0.0
    %5345 = vmatpush.msra.mxu0 0.0
    %5346 = vmatpush.msra.mxu0 0.0
    %5347 = vmatpush.msra.mxu0 0.0
    %5348 = vmatpush.msra.mxu0 0.0
    %5349 = vmatpush.msra.mxu0 0.0
    %5350 = vmatpush.msra.mxu0 0.0
    %5351 = vmatpush.msra.mxu0 0.0
    %5352 = vmatpush.msra.mxu0 0.0
    %5353 = vmatpush.msra.mxu0 0.0
    %v5354 = vand.u32 %v779, 4294901760
    %5355 = vmatpush.msra.mxu0 %v5354
    %v5356 = vand.u32 %v811, 4294901760
    %v5357 = vsub.f32 %v811, %v5356
    %v5358 = vand.u32 %v5357, 4294901760
    %v5359 = vsub.f32 %v5357, %v5358
    %v5360 = vand.u32 %v5359, 4294901760
    %5361 = vmatmul.f32.gmra.mxu0 %v5360
    %v5362 = vpop.f32.mrf.mxu0
    %v5363 = vadd.f32 0.0, %v5362
    %5364 = vdwg.mxu0
    %5365 = vmatpush.msra.mxu0 0.0
    %5366 = vmatpush.msra.mxu0 0.0
    %5367 = vmatpush.msra.mxu0 0.0
    %5368 = vmatpush.msra.mxu0 0.0
    %5369 = vmatpush.msra.mxu0 0.0
    %5370 = vmatpush.msra.mxu0 0.0
    %5371 = vmatpush.msra.mxu0 0.0
    %5372 = vmatpush.msra.mxu0 0.0
    %5373 = vmatpush.msra.mxu0 0.0
    %5374 = vmatpush.msra.mxu0 0.0
    %5375 = vmatpush.msra.mxu0 0.0
    %5376 = vmatpush.msra.mxu0 0.0
    %5377 = vmatpush.msra.mxu0 0.0
    %5378 = vmatpush.msra.mxu0 0.0
    %5379 = vmatpush.msra.mxu0 0.0
    %v5380 = vand.u32 %v779, 4294901760
    %v5381 = vsub.f32 %v779, %v5380
    %v5382 = vand.u32 %v5381, 4294901760
    %v5383 = vsub.f32 %v5381, %v5382
    %v5384 = vand.u32 %v5383, 4294901760
    %5385 = vmatpush.msra.mxu0 %v5384
    %v5386 = vand.u32 %v811, 4294901760
    %5387 = vmatmul.f32.gmra.mxu0 %v5386
    %v5388 = vpop.f32.mrf.mxu0
    %v5389 = vadd.f32 %v5363, %v5388
    %5390 = vdwg.mxu0
    %5391 = vmatpush.msra.mxu0 0.0
    %5392 = vmatpush.msra.mxu0 0.0
    %5393 = vmatpush.msra.mxu0 0.0
    %5394 = vmatpush.msra.mxu0 0.0
    %5395 = vmatpush.msra.mxu0 0.0
    %5396 = vmatpush.msra.mxu0 0.0
    %5397 = vmatpush.msra.mxu0 0.0
    %5398 = vmatpush.msra.mxu0 0.0
    %5399 = vmatpush.msra.mxu0 0.0
    %5400 = vmatpush.msra.mxu0 0.0
    %5401 = vmatpush.msra.mxu0 0.0
    %5402 = vmatpush.msra.mxu0 0.0
    %5403 = vmatpush.msra.mxu0 0.0
    %5404 = vmatpush.msra.mxu0 0.0
    %5405 = vmatpush.msra.mxu0 0.0
    %v5406 = vand.u32 %v779, 4294901760
    %v5407 = vsub.f32 %v779, %v5406
    %5408 = vmatpush.msra.mxu0 %v5407
    %v5409 = vand.u32 %v811, 4294901760
    %v5410 = vsub.f32 %v811, %v5409
    %5411 = vmatmul.f32.gmra.mxu0 %v5410
    %v5412 = vpop.f32.mrf.mxu0
    %v5413 = vadd.f32 %v5389, %v5412
    %5414 = vdwg.mxu0
    %5415 = vmatpush.msra.mxu0 0.0
    %5416 = vmatpush.msra.mxu0 0.0
    %5417 = vmatpush.msra.mxu0 0.0
    %5418 = vmatpush.msra.mxu0 0.0
    %5419 = vmatpush.msra.mxu0 0.0
    %5420 = vmatpush.msra.mxu0 0.0
    %5421 = vmatpush.msra.mxu0 0.0
    %5422 = vmatpush.msra.mxu0 0.0
    %5423 = vmatpush.msra.mxu0 0.0
    %5424 = vmatpush.msra.mxu0 0.0
    %5425 = vmatpush.msra.mxu0 0.0
    %5426 = vmatpush.msra.mxu0 0.0
    %5427 = vmatpush.msra.mxu0 0.0
    %5428 = vmatpush.msra.mxu0 0.0
    %5429 = vmatpush.msra.mxu0 0.0
    %v5430 = vand.u32 %v779, 4294901760
    %5431 = vmatpush.msra.mxu0 %v5430
    %v5432 = vand.u32 %v811, 4294901760
    %v5433 = vsub.f32 %v811, %v5432
    %v5434 = vand.u32 %v5433, 4294901760
    %5435 = vmatmul.f32.gmra.mxu0 %v5434
    %v5436 = vpop.f32.mrf.mxu0
    %v5437 = vadd.f32 %v5413, %v5436
    %5438 = vdwg.mxu0
    %5439 = vmatpush.msra.mxu0 0.0
    %5440 = vmatpush.msra.mxu0 0.0
    %5441 = vmatpush.msra.mxu0 0.0
    %5442 = vmatpush.msra.mxu0 0.0
    %5443 = vmatpush.msra.mxu0 0.0
    %5444 = vmatpush.msra.mxu0 0.0
    %5445 = vmatpush.msra.mxu0 0.0
    %5446 = vmatpush.msra.mxu0 0.0
    %5447 = vmatpush.msra.mxu0 0.0
    %5448 = vmatpush.msra.mxu0 0.0
    %5449 = vmatpush.msra.mxu0 0.0
    %5450 = vmatpush.msra.mxu0 0.0
    %5451 = vmatpush.msra.mxu0 0.0
    %5452 = vmatpush.msra.mxu0 0.0
    %5453 = vmatpush.msra.mxu0 0.0
    %v5454 = vand.u32 %v779, 4294901760
    %v5455 = vsub.f32 %v779, %v5454
    %v5456 = vand.u32 %v5455, 4294901760
    %5457 = vmatpush.msra.mxu0 %v5456
    %v5458 = vand.u32 %v811, 4294901760
    %5459 = vmatmul.f32.gmra.mxu0 %v5458
    %v5460 = vpop.f32.mrf.mxu0
    %v5461 = vadd.f32 %v5437, %v5460
    %5462 = vdwg.mxu0
    %5463 = vmatpush.msra.mxu0 0.0
    %5464 = vmatpush.msra.mxu0 0.0
    %5465 = vmatpush.msra.mxu0 0.0
    %5466 = vmatpush.msra.mxu0 0.0
    %5467 = vmatpush.msra.mxu0 0.0
    %5468 = vmatpush.msra.mxu0 0.0
    %5469 = vmatpush.msra.mxu0 0.0
    %5470 = vmatpush.msra.mxu0 0.0
    %5471 = vmatpush.msra.mxu0 0.0
    %5472 = vmatpush.msra.mxu0 0.0
    %5473 = vmatpush.msra.mxu0 0.0
    %5474 = vmatpush.msra.mxu0 0.0
    %5475 = vmatpush.msra.mxu0 0.0
    %5476 = vmatpush.msra.mxu0 0.0
    %5477 = vmatpush.msra.mxu0 0.0
    %v5478 = vand.u32 %v779, 4294901760
    %5479 = vmatpush.msra.mxu0 %v5478
    %v5480 = vand.u32 %v811, 4294901760
    %5481 = vmatmul.f32.gmra.mxu0 %v5480
    %v5482 = vpop.f32.mrf.mxu0
    %v5483 = vadd.f32 %v5461, %v5482
    %5484 = vdwg.mxu0
    %5485 = vmatpush.msra.mxu0 0.0
    %5486 = vmatpush.msra.mxu0 0.0
    %5487 = vmatpush.msra.mxu0 0.0
    %5488 = vmatpush.msra.mxu0 0.0
    %5489 = vmatpush.msra.mxu0 0.0
    %5490 = vmatpush.msra.mxu0 0.0
    %5491 = vmatpush.msra.mxu0 0.0
    %5492 = vmatpush.msra.mxu0 0.0
    %5493 = vmatpush.msra.mxu0 0.0
    %5494 = vmatpush.msra.mxu0 0.0
    %5495 = vmatpush.msra.mxu0 0.0
    %5496 = vmatpush.msra.mxu0 0.0
    %5497 = vmatpush.msra.mxu0 0.0
    %5498 = vmatpush.msra.mxu0 0.0
    %5499 = vmatpush.msra.mxu0 0.0
    %v5500 = vand.u32 %v780, 4294901760
    %5501 = vmatpush.msra.mxu0 %v5500
    %v5502 = vand.u32 %v811, 4294901760
    %v5503 = vsub.f32 %v811, %v5502
    %v5504 = vand.u32 %v5503, 4294901760
    %v5505 = vsub.f32 %v5503, %v5504
    %v5506 = vand.u32 %v5505, 4294901760
    %5507 = vmatmul.f32.gmra.mxu0 %v5506
    %v5508 = vpop.f32.mrf.mxu0
    %v5509 = vadd.f32 0.0, %v5508
    %5510 = vdwg.mxu0
    %5511 = vmatpush.msra.mxu0 0.0
    %5512 = vmatpush.msra.mxu0 0.0
    %5513 = vmatpush.msra.mxu0 0.0
    %5514 = vmatpush.msra.mxu0 0.0
    %5515 = vmatpush.msra.mxu0 0.0
    %5516 = vmatpush.msra.mxu0 0.0
    %5517 = vmatpush.msra.mxu0 0.0
    %5518 = vmatpush.msra.mxu0 0.0
    %5519 = vmatpush.msra.mxu0 0.0
    %5520 = vmatpush.msra.mxu0 0.0
    %5521 = vmatpush.msra.mxu0 0.0
    %5522 = vmatpush.msra.mxu0 0.0
    %5523 = vmatpush.msra.mxu0 0.0
    %5524 = vmatpush.msra.mxu0 0.0
    %5525 = vmatpush.msra.mxu0 0.0
    %v5526 = vand.u32 %v780, 4294901760
    %v5527 = vsub.f32 %v780, %v5526
    %v5528 = vand.u32 %v5527, 4294901760
    %v5529 = vsub.f32 %v5527, %v5528
    %v5530 = vand.u32 %v5529, 4294901760
    %5531 = vmatpush.msra.mxu0 %v5530
    %v5532 = vand.u32 %v811, 4294901760
    %5533 = vmatmul.f32.gmra.mxu0 %v5532
    %v5534 = vpop.f32.mrf.mxu0
    %v5535 = vadd.f32 %v5509, %v5534
    %5536 = vdwg.mxu0
    %5537 = vmatpush.msra.mxu0 0.0
    %5538 = vmatpush.msra.mxu0 0.0
    %5539 = vmatpush.msra.mxu0 0.0
    %5540 = vmatpush.msra.mxu0 0.0
    %5541 = vmatpush.msra.mxu0 0.0
    %5542 = vmatpush.msra.mxu0 0.0
    %5543 = vmatpush.msra.mxu0 0.0
    %5544 = vmatpush.msra.mxu0 0.0
    %5545 = vmatpush.msra.mxu0 0.0
    %5546 = vmatpush.msra.mxu0 0.0
    %5547 = vmatpush.msra.mxu0 0.0
    %5548 = vmatpush.msra.mxu0 0.0
    %5549 = vmatpush.msra.mxu0 0.0
    %5550 = vmatpush.msra.mxu0 0.0
    %5551 = vmatpush.msra.mxu0 0.0
    %v5552 = vand.u32 %v780, 4294901760
    %v5553 = vsub.f32 %v780, %v5552
    %5554 = vmatpush.msra.mxu0 %v5553
    %v5555 = vand.u32 %v811, 4294901760
    %v5556 = vsub.f32 %v811, %v5555
    %5557 = vmatmul.f32.gmra.mxu0 %v5556
    %v5558 = vpop.f32.mrf.mxu0
    %v5559 = vadd.f32 %v5535, %v5558
    %5560 = vdwg.mxu0
    %5561 = vmatpush.msra.mxu0 0.0
    %5562 = vmatpush.msra.mxu0 0.0
    %5563 = vmatpush.msra.mxu0 0.0
    %5564 = vmatpush.msra.mxu0 0.0
    %5565 = vmatpush.msra.mxu0 0.0
    %5566 = vmatpush.msra.mxu0 0.0
    %5567 = vmatpush.msra.mxu0 0.0
    %5568 = vmatpush.msra.mxu0 0.0
    %5569 = vmatpush.msra.mxu0 0.0
    %5570 = vmatpush.msra.mxu0 0.0
    %5571 = vmatpush.msra.mxu0 0.0
    %5572 = vmatpush.msra.mxu0 0.0
    %5573 = vmatpush.msra.mxu0 0.0
    %5574 = vmatpush.msra.mxu0 0.0
    %5575 = vmatpush.msra.mxu0 0.0
    %v5576 = vand.u32 %v780, 4294901760
    %5577 = vmatpush.msra.mxu0 %v5576
    %v5578 = vand.u32 %v811, 4294901760
    %v5579 = vsub.f32 %v811, %v5578
    %v5580 = vand.u32 %v5579, 4294901760
    %5581 = vmatmul.f32.gmra.mxu0 %v5580
    %v5582 = vpop.f32.mrf.mxu0
    %v5583 = vadd.f32 %v5559, %v5582
    %5584 = vdwg.mxu0
    %5585 = vmatpush.msra.mxu0 0.0
    %5586 = vmatpush.msra.mxu0 0.0
    %5587 = vmatpush.msra.mxu0 0.0
    %5588 = vmatpush.msra.mxu0 0.0
    %5589 = vmatpush.msra.mxu0 0.0
    %5590 = vmatpush.msra.mxu0 0.0
    %5591 = vmatpush.msra.mxu0 0.0
    %5592 = vmatpush.msra.mxu0 0.0
    %5593 = vmatpush.msra.mxu0 0.0
    %5594 = vmatpush.msra.mxu0 0.0
    %5595 = vmatpush.msra.mxu0 0.0
    %5596 = vmatpush.msra.mxu0 0.0
    %5597 = vmatpush.msra.mxu0 0.0
    %5598 = vmatpush.msra.mxu0 0.0
    %5599 = vmatpush.msra.mxu0 0.0
    %v5600 = vand.u32 %v780, 4294901760
    %v5601 = vsub.f32 %v780, %v5600
    %v5602 = vand.u32 %v5601, 4294901760
    %5603 = vmatpush.msra.mxu0 %v5602
    %v5604 = vand.u32 %v811, 4294901760
    %5605 = vmatmul.f32.gmra.mxu0 %v5604
    %v5606 = vpop.f32.mrf.mxu0
    %v5607 = vadd.f32 %v5583, %v5606
    %5608 = vdwg.mxu0
    %5609 = vmatpush.msra.mxu0 0.0
    %5610 = vmatpush.msra.mxu0 0.0
    %5611 = vmatpush.msra.mxu0 0.0
    %5612 = vmatpush.msra.mxu0 0.0
    %5613 = vmatpush.msra.mxu0 0.0
    %5614 = vmatpush.msra.mxu0 0.0
    %5615 = vmatpush.msra.mxu0 0.0
    %5616 = vmatpush.msra.mxu0 0.0
    %5617 = vmatpush.msra.mxu0 0.0
    %5618 = vmatpush.msra.mxu0 0.0
    %5619 = vmatpush.msra.mxu0 0.0
    %5620 = vmatpush.msra.mxu0 0.0
    %5621 = vmatpush.msra.mxu0 0.0
    %5622 = vmatpush.msra.mxu0 0.0
    %5623 = vmatpush.msra.mxu0 0.0
    %v5624 = vand.u32 %v780, 4294901760
    %5625 = vmatpush.msra.mxu0 %v5624
    %v5626 = vand.u32 %v811, 4294901760
    %5627 = vmatmul.f32.gmra.mxu0 %v5626
    %v5628 = vpop.f32.mrf.mxu0
    %v5629 = vadd.f32 %v5607, %v5628
    %5630 = vdwg.mxu0
    %5631 = vmatpush.msra.mxu0 0.0
    %5632 = vmatpush.msra.mxu0 0.0
    %5633 = vmatpush.msra.mxu0 0.0
    %5634 = vmatpush.msra.mxu0 0.0
    %5635 = vmatpush.msra.mxu0 0.0
    %5636 = vmatpush.msra.mxu0 0.0
    %5637 = vmatpush.msra.mxu0 0.0
    %5638 = vmatpush.msra.mxu0 0.0
    %5639 = vmatpush.msra.mxu0 0.0
    %5640 = vmatpush.msra.mxu0 0.0
    %5641 = vmatpush.msra.mxu0 0.0
    %5642 = vmatpush.msra.mxu0 0.0
    %5643 = vmatpush.msra.mxu0 0.0
    %5644 = vmatpush.msra.mxu0 0.0
    %5645 = vmatpush.msra.mxu0 0.0
    %v5646 = vand.u32 %v781, 4294901760
    %5647 = vmatpush.msra.mxu0 %v5646
    %v5648 = vand.u32 %v811, 4294901760
    %v5649 = vsub.f32 %v811, %v5648
    %v5650 = vand.u32 %v5649, 4294901760
    %v5651 = vsub.f32 %v5649, %v5650
    %v5652 = vand.u32 %v5651, 4294901760
    %5653 = vmatmul.f32.gmra.mxu0 %v5652
    %v5654 = vpop.f32.mrf.mxu0
    %v5655 = vadd.f32 0.0, %v5654
    %5656 = vdwg.mxu0
    %5657 = vmatpush.msra.mxu0 0.0
    %5658 = vmatpush.msra.mxu0 0.0
    %5659 = vmatpush.msra.mxu0 0.0
    %5660 = vmatpush.msra.mxu0 0.0
    %5661 = vmatpush.msra.mxu0 0.0
    %5662 = vmatpush.msra.mxu0 0.0
    %5663 = vmatpush.msra.mxu0 0.0
    %5664 = vmatpush.msra.mxu0 0.0
    %5665 = vmatpush.msra.mxu0 0.0
    %5666 = vmatpush.msra.mxu0 0.0
    %5667 = vmatpush.msra.mxu0 0.0
    %5668 = vmatpush.msra.mxu0 0.0
    %5669 = vmatpush.msra.mxu0 0.0
    %5670 = vmatpush.msra.mxu0 0.0
    %5671 = vmatpush.msra.mxu0 0.0
    %v5672 = vand.u32 %v781, 4294901760
    %v5673 = vsub.f32 %v781, %v5672
    %v5674 = vand.u32 %v5673, 4294901760
    %v5675 = vsub.f32 %v5673, %v5674
    %v5676 = vand.u32 %v5675, 4294901760
    %5677 = vmatpush.msra.mxu0 %v5676
    %v5678 = vand.u32 %v811, 4294901760
    %5679 = vmatmul.f32.gmra.mxu0 %v5678
    %v5680 = vpop.f32.mrf.mxu0
    %v5681 = vadd.f32 %v5655, %v5680
    %5682 = vdwg.mxu0
    %5683 = vmatpush.msra.mxu0 0.0
    %5684 = vmatpush.msra.mxu0 0.0
    %5685 = vmatpush.msra.mxu0 0.0
    %5686 = vmatpush.msra.mxu0 0.0
    %5687 = vmatpush.msra.mxu0 0.0
    %5688 = vmatpush.msra.mxu0 0.0
    %5689 = vmatpush.msra.mxu0 0.0
    %5690 = vmatpush.msra.mxu0 0.0
    %5691 = vmatpush.msra.mxu0 0.0
    %5692 = vmatpush.msra.mxu0 0.0
    %5693 = vmatpush.msra.mxu0 0.0
    %5694 = vmatpush.msra.mxu0 0.0
    %5695 = vmatpush.msra.mxu0 0.0
    %5696 = vmatpush.msra.mxu0 0.0
    %5697 = vmatpush.msra.mxu0 0.0
    %v5698 = vand.u32 %v781, 4294901760
    %v5699 = vsub.f32 %v781, %v5698
    %5700 = vmatpush.msra.mxu0 %v5699
    %v5701 = vand.u32 %v811, 4294901760
    %v5702 = vsub.f32 %v811, %v5701
    %5703 = vmatmul.f32.gmra.mxu0 %v5702
    %v5704 = vpop.f32.mrf.mxu0
    %v5705 = vadd.f32 %v5681, %v5704
    %5706 = vdwg.mxu0
    %5707 = vmatpush.msra.mxu0 0.0
    %5708 = vmatpush.msra.mxu0 0.0
    %5709 = vmatpush.msra.mxu0 0.0
    %5710 = vmatpush.msra.mxu0 0.0
    %5711 = vmatpush.msra.mxu0 0.0
    %5712 = vmatpush.msra.mxu0 0.0
    %5713 = vmatpush.msra.mxu0 0.0
    %5714 = vmatpush.msra.mxu0 0.0
    %5715 = vmatpush.msra.mxu0 0.0
    %5716 = vmatpush.msra.mxu0 0.0
    %5717 = vmatpush.msra.mxu0 0.0
    %5718 = vmatpush.msra.mxu0 0.0
    %5719 = vmatpush.msra.mxu0 0.0
    %5720 = vmatpush.msra.mxu0 0.0
    %5721 = vmatpush.msra.mxu0 0.0
    %v5722 = vand.u32 %v781, 4294901760
    %5723 = vmatpush.msra.mxu0 %v5722
    %v5724 = vand.u32 %v811, 4294901760
    %v5725 = vsub.f32 %v811, %v5724
    %v5726 = vand.u32 %v5725, 4294901760
    %5727 = vmatmul.f32.gmra.mxu0 %v5726
    %v5728 = vpop.f32.mrf.mxu0
    %v5729 = vadd.f32 %v5705, %v5728
    %5730 = vdwg.mxu0
    %5731 = vmatpush.msra.mxu0 0.0
    %5732 = vmatpush.msra.mxu0 0.0
    %5733 = vmatpush.msra.mxu0 0.0
    %5734 = vmatpush.msra.mxu0 0.0
    %5735 = vmatpush.msra.mxu0 0.0
    %5736 = vmatpush.msra.mxu0 0.0
    %5737 = vmatpush.msra.mxu0 0.0
    %5738 = vmatpush.msra.mxu0 0.0
    %5739 = vmatpush.msra.mxu0 0.0
    %5740 = vmatpush.msra.mxu0 0.0
    %5741 = vmatpush.msra.mxu0 0.0
    %5742 = vmatpush.msra.mxu0 0.0
    %5743 = vmatpush.msra.mxu0 0.0
    %5744 = vmatpush.msra.mxu0 0.0
    %5745 = vmatpush.msra.mxu0 0.0
    %v5746 = vand.u32 %v781, 4294901760
    %v5747 = vsub.f32 %v781, %v5746
    %v5748 = vand.u32 %v5747, 4294901760
    %5749 = vmatpush.msra.mxu0 %v5748
    %v5750 = vand.u32 %v811, 4294901760
    %5751 = vmatmul.f32.gmra.mxu0 %v5750
    %v5752 = vpop.f32.mrf.mxu0
    %v5753 = vadd.f32 %v5729, %v5752
    %5754 = vdwg.mxu0
    %5755 = vmatpush.msra.mxu0 0.0
    %5756 = vmatpush.msra.mxu0 0.0
    %5757 = vmatpush.msra.mxu0 0.0
    %5758 = vmatpush.msra.mxu0 0.0
    %5759 = vmatpush.msra.mxu0 0.0
    %5760 = vmatpush.msra.mxu0 0.0
    %5761 = vmatpush.msra.mxu0 0.0
    %5762 = vmatpush.msra.mxu0 0.0
    %5763 = vmatpush.msra.mxu0 0.0
    %5764 = vmatpush.msra.mxu0 0.0
    %5765 = vmatpush.msra.mxu0 0.0
    %5766 = vmatpush.msra.mxu0 0.0
    %5767 = vmatpush.msra.mxu0 0.0
    %5768 = vmatpush.msra.mxu0 0.0
    %5769 = vmatpush.msra.mxu0 0.0
    %v5770 = vand.u32 %v781, 4294901760
    %5771 = vmatpush.msra.mxu0 %v5770
    %v5772 = vand.u32 %v811, 4294901760
    %5773 = vmatmul.f32.gmra.mxu0 %v5772
    %v5774 = vpop.f32.mrf.mxu0
    %v5775 = vadd.f32 %v5753, %v5774
    %5776 = vdwg.mxu0
    %v5781 = vrot.slane %v1103, 6
    %v5782 = vrot.slane %v1249, 4
    %v5783 = vrot.slane %v1395, 2
    %v5784 = vsel %vm120, %v957, %v5781
    %vm5785 = vcmask 1045508
    %v5786 = vsel %vm5785, %v5782, %v5783
    %vm5787 = vcmask 1043456
    %v5788 = vsel %vm5787, %v5784, %v5786
    %5790 = vst [vmem:[%s8] sm:$0xff] %v5788
    %v5821 = vrot.slane %v1687, 6
    %v5822 = vrot.slane %v1833, 4
    %v5823 = vrot.slane %v1979, 2
    %v5824 = vrot.slane %v2271, 6
    %v5825 = vrot.slane %v2417, 4
    %v5826 = vrot.slane %v2563, 2
    %v5827 = vrot.slane %v2855, 6
    %v5828 = vrot.slane %v3001, 4
    %v5829 = vrot.slane %v3147, 2
    %v5830 = vrot.slane %v3439, 6
    %v5831 = vrot.slane %v3585, 4
    %v5832 = vrot.slane %v3731, 2
    %v5833 = vrot.slane %v4023, 6
    %v5834 = vrot.slane %v4169, 4
    %v5835 = vrot.slane %v4315, 2
    %v5836 = vrot.slane %v4607, 6
    %v5837 = vrot.slane %v4753, 4
    %v5838 = vrot.slane %v4899, 2
    %v5839 = vrot.slane %v5191, 6
    %v5840 = vrot.slane %v5337, 4
    %v5841 = vrot.slane %v5483, 2
    %v5842 = vrot.slane %v5775, 6
    %v5843 = vsel %vm120, %v1541, %v5821
    %v5844 = vsel %vm5785, %v5822, %v5823
    %v5845 = vsel %vm5787, %v5843, %v5844
    %v5846 = vsel %vm120, %v2125, %v5824
    %v5847 = vsel %vm5785, %v5825, %v5826
    %v5848 = vsel %vm5787, %v5846, %v5847
    %v5849 = vsel %vm120, %v2709, %v5827
    %v5850 = vsel %vm5785, %v5828, %v5829
    %v5851 = vsel %vm5787, %v5849, %v5850
    %v5852 = vsel %vm120, %v3293, %v5830
    %v5853 = vsel %vm5785, %v5831, %v5832
    %v5854 = vsel %vm5787, %v5852, %v5853
    %v5855 = vsel %vm120, %v3877, %v5833
    %v5856 = vsel %vm5785, %v5834, %v5835
    %v5857 = vsel %vm5787, %v5855, %v5856
    %v5858 = vsel %vm120, %v4461, %v5836
    %v5859 = vsel %vm5785, %v5837, %v5838
    %v5860 = vsel %vm5787, %v5858, %v5859
    %v5861 = vsel %vm120, %v5045, %v5839
    %v5862 = vsel %vm5785, %v5840, %v5841
    %v5863 = vsel %vm5787, %v5861, %v5862
    %v5864 = vsel %vm120, %v5629, %v5842
    %5873 = vst [vmem:[%s10] sm:$0xff] %v5845
    %5874 = vst [vmem:[%s10 + $0x8] sm:$0xff] %v5848
    %5875 = vst [vmem:[%s10 + $0x10] sm:$0xff] %v5851
    %5876 = vst [vmem:[%s10 + $0x18] sm:$0xff] %v5854
    %5877 = vst [vmem:[%s10 + $0x20] sm:$0xff] %v5857
    %5878 = vst [vmem:[%s10 + $0x28] sm:$0xff] %v5860
    %5879 = vst [vmem:[%s10 + $0x30] sm:$0xff] %v5863
    %5880 = vst [vmem:[%s10 + $0x38] sm:$0xf] %v5864
    %v5881 = vsel %vm748, %v808, -inf
    %5882 = vmax.xlane.f32.xlu0 %v5881
    %v5883 = vpop.xlane.xlu0 %5882
    %vm5884 = vcmp.eq.f32.partialorder %v808, %v5883
    %v5885 = vsel %vm5884, %v751, 8
    %v5886 = vsel %vm748, %v5885, 2147483647
    %v5887 = vand.u32 %v5886, 65535
    %v5888 = vshra.s32 %v5886, 16
    %v5889 = vcvt.s32.f32 %v5887
    %v5890 = vcvt.s32.f32 %v5888
    %5891 = vmin.xlane.f32.xlu0 %v5890
    %v5892 = vpop.xlane.xlu0 %5891
    %vm5893 = vcmp.eq.f32.partialorder %v5890, %v5892
    %v5894 = vsel %vm5893, %v5889, inf
    %5895 = vmin.xlane.f32.xlu0 %v5894
    %v5896 = vpop.xlane.xlu0 %5895
    %v5897 = vcvt.f32.s32 %v5896
    %v5898 = vcvt.f32.s32 %v5892
    %v5899 = vshll.u32 %v5898, 16
    %v5900 = vadd.s32 %v5899, %v5897
    %vm5901 = vcmp.eq.s32.totalorder %v751, %v5900
    %v5902 = vsel %vm5901, 1, 0
    %v5903 = vcvt.s32.f32 %v5902
    %vm5904 = vcmp.eq.s32.totalorder %v751, 1
    %v5905 = vsel %vm5904, %v5900, %v806
    %v5906 = vadd.f32 %v807, %v5883
    %v5908 = vsel %vm809, %v5903, 0
    %5910 = vmatpush.msra.mxu0 0.0
    %5911 = vmatpush.msra.mxu0 0.0
    %5912 = vmatpush.msra.mxu0 0.0
    %5913 = vmatpush.msra.mxu0 0.0
    %5914 = vmatpush.msra.mxu0 0.0
    %5915 = vmatpush.msra.mxu0 0.0
    %5916 = vmatpush.msra.mxu0 0.0
    %5917 = vmatpush.msra.mxu0 0.0
    %5918 = vmatpush.msra.mxu0 0.0
    %5919 = vmatpush.msra.mxu0 0.0
    %5920 = vmatpush.msra.mxu0 0.0
    %5921 = vmatpush.msra.mxu0 0.0
    %5922 = vmatpush.msra.mxu0 0.0
    %5923 = vmatpush.msra.mxu0 0.0
    %5924 = vmatpush.msra.mxu0 0.0
    %v5925 = vand.u32 %v105, 4294901760
    %5926 = vmatpush.msra.mxu0 %v5925
    %v5927 = vand.u32 %v5908, 4294901760
    %v5928 = vsub.f32 %v5908, %v5927
    %v5929 = vand.u32 %v5928, 4294901760
    %v5930 = vsub.f32 %v5928, %v5929
    %v5931 = vand.u32 %v5930, 4294901760
    %5932 = vmatmul.f32.gmra.mxu0 %v5931
    %v5933 = vpop.f32.mrf.mxu0
    %v5934 = vadd.f32 0.0, %v5933
    %5935 = vdwg.mxu0
    %5936 = vmatpush.msra.mxu0 0.0
    %5937 = vmatpush.msra.mxu0 0.0
    %5938 = vmatpush.msra.mxu0 0.0
    %5939 = vmatpush.msra.mxu0 0.0
    %5940 = vmatpush.msra.mxu0 0.0
    %5941 = vmatpush.msra.mxu0 0.0
    %5942 = vmatpush.msra.mxu0 0.0
    %5943 = vmatpush.msra.mxu0 0.0
    %5944 = vmatpush.msra.mxu0 0.0
    %5945 = vmatpush.msra.mxu0 0.0
    %5946 = vmatpush.msra.mxu0 0.0
    %5947 = vmatpush.msra.mxu0 0.0
    %5948 = vmatpush.msra.mxu0 0.0
    %5949 = vmatpush.msra.mxu0 0.0
    %5950 = vmatpush.msra.mxu0 0.0
    %v5951 = vand.u32 %v105, 4294901760
    %v5952 = vsub.f32 %v105, %v5951
    %v5953 = vand.u32 %v5952, 4294901760
    %v5954 = vsub.f32 %v5952, %v5953
    %v5955 = vand.u32 %v5954, 4294901760
    %5956 = vmatpush.msra.mxu0 %v5955
    %v5957 = vand.u32 %v5908, 4294901760
    %5958 = vmatmul.f32.gmra.mxu0 %v5957
    %v5959 = vpop.f32.mrf.mxu0
    %v5960 = vadd.f32 %v5934, %v5959
    %5961 = vdwg.mxu0
    %5962 = vmatpush.msra.mxu0 0.0
    %5963 = vmatpush.msra.mxu0 0.0
    %5964 = vmatpush.msra.mxu0 0.0
    %5965 = vmatpush.msra.mxu0 0.0
    %5966 = vmatpush.msra.mxu0 0.0
    %5967 = vmatpush.msra.mxu0 0.0
    %5968 = vmatpush.msra.mxu0 0.0
    %5969 = vmatpush.msra.mxu0 0.0
    %5970 = vmatpush.msra.mxu0 0.0
    %5971 = vmatpush.msra.mxu0 0.0
    %5972 = vmatpush.msra.mxu0 0.0
    %5973 = vmatpush.msra.mxu0 0.0
    %5974 = vmatpush.msra.mxu0 0.0
    %5975 = vmatpush.msra.mxu0 0.0
    %5976 = vmatpush.msra.mxu0 0.0
    %v5977 = vand.u32 %v105, 4294901760
    %v5978 = vsub.f32 %v105, %v5977
    %5979 = vmatpush.msra.mxu0 %v5978
    %v5980 = vand.u32 %v5908, 4294901760
    %v5981 = vsub.f32 %v5908, %v5980
    %5982 = vmatmul.f32.gmra.mxu0 %v5981
    %v5983 = vpop.f32.mrf.mxu0
    %v5984 = vadd.f32 %v5960, %v5983
    %5985 = vdwg.mxu0
    %5986 = vmatpush.msra.mxu0 0.0
    %5987 = vmatpush.msra.mxu0 0.0
    %5988 = vmatpush.msra.mxu0 0.0
    %5989 = vmatpush.msra.mxu0 0.0
    %5990 = vmatpush.msra.mxu0 0.0
    %5991 = vmatpush.msra.mxu0 0.0
    %5992 = vmatpush.msra.mxu0 0.0
    %5993 = vmatpush.msra.mxu0 0.0
    %5994 = vmatpush.msra.mxu0 0.0
    %5995 = vmatpush.msra.mxu0 0.0
    %5996 = vmatpush.msra.mxu0 0.0
    %5997 = vmatpush.msra.mxu0 0.0
    %5998 = vmatpush.msra.mxu0 0.0
    %5999 = vmatpush.msra.mxu0 0.0
    %6000 = vmatpush.msra.mxu0 0.0
    %v6001 = vand.u32 %v105, 4294901760
    %6002 = vmatpush.msra.mxu0 %v6001
    %v6003 = vand.u32 %v5908, 4294901760
    %v6004 = vsub.f32 %v5908, %v6003
    %v6005 = vand.u32 %v6004, 4294901760
    %6006 = vmatmul.f32.gmra.mxu0 %v6005
    %v6007 = vpop.f32.mrf.mxu0
    %v6008 = vadd.f32 %v5984, %v6007
    %6009 = vdwg.mxu0
    %6010 = vmatpush.msra.mxu0 0.0
    %6011 = vmatpush.msra.mxu0 0.0
    %6012 = vmatpush.msra.mxu0 0.0
    %6013 = vmatpush.msra.mxu0 0.0
    %6014 = vmatpush.msra.mxu0 0.0
    %6015 = vmatpush.msra.mxu0 0.0
    %6016 = vmatpush.msra.mxu0 0.0
    %6017 = vmatpush.msra.mxu0 0.0
    %6018 = vmatpush.msra.mxu0 0.0
    %6019 = vmatpush.msra.mxu0 0.0
    %6020 = vmatpush.msra.mxu0 0.0
    %6021 = vmatpush.msra.mxu0 0.0
    %6022 = vmatpush.msra.mxu0 0.0
    %6023 = vmatpush.msra.mxu0 0.0
    %6024 = vmatpush.msra.mxu0 0.0
    %v6025 = vand.u32 %v105, 4294901760
    %v6026 = vsub.f32 %v105, %v6025
    %v6027 = vand.u32 %v6026, 4294901760
    %6028 = vmatpush.msra.mxu0 %v6027
    %v6029 = vand.u32 %v5908, 4294901760
    %6030 = vmatmul.f32.gmra.mxu0 %v6029
    %v6031 = vpop.f32.mrf.mxu0
    %v6032 = vadd.f32 %v6008, %v6031
    %6033 = vdwg.mxu0
    %6034 = vmatpush.msra.mxu0 0.0
    %6035 = vmatpush.msra.mxu0 0.0
    %6036 = vmatpush.msra.mxu0 0.0
    %6037 = vmatpush.msra.mxu0 0.0
    %6038 = vmatpush.msra.mxu0 0.0
    %6039 = vmatpush.msra.mxu0 0.0
    %6040 = vmatpush.msra.mxu0 0.0
    %6041 = vmatpush.msra.mxu0 0.0
    %6042 = vmatpush.msra.mxu0 0.0
    %6043 = vmatpush.msra.mxu0 0.0
    %6044 = vmatpush.msra.mxu0 0.0
    %6045 = vmatpush.msra.mxu0 0.0
    %6046 = vmatpush.msra.mxu0 0.0
    %6047 = vmatpush.msra.mxu0 0.0
    %6048 = vmatpush.msra.mxu0 0.0
    %v6049 = vand.u32 %v105, 4294901760
    %6050 = vmatpush.msra.mxu0 %v6049
    %v6051 = vand.u32 %v5908, 4294901760
    %6052 = vmatmul.f32.gmra.mxu0 %v6051
    %v6053 = vpop.f32.mrf.mxu0
    %v6054 = vadd.f32 %v6032, %v6053
    %6055 = vdwg.mxu0
    %6056 = vmatpush.msra.mxu0 0.0
    %6057 = vmatpush.msra.mxu0 0.0
    %6058 = vmatpush.msra.mxu0 0.0
    %6059 = vmatpush.msra.mxu0 0.0
    %6060 = vmatpush.msra.mxu0 0.0
    %6061 = vmatpush.msra.mxu0 0.0
    %6062 = vmatpush.msra.mxu0 0.0
    %6063 = vmatpush.msra.mxu0 0.0
    %6064 = vmatpush.msra.mxu0 0.0
    %6065 = vmatpush.msra.mxu0 0.0
    %6066 = vmatpush.msra.mxu0 0.0
    %6067 = vmatpush.msra.mxu0 0.0
    %6068 = vmatpush.msra.mxu0 0.0
    %6069 = vmatpush.msra.mxu0 0.0
    %6070 = vmatpush.msra.mxu0 0.0
    %v6071 = vand.u32 %v106, 4294901760
    %6072 = vmatpush.msra.mxu0 %v6071
    %v6073 = vand.u32 %v5908, 4294901760
    %v6074 = vsub.f32 %v5908, %v6073
    %v6075 = vand.u32 %v6074, 4294901760
    %v6076 = vsub.f32 %v6074, %v6075
    %v6077 = vand.u32 %v6076, 4294901760
    %6078 = vmatmul.f32.gmra.mxu0 %v6077
    %v6079 = vpop.f32.mrf.mxu0
    %v6080 = vadd.f32 0.0, %v6079
    %6081 = vdwg.mxu0
    %6082 = vmatpush.msra.mxu0 0.0
    %6083 = vmatpush.msra.mxu0 0.0
    %6084 = vmatpush.msra.mxu0 0.0
    %6085 = vmatpush.msra.mxu0 0.0
    %6086 = vmatpush.msra.mxu0 0.0
    %6087 = vmatpush.msra.mxu0 0.0
    %6088 = vmatpush.msra.mxu0 0.0
    %6089 = vmatpush.msra.mxu0 0.0
    %6090 = vmatpush.msra.mxu0 0.0
    %6091 = vmatpush.msra.mxu0 0.0
    %6092 = vmatpush.msra.mxu0 0.0
    %6093 = vmatpush.msra.mxu0 0.0
    %6094 = vmatpush.msra.mxu0 0.0
    %6095 = vmatpush.msra.mxu0 0.0
    %6096 = vmatpush.msra.mxu0 0.0
    %v6097 = vand.u32 %v106, 4294901760
    %v6098 = vsub.f32 %v106, %v6097
    %v6099 = vand.u32 %v6098, 4294901760
    %v6100 = vsub.f32 %v6098, %v6099
    %v6101 = vand.u32 %v6100, 4294901760
    %6102 = vmatpush.msra.mxu0 %v6101
    %v6103 = vand.u32 %v5908, 4294901760
    %6104 = vmatmul.f32.gmra.mxu0 %v6103
    %v6105 = vpop.f32.mrf.mxu0
    %v6106 = vadd.f32 %v6080, %v6105
    %6107 = vdwg.mxu0
    %6108 = vmatpush.msra.mxu0 0.0
    %6109 = vmatpush.msra.mxu0 0.0
    %6110 = vmatpush.msra.mxu0 0.0
    %6111 = vmatpush.msra.mxu0 0.0
    %6112 = vmatpush.msra.mxu0 0.0
    %6113 = vmatpush.msra.mxu0 0.0
    %6114 = vmatpush.msra.mxu0 0.0
    %6115 = vmatpush.msra.mxu0 0.0
    %6116 = vmatpush.msra.mxu0 0.0
    %6117 = vmatpush.msra.mxu0 0.0
    %6118 = vmatpush.msra.mxu0 0.0
    %6119 = vmatpush.msra.mxu0 0.0
    %6120 = vmatpush.msra.mxu0 0.0
    %6121 = vmatpush.msra.mxu0 0.0
    %6122 = vmatpush.msra.mxu0 0.0
    %v6123 = vand.u32 %v106, 4294901760
    %v6124 = vsub.f32 %v106, %v6123
    %6125 = vmatpush.msra.mxu0 %v6124
    %v6126 = vand.u32 %v5908, 4294901760
    %v6127 = vsub.f32 %v5908, %v6126
    %6128 = vmatmul.f32.gmra.mxu0 %v6127
    %v6129 = vpop.f32.mrf.mxu0
    %v6130 = vadd.f32 %v6106, %v6129
    %6131 = vdwg.mxu0
    %6132 = vmatpush.msra.mxu0 0.0
    %6133 = vmatpush.msra.mxu0 0.0
    %6134 = vmatpush.msra.mxu0 0.0
    %6135 = vmatpush.msra.mxu0 0.0
    %6136 = vmatpush.msra.mxu0 0.0
    %6137 = vmatpush.msra.mxu0 0.0
    %6138 = vmatpush.msra.mxu0 0.0
    %6139 = vmatpush.msra.mxu0 0.0
    %6140 = vmatpush.msra.mxu0 0.0
    %6141 = vmatpush.msra.mxu0 0.0
    %6142 = vmatpush.msra.mxu0 0.0
    %6143 = vmatpush.msra.mxu0 0.0
    %6144 = vmatpush.msra.mxu0 0.0
    %6145 = vmatpush.msra.mxu0 0.0
    %6146 = vmatpush.msra.mxu0 0.0
    %v6147 = vand.u32 %v106, 4294901760
    %6148 = vmatpush.msra.mxu0 %v6147
    %v6149 = vand.u32 %v5908, 4294901760
    %v6150 = vsub.f32 %v5908, %v6149
    %v6151 = vand.u32 %v6150, 4294901760
    %6152 = vmatmul.f32.gmra.mxu0 %v6151
    %v6153 = vpop.f32.mrf.mxu0
    %v6154 = vadd.f32 %v6130, %v6153
    %6155 = vdwg.mxu0
    %6156 = vmatpush.msra.mxu0 0.0
    %6157 = vmatpush.msra.mxu0 0.0
    %6158 = vmatpush.msra.mxu0 0.0
    %6159 = vmatpush.msra.mxu0 0.0
    %6160 = vmatpush.msra.mxu0 0.0
    %6161 = vmatpush.msra.mxu0 0.0
    %6162 = vmatpush.msra.mxu0 0.0
    %6163 = vmatpush.msra.mxu0 0.0
    %6164 = vmatpush.msra.mxu0 0.0
    %6165 = vmatpush.msra.mxu0 0.0
    %6166 = vmatpush.msra.mxu0 0.0
    %6167 = vmatpush.msra.mxu0 0.0
    %6168 = vmatpush.msra.mxu0 0.0
    %6169 = vmatpush.msra.mxu0 0.0
    %6170 = vmatpush.msra.mxu0 0.0
    %v6171 = vand.u32 %v106, 4294901760
    %v6172 = vsub.f32 %v106, %v6171
    %v6173 = vand.u32 %v6172, 4294901760
    %6174 = vmatpush.msra.mxu0 %v6173
    %v6175 = vand.u32 %v5908, 4294901760
    %6176 = vmatmul.f32.gmra.mxu0 %v6175
    %v6177 = vpop.f32.mrf.mxu0
    %v6178 = vadd.f32 %v6154, %v6177
    %6179 = vdwg.mxu0
    %6180 = vmatpush.msra.mxu0 0.0
    %6181 = vmatpush.msra.mxu0 0.0
    %6182 = vmatpush.msra.mxu0 0.0
    %6183 = vmatpush.msra.mxu0 0.0
    %6184 = vmatpush.msra.mxu0 0.0
    %6185 = vmatpush.msra.mxu0 0.0
    %6186 = vmatpush.msra.mxu0 0.0
    %6187 = vmatpush.msra.mxu0 0.0
    %6188 = vmatpush.msra.mxu0 0.0
    %6189 = vmatpush.msra.mxu0 0.0
    %6190 = vmatpush.msra.mxu0 0.0
    %6191 = vmatpush.msra.mxu0 0.0
    %6192 = vmatpush.msra.mxu0 0.0
    %6193 = vmatpush.msra.mxu0 0.0
    %6194 = vmatpush.msra.mxu0 0.0
    %v6195 = vand.u32 %v106, 4294901760
    %6196 = vmatpush.msra.mxu0 %v6195
    %v6197 = vand.u32 %v5908, 4294901760
    %6198 = vmatmul.f32.gmra.mxu0 %v6197
    %v6199 = vpop.f32.mrf.mxu0
    %v6200 = vadd.f32 %v6178, %v6199
    %6201 = vdwg.mxu0
    %6202 = vmatpush.msra.mxu0 0.0
    %6203 = vmatpush.msra.mxu0 0.0
    %6204 = vmatpush.msra.mxu0 0.0
    %6205 = vmatpush.msra.mxu0 0.0
    %6206 = vmatpush.msra.mxu0 0.0
    %6207 = vmatpush.msra.mxu0 0.0
    %6208 = vmatpush.msra.mxu0 0.0
    %6209 = vmatpush.msra.mxu0 0.0
    %6210 = vmatpush.msra.mxu0 0.0
    %6211 = vmatpush.msra.mxu0 0.0
    %6212 = vmatpush.msra.mxu0 0.0
    %6213 = vmatpush.msra.mxu0 0.0
    %6214 = vmatpush.msra.mxu0 0.0
    %6215 = vmatpush.msra.mxu0 0.0
    %6216 = vmatpush.msra.mxu0 0.0
    %v6217 = vand.u32 %v107, 4294901760
    %6218 = vmatpush.msra.mxu0 %v6217
    %v6219 = vand.u32 %v5908, 4294901760
    %v6220 = vsub.f32 %v5908, %v6219
    %v6221 = vand.u32 %v6220, 4294901760
    %v6222 = vsub.f32 %v6220, %v6221
    %v6223 = vand.u32 %v6222, 4294901760
    %6224 = vmatmul.f32.gmra.mxu0 %v6223
    %v6225 = vpop.f32.mrf.mxu0
    %v6226 = vadd.f32 0.0, %v6225
    %6227 = vdwg.mxu0
    %6228 = vmatpush.msra.mxu0 0.0
    %6229 = vmatpush.msra.mxu0 0.0
    %6230 = vmatpush.msra.mxu0 0.0
    %6231 = vmatpush.msra.mxu0 0.0
    %6232 = vmatpush.msra.mxu0 0.0
    %6233 = vmatpush.msra.mxu0 0.0
    %6234 = vmatpush.msra.mxu0 0.0
    %6235 = vmatpush.msra.mxu0 0.0
    %6236 = vmatpush.msra.mxu0 0.0
    %6237 = vmatpush.msra.mxu0 0.0
    %6238 = vmatpush.msra.mxu0 0.0
    %6239 = vmatpush.msra.mxu0 0.0
    %6240 = vmatpush.msra.mxu0 0.0
    %6241 = vmatpush.msra.mxu0 0.0
    %6242 = vmatpush.msra.mxu0 0.0
    %v6243 = vand.u32 %v107, 4294901760
    %v6244 = vsub.f32 %v107, %v6243
    %v6245 = vand.u32 %v6244, 4294901760
    %v6246 = vsub.f32 %v6244, %v6245
    %v6247 = vand.u32 %v6246, 4294901760
    %6248 = vmatpush.msra.mxu0 %v6247
    %v6249 = vand.u32 %v5908, 4294901760
    %6250 = vmatmul.f32.gmra.mxu0 %v6249
    %v6251 = vpop.f32.mrf.mxu0
    %v6252 = vadd.f32 %v6226, %v6251
    %6253 = vdwg.mxu0
    %6254 = vmatpush.msra.mxu0 0.0
    %6255 = vmatpush.msra.mxu0 0.0
    %6256 = vmatpush.msra.mxu0 0.0
    %6257 = vmatpush.msra.mxu0 0.0
    %6258 = vmatpush.msra.mxu0 0.0
    %6259 = vmatpush.msra.mxu0 0.0
    %6260 = vmatpush.msra.mxu0 0.0
    %6261 = vmatpush.msra.mxu0 0.0
    %6262 = vmatpush.msra.mxu0 0.0
    %6263 = vmatpush.msra.mxu0 0.0
    %6264 = vmatpush.msra.mxu0 0.0
    %6265 = vmatpush.msra.mxu0 0.0
    %6266 = vmatpush.msra.mxu0 0.0
    %6267 = vmatpush.msra.mxu0 0.0
    %6268 = vmatpush.msra.mxu0 0.0
    %v6269 = vand.u32 %v107, 4294901760
    %v6270 = vsub.f32 %v107, %v6269
    %6271 = vmatpush.msra.mxu0 %v6270
    %v6272 = vand.u32 %v5908, 4294901760
    %v6273 = vsub.f32 %v5908, %v6272
    %6274 = vmatmul.f32.gmra.mxu0 %v6273
    %v6275 = vpop.f32.mrf.mxu0
    %v6276 = vadd.f32 %v6252, %v6275
    %6277 = vdwg.mxu0
    %6278 = vmatpush.msra.mxu0 0.0
    %6279 = vmatpush.msra.mxu0 0.0
    %6280 = vmatpush.msra.mxu0 0.0
    %6281 = vmatpush.msra.mxu0 0.0
    %6282 = vmatpush.msra.mxu0 0.0
    %6283 = vmatpush.msra.mxu0 0.0
    %6284 = vmatpush.msra.mxu0 0.0
    %6285 = vmatpush.msra.mxu0 0.0
    %6286 = vmatpush.msra.mxu0 0.0
    %6287 = vmatpush.msra.mxu0 0.0
    %6288 = vmatpush.msra.mxu0 0.0
    %6289 = vmatpush.msra.mxu0 0.0
    %6290 = vmatpush.msra.mxu0 0.0
    %6291 = vmatpush.msra.mxu0 0.0
    %6292 = vmatpush.msra.mxu0 0.0
    %v6293 = vand.u32 %v107, 4294901760
    %6294 = vmatpush.msra.mxu0 %v6293
    %v6295 = vand.u32 %v5908, 4294901760
    %v6296 = vsub.f32 %v5908, %v6295
    %v6297 = vand.u32 %v6296, 4294901760
    %6298 = vmatmul.f32.gmra.mxu0 %v6297
    %v6299 = vpop.f32.mrf.mxu0
    %v6300 = vadd.f32 %v6276, %v6299
    %6301 = vdwg.mxu0
    %6302 = vmatpush.msra.mxu0 0.0
    %6303 = vmatpush.msra.mxu0 0.0
    %6304 = vmatpush.msra.mxu0 0.0
    %6305 = vmatpush.msra.mxu0 0.0
    %6306 = vmatpush.msra.mxu0 0.0
    %6307 = vmatpush.msra.mxu0 0.0
    %6308 = vmatpush.msra.mxu0 0.0
    %6309 = vmatpush.msra.mxu0 0.0
    %6310 = vmatpush.msra.mxu0 0.0
    %6311 = vmatpush.msra.mxu0 0.0
    %6312 = vmatpush.msra.mxu0 0.0
    %6313 = vmatpush.msra.mxu0 0.0
    %6314 = vmatpush.msra.mxu0 0.0
    %6315 = vmatpush.msra.mxu0 0.0
    %6316 = vmatpush.msra.mxu0 0.0
    %v6317 = vand.u32 %v107, 4294901760
    %v6318 = vsub.f32 %v107, %v6317
    %v6319 = vand.u32 %v6318, 4294901760
    %6320 = vmatpush.msra.mxu0 %v6319
    %v6321 = vand.u32 %v5908, 4294901760
    %6322 = vmatmul.f32.gmra.mxu0 %v6321
    %v6323 = vpop.f32.mrf.mxu0
    %v6324 = vadd.f32 %v6300, %v6323
    %6325 = vdwg.mxu0
    %6326 = vmatpush.msra.mxu0 0.0
    %6327 = vmatpush.msra.mxu0 0.0
    %6328 = vmatpush.msra.mxu0 0.0
    %6329 = vmatpush.msra.mxu0 0.0
    %6330 = vmatpush.msra.mxu0 0.0
    %6331 = vmatpush.msra.mxu0 0.0
    %6332 = vmatpush.msra.mxu0 0.0
    %6333 = vmatpush.msra.mxu0 0.0
    %6334 = vmatpush.msra.mxu0 0.0
    %6335 = vmatpush.msra.mxu0 0.0
    %6336 = vmatpush.msra.mxu0 0.0
    %6337 = vmatpush.msra.mxu0 0.0
    %6338 = vmatpush.msra.mxu0 0.0
    %6339 = vmatpush.msra.mxu0 0.0
    %6340 = vmatpush.msra.mxu0 0.0
    %v6341 = vand.u32 %v107, 4294901760
    %6342 = vmatpush.msra.mxu0 %v6341
    %v6343 = vand.u32 %v5908, 4294901760
    %6344 = vmatmul.f32.gmra.mxu0 %v6343
    %v6345 = vpop.f32.mrf.mxu0
    %v6346 = vadd.f32 %v6324, %v6345
    %6347 = vdwg.mxu0
    %6348 = vmatpush.msra.mxu0 0.0
    %6349 = vmatpush.msra.mxu0 0.0
    %6350 = vmatpush.msra.mxu0 0.0
    %6351 = vmatpush.msra.mxu0 0.0
    %6352 = vmatpush.msra.mxu0 0.0
    %6353 = vmatpush.msra.mxu0 0.0
    %6354 = vmatpush.msra.mxu0 0.0
    %6355 = vmatpush.msra.mxu0 0.0
    %6356 = vmatpush.msra.mxu0 0.0
    %6357 = vmatpush.msra.mxu0 0.0
    %6358 = vmatpush.msra.mxu0 0.0
    %6359 = vmatpush.msra.mxu0 0.0
    %6360 = vmatpush.msra.mxu0 0.0
    %6361 = vmatpush.msra.mxu0 0.0
    %6362 = vmatpush.msra.mxu0 0.0
    %v6363 = vand.u32 %v108, 4294901760
    %6364 = vmatpush.msra.mxu0 %v6363
    %v6365 = vand.u32 %v5908, 4294901760
    %v6366 = vsub.f32 %v5908, %v6365
    %v6367 = vand.u32 %v6366, 4294901760
    %v6368 = vsub.f32 %v6366, %v6367
    %v6369 = vand.u32 %v6368, 4294901760
    %6370 = vmatmul.f32.gmra.mxu0 %v6369
    %v6371 = vpop.f32.mrf.mxu0
    %v6372 = vadd.f32 0.0, %v6371
    %6373 = vdwg.mxu0
    %6374 = vmatpush.msra.mxu0 0.0
    %6375 = vmatpush.msra.mxu0 0.0
    %6376 = vmatpush.msra.mxu0 0.0
    %6377 = vmatpush.msra.mxu0 0.0
    %6378 = vmatpush.msra.mxu0 0.0
    %6379 = vmatpush.msra.mxu0 0.0
    %6380 = vmatpush.msra.mxu0 0.0
    %6381 = vmatpush.msra.mxu0 0.0
    %6382 = vmatpush.msra.mxu0 0.0
    %6383 = vmatpush.msra.mxu0 0.0
    %6384 = vmatpush.msra.mxu0 0.0
    %6385 = vmatpush.msra.mxu0 0.0
    %6386 = vmatpush.msra.mxu0 0.0
    %6387 = vmatpush.msra.mxu0 0.0
    %6388 = vmatpush.msra.mxu0 0.0
    %v6389 = vand.u32 %v108, 4294901760
    %v6390 = vsub.f32 %v108, %v6389
    %v6391 = vand.u32 %v6390, 4294901760
    %v6392 = vsub.f32 %v6390, %v6391
    %v6393 = vand.u32 %v6392, 4294901760
    %6394 = vmatpush.msra.mxu0 %v6393
    %v6395 = vand.u32 %v5908, 4294901760
    %6396 = vmatmul.f32.gmra.mxu0 %v6395
    %v6397 = vpop.f32.mrf.mxu0
    %v6398 = vadd.f32 %v6372, %v6397
    %6399 = vdwg.mxu0
    %6400 = vmatpush.msra.mxu0 0.0
    %6401 = vmatpush.msra.mxu0 0.0
    %6402 = vmatpush.msra.mxu0 0.0
    %6403 = vmatpush.msra.mxu0 0.0
    %6404 = vmatpush.msra.mxu0 0.0
    %6405 = vmatpush.msra.mxu0 0.0
    %6406 = vmatpush.msra.mxu0 0.0
    %6407 = vmatpush.msra.mxu0 0.0
    %6408 = vmatpush.msra.mxu0 0.0
    %6409 = vmatpush.msra.mxu0 0.0
    %6410 = vmatpush.msra.mxu0 0.0
    %6411 = vmatpush.msra.mxu0 0.0
    %6412 = vmatpush.msra.mxu0 0.0
    %6413 = vmatpush.msra.mxu0 0.0
    %6414 = vmatpush.msra.mxu0 0.0
    %v6415 = vand.u32 %v108, 4294901760
    %v6416 = vsub.f32 %v108, %v6415
    %6417 = vmatpush.msra.mxu0 %v6416
    %v6418 = vand.u32 %v5908, 4294901760
    %v6419 = vsub.f32 %v5908, %v6418
    %6420 = vmatmul.f32.gmra.mxu0 %v6419
    %v6421 = vpop.f32.mrf.mxu0
    %v6422 = vadd.f32 %v6398, %v6421
    %6423 = vdwg.mxu0
    %6424 = vmatpush.msra.mxu0 0.0
    %6425 = vmatpush.msra.mxu0 0.0
    %6426 = vmatpush.msra.mxu0 0.0
    %6427 = vmatpush.msra.mxu0 0.0
    %6428 = vmatpush.msra.mxu0 0.0
    %6429 = vmatpush.msra.mxu0 0.0
    %6430 = vmatpush.msra.mxu0 0.0
    %6431 = vmatpush.msra.mxu0 0.0
    %6432 = vmatpush.msra.mxu0 0.0
    %6433 = vmatpush.msra.mxu0 0.0
    %6434 = vmatpush.msra.mxu0 0.0
    %6435 = vmatpush.msra.mxu0 0.0
    %6436 = vmatpush.msra.mxu0 0.0
    %6437 = vmatpush.msra.mxu0 0.0
    %6438 = vmatpush.msra.mxu0 0.0
    %v6439 = vand.u32 %v108, 4294901760
    %6440 = vmatpush.msra.mxu0 %v6439
    %v6441 = vand.u32 %v5908, 4294901760
    %v6442 = vsub.f32 %v5908, %v6441
    %v6443 = vand.u32 %v6442, 4294901760
    %6444 = vmatmul.f32.gmra.mxu0 %v6443
    %v6445 = vpop.f32.mrf.mxu0
    %v6446 = vadd.f32 %v6422, %v6445
    %6447 = vdwg.mxu0
    %6448 = vmatpush.msra.mxu0 0.0
    %6449 = vmatpush.msra.mxu0 0.0
    %6450 = vmatpush.msra.mxu0 0.0
    %6451 = vmatpush.msra.mxu0 0.0
    %6452 = vmatpush.msra.mxu0 0.0
    %6453 = vmatpush.msra.mxu0 0.0
    %6454 = vmatpush.msra.mxu0 0.0
    %6455 = vmatpush.msra.mxu0 0.0
    %6456 = vmatpush.msra.mxu0 0.0
    %6457 = vmatpush.msra.mxu0 0.0
    %6458 = vmatpush.msra.mxu0 0.0
    %6459 = vmatpush.msra.mxu0 0.0
    %6460 = vmatpush.msra.mxu0 0.0
    %6461 = vmatpush.msra.mxu0 0.0
    %6462 = vmatpush.msra.mxu0 0.0
    %v6463 = vand.u32 %v108, 4294901760
    %v6464 = vsub.f32 %v108, %v6463
    %v6465 = vand.u32 %v6464, 4294901760
    %6466 = vmatpush.msra.mxu0 %v6465
    %v6467 = vand.u32 %v5908, 4294901760
    %6468 = vmatmul.f32.gmra.mxu0 %v6467
    %v6469 = vpop.f32.mrf.mxu0
    %v6470 = vadd.f32 %v6446, %v6469
    %6471 = vdwg.mxu0
    %6472 = vmatpush.msra.mxu0 0.0
    %6473 = vmatpush.msra.mxu0 0.0
    %6474 = vmatpush.msra.mxu0 0.0
    %6475 = vmatpush.msra.mxu0 0.0
    %6476 = vmatpush.msra.mxu0 0.0
    %6477 = vmatpush.msra.mxu0 0.0
    %6478 = vmatpush.msra.mxu0 0.0
    %6479 = vmatpush.msra.mxu0 0.0
    %6480 = vmatpush.msra.mxu0 0.0
    %6481 = vmatpush.msra.mxu0 0.0
    %6482 = vmatpush.msra.mxu0 0.0
    %6483 = vmatpush.msra.mxu0 0.0
    %6484 = vmatpush.msra.mxu0 0.0
    %6485 = vmatpush.msra.mxu0 0.0
    %6486 = vmatpush.msra.mxu0 0.0
    %v6487 = vand.u32 %v108, 4294901760
    %6488 = vmatpush.msra.mxu0 %v6487
    %v6489 = vand.u32 %v5908, 4294901760
    %6490 = vmatmul.f32.gmra.mxu0 %v6489
    %v6491 = vpop.f32.mrf.mxu0
    %v6492 = vadd.f32 %v6470, %v6491
    %6493 = vdwg.mxu0
    %6494 = vmatpush.msra.mxu0 0.0
    %6495 = vmatpush.msra.mxu0 0.0
    %6496 = vmatpush.msra.mxu0 0.0
    %6497 = vmatpush.msra.mxu0 0.0
    %6498 = vmatpush.msra.mxu0 0.0
    %6499 = vmatpush.msra.mxu0 0.0
    %6500 = vmatpush.msra.mxu0 0.0
    %6501 = vmatpush.msra.mxu0 0.0
    %6502 = vmatpush.msra.mxu0 0.0
    %6503 = vmatpush.msra.mxu0 0.0
    %6504 = vmatpush.msra.mxu0 0.0
    %6505 = vmatpush.msra.mxu0 0.0
    %6506 = vmatpush.msra.mxu0 0.0
    %6507 = vmatpush.msra.mxu0 0.0
    %6508 = vmatpush.msra.mxu0 0.0
    %v6509 = vand.u32 %v752, 4294901760
    %6510 = vmatpush.msra.mxu0 %v6509
    %v6511 = vand.u32 %v5908, 4294901760
    %v6512 = vsub.f32 %v5908, %v6511
    %v6513 = vand.u32 %v6512, 4294901760
    %v6514 = vsub.f32 %v6512, %v6513
    %v6515 = vand.u32 %v6514, 4294901760
    %6516 = vmatmul.f32.gmra.mxu0 %v6515
    %v6517 = vpop.f32.mrf.mxu0
    %v6518 = vadd.f32 0.0, %v6517
    %6519 = vdwg.mxu0
    %6520 = vmatpush.msra.mxu0 0.0
    %6521 = vmatpush.msra.mxu0 0.0
    %6522 = vmatpush.msra.mxu0 0.0
    %6523 = vmatpush.msra.mxu0 0.0
    %6524 = vmatpush.msra.mxu0 0.0
    %6525 = vmatpush.msra.mxu0 0.0
    %6526 = vmatpush.msra.mxu0 0.0
    %6527 = vmatpush.msra.mxu0 0.0
    %6528 = vmatpush.msra.mxu0 0.0
    %6529 = vmatpush.msra.mxu0 0.0
    %6530 = vmatpush.msra.mxu0 0.0
    %6531 = vmatpush.msra.mxu0 0.0
    %6532 = vmatpush.msra.mxu0 0.0
    %6533 = vmatpush.msra.mxu0 0.0
    %6534 = vmatpush.msra.mxu0 0.0
    %v6535 = vand.u32 %v752, 4294901760
    %v6536 = vsub.f32 %v752, %v6535
    %v6537 = vand.u32 %v6536, 4294901760
    %v6538 = vsub.f32 %v6536, %v6537
    %v6539 = vand.u32 %v6538, 4294901760
    %6540 = vmatpush.msra.mxu0 %v6539
    %v6541 = vand.u32 %v5908, 4294901760
    %6542 = vmatmul.f32.gmra.mxu0 %v6541
    %v6543 = vpop.f32.mrf.mxu0
    %v6544 = vadd.f32 %v6518, %v6543
    %6545 = vdwg.mxu0
    %6546 = vmatpush.msra.mxu0 0.0
    %6547 = vmatpush.msra.mxu0 0.0
    %6548 = vmatpush.msra.mxu0 0.0
    %6549 = vmatpush.msra.mxu0 0.0
    %6550 = vmatpush.msra.mxu0 0.0
    %6551 = vmatpush.msra.mxu0 0.0
    %6552 = vmatpush.msra.mxu0 0.0
    %6553 = vmatpush.msra.mxu0 0.0
    %6554 = vmatpush.msra.mxu0 0.0
    %6555 = vmatpush.msra.mxu0 0.0
    %6556 = vmatpush.msra.mxu0 0.0
    %6557 = vmatpush.msra.mxu0 0.0
    %6558 = vmatpush.msra.mxu0 0.0
    %6559 = vmatpush.msra.mxu0 0.0
    %6560 = vmatpush.msra.mxu0 0.0
    %v6561 = vand.u32 %v752, 4294901760
    %v6562 = vsub.f32 %v752, %v6561
    %6563 = vmatpush.msra.mxu0 %v6562
    %v6564 = vand.u32 %v5908, 4294901760
    %v6565 = vsub.f32 %v5908, %v6564
    %6566 = vmatmul.f32.gmra.mxu0 %v6565
    %v6567 = vpop.f32.mrf.mxu0
    %v6568 = vadd.f32 %v6544, %v6567
    %6569 = vdwg.mxu0
    %6570 = vmatpush.msra.mxu0 0.0
    %6571 = vmatpush.msra.mxu0 0.0
    %6572 = vmatpush.msra.mxu0 0.0
    %6573 = vmatpush.msra.mxu0 0.0
    %6574 = vmatpush.msra.mxu0 0.0
    %6575 = vmatpush.msra.mxu0 0.0
    %6576 = vmatpush.msra.mxu0 0.0
    %6577 = vmatpush.msra.mxu0 0.0
    %6578 = vmatpush.msra.mxu0 0.0
    %6579 = vmatpush.msra.mxu0 0.0
    %6580 = vmatpush.msra.mxu0 0.0
    %6581 = vmatpush.msra.mxu0 0.0
    %6582 = vmatpush.msra.mxu0 0.0
    %6583 = vmatpush.msra.mxu0 0.0
    %6584 = vmatpush.msra.mxu0 0.0
    %v6585 = vand.u32 %v752, 4294901760
    %6586 = vmatpush.msra.mxu0 %v6585
    %v6587 = vand.u32 %v5908, 4294901760
    %v6588 = vsub.f32 %v5908, %v6587
    %v6589 = vand.u32 %v6588, 4294901760
    %6590 = vmatmul.f32.gmra.mxu0 %v6589
    %v6591 = vpop.f32.mrf.mxu0
    %v6592 = vadd.f32 %v6568, %v6591
    %6593 = vdwg.mxu0
    %6594 = vmatpush.msra.mxu0 0.0
    %6595 = vmatpush.msra.mxu0 0.0
    %6596 = vmatpush.msra.mxu0 0.0
    %6597 = vmatpush.msra.mxu0 0.0
    %6598 = vmatpush.msra.mxu0 0.0
    %6599 = vmatpush.msra.mxu0 0.0
    %6600 = vmatpush.msra.mxu0 0.0
    %6601 = vmatpush.msra.mxu0 0.0
    %6602 = vmatpush.msra.mxu0 0.0
    %6603 = vmatpush.msra.mxu0 0.0
    %6604 = vmatpush.msra.mxu0 0.0
    %6605 = vmatpush.msra.mxu0 0.0
    %6606 = vmatpush.msra.mxu0 0.0
    %6607 = vmatpush.msra.mxu0 0.0
    %6608 = vmatpush.msra.mxu0 0.0
    %v6609 = vand.u32 %v752, 4294901760
    %v6610 = vsub.f32 %v752, %v6609
    %v6611 = vand.u32 %v6610, 4294901760
    %6612 = vmatpush.msra.mxu0 %v6611
    %v6613 = vand.u32 %v5908, 4294901760
    %6614 = vmatmul.f32.gmra.mxu0 %v6613
    %v6615 = vpop.f32.mrf.mxu0
    %v6616 = vadd.f32 %v6592, %v6615
    %6617 = vdwg.mxu0
    %6618 = vmatpush.msra.mxu0 0.0
    %6619 = vmatpush.msra.mxu0 0.0
    %6620 = vmatpush.msra.mxu0 0.0
    %6621 = vmatpush.msra.mxu0 0.0
    %6622 = vmatpush.msra.mxu0 0.0
    %6623 = vmatpush.msra.mxu0 0.0
    %6624 = vmatpush.msra.mxu0 0.0
    %6625 = vmatpush.msra.mxu0 0.0
    %6626 = vmatpush.msra.mxu0 0.0
    %6627 = vmatpush.msra.mxu0 0.0
    %6628 = vmatpush.msra.mxu0 0.0
    %6629 = vmatpush.msra.mxu0 0.0
    %6630 = vmatpush.msra.mxu0 0.0
    %6631 = vmatpush.msra.mxu0 0.0
    %6632 = vmatpush.msra.mxu0 0.0
    %v6633 = vand.u32 %v752, 4294901760
    %6634 = vmatpush.msra.mxu0 %v6633
    %v6635 = vand.u32 %v5908, 4294901760
    %6636 = vmatmul.f32.gmra.mxu0 %v6635
    %v6637 = vpop.f32.mrf.mxu0
    %v6638 = vadd.f32 %v6616, %v6637
    %6639 = vdwg.mxu0
    %6640 = vmatpush.msra.mxu0 0.0
    %6641 = vmatpush.msra.mxu0 0.0
    %6642 = vmatpush.msra.mxu0 0.0
    %6643 = vmatpush.msra.mxu0 0.0
    %6644 = vmatpush.msra.mxu0 0.0
    %6645 = vmatpush.msra.mxu0 0.0
    %6646 = vmatpush.msra.mxu0 0.0
    %6647 = vmatpush.msra.mxu0 0.0
    %6648 = vmatpush.msra.mxu0 0.0
    %6649 = vmatpush.msra.mxu0 0.0
    %6650 = vmatpush.msra.mxu0 0.0
    %6651 = vmatpush.msra.mxu0 0.0
    %6652 = vmatpush.msra.mxu0 0.0
    %6653 = vmatpush.msra.mxu0 0.0
    %6654 = vmatpush.msra.mxu0 0.0
    %v6655 = vand.u32 %v753, 4294901760
    %6656 = vmatpush.msra.mxu0 %v6655
    %v6657 = vand.u32 %v5908, 4294901760
    %v6658 = vsub.f32 %v5908, %v6657
    %v6659 = vand.u32 %v6658, 4294901760
    %v6660 = vsub.f32 %v6658, %v6659
    %v6661 = vand.u32 %v6660, 4294901760
    %6662 = vmatmul.f32.gmra.mxu0 %v6661
    %v6663 = vpop.f32.mrf.mxu0
    %v6664 = vadd.f32 0.0, %v6663
    %6665 = vdwg.mxu0
    %6666 = vmatpush.msra.mxu0 0.0
    %6667 = vmatpush.msra.mxu0 0.0
    %6668 = vmatpush.msra.mxu0 0.0
    %6669 = vmatpush.msra.mxu0 0.0
    %6670 = vmatpush.msra.mxu0 0.0
    %6671 = vmatpush.msra.mxu0 0.0
    %6672 = vmatpush.msra.mxu0 0.0
    %6673 = vmatpush.msra.mxu0 0.0
    %6674 = vmatpush.msra.mxu0 0.0
    %6675 = vmatpush.msra.mxu0 0.0
    %6676 = vmatpush.msra.mxu0 0.0
    %6677 = vmatpush.msra.mxu0 0.0
    %6678 = vmatpush.msra.mxu0 0.0
    %6679 = vmatpush.msra.mxu0 0.0
    %6680 = vmatpush.msra.mxu0 0.0
    %v6681 = vand.u32 %v753, 4294901760
    %v6682 = vsub.f32 %v753, %v6681
    %v6683 = vand.u32 %v6682, 4294901760
    %v6684 = vsub.f32 %v6682, %v6683
    %v6685 = vand.u32 %v6684, 4294901760
    %6686 = vmatpush.msra.mxu0 %v6685
    %v6687 = vand.u32 %v5908, 4294901760
    %6688 = vmatmul.f32.gmra.mxu0 %v6687
    %v6689 = vpop.f32.mrf.mxu0
    %v6690 = vadd.f32 %v6664, %v6689
    %6691 = vdwg.mxu0
    %6692 = vmatpush.msra.mxu0 0.0
    %6693 = vmatpush.msra.mxu0 0.0
    %6694 = vmatpush.msra.mxu0 0.0
    %6695 = vmatpush.msra.mxu0 0.0
    %6696 = vmatpush.msra.mxu0 0.0
    %6697 = vmatpush.msra.mxu0 0.0
    %6698 = vmatpush.msra.mxu0 0.0
    %6699 = vmatpush.msra.mxu0 0.0
    %6700 = vmatpush.msra.mxu0 0.0
    %6701 = vmatpush.msra.mxu0 0.0
    %6702 = vmatpush.msra.mxu0 0.0
    %6703 = vmatpush.msra.mxu0 0.0
    %6704 = vmatpush.msra.mxu0 0.0
    %6705 = vmatpush.msra.mxu0 0.0
    %6706 = vmatpush.msra.mxu0 0.0
    %v6707 = vand.u32 %v753, 4294901760
    %v6708 = vsub.f32 %v753, %v6707
    %6709 = vmatpush.msra.mxu0 %v6708
    %v6710 = vand.u32 %v5908, 4294901760
    %v6711 = vsub.f32 %v5908, %v6710
    %6712 = vmatmul.f32.gmra.mxu0 %v6711
    %v6713 = vpop.f32.mrf.mxu0
    %v6714 = vadd.f32 %v6690, %v6713
    %6715 = vdwg.mxu0
    %6716 = vmatpush.msra.mxu0 0.0
    %6717 = vmatpush.msra.mxu0 0.0
    %6718 = vmatpush.msra.mxu0 0.0
    %6719 = vmatpush.msra.mxu0 0.0
    %6720 = vmatpush.msra.mxu0 0.0
    %6721 = vmatpush.msra.mxu0 0.0
    %6722 = vmatpush.msra.mxu0 0.0
    %6723 = vmatpush.msra.mxu0 0.0
    %6724 = vmatpush.msra.mxu0 0.0
    %6725 = vmatpush.msra.mxu0 0.0
    %6726 = vmatpush.msra.mxu0 0.0
    %6727 = vmatpush.msra.mxu0 0.0
    %6728 = vmatpush.msra.mxu0 0.0
    %6729 = vmatpush.msra.mxu0 0.0
    %6730 = vmatpush.msra.mxu0 0.0
    %v6731 = vand.u32 %v753, 4294901760
    %6732 = vmatpush.msra.mxu0 %v6731
    %v6733 = vand.u32 %v5908, 4294901760
    %v6734 = vsub.f32 %v5908, %v6733
    %v6735 = vand.u32 %v6734, 4294901760
    %6736 = vmatmul.f32.gmra.mxu0 %v6735
    %v6737 = vpop.f32.mrf.mxu0
    %v6738 = vadd.f32 %v6714, %v6737
    %6739 = vdwg.mxu0
    %6740 = vmatpush.msra.mxu0 0.0
    %6741 = vmatpush.msra.mxu0 0.0
    %6742 = vmatpush.msra.mxu0 0.0
    %6743 = vmatpush.msra.mxu0 0.0
    %6744 = vmatpush.msra.mxu0 0.0
    %6745 = vmatpush.msra.mxu0 0.0
    %6746 = vmatpush.msra.mxu0 0.0
    %6747 = vmatpush.msra.mxu0 0.0
    %6748 = vmatpush.msra.mxu0 0.0
    %6749 = vmatpush.msra.mxu0 0.0
    %6750 = vmatpush.msra.mxu0 0.0
    %6751 = vmatpush.msra.mxu0 0.0
    %6752 = vmatpush.msra.mxu0 0.0
    %6753 = vmatpush.msra.mxu0 0.0
    %6754 = vmatpush.msra.mxu0 0.0
    %v6755 = vand.u32 %v753, 4294901760
    %v6756 = vsub.f32 %v753, %v6755
    %v6757 = vand.u32 %v6756, 4294901760
    %6758 = vmatpush.msra.mxu0 %v6757
    %v6759 = vand.u32 %v5908, 4294901760
    %6760 = vmatmul.f32.gmra.mxu0 %v6759
    %v6761 = vpop.f32.mrf.mxu0
    %v6762 = vadd.f32 %v6738, %v6761
    %6763 = vdwg.mxu0
    %6764 = vmatpush.msra.mxu0 0.0
    %6765 = vmatpush.msra.mxu0 0.0
    %6766 = vmatpush.msra.mxu0 0.0
    %6767 = vmatpush.msra.mxu0 0.0
    %6768 = vmatpush.msra.mxu0 0.0
    %6769 = vmatpush.msra.mxu0 0.0
    %6770 = vmatpush.msra.mxu0 0.0
    %6771 = vmatpush.msra.mxu0 0.0
    %6772 = vmatpush.msra.mxu0 0.0
    %6773 = vmatpush.msra.mxu0 0.0
    %6774 = vmatpush.msra.mxu0 0.0
    %6775 = vmatpush.msra.mxu0 0.0
    %6776 = vmatpush.msra.mxu0 0.0
    %6777 = vmatpush.msra.mxu0 0.0
    %6778 = vmatpush.msra.mxu0 0.0
    %v6779 = vand.u32 %v753, 4294901760
    %6780 = vmatpush.msra.mxu0 %v6779
    %v6781 = vand.u32 %v5908, 4294901760
    %6782 = vmatmul.f32.gmra.mxu0 %v6781
    %v6783 = vpop.f32.mrf.mxu0
    %v6784 = vadd.f32 %v6762, %v6783
    %6785 = vdwg.mxu0
    %6786 = vmatpush.msra.mxu0 0.0
    %6787 = vmatpush.msra.mxu0 0.0
    %6788 = vmatpush.msra.mxu0 0.0
    %6789 = vmatpush.msra.mxu0 0.0
    %6790 = vmatpush.msra.mxu0 0.0
    %6791 = vmatpush.msra.mxu0 0.0
    %6792 = vmatpush.msra.mxu0 0.0
    %6793 = vmatpush.msra.mxu0 0.0
    %6794 = vmatpush.msra.mxu0 0.0
    %6795 = vmatpush.msra.mxu0 0.0
    %6796 = vmatpush.msra.mxu0 0.0
    %6797 = vmatpush.msra.mxu0 0.0
    %6798 = vmatpush.msra.mxu0 0.0
    %6799 = vmatpush.msra.mxu0 0.0
    %6800 = vmatpush.msra.mxu0 0.0
    %v6801 = vand.u32 %v754, 4294901760
    %6802 = vmatpush.msra.mxu0 %v6801
    %v6803 = vand.u32 %v5908, 4294901760
    %v6804 = vsub.f32 %v5908, %v6803
    %v6805 = vand.u32 %v6804, 4294901760
    %v6806 = vsub.f32 %v6804, %v6805
    %v6807 = vand.u32 %v6806, 4294901760
    %6808 = vmatmul.f32.gmra.mxu0 %v6807
    %v6809 = vpop.f32.mrf.mxu0
    %v6810 = vadd.f32 0.0, %v6809
    %6811 = vdwg.mxu0
    %6812 = vmatpush.msra.mxu0 0.0
    %6813 = vmatpush.msra.mxu0 0.0
    %6814 = vmatpush.msra.mxu0 0.0
    %6815 = vmatpush.msra.mxu0 0.0
    %6816 = vmatpush.msra.mxu0 0.0
    %6817 = vmatpush.msra.mxu0 0.0
    %6818 = vmatpush.msra.mxu0 0.0
    %6819 = vmatpush.msra.mxu0 0.0
    %6820 = vmatpush.msra.mxu0 0.0
    %6821 = vmatpush.msra.mxu0 0.0
    %6822 = vmatpush.msra.mxu0 0.0
    %6823 = vmatpush.msra.mxu0 0.0
    %6824 = vmatpush.msra.mxu0 0.0
    %6825 = vmatpush.msra.mxu0 0.0
    %6826 = vmatpush.msra.mxu0 0.0
    %v6827 = vand.u32 %v754, 4294901760
    %v6828 = vsub.f32 %v754, %v6827
    %v6829 = vand.u32 %v6828, 4294901760
    %v6830 = vsub.f32 %v6828, %v6829
    %v6831 = vand.u32 %v6830, 4294901760
    %6832 = vmatpush.msra.mxu0 %v6831
    %v6833 = vand.u32 %v5908, 4294901760
    %6834 = vmatmul.f32.gmra.mxu0 %v6833
    %v6835 = vpop.f32.mrf.mxu0
    %v6836 = vadd.f32 %v6810, %v6835
    %6837 = vdwg.mxu0
    %6838 = vmatpush.msra.mxu0 0.0
    %6839 = vmatpush.msra.mxu0 0.0
    %6840 = vmatpush.msra.mxu0 0.0
    %6841 = vmatpush.msra.mxu0 0.0
    %6842 = vmatpush.msra.mxu0 0.0
    %6843 = vmatpush.msra.mxu0 0.0
    %6844 = vmatpush.msra.mxu0 0.0
    %6845 = vmatpush.msra.mxu0 0.0
    %6846 = vmatpush.msra.mxu0 0.0
    %6847 = vmatpush.msra.mxu0 0.0
    %6848 = vmatpush.msra.mxu0 0.0
    %6849 = vmatpush.msra.mxu0 0.0
    %6850 = vmatpush.msra.mxu0 0.0
    %6851 = vmatpush.msra.mxu0 0.0
    %6852 = vmatpush.msra.mxu0 0.0
    %v6853 = vand.u32 %v754, 4294901760
    %v6854 = vsub.f32 %v754, %v6853
    %6855 = vmatpush.msra.mxu0 %v6854
    %v6856 = vand.u32 %v5908, 4294901760
    %v6857 = vsub.f32 %v5908, %v6856
    %6858 = vmatmul.f32.gmra.mxu0 %v6857
    %v6859 = vpop.f32.mrf.mxu0
    %v6860 = vadd.f32 %v6836, %v6859
    %6861 = vdwg.mxu0
    %6862 = vmatpush.msra.mxu0 0.0
    %6863 = vmatpush.msra.mxu0 0.0
    %6864 = vmatpush.msra.mxu0 0.0
    %6865 = vmatpush.msra.mxu0 0.0
    %6866 = vmatpush.msra.mxu0 0.0
    %6867 = vmatpush.msra.mxu0 0.0
    %6868 = vmatpush.msra.mxu0 0.0
    %6869 = vmatpush.msra.mxu0 0.0
    %6870 = vmatpush.msra.mxu0 0.0
    %6871 = vmatpush.msra.mxu0 0.0
    %6872 = vmatpush.msra.mxu0 0.0
    %6873 = vmatpush.msra.mxu0 0.0
    %6874 = vmatpush.msra.mxu0 0.0
    %6875 = vmatpush.msra.mxu0 0.0
    %6876 = vmatpush.msra.mxu0 0.0
    %v6877 = vand.u32 %v754, 4294901760
    %6878 = vmatpush.msra.mxu0 %v6877
    %v6879 = vand.u32 %v5908, 4294901760
    %v6880 = vsub.f32 %v5908, %v6879
    %v6881 = vand.u32 %v6880, 4294901760
    %6882 = vmatmul.f32.gmra.mxu0 %v6881
    %v6883 = vpop.f32.mrf.mxu0
    %v6884 = vadd.f32 %v6860, %v6883
    %6885 = vdwg.mxu0
    %6886 = vmatpush.msra.mxu0 0.0
    %6887 = vmatpush.msra.mxu0 0.0
    %6888 = vmatpush.msra.mxu0 0.0
    %6889 = vmatpush.msra.mxu0 0.0
    %6890 = vmatpush.msra.mxu0 0.0
    %6891 = vmatpush.msra.mxu0 0.0
    %6892 = vmatpush.msra.mxu0 0.0
    %6893 = vmatpush.msra.mxu0 0.0
    %6894 = vmatpush.msra.mxu0 0.0
    %6895 = vmatpush.msra.mxu0 0.0
    %6896 = vmatpush.msra.mxu0 0.0
    %6897 = vmatpush.msra.mxu0 0.0
    %6898 = vmatpush.msra.mxu0 0.0
    %6899 = vmatpush.msra.mxu0 0.0
    %6900 = vmatpush.msra.mxu0 0.0
    %v6901 = vand.u32 %v754, 4294901760
    %v6902 = vsub.f32 %v754, %v6901
    %v6903 = vand.u32 %v6902, 4294901760
    %6904 = vmatpush.msra.mxu0 %v6903
    %v6905 = vand.u32 %v5908, 4294901760
    %6906 = vmatmul.f32.gmra.mxu0 %v6905
    %v6907 = vpop.f32.mrf.mxu0
    %v6908 = vadd.f32 %v6884, %v6907
    %6909 = vdwg.mxu0
    %6910 = vmatpush.msra.mxu0 0.0
    %6911 = vmatpush.msra.mxu0 0.0
    %6912 = vmatpush.msra.mxu0 0.0
    %6913 = vmatpush.msra.mxu0 0.0
    %6914 = vmatpush.msra.mxu0 0.0
    %6915 = vmatpush.msra.mxu0 0.0
    %6916 = vmatpush.msra.mxu0 0.0
    %6917 = vmatpush.msra.mxu0 0.0
    %6918 = vmatpush.msra.mxu0 0.0
    %6919 = vmatpush.msra.mxu0 0.0
    %6920 = vmatpush.msra.mxu0 0.0
    %6921 = vmatpush.msra.mxu0 0.0
    %6922 = vmatpush.msra.mxu0 0.0
    %6923 = vmatpush.msra.mxu0 0.0
    %6924 = vmatpush.msra.mxu0 0.0
    %v6925 = vand.u32 %v754, 4294901760
    %6926 = vmatpush.msra.mxu0 %v6925
    %v6927 = vand.u32 %v5908, 4294901760
    %6928 = vmatmul.f32.gmra.mxu0 %v6927
    %v6929 = vpop.f32.mrf.mxu0
    %v6930 = vadd.f32 %v6908, %v6929
    %6931 = vdwg.mxu0
    %6932 = vmatpush.msra.mxu0 0.0
    %6933 = vmatpush.msra.mxu0 0.0
    %6934 = vmatpush.msra.mxu0 0.0
    %6935 = vmatpush.msra.mxu0 0.0
    %6936 = vmatpush.msra.mxu0 0.0
    %6937 = vmatpush.msra.mxu0 0.0
    %6938 = vmatpush.msra.mxu0 0.0
    %6939 = vmatpush.msra.mxu0 0.0
    %6940 = vmatpush.msra.mxu0 0.0
    %6941 = vmatpush.msra.mxu0 0.0
    %6942 = vmatpush.msra.mxu0 0.0
    %6943 = vmatpush.msra.mxu0 0.0
    %6944 = vmatpush.msra.mxu0 0.0
    %6945 = vmatpush.msra.mxu0 0.0
    %6946 = vmatpush.msra.mxu0 0.0
    %v6947 = vand.u32 %v755, 4294901760
    %6948 = vmatpush.msra.mxu0 %v6947
    %v6949 = vand.u32 %v5908, 4294901760
    %v6950 = vsub.f32 %v5908, %v6949
    %v6951 = vand.u32 %v6950, 4294901760
    %v6952 = vsub.f32 %v6950, %v6951
    %v6953 = vand.u32 %v6952, 4294901760
    %6954 = vmatmul.f32.gmra.mxu0 %v6953
    %v6955 = vpop.f32.mrf.mxu0
    %v6956 = vadd.f32 0.0, %v6955
    %6957 = vdwg.mxu0
    %6958 = vmatpush.msra.mxu0 0.0
    %6959 = vmatpush.msra.mxu0 0.0
    %6960 = vmatpush.msra.mxu0 0.0
    %6961 = vmatpush.msra.mxu0 0.0
    %6962 = vmatpush.msra.mxu0 0.0
    %6963 = vmatpush.msra.mxu0 0.0
    %6964 = vmatpush.msra.mxu0 0.0
    %6965 = vmatpush.msra.mxu0 0.0
    %6966 = vmatpush.msra.mxu0 0.0
    %6967 = vmatpush.msra.mxu0 0.0
    %6968 = vmatpush.msra.mxu0 0.0
    %6969 = vmatpush.msra.mxu0 0.0
    %6970 = vmatpush.msra.mxu0 0.0
    %6971 = vmatpush.msra.mxu0 0.0
    %6972 = vmatpush.msra.mxu0 0.0
    %v6973 = vand.u32 %v755, 4294901760
    %v6974 = vsub.f32 %v755, %v6973
    %v6975 = vand.u32 %v6974, 4294901760
    %v6976 = vsub.f32 %v6974, %v6975
    %v6977 = vand.u32 %v6976, 4294901760
    %6978 = vmatpush.msra.mxu0 %v6977
    %v6979 = vand.u32 %v5908, 4294901760
    %6980 = vmatmul.f32.gmra.mxu0 %v6979
    %v6981 = vpop.f32.mrf.mxu0
    %v6982 = vadd.f32 %v6956, %v6981
    %6983 = vdwg.mxu0
    %6984 = vmatpush.msra.mxu0 0.0
    %6985 = vmatpush.msra.mxu0 0.0
    %6986 = vmatpush.msra.mxu0 0.0
    %6987 = vmatpush.msra.mxu0 0.0
    %6988 = vmatpush.msra.mxu0 0.0
    %6989 = vmatpush.msra.mxu0 0.0
    %6990 = vmatpush.msra.mxu0 0.0
    %6991 = vmatpush.msra.mxu0 0.0
    %6992 = vmatpush.msra.mxu0 0.0
    %6993 = vmatpush.msra.mxu0 0.0
    %6994 = vmatpush.msra.mxu0 0.0
    %6995 = vmatpush.msra.mxu0 0.0
    %6996 = vmatpush.msra.mxu0 0.0
    %6997 = vmatpush.msra.mxu0 0.0
    %6998 = vmatpush.msra.mxu0 0.0
    %v6999 = vand.u32 %v755, 4294901760
    %v7000 = vsub.f32 %v755, %v6999
    %7001 = vmatpush.msra.mxu0 %v7000
    %v7002 = vand.u32 %v5908, 4294901760
    %v7003 = vsub.f32 %v5908, %v7002
    %7004 = vmatmul.f32.gmra.mxu0 %v7003
    %v7005 = vpop.f32.mrf.mxu0
    %v7006 = vadd.f32 %v6982, %v7005
    %7007 = vdwg.mxu0
    %7008 = vmatpush.msra.mxu0 0.0
    %7009 = vmatpush.msra.mxu0 0.0
    %7010 = vmatpush.msra.mxu0 0.0
    %7011 = vmatpush.msra.mxu0 0.0
    %7012 = vmatpush.msra.mxu0 0.0
    %7013 = vmatpush.msra.mxu0 0.0
    %7014 = vmatpush.msra.mxu0 0.0
    %7015 = vmatpush.msra.mxu0 0.0
    %7016 = vmatpush.msra.mxu0 0.0
    %7017 = vmatpush.msra.mxu0 0.0
    %7018 = vmatpush.msra.mxu0 0.0
    %7019 = vmatpush.msra.mxu0 0.0
    %7020 = vmatpush.msra.mxu0 0.0
    %7021 = vmatpush.msra.mxu0 0.0
    %7022 = vmatpush.msra.mxu0 0.0
    %v7023 = vand.u32 %v755, 4294901760
    %7024 = vmatpush.msra.mxu0 %v7023
    %v7025 = vand.u32 %v5908, 4294901760
    %v7026 = vsub.f32 %v5908, %v7025
    %v7027 = vand.u32 %v7026, 4294901760
    %7028 = vmatmul.f32.gmra.mxu0 %v7027
    %v7029 = vpop.f32.mrf.mxu0
    %v7030 = vadd.f32 %v7006, %v7029
    %7031 = vdwg.mxu0
    %7032 = vmatpush.msra.mxu0 0.0
    %7033 = vmatpush.msra.mxu0 0.0
    %7034 = vmatpush.msra.mxu0 0.0
    %7035 = vmatpush.msra.mxu0 0.0
    %7036 = vmatpush.msra.mxu0 0.0
    %7037 = vmatpush.msra.mxu0 0.0
    %7038 = vmatpush.msra.mxu0 0.0
    %7039 = vmatpush.msra.mxu0 0.0
    %7040 = vmatpush.msra.mxu0 0.0
    %7041 = vmatpush.msra.mxu0 0.0
    %7042 = vmatpush.msra.mxu0 0.0
    %7043 = vmatpush.msra.mxu0 0.0
    %7044 = vmatpush.msra.mxu0 0.0
    %7045 = vmatpush.msra.mxu0 0.0
    %7046 = vmatpush.msra.mxu0 0.0
    %v7047 = vand.u32 %v755, 4294901760
    %v7048 = vsub.f32 %v755, %v7047
    %v7049 = vand.u32 %v7048, 4294901760
    %7050 = vmatpush.msra.mxu0 %v7049
    %v7051 = vand.u32 %v5908, 4294901760
    %7052 = vmatmul.f32.gmra.mxu0 %v7051
    %v7053 = vpop.f32.mrf.mxu0
    %v7054 = vadd.f32 %v7030, %v7053
    %7055 = vdwg.mxu0
    %7056 = vmatpush.msra.mxu0 0.0
    %7057 = vmatpush.msra.mxu0 0.0
    %7058 = vmatpush.msra.mxu0 0.0
    %7059 = vmatpush.msra.mxu0 0.0
    %7060 = vmatpush.msra.mxu0 0.0
    %7061 = vmatpush.msra.mxu0 0.0
    %7062 = vmatpush.msra.mxu0 0.0
    %7063 = vmatpush.msra.mxu0 0.0
    %7064 = vmatpush.msra.mxu0 0.0
    %7065 = vmatpush.msra.mxu0 0.0
    %7066 = vmatpush.msra.mxu0 0.0
    %7067 = vmatpush.msra.mxu0 0.0
    %7068 = vmatpush.msra.mxu0 0.0
    %7069 = vmatpush.msra.mxu0 0.0
    %7070 = vmatpush.msra.mxu0 0.0
    %v7071 = vand.u32 %v755, 4294901760
    %7072 = vmatpush.msra.mxu0 %v7071
    %v7073 = vand.u32 %v5908, 4294901760
    %7074 = vmatmul.f32.gmra.mxu0 %v7073
    %v7075 = vpop.f32.mrf.mxu0
    %v7076 = vadd.f32 %v7054, %v7075
    %7077 = vdwg.mxu0
    %7078 = vmatpush.msra.mxu0 0.0
    %7079 = vmatpush.msra.mxu0 0.0
    %7080 = vmatpush.msra.mxu0 0.0
    %7081 = vmatpush.msra.mxu0 0.0
    %7082 = vmatpush.msra.mxu0 0.0
    %7083 = vmatpush.msra.mxu0 0.0
    %7084 = vmatpush.msra.mxu0 0.0
    %7085 = vmatpush.msra.mxu0 0.0
    %7086 = vmatpush.msra.mxu0 0.0
    %7087 = vmatpush.msra.mxu0 0.0
    %7088 = vmatpush.msra.mxu0 0.0
    %7089 = vmatpush.msra.mxu0 0.0
    %7090 = vmatpush.msra.mxu0 0.0
    %7091 = vmatpush.msra.mxu0 0.0
    %7092 = vmatpush.msra.mxu0 0.0
    %v7093 = vand.u32 %v756, 4294901760
    %7094 = vmatpush.msra.mxu0 %v7093
    %v7095 = vand.u32 %v5908, 4294901760
    %v7096 = vsub.f32 %v5908, %v7095
    %v7097 = vand.u32 %v7096, 4294901760
    %v7098 = vsub.f32 %v7096, %v7097
    %v7099 = vand.u32 %v7098, 4294901760
    %7100 = vmatmul.f32.gmra.mxu0 %v7099
    %v7101 = vpop.f32.mrf.mxu0
    %v7102 = vadd.f32 0.0, %v7101
    %7103 = vdwg.mxu0
    %7104 = vmatpush.msra.mxu0 0.0
    %7105 = vmatpush.msra.mxu0 0.0
    %7106 = vmatpush.msra.mxu0 0.0
    %7107 = vmatpush.msra.mxu0 0.0
    %7108 = vmatpush.msra.mxu0 0.0
    %7109 = vmatpush.msra.mxu0 0.0
    %7110 = vmatpush.msra.mxu0 0.0
    %7111 = vmatpush.msra.mxu0 0.0
    %7112 = vmatpush.msra.mxu0 0.0
    %7113 = vmatpush.msra.mxu0 0.0
    %7114 = vmatpush.msra.mxu0 0.0
    %7115 = vmatpush.msra.mxu0 0.0
    %7116 = vmatpush.msra.mxu0 0.0
    %7117 = vmatpush.msra.mxu0 0.0
    %7118 = vmatpush.msra.mxu0 0.0
    %v7119 = vand.u32 %v756, 4294901760
    %v7120 = vsub.f32 %v756, %v7119
    %v7121 = vand.u32 %v7120, 4294901760
    %v7122 = vsub.f32 %v7120, %v7121
    %v7123 = vand.u32 %v7122, 4294901760
    %7124 = vmatpush.msra.mxu0 %v7123
    %v7125 = vand.u32 %v5908, 4294901760
    %7126 = vmatmul.f32.gmra.mxu0 %v7125
    %v7127 = vpop.f32.mrf.mxu0
    %v7128 = vadd.f32 %v7102, %v7127
    %7129 = vdwg.mxu0
    %7130 = vmatpush.msra.mxu0 0.0
    %7131 = vmatpush.msra.mxu0 0.0
    %7132 = vmatpush.msra.mxu0 0.0
    %7133 = vmatpush.msra.mxu0 0.0
    %7134 = vmatpush.msra.mxu0 0.0
    %7135 = vmatpush.msra.mxu0 0.0
    %7136 = vmatpush.msra.mxu0 0.0
    %7137 = vmatpush.msra.mxu0 0.0
    %7138 = vmatpush.msra.mxu0 0.0
    %7139 = vmatpush.msra.mxu0 0.0
    %7140 = vmatpush.msra.mxu0 0.0
    %7141 = vmatpush.msra.mxu0 0.0
    %7142 = vmatpush.msra.mxu0 0.0
    %7143 = vmatpush.msra.mxu0 0.0
    %7144 = vmatpush.msra.mxu0 0.0
    %v7145 = vand.u32 %v756, 4294901760
    %v7146 = vsub.f32 %v756, %v7145
    %7147 = vmatpush.msra.mxu0 %v7146
    %v7148 = vand.u32 %v5908, 4294901760
    %v7149 = vsub.f32 %v5908, %v7148
    %7150 = vmatmul.f32.gmra.mxu0 %v7149
    %v7151 = vpop.f32.mrf.mxu0
    %v7152 = vadd.f32 %v7128, %v7151
    %7153 = vdwg.mxu0
    %7154 = vmatpush.msra.mxu0 0.0
    %7155 = vmatpush.msra.mxu0 0.0
    %7156 = vmatpush.msra.mxu0 0.0
    %7157 = vmatpush.msra.mxu0 0.0
    %7158 = vmatpush.msra.mxu0 0.0
    %7159 = vmatpush.msra.mxu0 0.0
    %7160 = vmatpush.msra.mxu0 0.0
    %7161 = vmatpush.msra.mxu0 0.0
    %7162 = vmatpush.msra.mxu0 0.0
    %7163 = vmatpush.msra.mxu0 0.0
    %7164 = vmatpush.msra.mxu0 0.0
    %7165 = vmatpush.msra.mxu0 0.0
    %7166 = vmatpush.msra.mxu0 0.0
    %7167 = vmatpush.msra.mxu0 0.0
    %7168 = vmatpush.msra.mxu0 0.0
    %v7169 = vand.u32 %v756, 4294901760
    %7170 = vmatpush.msra.mxu0 %v7169
    %v7171 = vand.u32 %v5908, 4294901760
    %v7172 = vsub.f32 %v5908, %v7171
    %v7173 = vand.u32 %v7172, 4294901760
    %7174 = vmatmul.f32.gmra.mxu0 %v7173
    %v7175 = vpop.f32.mrf.mxu0
    %v7176 = vadd.f32 %v7152, %v7175
    %7177 = vdwg.mxu0
    %7178 = vmatpush.msra.mxu0 0.0
    %7179 = vmatpush.msra.mxu0 0.0
    %7180 = vmatpush.msra.mxu0 0.0
    %7181 = vmatpush.msra.mxu0 0.0
    %7182 = vmatpush.msra.mxu0 0.0
    %7183 = vmatpush.msra.mxu0 0.0
    %7184 = vmatpush.msra.mxu0 0.0
    %7185 = vmatpush.msra.mxu0 0.0
    %7186 = vmatpush.msra.mxu0 0.0
    %7187 = vmatpush.msra.mxu0 0.0
    %7188 = vmatpush.msra.mxu0 0.0
    %7189 = vmatpush.msra.mxu0 0.0
    %7190 = vmatpush.msra.mxu0 0.0
    %7191 = vmatpush.msra.mxu0 0.0
    %7192 = vmatpush.msra.mxu0 0.0
    %v7193 = vand.u32 %v756, 4294901760
    %v7194 = vsub.f32 %v756, %v7193
    %v7195 = vand.u32 %v7194, 4294901760
    %7196 = vmatpush.msra.mxu0 %v7195
    %v7197 = vand.u32 %v5908, 4294901760
    %7198 = vmatmul.f32.gmra.mxu0 %v7197
    %v7199 = vpop.f32.mrf.mxu0
    %v7200 = vadd.f32 %v7176, %v7199
    %7201 = vdwg.mxu0
    %7202 = vmatpush.msra.mxu0 0.0
    %7203 = vmatpush.msra.mxu0 0.0
    %7204 = vmatpush.msra.mxu0 0.0
    %7205 = vmatpush.msra.mxu0 0.0
    %7206 = vmatpush.msra.mxu0 0.0
    %7207 = vmatpush.msra.mxu0 0.0
    %7208 = vmatpush.msra.mxu0 0.0
    %7209 = vmatpush.msra.mxu0 0.0
    %7210 = vmatpush.msra.mxu0 0.0
    %7211 = vmatpush.msra.mxu0 0.0
    %7212 = vmatpush.msra.mxu0 0.0
    %7213 = vmatpush.msra.mxu0 0.0
    %7214 = vmatpush.msra.mxu0 0.0
    %7215 = vmatpush.msra.mxu0 0.0
    %7216 = vmatpush.msra.mxu0 0.0
    %v7217 = vand.u32 %v756, 4294901760
    %7218 = vmatpush.msra.mxu0 %v7217
    %v7219 = vand.u32 %v5908, 4294901760
    %7220 = vmatmul.f32.gmra.mxu0 %v7219
    %v7221 = vpop.f32.mrf.mxu0
    %v7222 = vadd.f32 %v7200, %v7221
    %7223 = vdwg.mxu0
    %7224 = vmatpush.msra.mxu0 0.0
    %7225 = vmatpush.msra.mxu0 0.0
    %7226 = vmatpush.msra.mxu0 0.0
    %7227 = vmatpush.msra.mxu0 0.0
    %7228 = vmatpush.msra.mxu0 0.0
    %7229 = vmatpush.msra.mxu0 0.0
    %7230 = vmatpush.msra.mxu0 0.0
    %7231 = vmatpush.msra.mxu0 0.0
    %7232 = vmatpush.msra.mxu0 0.0
    %7233 = vmatpush.msra.mxu0 0.0
    %7234 = vmatpush.msra.mxu0 0.0
    %7235 = vmatpush.msra.mxu0 0.0
    %7236 = vmatpush.msra.mxu0 0.0
    %7237 = vmatpush.msra.mxu0 0.0
    %7238 = vmatpush.msra.mxu0 0.0
    %v7239 = vand.u32 %v757, 4294901760
    %7240 = vmatpush.msra.mxu0 %v7239
    %v7241 = vand.u32 %v5908, 4294901760
    %v7242 = vsub.f32 %v5908, %v7241
    %v7243 = vand.u32 %v7242, 4294901760
    %v7244 = vsub.f32 %v7242, %v7243
    %v7245 = vand.u32 %v7244, 4294901760
    %7246 = vmatmul.f32.gmra.mxu0 %v7245
    %v7247 = vpop.f32.mrf.mxu0
    %v7248 = vadd.f32 0.0, %v7247
    %7249 = vdwg.mxu0
    %7250 = vmatpush.msra.mxu0 0.0
    %7251 = vmatpush.msra.mxu0 0.0
    %7252 = vmatpush.msra.mxu0 0.0
    %7253 = vmatpush.msra.mxu0 0.0
    %7254 = vmatpush.msra.mxu0 0.0
    %7255 = vmatpush.msra.mxu0 0.0
    %7256 = vmatpush.msra.mxu0 0.0
    %7257 = vmatpush.msra.mxu0 0.0
    %7258 = vmatpush.msra.mxu0 0.0
    %7259 = vmatpush.msra.mxu0 0.0
    %7260 = vmatpush.msra.mxu0 0.0
    %7261 = vmatpush.msra.mxu0 0.0
    %7262 = vmatpush.msra.mxu0 0.0
    %7263 = vmatpush.msra.mxu0 0.0
    %7264 = vmatpush.msra.mxu0 0.0
    %v7265 = vand.u32 %v757, 4294901760
    %v7266 = vsub.f32 %v757, %v7265
    %v7267 = vand.u32 %v7266, 4294901760
    %v7268 = vsub.f32 %v7266, %v7267
    %v7269 = vand.u32 %v7268, 4294901760
    %7270 = vmatpush.msra.mxu0 %v7269
    %v7271 = vand.u32 %v5908, 4294901760
    %7272 = vmatmul.f32.gmra.mxu0 %v7271
    %v7273 = vpop.f32.mrf.mxu0
    %v7274 = vadd.f32 %v7248, %v7273
    %7275 = vdwg.mxu0
    %7276 = vmatpush.msra.mxu0 0.0
    %7277 = vmatpush.msra.mxu0 0.0
    %7278 = vmatpush.msra.mxu0 0.0
    %7279 = vmatpush.msra.mxu0 0.0
    %7280 = vmatpush.msra.mxu0 0.0
    %7281 = vmatpush.msra.mxu0 0.0
    %7282 = vmatpush.msra.mxu0 0.0
    %7283 = vmatpush.msra.mxu0 0.0
    %7284 = vmatpush.msra.mxu0 0.0
    %7285 = vmatpush.msra.mxu0 0.0
    %7286 = vmatpush.msra.mxu0 0.0
    %7287 = vmatpush.msra.mxu0 0.0
    %7288 = vmatpush.msra.mxu0 0.0
    %7289 = vmatpush.msra.mxu0 0.0
    %7290 = vmatpush.msra.mxu0 0.0
    %v7291 = vand.u32 %v757, 4294901760
    %v7292 = vsub.f32 %v757, %v7291
    %7293 = vmatpush.msra.mxu0 %v7292
    %v7294 = vand.u32 %v5908, 4294901760
    %v7295 = vsub.f32 %v5908, %v7294
    %7296 = vmatmul.f32.gmra.mxu0 %v7295
    %v7297 = vpop.f32.mrf.mxu0
    %v7298 = vadd.f32 %v7274, %v7297
    %7299 = vdwg.mxu0
    %7300 = vmatpush.msra.mxu0 0.0
    %7301 = vmatpush.msra.mxu0 0.0
    %7302 = vmatpush.msra.mxu0 0.0
    %7303 = vmatpush.msra.mxu0 0.0
    %7304 = vmatpush.msra.mxu0 0.0
    %7305 = vmatpush.msra.mxu0 0.0
    %7306 = vmatpush.msra.mxu0 0.0
    %7307 = vmatpush.msra.mxu0 0.0
    %7308 = vmatpush.msra.mxu0 0.0
    %7309 = vmatpush.msra.mxu0 0.0
    %7310 = vmatpush.msra.mxu0 0.0
    %7311 = vmatpush.msra.mxu0 0.0
    %7312 = vmatpush.msra.mxu0 0.0
    %7313 = vmatpush.msra.mxu0 0.0
    %7314 = vmatpush.msra.mxu0 0.0
    %v7315 = vand.u32 %v757, 4294901760
    %7316 = vmatpush.msra.mxu0 %v7315
    %v7317 = vand.u32 %v5908, 4294901760
    %v7318 = vsub.f32 %v5908, %v7317
    %v7319 = vand.u32 %v7318, 4294901760
    %7320 = vmatmul.f32.gmra.mxu0 %v7319
    %v7321 = vpop.f32.mrf.mxu0
    %v7322 = vadd.f32 %v7298, %v7321
    %7323 = vdwg.mxu0
    %7324 = vmatpush.msra.mxu0 0.0
    %7325 = vmatpush.msra.mxu0 0.0
    %7326 = vmatpush.msra.mxu0 0.0
    %7327 = vmatpush.msra.mxu0 0.0
    %7328 = vmatpush.msra.mxu0 0.0
    %7329 = vmatpush.msra.mxu0 0.0
    %7330 = vmatpush.msra.mxu0 0.0
    %7331 = vmatpush.msra.mxu0 0.0
    %7332 = vmatpush.msra.mxu0 0.0
    %7333 = vmatpush.msra.mxu0 0.0
    %7334 = vmatpush.msra.mxu0 0.0
    %7335 = vmatpush.msra.mxu0 0.0
    %7336 = vmatpush.msra.mxu0 0.0
    %7337 = vmatpush.msra.mxu0 0.0
    %7338 = vmatpush.msra.mxu0 0.0
    %v7339 = vand.u32 %v757, 4294901760
    %v7340 = vsub.f32 %v757, %v7339
    %v7341 = vand.u32 %v7340, 4294901760
    %7342 = vmatpush.msra.mxu0 %v7341
    %v7343 = vand.u32 %v5908, 4294901760
    %7344 = vmatmul.f32.gmra.mxu0 %v7343
    %v7345 = vpop.f32.mrf.mxu0
    %v7346 = vadd.f32 %v7322, %v7345
    %7347 = vdwg.mxu0
    %7348 = vmatpush.msra.mxu0 0.0
    %7349 = vmatpush.msra.mxu0 0.0
    %7350 = vmatpush.msra.mxu0 0.0
    %7351 = vmatpush.msra.mxu0 0.0
    %7352 = vmatpush.msra.mxu0 0.0
    %7353 = vmatpush.msra.mxu0 0.0
    %7354 = vmatpush.msra.mxu0 0.0
    %7355 = vmatpush.msra.mxu0 0.0
    %7356 = vmatpush.msra.mxu0 0.0
    %7357 = vmatpush.msra.mxu0 0.0
    %7358 = vmatpush.msra.mxu0 0.0
    %7359 = vmatpush.msra.mxu0 0.0
    %7360 = vmatpush.msra.mxu0 0.0
    %7361 = vmatpush.msra.mxu0 0.0
    %7362 = vmatpush.msra.mxu0 0.0
    %v7363 = vand.u32 %v757, 4294901760
    %7364 = vmatpush.msra.mxu0 %v7363
    %v7365 = vand.u32 %v5908, 4294901760
    %7366 = vmatmul.f32.gmra.mxu0 %v7365
    %v7367 = vpop.f32.mrf.mxu0
    %v7368 = vadd.f32 %v7346, %v7367
    %7369 = vdwg.mxu0
    %7370 = vmatpush.msra.mxu0 0.0
    %7371 = vmatpush.msra.mxu0 0.0
    %7372 = vmatpush.msra.mxu0 0.0
    %7373 = vmatpush.msra.mxu0 0.0
    %7374 = vmatpush.msra.mxu0 0.0
    %7375 = vmatpush.msra.mxu0 0.0
    %7376 = vmatpush.msra.mxu0 0.0
    %7377 = vmatpush.msra.mxu0 0.0
    %7378 = vmatpush.msra.mxu0 0.0
    %7379 = vmatpush.msra.mxu0 0.0
    %7380 = vmatpush.msra.mxu0 0.0
    %7381 = vmatpush.msra.mxu0 0.0
    %7382 = vmatpush.msra.mxu0 0.0
    %7383 = vmatpush.msra.mxu0 0.0
    %7384 = vmatpush.msra.mxu0 0.0
    %v7385 = vand.u32 %v758, 4294901760
    %7386 = vmatpush.msra.mxu0 %v7385
    %v7387 = vand.u32 %v5908, 4294901760
    %v7388 = vsub.f32 %v5908, %v7387
    %v7389 = vand.u32 %v7388, 4294901760
    %v7390 = vsub.f32 %v7388, %v7389
    %v7391 = vand.u32 %v7390, 4294901760
    %7392 = vmatmul.f32.gmra.mxu0 %v7391
    %v7393 = vpop.f32.mrf.mxu0
    %v7394 = vadd.f32 0.0, %v7393
    %7395 = vdwg.mxu0
    %7396 = vmatpush.msra.mxu0 0.0
    %7397 = vmatpush.msra.mxu0 0.0
    %7398 = vmatpush.msra.mxu0 0.0
    %7399 = vmatpush.msra.mxu0 0.0
    %7400 = vmatpush.msra.mxu0 0.0
    %7401 = vmatpush.msra.mxu0 0.0
    %7402 = vmatpush.msra.mxu0 0.0
    %7403 = vmatpush.msra.mxu0 0.0
    %7404 = vmatpush.msra.mxu0 0.0
    %7405 = vmatpush.msra.mxu0 0.0
    %7406 = vmatpush.msra.mxu0 0.0
    %7407 = vmatpush.msra.mxu0 0.0
    %7408 = vmatpush.msra.mxu0 0.0
    %7409 = vmatpush.msra.mxu0 0.0
    %7410 = vmatpush.msra.mxu0 0.0
    %v7411 = vand.u32 %v758, 4294901760
    %v7412 = vsub.f32 %v758, %v7411
    %v7413 = vand.u32 %v7412, 4294901760
    %v7414 = vsub.f32 %v7412, %v7413
    %v7415 = vand.u32 %v7414, 4294901760
    %7416 = vmatpush.msra.mxu0 %v7415
    %v7417 = vand.u32 %v5908, 4294901760
    %7418 = vmatmul.f32.gmra.mxu0 %v7417
    %v7419 = vpop.f32.mrf.mxu0
    %v7420 = vadd.f32 %v7394, %v7419
    %7421 = vdwg.mxu0
    %7422 = vmatpush.msra.mxu0 0.0
    %7423 = vmatpush.msra.mxu0 0.0
    %7424 = vmatpush.msra.mxu0 0.0
    %7425 = vmatpush.msra.mxu0 0.0
    %7426 = vmatpush.msra.mxu0 0.0
    %7427 = vmatpush.msra.mxu0 0.0
    %7428 = vmatpush.msra.mxu0 0.0
    %7429 = vmatpush.msra.mxu0 0.0
    %7430 = vmatpush.msra.mxu0 0.0
    %7431 = vmatpush.msra.mxu0 0.0
    %7432 = vmatpush.msra.mxu0 0.0
    %7433 = vmatpush.msra.mxu0 0.0
    %7434 = vmatpush.msra.mxu0 0.0
    %7435 = vmatpush.msra.mxu0 0.0
    %7436 = vmatpush.msra.mxu0 0.0
    %v7437 = vand.u32 %v758, 4294901760
    %v7438 = vsub.f32 %v758, %v7437
    %7439 = vmatpush.msra.mxu0 %v7438
    %v7440 = vand.u32 %v5908, 4294901760
    %v7441 = vsub.f32 %v5908, %v7440
    %7442 = vmatmul.f32.gmra.mxu0 %v7441
    %v7443 = vpop.f32.mrf.mxu0
    %v7444 = vadd.f32 %v7420, %v7443
    %7445 = vdwg.mxu0
    %7446 = vmatpush.msra.mxu0 0.0
    %7447 = vmatpush.msra.mxu0 0.0
    %7448 = vmatpush.msra.mxu0 0.0
    %7449 = vmatpush.msra.mxu0 0.0
    %7450 = vmatpush.msra.mxu0 0.0
    %7451 = vmatpush.msra.mxu0 0.0
    %7452 = vmatpush.msra.mxu0 0.0
    %7453 = vmatpush.msra.mxu0 0.0
    %7454 = vmatpush.msra.mxu0 0.0
    %7455 = vmatpush.msra.mxu0 0.0
    %7456 = vmatpush.msra.mxu0 0.0
    %7457 = vmatpush.msra.mxu0 0.0
    %7458 = vmatpush.msra.mxu0 0.0
    %7459 = vmatpush.msra.mxu0 0.0
    %7460 = vmatpush.msra.mxu0 0.0
    %v7461 = vand.u32 %v758, 4294901760
    %7462 = vmatpush.msra.mxu0 %v7461
    %v7463 = vand.u32 %v5908, 4294901760
    %v7464 = vsub.f32 %v5908, %v7463
    %v7465 = vand.u32 %v7464, 4294901760
    %7466 = vmatmul.f32.gmra.mxu0 %v7465
    %v7467 = vpop.f32.mrf.mxu0
    %v7468 = vadd.f32 %v7444, %v7467
    %7469 = vdwg.mxu0
    %7470 = vmatpush.msra.mxu0 0.0
    %7471 = vmatpush.msra.mxu0 0.0
    %7472 = vmatpush.msra.mxu0 0.0
    %7473 = vmatpush.msra.mxu0 0.0
    %7474 = vmatpush.msra.mxu0 0.0
    %7475 = vmatpush.msra.mxu0 0.0
    %7476 = vmatpush.msra.mxu0 0.0
    %7477 = vmatpush.msra.mxu0 0.0
    %7478 = vmatpush.msra.mxu0 0.0
    %7479 = vmatpush.msra.mxu0 0.0
    %7480 = vmatpush.msra.mxu0 0.0
    %7481 = vmatpush.msra.mxu0 0.0
    %7482 = vmatpush.msra.mxu0 0.0
    %7483 = vmatpush.msra.mxu0 0.0
    %7484 = vmatpush.msra.mxu0 0.0
    %v7485 = vand.u32 %v758, 4294901760
    %v7486 = vsub.f32 %v758, %v7485
    %v7487 = vand.u32 %v7486, 4294901760
    %7488 = vmatpush.msra.mxu0 %v7487
    %v7489 = vand.u32 %v5908, 4294901760
    %7490 = vmatmul.f32.gmra.mxu0 %v7489
    %v7491 = vpop.f32.mrf.mxu0
    %v7492 = vadd.f32 %v7468, %v7491
    %7493 = vdwg.mxu0
    %7494 = vmatpush.msra.mxu0 0.0
    %7495 = vmatpush.msra.mxu0 0.0
    %7496 = vmatpush.msra.mxu0 0.0
    %7497 = vmatpush.msra.mxu0 0.0
    %7498 = vmatpush.msra.mxu0 0.0
    %7499 = vmatpush.msra.mxu0 0.0
    %7500 = vmatpush.msra.mxu0 0.0
    %7501 = vmatpush.msra.mxu0 0.0
    %7502 = vmatpush.msra.mxu0 0.0
    %7503 = vmatpush.msra.mxu0 0.0
    %7504 = vmatpush.msra.mxu0 0.0
    %7505 = vmatpush.msra.mxu0 0.0
    %7506 = vmatpush.msra.mxu0 0.0
    %7507 = vmatpush.msra.mxu0 0.0
    %7508 = vmatpush.msra.mxu0 0.0
    %v7509 = vand.u32 %v758, 4294901760
    %7510 = vmatpush.msra.mxu0 %v7509
    %v7511 = vand.u32 %v5908, 4294901760
    %7512 = vmatmul.f32.gmra.mxu0 %v7511
    %v7513 = vpop.f32.mrf.mxu0
    %v7514 = vadd.f32 %v7492, %v7513
    %7515 = vdwg.mxu0
    %7516 = vmatpush.msra.mxu0 0.0
    %7517 = vmatpush.msra.mxu0 0.0
    %7518 = vmatpush.msra.mxu0 0.0
    %7519 = vmatpush.msra.mxu0 0.0
    %7520 = vmatpush.msra.mxu0 0.0
    %7521 = vmatpush.msra.mxu0 0.0
    %7522 = vmatpush.msra.mxu0 0.0
    %7523 = vmatpush.msra.mxu0 0.0
    %7524 = vmatpush.msra.mxu0 0.0
    %7525 = vmatpush.msra.mxu0 0.0
    %7526 = vmatpush.msra.mxu0 0.0
    %7527 = vmatpush.msra.mxu0 0.0
    %7528 = vmatpush.msra.mxu0 0.0
    %7529 = vmatpush.msra.mxu0 0.0
    %7530 = vmatpush.msra.mxu0 0.0
    %v7531 = vand.u32 %v759, 4294901760
    %7532 = vmatpush.msra.mxu0 %v7531
    %v7533 = vand.u32 %v5908, 4294901760
    %v7534 = vsub.f32 %v5908, %v7533
    %v7535 = vand.u32 %v7534, 4294901760
    %v7536 = vsub.f32 %v7534, %v7535
    %v7537 = vand.u32 %v7536, 4294901760
    %7538 = vmatmul.f32.gmra.mxu0 %v7537
    %v7539 = vpop.f32.mrf.mxu0
    %v7540 = vadd.f32 0.0, %v7539
    %7541 = vdwg.mxu0
    %7542 = vmatpush.msra.mxu0 0.0
    %7543 = vmatpush.msra.mxu0 0.0
    %7544 = vmatpush.msra.mxu0 0.0
    %7545 = vmatpush.msra.mxu0 0.0
    %7546 = vmatpush.msra.mxu0 0.0
    %7547 = vmatpush.msra.mxu0 0.0
    %7548 = vmatpush.msra.mxu0 0.0
    %7549 = vmatpush.msra.mxu0 0.0
    %7550 = vmatpush.msra.mxu0 0.0
    %7551 = vmatpush.msra.mxu0 0.0
    %7552 = vmatpush.msra.mxu0 0.0
    %7553 = vmatpush.msra.mxu0 0.0
    %7554 = vmatpush.msra.mxu0 0.0
    %7555 = vmatpush.msra.mxu0 0.0
    %7556 = vmatpush.msra.mxu0 0.0
    %v7557 = vand.u32 %v759, 4294901760
    %v7558 = vsub.f32 %v759, %v7557
    %v7559 = vand.u32 %v7558, 4294901760
    %v7560 = vsub.f32 %v7558, %v7559
    %v7561 = vand.u32 %v7560, 4294901760
    %7562 = vmatpush.msra.mxu0 %v7561
    %v7563 = vand.u32 %v5908, 4294901760
    %7564 = vmatmul.f32.gmra.mxu0 %v7563
    %v7565 = vpop.f32.mrf.mxu0
    %v7566 = vadd.f32 %v7540, %v7565
    %7567 = vdwg.mxu0
    %7568 = vmatpush.msra.mxu0 0.0
    %7569 = vmatpush.msra.mxu0 0.0
    %7570 = vmatpush.msra.mxu0 0.0
    %7571 = vmatpush.msra.mxu0 0.0
    %7572 = vmatpush.msra.mxu0 0.0
    %7573 = vmatpush.msra.mxu0 0.0
    %7574 = vmatpush.msra.mxu0 0.0
    %7575 = vmatpush.msra.mxu0 0.0
    %7576 = vmatpush.msra.mxu0 0.0
    %7577 = vmatpush.msra.mxu0 0.0
    %7578 = vmatpush.msra.mxu0 0.0
    %7579 = vmatpush.msra.mxu0 0.0
    %7580 = vmatpush.msra.mxu0 0.0
    %7581 = vmatpush.msra.mxu0 0.0
    %7582 = vmatpush.msra.mxu0 0.0
    %v7583 = vand.u32 %v759, 4294901760
    %v7584 = vsub.f32 %v759, %v7583
    %7585 = vmatpush.msra.mxu0 %v7584
    %v7586 = vand.u32 %v5908, 4294901760
    %v7587 = vsub.f32 %v5908, %v7586
    %7588 = vmatmul.f32.gmra.mxu0 %v7587
    %v7589 = vpop.f32.mrf.mxu0
    %v7590 = vadd.f32 %v7566, %v7589
    %7591 = vdwg.mxu0
    %7592 = vmatpush.msra.mxu0 0.0
    %7593 = vmatpush.msra.mxu0 0.0
    %7594 = vmatpush.msra.mxu0 0.0
    %7595 = vmatpush.msra.mxu0 0.0
    %7596 = vmatpush.msra.mxu0 0.0
    %7597 = vmatpush.msra.mxu0 0.0
    %7598 = vmatpush.msra.mxu0 0.0
    %7599 = vmatpush.msra.mxu0 0.0
    %7600 = vmatpush.msra.mxu0 0.0
    %7601 = vmatpush.msra.mxu0 0.0
    %7602 = vmatpush.msra.mxu0 0.0
    %7603 = vmatpush.msra.mxu0 0.0
    %7604 = vmatpush.msra.mxu0 0.0
    %7605 = vmatpush.msra.mxu0 0.0
    %7606 = vmatpush.msra.mxu0 0.0
    %v7607 = vand.u32 %v759, 4294901760
    %7608 = vmatpush.msra.mxu0 %v7607
    %v7609 = vand.u32 %v5908, 4294901760
    %v7610 = vsub.f32 %v5908, %v7609
    %v7611 = vand.u32 %v7610, 4294901760
    %7612 = vmatmul.f32.gmra.mxu0 %v7611
    %v7613 = vpop.f32.mrf.mxu0
    %v7614 = vadd.f32 %v7590, %v7613
    %7615 = vdwg.mxu0
    %7616 = vmatpush.msra.mxu0 0.0
    %7617 = vmatpush.msra.mxu0 0.0
    %7618 = vmatpush.msra.mxu0 0.0
    %7619 = vmatpush.msra.mxu0 0.0
    %7620 = vmatpush.msra.mxu0 0.0
    %7621 = vmatpush.msra.mxu0 0.0
    %7622 = vmatpush.msra.mxu0 0.0
    %7623 = vmatpush.msra.mxu0 0.0
    %7624 = vmatpush.msra.mxu0 0.0
    %7625 = vmatpush.msra.mxu0 0.0
    %7626 = vmatpush.msra.mxu0 0.0
    %7627 = vmatpush.msra.mxu0 0.0
    %7628 = vmatpush.msra.mxu0 0.0
    %7629 = vmatpush.msra.mxu0 0.0
    %7630 = vmatpush.msra.mxu0 0.0
    %v7631 = vand.u32 %v759, 4294901760
    %v7632 = vsub.f32 %v759, %v7631
    %v7633 = vand.u32 %v7632, 4294901760
    %7634 = vmatpush.msra.mxu0 %v7633
    %v7635 = vand.u32 %v5908, 4294901760
    %7636 = vmatmul.f32.gmra.mxu0 %v7635
    %v7637 = vpop.f32.mrf.mxu0
    %v7638 = vadd.f32 %v7614, %v7637
    %7639 = vdwg.mxu0
    %7640 = vmatpush.msra.mxu0 0.0
    %7641 = vmatpush.msra.mxu0 0.0
    %7642 = vmatpush.msra.mxu0 0.0
    %7643 = vmatpush.msra.mxu0 0.0
    %7644 = vmatpush.msra.mxu0 0.0
    %7645 = vmatpush.msra.mxu0 0.0
    %7646 = vmatpush.msra.mxu0 0.0
    %7647 = vmatpush.msra.mxu0 0.0
    %7648 = vmatpush.msra.mxu0 0.0
    %7649 = vmatpush.msra.mxu0 0.0
    %7650 = vmatpush.msra.mxu0 0.0
    %7651 = vmatpush.msra.mxu0 0.0
    %7652 = vmatpush.msra.mxu0 0.0
    %7653 = vmatpush.msra.mxu0 0.0
    %7654 = vmatpush.msra.mxu0 0.0
    %v7655 = vand.u32 %v759, 4294901760
    %7656 = vmatpush.msra.mxu0 %v7655
    %v7657 = vand.u32 %v5908, 4294901760
    %7658 = vmatmul.f32.gmra.mxu0 %v7657
    %v7659 = vpop.f32.mrf.mxu0
    %v7660 = vadd.f32 %v7638, %v7659
    %7661 = vdwg.mxu0
    %7662 = vmatpush.msra.mxu0 0.0
    %7663 = vmatpush.msra.mxu0 0.0
    %7664 = vmatpush.msra.mxu0 0.0
    %7665 = vmatpush.msra.mxu0 0.0
    %7666 = vmatpush.msra.mxu0 0.0
    %7667 = vmatpush.msra.mxu0 0.0
    %7668 = vmatpush.msra.mxu0 0.0
    %7669 = vmatpush.msra.mxu0 0.0
    %7670 = vmatpush.msra.mxu0 0.0
    %7671 = vmatpush.msra.mxu0 0.0
    %7672 = vmatpush.msra.mxu0 0.0
    %7673 = vmatpush.msra.mxu0 0.0
    %7674 = vmatpush.msra.mxu0 0.0
    %7675 = vmatpush.msra.mxu0 0.0
    %7676 = vmatpush.msra.mxu0 0.0
    %v7677 = vand.u32 %v760, 4294901760
    %7678 = vmatpush.msra.mxu0 %v7677
    %v7679 = vand.u32 %v5908, 4294901760
    %v7680 = vsub.f32 %v5908, %v7679
    %v7681 = vand.u32 %v7680, 4294901760
    %v7682 = vsub.f32 %v7680, %v7681
    %v7683 = vand.u32 %v7682, 4294901760
    %7684 = vmatmul.f32.gmra.mxu0 %v7683
    %v7685 = vpop.f32.mrf.mxu0
    %v7686 = vadd.f32 0.0, %v7685
    %7687 = vdwg.mxu0
    %7688 = vmatpush.msra.mxu0 0.0
    %7689 = vmatpush.msra.mxu0 0.0
    %7690 = vmatpush.msra.mxu0 0.0
    %7691 = vmatpush.msra.mxu0 0.0
    %7692 = vmatpush.msra.mxu0 0.0
    %7693 = vmatpush.msra.mxu0 0.0
    %7694 = vmatpush.msra.mxu0 0.0
    %7695 = vmatpush.msra.mxu0 0.0
    %7696 = vmatpush.msra.mxu0 0.0
    %7697 = vmatpush.msra.mxu0 0.0
    %7698 = vmatpush.msra.mxu0 0.0
    %7699 = vmatpush.msra.mxu0 0.0
    %7700 = vmatpush.msra.mxu0 0.0
    %7701 = vmatpush.msra.mxu0 0.0
    %7702 = vmatpush.msra.mxu0 0.0
    %v7703 = vand.u32 %v760, 4294901760
    %v7704 = vsub.f32 %v760, %v7703
    %v7705 = vand.u32 %v7704, 4294901760
    %v7706 = vsub.f32 %v7704, %v7705
    %v7707 = vand.u32 %v7706, 4294901760
    %7708 = vmatpush.msra.mxu0 %v7707
    %v7709 = vand.u32 %v5908, 4294901760
    %7710 = vmatmul.f32.gmra.mxu0 %v7709
    %v7711 = vpop.f32.mrf.mxu0
    %v7712 = vadd.f32 %v7686, %v7711
    %7713 = vdwg.mxu0
    %7714 = vmatpush.msra.mxu0 0.0
    %7715 = vmatpush.msra.mxu0 0.0
    %7716 = vmatpush.msra.mxu0 0.0
    %7717 = vmatpush.msra.mxu0 0.0
    %7718 = vmatpush.msra.mxu0 0.0
    %7719 = vmatpush.msra.mxu0 0.0
    %7720 = vmatpush.msra.mxu0 0.0
    %7721 = vmatpush.msra.mxu0 0.0
    %7722 = vmatpush.msra.mxu0 0.0
    %7723 = vmatpush.msra.mxu0 0.0
    %7724 = vmatpush.msra.mxu0 0.0
    %7725 = vmatpush.msra.mxu0 0.0
    %7726 = vmatpush.msra.mxu0 0.0
    %7727 = vmatpush.msra.mxu0 0.0
    %7728 = vmatpush.msra.mxu0 0.0
    %v7729 = vand.u32 %v760, 4294901760
    %v7730 = vsub.f32 %v760, %v7729
    %7731 = vmatpush.msra.mxu0 %v7730
    %v7732 = vand.u32 %v5908, 4294901760
    %v7733 = vsub.f32 %v5908, %v7732
    %7734 = vmatmul.f32.gmra.mxu0 %v7733
    %v7735 = vpop.f32.mrf.mxu0
    %v7736 = vadd.f32 %v7712, %v7735
    %7737 = vdwg.mxu0
    %7738 = vmatpush.msra.mxu0 0.0
    %7739 = vmatpush.msra.mxu0 0.0
    %7740 = vmatpush.msra.mxu0 0.0
    %7741 = vmatpush.msra.mxu0 0.0
    %7742 = vmatpush.msra.mxu0 0.0
    %7743 = vmatpush.msra.mxu0 0.0
    %7744 = vmatpush.msra.mxu0 0.0
    %7745 = vmatpush.msra.mxu0 0.0
    %7746 = vmatpush.msra.mxu0 0.0
    %7747 = vmatpush.msra.mxu0 0.0
    %7748 = vmatpush.msra.mxu0 0.0
    %7749 = vmatpush.msra.mxu0 0.0
    %7750 = vmatpush.msra.mxu0 0.0
    %7751 = vmatpush.msra.mxu0 0.0
    %7752 = vmatpush.msra.mxu0 0.0
    %v7753 = vand.u32 %v760, 4294901760
    %7754 = vmatpush.msra.mxu0 %v7753
    %v7755 = vand.u32 %v5908, 4294901760
    %v7756 = vsub.f32 %v5908, %v7755
    %v7757 = vand.u32 %v7756, 4294901760
    %7758 = vmatmul.f32.gmra.mxu0 %v7757
    %v7759 = vpop.f32.mrf.mxu0
    %v7760 = vadd.f32 %v7736, %v7759
    %7761 = vdwg.mxu0
    %7762 = vmatpush.msra.mxu0 0.0
    %7763 = vmatpush.msra.mxu0 0.0
    %7764 = vmatpush.msra.mxu0 0.0
    %7765 = vmatpush.msra.mxu0 0.0
    %7766 = vmatpush.msra.mxu0 0.0
    %7767 = vmatpush.msra.mxu0 0.0
    %7768 = vmatpush.msra.mxu0 0.0
    %7769 = vmatpush.msra.mxu0 0.0
    %7770 = vmatpush.msra.mxu0 0.0
    %7771 = vmatpush.msra.mxu0 0.0
    %7772 = vmatpush.msra.mxu0 0.0
    %7773 = vmatpush.msra.mxu0 0.0
    %7774 = vmatpush.msra.mxu0 0.0
    %7775 = vmatpush.msra.mxu0 0.0
    %7776 = vmatpush.msra.mxu0 0.0
    %v7777 = vand.u32 %v760, 4294901760
    %v7778 = vsub.f32 %v760, %v7777
    %v7779 = vand.u32 %v7778, 4294901760
    %7780 = vmatpush.msra.mxu0 %v7779
    %v7781 = vand.u32 %v5908, 4294901760
    %7782 = vmatmul.f32.gmra.mxu0 %v7781
    %v7783 = vpop.f32.mrf.mxu0
    %v7784 = vadd.f32 %v7760, %v7783
    %7785 = vdwg.mxu0
    %7786 = vmatpush.msra.mxu0 0.0
    %7787 = vmatpush.msra.mxu0 0.0
    %7788 = vmatpush.msra.mxu0 0.0
    %7789 = vmatpush.msra.mxu0 0.0
    %7790 = vmatpush.msra.mxu0 0.0
    %7791 = vmatpush.msra.mxu0 0.0
    %7792 = vmatpush.msra.mxu0 0.0
    %7793 = vmatpush.msra.mxu0 0.0
    %7794 = vmatpush.msra.mxu0 0.0
    %7795 = vmatpush.msra.mxu0 0.0
    %7796 = vmatpush.msra.mxu0 0.0
    %7797 = vmatpush.msra.mxu0 0.0
    %7798 = vmatpush.msra.mxu0 0.0
    %7799 = vmatpush.msra.mxu0 0.0
    %7800 = vmatpush.msra.mxu0 0.0
    %v7801 = vand.u32 %v760, 4294901760
    %7802 = vmatpush.msra.mxu0 %v7801
    %v7803 = vand.u32 %v5908, 4294901760
    %7804 = vmatmul.f32.gmra.mxu0 %v7803
    %v7805 = vpop.f32.mrf.mxu0
    %v7806 = vadd.f32 %v7784, %v7805
    %7807 = vdwg.mxu0
    %7808 = vmatpush.msra.mxu0 0.0
    %7809 = vmatpush.msra.mxu0 0.0
    %7810 = vmatpush.msra.mxu0 0.0
    %7811 = vmatpush.msra.mxu0 0.0
    %7812 = vmatpush.msra.mxu0 0.0
    %7813 = vmatpush.msra.mxu0 0.0
    %7814 = vmatpush.msra.mxu0 0.0
    %7815 = vmatpush.msra.mxu0 0.0
    %7816 = vmatpush.msra.mxu0 0.0
    %7817 = vmatpush.msra.mxu0 0.0
    %7818 = vmatpush.msra.mxu0 0.0
    %7819 = vmatpush.msra.mxu0 0.0
    %7820 = vmatpush.msra.mxu0 0.0
    %7821 = vmatpush.msra.mxu0 0.0
    %7822 = vmatpush.msra.mxu0 0.0
    %v7823 = vand.u32 %v761, 4294901760
    %7824 = vmatpush.msra.mxu0 %v7823
    %v7825 = vand.u32 %v5908, 4294901760
    %v7826 = vsub.f32 %v5908, %v7825
    %v7827 = vand.u32 %v7826, 4294901760
    %v7828 = vsub.f32 %v7826, %v7827
    %v7829 = vand.u32 %v7828, 4294901760
    %7830 = vmatmul.f32.gmra.mxu0 %v7829
    %v7831 = vpop.f32.mrf.mxu0
    %v7832 = vadd.f32 0.0, %v7831
    %7833 = vdwg.mxu0
    %7834 = vmatpush.msra.mxu0 0.0
    %7835 = vmatpush.msra.mxu0 0.0
    %7836 = vmatpush.msra.mxu0 0.0
    %7837 = vmatpush.msra.mxu0 0.0
    %7838 = vmatpush.msra.mxu0 0.0
    %7839 = vmatpush.msra.mxu0 0.0
    %7840 = vmatpush.msra.mxu0 0.0
    %7841 = vmatpush.msra.mxu0 0.0
    %7842 = vmatpush.msra.mxu0 0.0
    %7843 = vmatpush.msra.mxu0 0.0
    %7844 = vmatpush.msra.mxu0 0.0
    %7845 = vmatpush.msra.mxu0 0.0
    %7846 = vmatpush.msra.mxu0 0.0
    %7847 = vmatpush.msra.mxu0 0.0
    %7848 = vmatpush.msra.mxu0 0.0
    %v7849 = vand.u32 %v761, 4294901760
    %v7850 = vsub.f32 %v761, %v7849
    %v7851 = vand.u32 %v7850, 4294901760
    %v7852 = vsub.f32 %v7850, %v7851
    %v7853 = vand.u32 %v7852, 4294901760
    %7854 = vmatpush.msra.mxu0 %v7853
    %v7855 = vand.u32 %v5908, 4294901760
    %7856 = vmatmul.f32.gmra.mxu0 %v7855
    %v7857 = vpop.f32.mrf.mxu0
    %v7858 = vadd.f32 %v7832, %v7857
    %7859 = vdwg.mxu0
    %7860 = vmatpush.msra.mxu0 0.0
    %7861 = vmatpush.msra.mxu0 0.0
    %7862 = vmatpush.msra.mxu0 0.0
    %7863 = vmatpush.msra.mxu0 0.0
    %7864 = vmatpush.msra.mxu0 0.0
    %7865 = vmatpush.msra.mxu0 0.0
    %7866 = vmatpush.msra.mxu0 0.0
    %7867 = vmatpush.msra.mxu0 0.0
    %7868 = vmatpush.msra.mxu0 0.0
    %7869 = vmatpush.msra.mxu0 0.0
    %7870 = vmatpush.msra.mxu0 0.0
    %7871 = vmatpush.msra.mxu0 0.0
    %7872 = vmatpush.msra.mxu0 0.0
    %7873 = vmatpush.msra.mxu0 0.0
    %7874 = vmatpush.msra.mxu0 0.0
    %v7875 = vand.u32 %v761, 4294901760
    %v7876 = vsub.f32 %v761, %v7875
    %7877 = vmatpush.msra.mxu0 %v7876
    %v7878 = vand.u32 %v5908, 4294901760
    %v7879 = vsub.f32 %v5908, %v7878
    %7880 = vmatmul.f32.gmra.mxu0 %v7879
    %v7881 = vpop.f32.mrf.mxu0
    %v7882 = vadd.f32 %v7858, %v7881
    %7883 = vdwg.mxu0
    %7884 = vmatpush.msra.mxu0 0.0
    %7885 = vmatpush.msra.mxu0 0.0
    %7886 = vmatpush.msra.mxu0 0.0
    %7887 = vmatpush.msra.mxu0 0.0
    %7888 = vmatpush.msra.mxu0 0.0
    %7889 = vmatpush.msra.mxu0 0.0
    %7890 = vmatpush.msra.mxu0 0.0
    %7891 = vmatpush.msra.mxu0 0.0
    %7892 = vmatpush.msra.mxu0 0.0
    %7893 = vmatpush.msra.mxu0 0.0
    %7894 = vmatpush.msra.mxu0 0.0
    %7895 = vmatpush.msra.mxu0 0.0
    %7896 = vmatpush.msra.mxu0 0.0
    %7897 = vmatpush.msra.mxu0 0.0
    %7898 = vmatpush.msra.mxu0 0.0
    %v7899 = vand.u32 %v761, 4294901760
    %7900 = vmatpush.msra.mxu0 %v7899
    %v7901 = vand.u32 %v5908, 4294901760
    %v7902 = vsub.f32 %v5908, %v7901
    %v7903 = vand.u32 %v7902, 4294901760
    %7904 = vmatmul.f32.gmra.mxu0 %v7903
    %v7905 = vpop.f32.mrf.mxu0
    %v7906 = vadd.f32 %v7882, %v7905
    %7907 = vdwg.mxu0
    %7908 = vmatpush.msra.mxu0 0.0
    %7909 = vmatpush.msra.mxu0 0.0
    %7910 = vmatpush.msra.mxu0 0.0
    %7911 = vmatpush.msra.mxu0 0.0
    %7912 = vmatpush.msra.mxu0 0.0
    %7913 = vmatpush.msra.mxu0 0.0
    %7914 = vmatpush.msra.mxu0 0.0
    %7915 = vmatpush.msra.mxu0 0.0
    %7916 = vmatpush.msra.mxu0 0.0
    %7917 = vmatpush.msra.mxu0 0.0
    %7918 = vmatpush.msra.mxu0 0.0
    %7919 = vmatpush.msra.mxu0 0.0
    %7920 = vmatpush.msra.mxu0 0.0
    %7921 = vmatpush.msra.mxu0 0.0
    %7922 = vmatpush.msra.mxu0 0.0
    %v7923 = vand.u32 %v761, 4294901760
    %v7924 = vsub.f32 %v761, %v7923
    %v7925 = vand.u32 %v7924, 4294901760
    %7926 = vmatpush.msra.mxu0 %v7925
    %v7927 = vand.u32 %v5908, 4294901760
    %7928 = vmatmul.f32.gmra.mxu0 %v7927
    %v7929 = vpop.f32.mrf.mxu0
    %v7930 = vadd.f32 %v7906, %v7929
    %7931 = vdwg.mxu0
    %7932 = vmatpush.msra.mxu0 0.0
    %7933 = vmatpush.msra.mxu0 0.0
    %7934 = vmatpush.msra.mxu0 0.0
    %7935 = vmatpush.msra.mxu0 0.0
    %7936 = vmatpush.msra.mxu0 0.0
    %7937 = vmatpush.msra.mxu0 0.0
    %7938 = vmatpush.msra.mxu0 0.0
    %7939 = vmatpush.msra.mxu0 0.0
    %7940 = vmatpush.msra.mxu0 0.0
    %7941 = vmatpush.msra.mxu0 0.0
    %7942 = vmatpush.msra.mxu0 0.0
    %7943 = vmatpush.msra.mxu0 0.0
    %7944 = vmatpush.msra.mxu0 0.0
    %7945 = vmatpush.msra.mxu0 0.0
    %7946 = vmatpush.msra.mxu0 0.0
    %v7947 = vand.u32 %v761, 4294901760
    %7948 = vmatpush.msra.mxu0 %v7947
    %v7949 = vand.u32 %v5908, 4294901760
    %7950 = vmatmul.f32.gmra.mxu0 %v7949
    %v7951 = vpop.f32.mrf.mxu0
    %v7952 = vadd.f32 %v7930, %v7951
    %7953 = vdwg.mxu0
    %7954 = vmatpush.msra.mxu0 0.0
    %7955 = vmatpush.msra.mxu0 0.0
    %7956 = vmatpush.msra.mxu0 0.0
    %7957 = vmatpush.msra.mxu0 0.0
    %7958 = vmatpush.msra.mxu0 0.0
    %7959 = vmatpush.msra.mxu0 0.0
    %7960 = vmatpush.msra.mxu0 0.0
    %7961 = vmatpush.msra.mxu0 0.0
    %7962 = vmatpush.msra.mxu0 0.0
    %7963 = vmatpush.msra.mxu0 0.0
    %7964 = vmatpush.msra.mxu0 0.0
    %7965 = vmatpush.msra.mxu0 0.0
    %7966 = vmatpush.msra.mxu0 0.0
    %7967 = vmatpush.msra.mxu0 0.0
    %7968 = vmatpush.msra.mxu0 0.0
    %v7969 = vand.u32 %v762, 4294901760
    %7970 = vmatpush.msra.mxu0 %v7969
    %v7971 = vand.u32 %v5908, 4294901760
    %v7972 = vsub.f32 %v5908, %v7971
    %v7973 = vand.u32 %v7972, 4294901760
    %v7974 = vsub.f32 %v7972, %v7973
    %v7975 = vand.u32 %v7974, 4294901760
    %7976 = vmatmul.f32.gmra.mxu0 %v7975
    %v7977 = vpop.f32.mrf.mxu0
    %v7978 = vadd.f32 0.0, %v7977
    %7979 = vdwg.mxu0
    %7980 = vmatpush.msra.mxu0 0.0
    %7981 = vmatpush.msra.mxu0 0.0
    %7982 = vmatpush.msra.mxu0 0.0
    %7983 = vmatpush.msra.mxu0 0.0
    %7984 = vmatpush.msra.mxu0 0.0
    %7985 = vmatpush.msra.mxu0 0.0
    %7986 = vmatpush.msra.mxu0 0.0
    %7987 = vmatpush.msra.mxu0 0.0
    %7988 = vmatpush.msra.mxu0 0.0
    %7989 = vmatpush.msra.mxu0 0.0
    %7990 = vmatpush.msra.mxu0 0.0
    %7991 = vmatpush.msra.mxu0 0.0
    %7992 = vmatpush.msra.mxu0 0.0
    %7993 = vmatpush.msra.mxu0 0.0
    %7994 = vmatpush.msra.mxu0 0.0
    %v7995 = vand.u32 %v762, 4294901760
    %v7996 = vsub.f32 %v762, %v7995
    %v7997 = vand.u32 %v7996, 4294901760
    %v7998 = vsub.f32 %v7996, %v7997
    %v7999 = vand.u32 %v7998, 4294901760
    %8000 = vmatpush.msra.mxu0 %v7999
    %v8001 = vand.u32 %v5908, 4294901760
    %8002 = vmatmul.f32.gmra.mxu0 %v8001
    %v8003 = vpop.f32.mrf.mxu0
    %v8004 = vadd.f32 %v7978, %v8003
    %8005 = vdwg.mxu0
    %8006 = vmatpush.msra.mxu0 0.0
    %8007 = vmatpush.msra.mxu0 0.0
    %8008 = vmatpush.msra.mxu0 0.0
    %8009 = vmatpush.msra.mxu0 0.0
    %8010 = vmatpush.msra.mxu0 0.0
    %8011 = vmatpush.msra.mxu0 0.0
    %8012 = vmatpush.msra.mxu0 0.0
    %8013 = vmatpush.msra.mxu0 0.0
    %8014 = vmatpush.msra.mxu0 0.0
    %8015 = vmatpush.msra.mxu0 0.0
    %8016 = vmatpush.msra.mxu0 0.0
    %8017 = vmatpush.msra.mxu0 0.0
    %8018 = vmatpush.msra.mxu0 0.0
    %8019 = vmatpush.msra.mxu0 0.0
    %8020 = vmatpush.msra.mxu0 0.0
    %v8021 = vand.u32 %v762, 4294901760
    %v8022 = vsub.f32 %v762, %v8021
    %8023 = vmatpush.msra.mxu0 %v8022
    %v8024 = vand.u32 %v5908, 4294901760
    %v8025 = vsub.f32 %v5908, %v8024
    %8026 = vmatmul.f32.gmra.mxu0 %v8025
    %v8027 = vpop.f32.mrf.mxu0
    %v8028 = vadd.f32 %v8004, %v8027
    %8029 = vdwg.mxu0
    %8030 = vmatpush.msra.mxu0 0.0
    %8031 = vmatpush.msra.mxu0 0.0
    %8032 = vmatpush.msra.mxu0 0.0
    %8033 = vmatpush.msra.mxu0 0.0
    %8034 = vmatpush.msra.mxu0 0.0
    %8035 = vmatpush.msra.mxu0 0.0
    %8036 = vmatpush.msra.mxu0 0.0
    %8037 = vmatpush.msra.mxu0 0.0
    %8038 = vmatpush.msra.mxu0 0.0
    %8039 = vmatpush.msra.mxu0 0.0
    %8040 = vmatpush.msra.mxu0 0.0
    %8041 = vmatpush.msra.mxu0 0.0
    %8042 = vmatpush.msra.mxu0 0.0
    %8043 = vmatpush.msra.mxu0 0.0
    %8044 = vmatpush.msra.mxu0 0.0
    %v8045 = vand.u32 %v762, 4294901760
    %8046 = vmatpush.msra.mxu0 %v8045
    %v8047 = vand.u32 %v5908, 4294901760
    %v8048 = vsub.f32 %v5908, %v8047
    %v8049 = vand.u32 %v8048, 4294901760
    %8050 = vmatmul.f32.gmra.mxu0 %v8049
    %v8051 = vpop.f32.mrf.mxu0
    %v8052 = vadd.f32 %v8028, %v8051
    %8053 = vdwg.mxu0
    %8054 = vmatpush.msra.mxu0 0.0
    %8055 = vmatpush.msra.mxu0 0.0
    %8056 = vmatpush.msra.mxu0 0.0
    %8057 = vmatpush.msra.mxu0 0.0
    %8058 = vmatpush.msra.mxu0 0.0
    %8059 = vmatpush.msra.mxu0 0.0
    %8060 = vmatpush.msra.mxu0 0.0
    %8061 = vmatpush.msra.mxu0 0.0
    %8062 = vmatpush.msra.mxu0 0.0
    %8063 = vmatpush.msra.mxu0 0.0
    %8064 = vmatpush.msra.mxu0 0.0
    %8065 = vmatpush.msra.mxu0 0.0
    %8066 = vmatpush.msra.mxu0 0.0
    %8067 = vmatpush.msra.mxu0 0.0
    %8068 = vmatpush.msra.mxu0 0.0
    %v8069 = vand.u32 %v762, 4294901760
    %v8070 = vsub.f32 %v762, %v8069
    %v8071 = vand.u32 %v8070, 4294901760
    %8072 = vmatpush.msra.mxu0 %v8071
    %v8073 = vand.u32 %v5908, 4294901760
    %8074 = vmatmul.f32.gmra.mxu0 %v8073
    %v8075 = vpop.f32.mrf.mxu0
    %v8076 = vadd.f32 %v8052, %v8075
    %8077 = vdwg.mxu0
    %8078 = vmatpush.msra.mxu0 0.0
    %8079 = vmatpush.msra.mxu0 0.0
    %8080 = vmatpush.msra.mxu0 0.0
    %8081 = vmatpush.msra.mxu0 0.0
    %8082 = vmatpush.msra.mxu0 0.0
    %8083 = vmatpush.msra.mxu0 0.0
    %8084 = vmatpush.msra.mxu0 0.0
    %8085 = vmatpush.msra.mxu0 0.0
    %8086 = vmatpush.msra.mxu0 0.0
    %8087 = vmatpush.msra.mxu0 0.0
    %8088 = vmatpush.msra.mxu0 0.0
    %8089 = vmatpush.msra.mxu0 0.0
    %8090 = vmatpush.msra.mxu0 0.0
    %8091 = vmatpush.msra.mxu0 0.0
    %8092 = vmatpush.msra.mxu0 0.0
    %v8093 = vand.u32 %v762, 4294901760
    %8094 = vmatpush.msra.mxu0 %v8093
    %v8095 = vand.u32 %v5908, 4294901760
    %8096 = vmatmul.f32.gmra.mxu0 %v8095
    %v8097 = vpop.f32.mrf.mxu0
    %v8098 = vadd.f32 %v8076, %v8097
    %8099 = vdwg.mxu0
    %8100 = vmatpush.msra.mxu0 0.0
    %8101 = vmatpush.msra.mxu0 0.0
    %8102 = vmatpush.msra.mxu0 0.0
    %8103 = vmatpush.msra.mxu0 0.0
    %8104 = vmatpush.msra.mxu0 0.0
    %8105 = vmatpush.msra.mxu0 0.0
    %8106 = vmatpush.msra.mxu0 0.0
    %8107 = vmatpush.msra.mxu0 0.0
    %8108 = vmatpush.msra.mxu0 0.0
    %8109 = vmatpush.msra.mxu0 0.0
    %8110 = vmatpush.msra.mxu0 0.0
    %8111 = vmatpush.msra.mxu0 0.0
    %8112 = vmatpush.msra.mxu0 0.0
    %8113 = vmatpush.msra.mxu0 0.0
    %8114 = vmatpush.msra.mxu0 0.0
    %v8115 = vand.u32 %v763, 4294901760
    %8116 = vmatpush.msra.mxu0 %v8115
    %v8117 = vand.u32 %v5908, 4294901760
    %v8118 = vsub.f32 %v5908, %v8117
    %v8119 = vand.u32 %v8118, 4294901760
    %v8120 = vsub.f32 %v8118, %v8119
    %v8121 = vand.u32 %v8120, 4294901760
    %8122 = vmatmul.f32.gmra.mxu0 %v8121
    %v8123 = vpop.f32.mrf.mxu0
    %v8124 = vadd.f32 0.0, %v8123
    %8125 = vdwg.mxu0
    %8126 = vmatpush.msra.mxu0 0.0
    %8127 = vmatpush.msra.mxu0 0.0
    %8128 = vmatpush.msra.mxu0 0.0
    %8129 = vmatpush.msra.mxu0 0.0
    %8130 = vmatpush.msra.mxu0 0.0
    %8131 = vmatpush.msra.mxu0 0.0
    %8132 = vmatpush.msra.mxu0 0.0
    %8133 = vmatpush.msra.mxu0 0.0
    %8134 = vmatpush.msra.mxu0 0.0
    %8135 = vmatpush.msra.mxu0 0.0
    %8136 = vmatpush.msra.mxu0 0.0
    %8137 = vmatpush.msra.mxu0 0.0
    %8138 = vmatpush.msra.mxu0 0.0
    %8139 = vmatpush.msra.mxu0 0.0
    %8140 = vmatpush.msra.mxu0 0.0
    %v8141 = vand.u32 %v763, 4294901760
    %v8142 = vsub.f32 %v763, %v8141
    %v8143 = vand.u32 %v8142, 4294901760
    %v8144 = vsub.f32 %v8142, %v8143
    %v8145 = vand.u32 %v8144, 4294901760
    %8146 = vmatpush.msra.mxu0 %v8145
    %v8147 = vand.u32 %v5908, 4294901760
    %8148 = vmatmul.f32.gmra.mxu0 %v8147
    %v8149 = vpop.f32.mrf.mxu0
    %v8150 = vadd.f32 %v8124, %v8149
    %8151 = vdwg.mxu0
    %8152 = vmatpush.msra.mxu0 0.0
    %8153 = vmatpush.msra.mxu0 0.0
    %8154 = vmatpush.msra.mxu0 0.0
    %8155 = vmatpush.msra.mxu0 0.0
    %8156 = vmatpush.msra.mxu0 0.0
    %8157 = vmatpush.msra.mxu0 0.0
    %8158 = vmatpush.msra.mxu0 0.0
    %8159 = vmatpush.msra.mxu0 0.0
    %8160 = vmatpush.msra.mxu0 0.0
    %8161 = vmatpush.msra.mxu0 0.0
    %8162 = vmatpush.msra.mxu0 0.0
    %8163 = vmatpush.msra.mxu0 0.0
    %8164 = vmatpush.msra.mxu0 0.0
    %8165 = vmatpush.msra.mxu0 0.0
    %8166 = vmatpush.msra.mxu0 0.0
    %v8167 = vand.u32 %v763, 4294901760
    %v8168 = vsub.f32 %v763, %v8167
    %8169 = vmatpush.msra.mxu0 %v8168
    %v8170 = vand.u32 %v5908, 4294901760
    %v8171 = vsub.f32 %v5908, %v8170
    %8172 = vmatmul.f32.gmra.mxu0 %v8171
    %v8173 = vpop.f32.mrf.mxu0
    %v8174 = vadd.f32 %v8150, %v8173
    %8175 = vdwg.mxu0
    %8176 = vmatpush.msra.mxu0 0.0
    %8177 = vmatpush.msra.mxu0 0.0
    %8178 = vmatpush.msra.mxu0 0.0
    %8179 = vmatpush.msra.mxu0 0.0
    %8180 = vmatpush.msra.mxu0 0.0
    %8181 = vmatpush.msra.mxu0 0.0
    %8182 = vmatpush.msra.mxu0 0.0
    %8183 = vmatpush.msra.mxu0 0.0
    %8184 = vmatpush.msra.mxu0 0.0
    %8185 = vmatpush.msra.mxu0 0.0
    %8186 = vmatpush.msra.mxu0 0.0
    %8187 = vmatpush.msra.mxu0 0.0
    %8188 = vmatpush.msra.mxu0 0.0
    %8189 = vmatpush.msra.mxu0 0.0
    %8190 = vmatpush.msra.mxu0 0.0
    %v8191 = vand.u32 %v763, 4294901760
    %8192 = vmatpush.msra.mxu0 %v8191
    %v8193 = vand.u32 %v5908, 4294901760
    %v8194 = vsub.f32 %v5908, %v8193
    %v8195 = vand.u32 %v8194, 4294901760
    %8196 = vmatmul.f32.gmra.mxu0 %v8195
    %v8197 = vpop.f32.mrf.mxu0
    %v8198 = vadd.f32 %v8174, %v8197
    %8199 = vdwg.mxu0
    %8200 = vmatpush.msra.mxu0 0.0
    %8201 = vmatpush.msra.mxu0 0.0
    %8202 = vmatpush.msra.mxu0 0.0
    %8203 = vmatpush.msra.mxu0 0.0
    %8204 = vmatpush.msra.mxu0 0.0
    %8205 = vmatpush.msra.mxu0 0.0
    %8206 = vmatpush.msra.mxu0 0.0
    %8207 = vmatpush.msra.mxu0 0.0
    %8208 = vmatpush.msra.mxu0 0.0
    %8209 = vmatpush.msra.mxu0 0.0
    %8210 = vmatpush.msra.mxu0 0.0
    %8211 = vmatpush.msra.mxu0 0.0
    %8212 = vmatpush.msra.mxu0 0.0
    %8213 = vmatpush.msra.mxu0 0.0
    %8214 = vmatpush.msra.mxu0 0.0
    %v8215 = vand.u32 %v763, 4294901760
    %v8216 = vsub.f32 %v763, %v8215
    %v8217 = vand.u32 %v8216, 4294901760
    %8218 = vmatpush.msra.mxu0 %v8217
    %v8219 = vand.u32 %v5908, 4294901760
    %8220 = vmatmul.f32.gmra.mxu0 %v8219
    %v8221 = vpop.f32.mrf.mxu0
    %v8222 = vadd.f32 %v8198, %v8221
    %8223 = vdwg.mxu0
    %8224 = vmatpush.msra.mxu0 0.0
    %8225 = vmatpush.msra.mxu0 0.0
    %8226 = vmatpush.msra.mxu0 0.0
    %8227 = vmatpush.msra.mxu0 0.0
    %8228 = vmatpush.msra.mxu0 0.0
    %8229 = vmatpush.msra.mxu0 0.0
    %8230 = vmatpush.msra.mxu0 0.0
    %8231 = vmatpush.msra.mxu0 0.0
    %8232 = vmatpush.msra.mxu0 0.0
    %8233 = vmatpush.msra.mxu0 0.0
    %8234 = vmatpush.msra.mxu0 0.0
    %8235 = vmatpush.msra.mxu0 0.0
    %8236 = vmatpush.msra.mxu0 0.0
    %8237 = vmatpush.msra.mxu0 0.0
    %8238 = vmatpush.msra.mxu0 0.0
    %v8239 = vand.u32 %v763, 4294901760
    %8240 = vmatpush.msra.mxu0 %v8239
    %v8241 = vand.u32 %v5908, 4294901760
    %8242 = vmatmul.f32.gmra.mxu0 %v8241
    %v8243 = vpop.f32.mrf.mxu0
    %v8244 = vadd.f32 %v8222, %v8243
    %8245 = vdwg.mxu0
    %8246 = vmatpush.msra.mxu0 0.0
    %8247 = vmatpush.msra.mxu0 0.0
    %8248 = vmatpush.msra.mxu0 0.0
    %8249 = vmatpush.msra.mxu0 0.0
    %8250 = vmatpush.msra.mxu0 0.0
    %8251 = vmatpush.msra.mxu0 0.0
    %8252 = vmatpush.msra.mxu0 0.0
    %8253 = vmatpush.msra.mxu0 0.0
    %8254 = vmatpush.msra.mxu0 0.0
    %8255 = vmatpush.msra.mxu0 0.0
    %8256 = vmatpush.msra.mxu0 0.0
    %8257 = vmatpush.msra.mxu0 0.0
    %8258 = vmatpush.msra.mxu0 0.0
    %8259 = vmatpush.msra.mxu0 0.0
    %8260 = vmatpush.msra.mxu0 0.0
    %v8261 = vand.u32 %v764, 4294901760
    %8262 = vmatpush.msra.mxu0 %v8261
    %v8263 = vand.u32 %v5908, 4294901760
    %v8264 = vsub.f32 %v5908, %v8263
    %v8265 = vand.u32 %v8264, 4294901760
    %v8266 = vsub.f32 %v8264, %v8265
    %v8267 = vand.u32 %v8266, 4294901760
    %8268 = vmatmul.f32.gmra.mxu0 %v8267
    %v8269 = vpop.f32.mrf.mxu0
    %v8270 = vadd.f32 0.0, %v8269
    %8271 = vdwg.mxu0
    %8272 = vmatpush.msra.mxu0 0.0
    %8273 = vmatpush.msra.mxu0 0.0
    %8274 = vmatpush.msra.mxu0 0.0
    %8275 = vmatpush.msra.mxu0 0.0
    %8276 = vmatpush.msra.mxu0 0.0
    %8277 = vmatpush.msra.mxu0 0.0
    %8278 = vmatpush.msra.mxu0 0.0
    %8279 = vmatpush.msra.mxu0 0.0
    %8280 = vmatpush.msra.mxu0 0.0
    %8281 = vmatpush.msra.mxu0 0.0
    %8282 = vmatpush.msra.mxu0 0.0
    %8283 = vmatpush.msra.mxu0 0.0
    %8284 = vmatpush.msra.mxu0 0.0
    %8285 = vmatpush.msra.mxu0 0.0
    %8286 = vmatpush.msra.mxu0 0.0
    %v8287 = vand.u32 %v764, 4294901760
    %v8288 = vsub.f32 %v764, %v8287
    %v8289 = vand.u32 %v8288, 4294901760
    %v8290 = vsub.f32 %v8288, %v8289
    %v8291 = vand.u32 %v8290, 4294901760
    %8292 = vmatpush.msra.mxu0 %v8291
    %v8293 = vand.u32 %v5908, 4294901760
    %8294 = vmatmul.f32.gmra.mxu0 %v8293
    %v8295 = vpop.f32.mrf.mxu0
    %v8296 = vadd.f32 %v8270, %v8295
    %8297 = vdwg.mxu0
    %8298 = vmatpush.msra.mxu0 0.0
    %8299 = vmatpush.msra.mxu0 0.0
    %8300 = vmatpush.msra.mxu0 0.0
    %8301 = vmatpush.msra.mxu0 0.0
    %8302 = vmatpush.msra.mxu0 0.0
    %8303 = vmatpush.msra.mxu0 0.0
    %8304 = vmatpush.msra.mxu0 0.0
    %8305 = vmatpush.msra.mxu0 0.0
    %8306 = vmatpush.msra.mxu0 0.0
    %8307 = vmatpush.msra.mxu0 0.0
    %8308 = vmatpush.msra.mxu0 0.0
    %8309 = vmatpush.msra.mxu0 0.0
    %8310 = vmatpush.msra.mxu0 0.0
    %8311 = vmatpush.msra.mxu0 0.0
    %8312 = vmatpush.msra.mxu0 0.0
    %v8313 = vand.u32 %v764, 4294901760
    %v8314 = vsub.f32 %v764, %v8313
    %8315 = vmatpush.msra.mxu0 %v8314
    %v8316 = vand.u32 %v5908, 4294901760
    %v8317 = vsub.f32 %v5908, %v8316
    %8318 = vmatmul.f32.gmra.mxu0 %v8317
    %v8319 = vpop.f32.mrf.mxu0
    %v8320 = vadd.f32 %v8296, %v8319
    %8321 = vdwg.mxu0
    %8322 = vmatpush.msra.mxu0 0.0
    %8323 = vmatpush.msra.mxu0 0.0
    %8324 = vmatpush.msra.mxu0 0.0
    %8325 = vmatpush.msra.mxu0 0.0
    %8326 = vmatpush.msra.mxu0 0.0
    %8327 = vmatpush.msra.mxu0 0.0
    %8328 = vmatpush.msra.mxu0 0.0
    %8329 = vmatpush.msra.mxu0 0.0
    %8330 = vmatpush.msra.mxu0 0.0
    %8331 = vmatpush.msra.mxu0 0.0
    %8332 = vmatpush.msra.mxu0 0.0
    %8333 = vmatpush.msra.mxu0 0.0
    %8334 = vmatpush.msra.mxu0 0.0
    %8335 = vmatpush.msra.mxu0 0.0
    %8336 = vmatpush.msra.mxu0 0.0
    %v8337 = vand.u32 %v764, 4294901760
    %8338 = vmatpush.msra.mxu0 %v8337
    %v8339 = vand.u32 %v5908, 4294901760
    %v8340 = vsub.f32 %v5908, %v8339
    %v8341 = vand.u32 %v8340, 4294901760
    %8342 = vmatmul.f32.gmra.mxu0 %v8341
    %v8343 = vpop.f32.mrf.mxu0
    %v8344 = vadd.f32 %v8320, %v8343
    %8345 = vdwg.mxu0
    %8346 = vmatpush.msra.mxu0 0.0
    %8347 = vmatpush.msra.mxu0 0.0
    %8348 = vmatpush.msra.mxu0 0.0
    %8349 = vmatpush.msra.mxu0 0.0
    %8350 = vmatpush.msra.mxu0 0.0
    %8351 = vmatpush.msra.mxu0 0.0
    %8352 = vmatpush.msra.mxu0 0.0
    %8353 = vmatpush.msra.mxu0 0.0
    %8354 = vmatpush.msra.mxu0 0.0
    %8355 = vmatpush.msra.mxu0 0.0
    %8356 = vmatpush.msra.mxu0 0.0
    %8357 = vmatpush.msra.mxu0 0.0
    %8358 = vmatpush.msra.mxu0 0.0
    %8359 = vmatpush.msra.mxu0 0.0
    %8360 = vmatpush.msra.mxu0 0.0
    %v8361 = vand.u32 %v764, 4294901760
    %v8362 = vsub.f32 %v764, %v8361
    %v8363 = vand.u32 %v8362, 4294901760
    %8364 = vmatpush.msra.mxu0 %v8363
    %v8365 = vand.u32 %v5908, 4294901760
    %8366 = vmatmul.f32.gmra.mxu0 %v8365
    %v8367 = vpop.f32.mrf.mxu0
    %v8368 = vadd.f32 %v8344, %v8367
    %8369 = vdwg.mxu0
    %8370 = vmatpush.msra.mxu0 0.0
    %8371 = vmatpush.msra.mxu0 0.0
    %8372 = vmatpush.msra.mxu0 0.0
    %8373 = vmatpush.msra.mxu0 0.0
    %8374 = vmatpush.msra.mxu0 0.0
    %8375 = vmatpush.msra.mxu0 0.0
    %8376 = vmatpush.msra.mxu0 0.0
    %8377 = vmatpush.msra.mxu0 0.0
    %8378 = vmatpush.msra.mxu0 0.0
    %8379 = vmatpush.msra.mxu0 0.0
    %8380 = vmatpush.msra.mxu0 0.0
    %8381 = vmatpush.msra.mxu0 0.0
    %8382 = vmatpush.msra.mxu0 0.0
    %8383 = vmatpush.msra.mxu0 0.0
    %8384 = vmatpush.msra.mxu0 0.0
    %v8385 = vand.u32 %v764, 4294901760
    %8386 = vmatpush.msra.mxu0 %v8385
    %v8387 = vand.u32 %v5908, 4294901760
    %8388 = vmatmul.f32.gmra.mxu0 %v8387
    %v8389 = vpop.f32.mrf.mxu0
    %v8390 = vadd.f32 %v8368, %v8389
    %8391 = vdwg.mxu0
    %8392 = vmatpush.msra.mxu0 0.0
    %8393 = vmatpush.msra.mxu0 0.0
    %8394 = vmatpush.msra.mxu0 0.0
    %8395 = vmatpush.msra.mxu0 0.0
    %8396 = vmatpush.msra.mxu0 0.0
    %8397 = vmatpush.msra.mxu0 0.0
    %8398 = vmatpush.msra.mxu0 0.0
    %8399 = vmatpush.msra.mxu0 0.0
    %8400 = vmatpush.msra.mxu0 0.0
    %8401 = vmatpush.msra.mxu0 0.0
    %8402 = vmatpush.msra.mxu0 0.0
    %8403 = vmatpush.msra.mxu0 0.0
    %8404 = vmatpush.msra.mxu0 0.0
    %8405 = vmatpush.msra.mxu0 0.0
    %8406 = vmatpush.msra.mxu0 0.0
    %v8407 = vand.u32 %v765, 4294901760
    %8408 = vmatpush.msra.mxu0 %v8407
    %v8409 = vand.u32 %v5908, 4294901760
    %v8410 = vsub.f32 %v5908, %v8409
    %v8411 = vand.u32 %v8410, 4294901760
    %v8412 = vsub.f32 %v8410, %v8411
    %v8413 = vand.u32 %v8412, 4294901760
    %8414 = vmatmul.f32.gmra.mxu0 %v8413
    %v8415 = vpop.f32.mrf.mxu0
    %v8416 = vadd.f32 0.0, %v8415
    %8417 = vdwg.mxu0
    %8418 = vmatpush.msra.mxu0 0.0
    %8419 = vmatpush.msra.mxu0 0.0
    %8420 = vmatpush.msra.mxu0 0.0
    %8421 = vmatpush.msra.mxu0 0.0
    %8422 = vmatpush.msra.mxu0 0.0
    %8423 = vmatpush.msra.mxu0 0.0
    %8424 = vmatpush.msra.mxu0 0.0
    %8425 = vmatpush.msra.mxu0 0.0
    %8426 = vmatpush.msra.mxu0 0.0
    %8427 = vmatpush.msra.mxu0 0.0
    %8428 = vmatpush.msra.mxu0 0.0
    %8429 = vmatpush.msra.mxu0 0.0
    %8430 = vmatpush.msra.mxu0 0.0
    %8431 = vmatpush.msra.mxu0 0.0
    %8432 = vmatpush.msra.mxu0 0.0
    %v8433 = vand.u32 %v765, 4294901760
    %v8434 = vsub.f32 %v765, %v8433
    %v8435 = vand.u32 %v8434, 4294901760
    %v8436 = vsub.f32 %v8434, %v8435
    %v8437 = vand.u32 %v8436, 4294901760
    %8438 = vmatpush.msra.mxu0 %v8437
    %v8439 = vand.u32 %v5908, 4294901760
    %8440 = vmatmul.f32.gmra.mxu0 %v8439
    %v8441 = vpop.f32.mrf.mxu0
    %v8442 = vadd.f32 %v8416, %v8441
    %8443 = vdwg.mxu0
    %8444 = vmatpush.msra.mxu0 0.0
    %8445 = vmatpush.msra.mxu0 0.0
    %8446 = vmatpush.msra.mxu0 0.0
    %8447 = vmatpush.msra.mxu0 0.0
    %8448 = vmatpush.msra.mxu0 0.0
    %8449 = vmatpush.msra.mxu0 0.0
    %8450 = vmatpush.msra.mxu0 0.0
    %8451 = vmatpush.msra.mxu0 0.0
    %8452 = vmatpush.msra.mxu0 0.0
    %8453 = vmatpush.msra.mxu0 0.0
    %8454 = vmatpush.msra.mxu0 0.0
    %8455 = vmatpush.msra.mxu0 0.0
    %8456 = vmatpush.msra.mxu0 0.0
    %8457 = vmatpush.msra.mxu0 0.0
    %8458 = vmatpush.msra.mxu0 0.0
    %v8459 = vand.u32 %v765, 4294901760
    %v8460 = vsub.f32 %v765, %v8459
    %8461 = vmatpush.msra.mxu0 %v8460
    %v8462 = vand.u32 %v5908, 4294901760
    %v8463 = vsub.f32 %v5908, %v8462
    %8464 = vmatmul.f32.gmra.mxu0 %v8463
    %v8465 = vpop.f32.mrf.mxu0
    %v8466 = vadd.f32 %v8442, %v8465
    %8467 = vdwg.mxu0
    %8468 = vmatpush.msra.mxu0 0.0
    %8469 = vmatpush.msra.mxu0 0.0
    %8470 = vmatpush.msra.mxu0 0.0
    %8471 = vmatpush.msra.mxu0 0.0
    %8472 = vmatpush.msra.mxu0 0.0
    %8473 = vmatpush.msra.mxu0 0.0
    %8474 = vmatpush.msra.mxu0 0.0
    %8475 = vmatpush.msra.mxu0 0.0
    %8476 = vmatpush.msra.mxu0 0.0
    %8477 = vmatpush.msra.mxu0 0.0
    %8478 = vmatpush.msra.mxu0 0.0
    %8479 = vmatpush.msra.mxu0 0.0
    %8480 = vmatpush.msra.mxu0 0.0
    %8481 = vmatpush.msra.mxu0 0.0
    %8482 = vmatpush.msra.mxu0 0.0
    %v8483 = vand.u32 %v765, 4294901760
    %8484 = vmatpush.msra.mxu0 %v8483
    %v8485 = vand.u32 %v5908, 4294901760
    %v8486 = vsub.f32 %v5908, %v8485
    %v8487 = vand.u32 %v8486, 4294901760
    %8488 = vmatmul.f32.gmra.mxu0 %v8487
    %v8489 = vpop.f32.mrf.mxu0
    %v8490 = vadd.f32 %v8466, %v8489
    %8491 = vdwg.mxu0
    %8492 = vmatpush.msra.mxu0 0.0
    %8493 = vmatpush.msra.mxu0 0.0
    %8494 = vmatpush.msra.mxu0 0.0
    %8495 = vmatpush.msra.mxu0 0.0
    %8496 = vmatpush.msra.mxu0 0.0
    %8497 = vmatpush.msra.mxu0 0.0
    %8498 = vmatpush.msra.mxu0 0.0
    %8499 = vmatpush.msra.mxu0 0.0
    %8500 = vmatpush.msra.mxu0 0.0
    %8501 = vmatpush.msra.mxu0 0.0
    %8502 = vmatpush.msra.mxu0 0.0
    %8503 = vmatpush.msra.mxu0 0.0
    %8504 = vmatpush.msra.mxu0 0.0
    %8505 = vmatpush.msra.mxu0 0.0
    %8506 = vmatpush.msra.mxu0 0.0
    %v8507 = vand.u32 %v765, 4294901760
    %v8508 = vsub.f32 %v765, %v8507
    %v8509 = vand.u32 %v8508, 4294901760
    %8510 = vmatpush.msra.mxu0 %v8509
    %v8511 = vand.u32 %v5908, 4294901760
    %8512 = vmatmul.f32.gmra.mxu0 %v8511
    %v8513 = vpop.f32.mrf.mxu0
    %v8514 = vadd.f32 %v8490, %v8513
    %8515 = vdwg.mxu0
    %8516 = vmatpush.msra.mxu0 0.0
    %8517 = vmatpush.msra.mxu0 0.0
    %8518 = vmatpush.msra.mxu0 0.0
    %8519 = vmatpush.msra.mxu0 0.0
    %8520 = vmatpush.msra.mxu0 0.0
    %8521 = vmatpush.msra.mxu0 0.0
    %8522 = vmatpush.msra.mxu0 0.0
    %8523 = vmatpush.msra.mxu0 0.0
    %8524 = vmatpush.msra.mxu0 0.0
    %8525 = vmatpush.msra.mxu0 0.0
    %8526 = vmatpush.msra.mxu0 0.0
    %8527 = vmatpush.msra.mxu0 0.0
    %8528 = vmatpush.msra.mxu0 0.0
    %8529 = vmatpush.msra.mxu0 0.0
    %8530 = vmatpush.msra.mxu0 0.0
    %v8531 = vand.u32 %v765, 4294901760
    %8532 = vmatpush.msra.mxu0 %v8531
    %v8533 = vand.u32 %v5908, 4294901760
    %8534 = vmatmul.f32.gmra.mxu0 %v8533
    %v8535 = vpop.f32.mrf.mxu0
    %v8536 = vadd.f32 %v8514, %v8535
    %8537 = vdwg.mxu0
    %8538 = vmatpush.msra.mxu0 0.0
    %8539 = vmatpush.msra.mxu0 0.0
    %8540 = vmatpush.msra.mxu0 0.0
    %8541 = vmatpush.msra.mxu0 0.0
    %8542 = vmatpush.msra.mxu0 0.0
    %8543 = vmatpush.msra.mxu0 0.0
    %8544 = vmatpush.msra.mxu0 0.0
    %8545 = vmatpush.msra.mxu0 0.0
    %8546 = vmatpush.msra.mxu0 0.0
    %8547 = vmatpush.msra.mxu0 0.0
    %8548 = vmatpush.msra.mxu0 0.0
    %8549 = vmatpush.msra.mxu0 0.0
    %8550 = vmatpush.msra.mxu0 0.0
    %8551 = vmatpush.msra.mxu0 0.0
    %8552 = vmatpush.msra.mxu0 0.0
    %v8553 = vand.u32 %v766, 4294901760
    %8554 = vmatpush.msra.mxu0 %v8553
    %v8555 = vand.u32 %v5908, 4294901760
    %v8556 = vsub.f32 %v5908, %v8555
    %v8557 = vand.u32 %v8556, 4294901760
    %v8558 = vsub.f32 %v8556, %v8557
    %v8559 = vand.u32 %v8558, 4294901760
    %8560 = vmatmul.f32.gmra.mxu0 %v8559
    %v8561 = vpop.f32.mrf.mxu0
    %v8562 = vadd.f32 0.0, %v8561
    %8563 = vdwg.mxu0
    %8564 = vmatpush.msra.mxu0 0.0
    %8565 = vmatpush.msra.mxu0 0.0
    %8566 = vmatpush.msra.mxu0 0.0
    %8567 = vmatpush.msra.mxu0 0.0
    %8568 = vmatpush.msra.mxu0 0.0
    %8569 = vmatpush.msra.mxu0 0.0
    %8570 = vmatpush.msra.mxu0 0.0
    %8571 = vmatpush.msra.mxu0 0.0
    %8572 = vmatpush.msra.mxu0 0.0
    %8573 = vmatpush.msra.mxu0 0.0
    %8574 = vmatpush.msra.mxu0 0.0
    %8575 = vmatpush.msra.mxu0 0.0
    %8576 = vmatpush.msra.mxu0 0.0
    %8577 = vmatpush.msra.mxu0 0.0
    %8578 = vmatpush.msra.mxu0 0.0
    %v8579 = vand.u32 %v766, 4294901760
    %v8580 = vsub.f32 %v766, %v8579
    %v8581 = vand.u32 %v8580, 4294901760
    %v8582 = vsub.f32 %v8580, %v8581
    %v8583 = vand.u32 %v8582, 4294901760
    %8584 = vmatpush.msra.mxu0 %v8583
    %v8585 = vand.u32 %v5908, 4294901760
    %8586 = vmatmul.f32.gmra.mxu0 %v8585
    %v8587 = vpop.f32.mrf.mxu0
    %v8588 = vadd.f32 %v8562, %v8587
    %8589 = vdwg.mxu0
    %8590 = vmatpush.msra.mxu0 0.0
    %8591 = vmatpush.msra.mxu0 0.0
    %8592 = vmatpush.msra.mxu0 0.0
    %8593 = vmatpush.msra.mxu0 0.0
    %8594 = vmatpush.msra.mxu0 0.0
    %8595 = vmatpush.msra.mxu0 0.0
    %8596 = vmatpush.msra.mxu0 0.0
    %8597 = vmatpush.msra.mxu0 0.0
    %8598 = vmatpush.msra.mxu0 0.0
    %8599 = vmatpush.msra.mxu0 0.0
    %8600 = vmatpush.msra.mxu0 0.0
    %8601 = vmatpush.msra.mxu0 0.0
    %8602 = vmatpush.msra.mxu0 0.0
    %8603 = vmatpush.msra.mxu0 0.0
    %8604 = vmatpush.msra.mxu0 0.0
    %v8605 = vand.u32 %v766, 4294901760
    %v8606 = vsub.f32 %v766, %v8605
    %8607 = vmatpush.msra.mxu0 %v8606
    %v8608 = vand.u32 %v5908, 4294901760
    %v8609 = vsub.f32 %v5908, %v8608
    %8610 = vmatmul.f32.gmra.mxu0 %v8609
    %v8611 = vpop.f32.mrf.mxu0
    %v8612 = vadd.f32 %v8588, %v8611
    %8613 = vdwg.mxu0
    %8614 = vmatpush.msra.mxu0 0.0
    %8615 = vmatpush.msra.mxu0 0.0
    %8616 = vmatpush.msra.mxu0 0.0
    %8617 = vmatpush.msra.mxu0 0.0
    %8618 = vmatpush.msra.mxu0 0.0
    %8619 = vmatpush.msra.mxu0 0.0
    %8620 = vmatpush.msra.mxu0 0.0
    %8621 = vmatpush.msra.mxu0 0.0
    %8622 = vmatpush.msra.mxu0 0.0
    %8623 = vmatpush.msra.mxu0 0.0
    %8624 = vmatpush.msra.mxu0 0.0
    %8625 = vmatpush.msra.mxu0 0.0
    %8626 = vmatpush.msra.mxu0 0.0
    %8627 = vmatpush.msra.mxu0 0.0
    %8628 = vmatpush.msra.mxu0 0.0
    %v8629 = vand.u32 %v766, 4294901760
    %8630 = vmatpush.msra.mxu0 %v8629
    %v8631 = vand.u32 %v5908, 4294901760
    %v8632 = vsub.f32 %v5908, %v8631
    %v8633 = vand.u32 %v8632, 4294901760
    %8634 = vmatmul.f32.gmra.mxu0 %v8633
    %v8635 = vpop.f32.mrf.mxu0
    %v8636 = vadd.f32 %v8612, %v8635
    %8637 = vdwg.mxu0
    %8638 = vmatpush.msra.mxu0 0.0
    %8639 = vmatpush.msra.mxu0 0.0
    %8640 = vmatpush.msra.mxu0 0.0
    %8641 = vmatpush.msra.mxu0 0.0
    %8642 = vmatpush.msra.mxu0 0.0
    %8643 = vmatpush.msra.mxu0 0.0
    %8644 = vmatpush.msra.mxu0 0.0
    %8645 = vmatpush.msra.mxu0 0.0
    %8646 = vmatpush.msra.mxu0 0.0
    %8647 = vmatpush.msra.mxu0 0.0
    %8648 = vmatpush.msra.mxu0 0.0
    %8649 = vmatpush.msra.mxu0 0.0
    %8650 = vmatpush.msra.mxu0 0.0
    %8651 = vmatpush.msra.mxu0 0.0
    %8652 = vmatpush.msra.mxu0 0.0
    %v8653 = vand.u32 %v766, 4294901760
    %v8654 = vsub.f32 %v766, %v8653
    %v8655 = vand.u32 %v8654, 4294901760
    %8656 = vmatpush.msra.mxu0 %v8655
    %v8657 = vand.u32 %v5908, 4294901760
    %8658 = vmatmul.f32.gmra.mxu0 %v8657
    %v8659 = vpop.f32.mrf.mxu0
    %v8660 = vadd.f32 %v8636, %v8659
    %8661 = vdwg.mxu0
    %8662 = vmatpush.msra.mxu0 0.0
    %8663 = vmatpush.msra.mxu0 0.0
    %8664 = vmatpush.msra.mxu0 0.0
    %8665 = vmatpush.msra.mxu0 0.0
    %8666 = vmatpush.msra.mxu0 0.0
    %8667 = vmatpush.msra.mxu0 0.0
    %8668 = vmatpush.msra.mxu0 0.0
    %8669 = vmatpush.msra.mxu0 0.0
    %8670 = vmatpush.msra.mxu0 0.0
    %8671 = vmatpush.msra.mxu0 0.0
    %8672 = vmatpush.msra.mxu0 0.0
    %8673 = vmatpush.msra.mxu0 0.0
    %8674 = vmatpush.msra.mxu0 0.0
    %8675 = vmatpush.msra.mxu0 0.0
    %8676 = vmatpush.msra.mxu0 0.0
    %v8677 = vand.u32 %v766, 4294901760
    %8678 = vmatpush.msra.mxu0 %v8677
    %v8679 = vand.u32 %v5908, 4294901760
    %8680 = vmatmul.f32.gmra.mxu0 %v8679
    %v8681 = vpop.f32.mrf.mxu0
    %v8682 = vadd.f32 %v8660, %v8681
    %8683 = vdwg.mxu0
    %8684 = vmatpush.msra.mxu0 0.0
    %8685 = vmatpush.msra.mxu0 0.0
    %8686 = vmatpush.msra.mxu0 0.0
    %8687 = vmatpush.msra.mxu0 0.0
    %8688 = vmatpush.msra.mxu0 0.0
    %8689 = vmatpush.msra.mxu0 0.0
    %8690 = vmatpush.msra.mxu0 0.0
    %8691 = vmatpush.msra.mxu0 0.0
    %8692 = vmatpush.msra.mxu0 0.0
    %8693 = vmatpush.msra.mxu0 0.0
    %8694 = vmatpush.msra.mxu0 0.0
    %8695 = vmatpush.msra.mxu0 0.0
    %8696 = vmatpush.msra.mxu0 0.0
    %8697 = vmatpush.msra.mxu0 0.0
    %8698 = vmatpush.msra.mxu0 0.0
    %v8699 = vand.u32 %v767, 4294901760
    %8700 = vmatpush.msra.mxu0 %v8699
    %v8701 = vand.u32 %v5908, 4294901760
    %v8702 = vsub.f32 %v5908, %v8701
    %v8703 = vand.u32 %v8702, 4294901760
    %v8704 = vsub.f32 %v8702, %v8703
    %v8705 = vand.u32 %v8704, 4294901760
    %8706 = vmatmul.f32.gmra.mxu0 %v8705
    %v8707 = vpop.f32.mrf.mxu0
    %v8708 = vadd.f32 0.0, %v8707
    %8709 = vdwg.mxu0
    %8710 = vmatpush.msra.mxu0 0.0
    %8711 = vmatpush.msra.mxu0 0.0
    %8712 = vmatpush.msra.mxu0 0.0
    %8713 = vmatpush.msra.mxu0 0.0
    %8714 = vmatpush.msra.mxu0 0.0
    %8715 = vmatpush.msra.mxu0 0.0
    %8716 = vmatpush.msra.mxu0 0.0
    %8717 = vmatpush.msra.mxu0 0.0
    %8718 = vmatpush.msra.mxu0 0.0
    %8719 = vmatpush.msra.mxu0 0.0
    %8720 = vmatpush.msra.mxu0 0.0
    %8721 = vmatpush.msra.mxu0 0.0
    %8722 = vmatpush.msra.mxu0 0.0
    %8723 = vmatpush.msra.mxu0 0.0
    %8724 = vmatpush.msra.mxu0 0.0
    %v8725 = vand.u32 %v767, 4294901760
    %v8726 = vsub.f32 %v767, %v8725
    %v8727 = vand.u32 %v8726, 4294901760
    %v8728 = vsub.f32 %v8726, %v8727
    %v8729 = vand.u32 %v8728, 4294901760
    %8730 = vmatpush.msra.mxu0 %v8729
    %v8731 = vand.u32 %v5908, 4294901760
    %8732 = vmatmul.f32.gmra.mxu0 %v8731
    %v8733 = vpop.f32.mrf.mxu0
    %v8734 = vadd.f32 %v8708, %v8733
    %8735 = vdwg.mxu0
    %8736 = vmatpush.msra.mxu0 0.0
    %8737 = vmatpush.msra.mxu0 0.0
    %8738 = vmatpush.msra.mxu0 0.0
    %8739 = vmatpush.msra.mxu0 0.0
    %8740 = vmatpush.msra.mxu0 0.0
    %8741 = vmatpush.msra.mxu0 0.0
    %8742 = vmatpush.msra.mxu0 0.0
    %8743 = vmatpush.msra.mxu0 0.0
    %8744 = vmatpush.msra.mxu0 0.0
    %8745 = vmatpush.msra.mxu0 0.0
    %8746 = vmatpush.msra.mxu0 0.0
    %8747 = vmatpush.msra.mxu0 0.0
    %8748 = vmatpush.msra.mxu0 0.0
    %8749 = vmatpush.msra.mxu0 0.0
    %8750 = vmatpush.msra.mxu0 0.0
    %v8751 = vand.u32 %v767, 4294901760
    %v8752 = vsub.f32 %v767, %v8751
    %8753 = vmatpush.msra.mxu0 %v8752
    %v8754 = vand.u32 %v5908, 4294901760
    %v8755 = vsub.f32 %v5908, %v8754
    %8756 = vmatmul.f32.gmra.mxu0 %v8755
    %v8757 = vpop.f32.mrf.mxu0
    %v8758 = vadd.f32 %v8734, %v8757
    %8759 = vdwg.mxu0
    %8760 = vmatpush.msra.mxu0 0.0
    %8761 = vmatpush.msra.mxu0 0.0
    %8762 = vmatpush.msra.mxu0 0.0
    %8763 = vmatpush.msra.mxu0 0.0
    %8764 = vmatpush.msra.mxu0 0.0
    %8765 = vmatpush.msra.mxu0 0.0
    %8766 = vmatpush.msra.mxu0 0.0
    %8767 = vmatpush.msra.mxu0 0.0
    %8768 = vmatpush.msra.mxu0 0.0
    %8769 = vmatpush.msra.mxu0 0.0
    %8770 = vmatpush.msra.mxu0 0.0
    %8771 = vmatpush.msra.mxu0 0.0
    %8772 = vmatpush.msra.mxu0 0.0
    %8773 = vmatpush.msra.mxu0 0.0
    %8774 = vmatpush.msra.mxu0 0.0
    %v8775 = vand.u32 %v767, 4294901760
    %8776 = vmatpush.msra.mxu0 %v8775
    %v8777 = vand.u32 %v5908, 4294901760
    %v8778 = vsub.f32 %v5908, %v8777
    %v8779 = vand.u32 %v8778, 4294901760
    %8780 = vmatmul.f32.gmra.mxu0 %v8779
    %v8781 = vpop.f32.mrf.mxu0
    %v8782 = vadd.f32 %v8758, %v8781
    %8783 = vdwg.mxu0
    %8784 = vmatpush.msra.mxu0 0.0
    %8785 = vmatpush.msra.mxu0 0.0
    %8786 = vmatpush.msra.mxu0 0.0
    %8787 = vmatpush.msra.mxu0 0.0
    %8788 = vmatpush.msra.mxu0 0.0
    %8789 = vmatpush.msra.mxu0 0.0
    %8790 = vmatpush.msra.mxu0 0.0
    %8791 = vmatpush.msra.mxu0 0.0
    %8792 = vmatpush.msra.mxu0 0.0
    %8793 = vmatpush.msra.mxu0 0.0
    %8794 = vmatpush.msra.mxu0 0.0
    %8795 = vmatpush.msra.mxu0 0.0
    %8796 = vmatpush.msra.mxu0 0.0
    %8797 = vmatpush.msra.mxu0 0.0
    %8798 = vmatpush.msra.mxu0 0.0
    %v8799 = vand.u32 %v767, 4294901760
    %v8800 = vsub.f32 %v767, %v8799
    %v8801 = vand.u32 %v8800, 4294901760
    %8802 = vmatpush.msra.mxu0 %v8801
    %v8803 = vand.u32 %v5908, 4294901760
    %8804 = vmatmul.f32.gmra.mxu0 %v8803
    %v8805 = vpop.f32.mrf.mxu0
    %v8806 = vadd.f32 %v8782, %v8805
    %8807 = vdwg.mxu0
    %8808 = vmatpush.msra.mxu0 0.0
    %8809 = vmatpush.msra.mxu0 0.0
    %8810 = vmatpush.msra.mxu0 0.0
    %8811 = vmatpush.msra.mxu0 0.0
    %8812 = vmatpush.msra.mxu0 0.0
    %8813 = vmatpush.msra.mxu0 0.0
    %8814 = vmatpush.msra.mxu0 0.0
    %8815 = vmatpush.msra.mxu0 0.0
    %8816 = vmatpush.msra.mxu0 0.0
    %8817 = vmatpush.msra.mxu0 0.0
    %8818 = vmatpush.msra.mxu0 0.0
    %8819 = vmatpush.msra.mxu0 0.0
    %8820 = vmatpush.msra.mxu0 0.0
    %8821 = vmatpush.msra.mxu0 0.0
    %8822 = vmatpush.msra.mxu0 0.0
    %v8823 = vand.u32 %v767, 4294901760
    %8824 = vmatpush.msra.mxu0 %v8823
    %v8825 = vand.u32 %v5908, 4294901760
    %8826 = vmatmul.f32.gmra.mxu0 %v8825
    %v8827 = vpop.f32.mrf.mxu0
    %v8828 = vadd.f32 %v8806, %v8827
    %8829 = vdwg.mxu0
    %8830 = vmatpush.msra.mxu0 0.0
    %8831 = vmatpush.msra.mxu0 0.0
    %8832 = vmatpush.msra.mxu0 0.0
    %8833 = vmatpush.msra.mxu0 0.0
    %8834 = vmatpush.msra.mxu0 0.0
    %8835 = vmatpush.msra.mxu0 0.0
    %8836 = vmatpush.msra.mxu0 0.0
    %8837 = vmatpush.msra.mxu0 0.0
    %8838 = vmatpush.msra.mxu0 0.0
    %8839 = vmatpush.msra.mxu0 0.0
    %8840 = vmatpush.msra.mxu0 0.0
    %8841 = vmatpush.msra.mxu0 0.0
    %8842 = vmatpush.msra.mxu0 0.0
    %8843 = vmatpush.msra.mxu0 0.0
    %8844 = vmatpush.msra.mxu0 0.0
    %v8845 = vand.u32 %v768, 4294901760
    %8846 = vmatpush.msra.mxu0 %v8845
    %v8847 = vand.u32 %v5908, 4294901760
    %v8848 = vsub.f32 %v5908, %v8847
    %v8849 = vand.u32 %v8848, 4294901760
    %v8850 = vsub.f32 %v8848, %v8849
    %v8851 = vand.u32 %v8850, 4294901760
    %8852 = vmatmul.f32.gmra.mxu0 %v8851
    %v8853 = vpop.f32.mrf.mxu0
    %v8854 = vadd.f32 0.0, %v8853
    %8855 = vdwg.mxu0
    %8856 = vmatpush.msra.mxu0 0.0
    %8857 = vmatpush.msra.mxu0 0.0
    %8858 = vmatpush.msra.mxu0 0.0
    %8859 = vmatpush.msra.mxu0 0.0
    %8860 = vmatpush.msra.mxu0 0.0
    %8861 = vmatpush.msra.mxu0 0.0
    %8862 = vmatpush.msra.mxu0 0.0
    %8863 = vmatpush.msra.mxu0 0.0
    %8864 = vmatpush.msra.mxu0 0.0
    %8865 = vmatpush.msra.mxu0 0.0
    %8866 = vmatpush.msra.mxu0 0.0
    %8867 = vmatpush.msra.mxu0 0.0
    %8868 = vmatpush.msra.mxu0 0.0
    %8869 = vmatpush.msra.mxu0 0.0
    %8870 = vmatpush.msra.mxu0 0.0
    %v8871 = vand.u32 %v768, 4294901760
    %v8872 = vsub.f32 %v768, %v8871
    %v8873 = vand.u32 %v8872, 4294901760
    %v8874 = vsub.f32 %v8872, %v8873
    %v8875 = vand.u32 %v8874, 4294901760
    %8876 = vmatpush.msra.mxu0 %v8875
    %v8877 = vand.u32 %v5908, 4294901760
    %8878 = vmatmul.f32.gmra.mxu0 %v8877
    %v8879 = vpop.f32.mrf.mxu0
    %v8880 = vadd.f32 %v8854, %v8879
    %8881 = vdwg.mxu0
    %8882 = vmatpush.msra.mxu0 0.0
    %8883 = vmatpush.msra.mxu0 0.0
    %8884 = vmatpush.msra.mxu0 0.0
    %8885 = vmatpush.msra.mxu0 0.0
    %8886 = vmatpush.msra.mxu0 0.0
    %8887 = vmatpush.msra.mxu0 0.0
    %8888 = vmatpush.msra.mxu0 0.0
    %8889 = vmatpush.msra.mxu0 0.0
    %8890 = vmatpush.msra.mxu0 0.0
    %8891 = vmatpush.msra.mxu0 0.0
    %8892 = vmatpush.msra.mxu0 0.0
    %8893 = vmatpush.msra.mxu0 0.0
    %8894 = vmatpush.msra.mxu0 0.0
    %8895 = vmatpush.msra.mxu0 0.0
    %8896 = vmatpush.msra.mxu0 0.0
    %v8897 = vand.u32 %v768, 4294901760
    %v8898 = vsub.f32 %v768, %v8897
    %8899 = vmatpush.msra.mxu0 %v8898
    %v8900 = vand.u32 %v5908, 4294901760
    %v8901 = vsub.f32 %v5908, %v8900
    %8902 = vmatmul.f32.gmra.mxu0 %v8901
    %v8903 = vpop.f32.mrf.mxu0
    %v8904 = vadd.f32 %v8880, %v8903
    %8905 = vdwg.mxu0
    %8906 = vmatpush.msra.mxu0 0.0
    %8907 = vmatpush.msra.mxu0 0.0
    %8908 = vmatpush.msra.mxu0 0.0
    %8909 = vmatpush.msra.mxu0 0.0
    %8910 = vmatpush.msra.mxu0 0.0
    %8911 = vmatpush.msra.mxu0 0.0
    %8912 = vmatpush.msra.mxu0 0.0
    %8913 = vmatpush.msra.mxu0 0.0
    %8914 = vmatpush.msra.mxu0 0.0
    %8915 = vmatpush.msra.mxu0 0.0
    %8916 = vmatpush.msra.mxu0 0.0
    %8917 = vmatpush.msra.mxu0 0.0
    %8918 = vmatpush.msra.mxu0 0.0
    %8919 = vmatpush.msra.mxu0 0.0
    %8920 = vmatpush.msra.mxu0 0.0
    %v8921 = vand.u32 %v768, 4294901760
    %8922 = vmatpush.msra.mxu0 %v8921
    %v8923 = vand.u32 %v5908, 4294901760
    %v8924 = vsub.f32 %v5908, %v8923
    %v8925 = vand.u32 %v8924, 4294901760
    %8926 = vmatmul.f32.gmra.mxu0 %v8925
    %v8927 = vpop.f32.mrf.mxu0
    %v8928 = vadd.f32 %v8904, %v8927
    %8929 = vdwg.mxu0
    %8930 = vmatpush.msra.mxu0 0.0
    %8931 = vmatpush.msra.mxu0 0.0
    %8932 = vmatpush.msra.mxu0 0.0
    %8933 = vmatpush.msra.mxu0 0.0
    %8934 = vmatpush.msra.mxu0 0.0
    %8935 = vmatpush.msra.mxu0 0.0
    %8936 = vmatpush.msra.mxu0 0.0
    %8937 = vmatpush.msra.mxu0 0.0
    %8938 = vmatpush.msra.mxu0 0.0
    %8939 = vmatpush.msra.mxu0 0.0
    %8940 = vmatpush.msra.mxu0 0.0
    %8941 = vmatpush.msra.mxu0 0.0
    %8942 = vmatpush.msra.mxu0 0.0
    %8943 = vmatpush.msra.mxu0 0.0
    %8944 = vmatpush.msra.mxu0 0.0
    %v8945 = vand.u32 %v768, 4294901760
    %v8946 = vsub.f32 %v768, %v8945
    %v8947 = vand.u32 %v8946, 4294901760
    %8948 = vmatpush.msra.mxu0 %v8947
    %v8949 = vand.u32 %v5908, 4294901760
    %8950 = vmatmul.f32.gmra.mxu0 %v8949
    %v8951 = vpop.f32.mrf.mxu0
    %v8952 = vadd.f32 %v8928, %v8951
    %8953 = vdwg.mxu0
    %8954 = vmatpush.msra.mxu0 0.0
    %8955 = vmatpush.msra.mxu0 0.0
    %8956 = vmatpush.msra.mxu0 0.0
    %8957 = vmatpush.msra.mxu0 0.0
    %8958 = vmatpush.msra.mxu0 0.0
    %8959 = vmatpush.msra.mxu0 0.0
    %8960 = vmatpush.msra.mxu0 0.0
    %8961 = vmatpush.msra.mxu0 0.0
    %8962 = vmatpush.msra.mxu0 0.0
    %8963 = vmatpush.msra.mxu0 0.0
    %8964 = vmatpush.msra.mxu0 0.0
    %8965 = vmatpush.msra.mxu0 0.0
    %8966 = vmatpush.msra.mxu0 0.0
    %8967 = vmatpush.msra.mxu0 0.0
    %8968 = vmatpush.msra.mxu0 0.0
    %v8969 = vand.u32 %v768, 4294901760
    %8970 = vmatpush.msra.mxu0 %v8969
    %v8971 = vand.u32 %v5908, 4294901760
    %8972 = vmatmul.f32.gmra.mxu0 %v8971
    %v8973 = vpop.f32.mrf.mxu0
    %v8974 = vadd.f32 %v8952, %v8973
    %8975 = vdwg.mxu0
    %8976 = vmatpush.msra.mxu0 0.0
    %8977 = vmatpush.msra.mxu0 0.0
    %8978 = vmatpush.msra.mxu0 0.0
    %8979 = vmatpush.msra.mxu0 0.0
    %8980 = vmatpush.msra.mxu0 0.0
    %8981 = vmatpush.msra.mxu0 0.0
    %8982 = vmatpush.msra.mxu0 0.0
    %8983 = vmatpush.msra.mxu0 0.0
    %8984 = vmatpush.msra.mxu0 0.0
    %8985 = vmatpush.msra.mxu0 0.0
    %8986 = vmatpush.msra.mxu0 0.0
    %8987 = vmatpush.msra.mxu0 0.0
    %8988 = vmatpush.msra.mxu0 0.0
    %8989 = vmatpush.msra.mxu0 0.0
    %8990 = vmatpush.msra.mxu0 0.0
    %v8991 = vand.u32 %v769, 4294901760
    %8992 = vmatpush.msra.mxu0 %v8991
    %v8993 = vand.u32 %v5908, 4294901760
    %v8994 = vsub.f32 %v5908, %v8993
    %v8995 = vand.u32 %v8994, 4294901760
    %v8996 = vsub.f32 %v8994, %v8995
    %v8997 = vand.u32 %v8996, 4294901760
    %8998 = vmatmul.f32.gmra.mxu0 %v8997
    %v8999 = vpop.f32.mrf.mxu0
    %v9000 = vadd.f32 0.0, %v8999
    %9001 = vdwg.mxu0
    %9002 = vmatpush.msra.mxu0 0.0
    %9003 = vmatpush.msra.mxu0 0.0
    %9004 = vmatpush.msra.mxu0 0.0
    %9005 = vmatpush.msra.mxu0 0.0
    %9006 = vmatpush.msra.mxu0 0.0
    %9007 = vmatpush.msra.mxu0 0.0
    %9008 = vmatpush.msra.mxu0 0.0
    %9009 = vmatpush.msra.mxu0 0.0
    %9010 = vmatpush.msra.mxu0 0.0
    %9011 = vmatpush.msra.mxu0 0.0
    %9012 = vmatpush.msra.mxu0 0.0
    %9013 = vmatpush.msra.mxu0 0.0
    %9014 = vmatpush.msra.mxu0 0.0
    %9015 = vmatpush.msra.mxu0 0.0
    %9016 = vmatpush.msra.mxu0 0.0
    %v9017 = vand.u32 %v769, 4294901760
    %v9018 = vsub.f32 %v769, %v9017
    %v9019 = vand.u32 %v9018, 4294901760
    %v9020 = vsub.f32 %v9018, %v9019
    %v9021 = vand.u32 %v9020, 4294901760
    %9022 = vmatpush.msra.mxu0 %v9021
    %v9023 = vand.u32 %v5908, 4294901760
    %9024 = vmatmul.f32.gmra.mxu0 %v9023
    %v9025 = vpop.f32.mrf.mxu0
    %v9026 = vadd.f32 %v9000, %v9025
    %9027 = vdwg.mxu0
    %9028 = vmatpush.msra.mxu0 0.0
    %9029 = vmatpush.msra.mxu0 0.0
    %9030 = vmatpush.msra.mxu0 0.0
    %9031 = vmatpush.msra.mxu0 0.0
    %9032 = vmatpush.msra.mxu0 0.0
    %9033 = vmatpush.msra.mxu0 0.0
    %9034 = vmatpush.msra.mxu0 0.0
    %9035 = vmatpush.msra.mxu0 0.0
    %9036 = vmatpush.msra.mxu0 0.0
    %9037 = vmatpush.msra.mxu0 0.0
    %9038 = vmatpush.msra.mxu0 0.0
    %9039 = vmatpush.msra.mxu0 0.0
    %9040 = vmatpush.msra.mxu0 0.0
    %9041 = vmatpush.msra.mxu0 0.0
    %9042 = vmatpush.msra.mxu0 0.0
    %v9043 = vand.u32 %v769, 4294901760
    %v9044 = vsub.f32 %v769, %v9043
    %9045 = vmatpush.msra.mxu0 %v9044
    %v9046 = vand.u32 %v5908, 4294901760
    %v9047 = vsub.f32 %v5908, %v9046
    %9048 = vmatmul.f32.gmra.mxu0 %v9047
    %v9049 = vpop.f32.mrf.mxu0
    %v9050 = vadd.f32 %v9026, %v9049
    %9051 = vdwg.mxu0
    %9052 = vmatpush.msra.mxu0 0.0
    %9053 = vmatpush.msra.mxu0 0.0
    %9054 = vmatpush.msra.mxu0 0.0
    %9055 = vmatpush.msra.mxu0 0.0
    %9056 = vmatpush.msra.mxu0 0.0
    %9057 = vmatpush.msra.mxu0 0.0
    %9058 = vmatpush.msra.mxu0 0.0
    %9059 = vmatpush.msra.mxu0 0.0
    %9060 = vmatpush.msra.mxu0 0.0
    %9061 = vmatpush.msra.mxu0 0.0
    %9062 = vmatpush.msra.mxu0 0.0
    %9063 = vmatpush.msra.mxu0 0.0
    %9064 = vmatpush.msra.mxu0 0.0
    %9065 = vmatpush.msra.mxu0 0.0
    %9066 = vmatpush.msra.mxu0 0.0
    %v9067 = vand.u32 %v769, 4294901760
    %9068 = vmatpush.msra.mxu0 %v9067
    %v9069 = vand.u32 %v5908, 4294901760
    %v9070 = vsub.f32 %v5908, %v9069
    %v9071 = vand.u32 %v9070, 4294901760
    %9072 = vmatmul.f32.gmra.mxu0 %v9071
    %v9073 = vpop.f32.mrf.mxu0
    %v9074 = vadd.f32 %v9050, %v9073
    %9075 = vdwg.mxu0
    %9076 = vmatpush.msra.mxu0 0.0
    %9077 = vmatpush.msra.mxu0 0.0
    %9078 = vmatpush.msra.mxu0 0.0
    %9079 = vmatpush.msra.mxu0 0.0
    %9080 = vmatpush.msra.mxu0 0.0
    %9081 = vmatpush.msra.mxu0 0.0
    %9082 = vmatpush.msra.mxu0 0.0
    %9083 = vmatpush.msra.mxu0 0.0
    %9084 = vmatpush.msra.mxu0 0.0
    %9085 = vmatpush.msra.mxu0 0.0
    %9086 = vmatpush.msra.mxu0 0.0
    %9087 = vmatpush.msra.mxu0 0.0
    %9088 = vmatpush.msra.mxu0 0.0
    %9089 = vmatpush.msra.mxu0 0.0
    %9090 = vmatpush.msra.mxu0 0.0
    %v9091 = vand.u32 %v769, 4294901760
    %v9092 = vsub.f32 %v769, %v9091
    %v9093 = vand.u32 %v9092, 4294901760
    %9094 = vmatpush.msra.mxu0 %v9093
    %v9095 = vand.u32 %v5908, 4294901760
    %9096 = vmatmul.f32.gmra.mxu0 %v9095
    %v9097 = vpop.f32.mrf.mxu0
    %v9098 = vadd.f32 %v9074, %v9097
    %9099 = vdwg.mxu0
    %9100 = vmatpush.msra.mxu0 0.0
    %9101 = vmatpush.msra.mxu0 0.0
    %9102 = vmatpush.msra.mxu0 0.0
    %9103 = vmatpush.msra.mxu0 0.0
    %9104 = vmatpush.msra.mxu0 0.0
    %9105 = vmatpush.msra.mxu0 0.0
    %9106 = vmatpush.msra.mxu0 0.0
    %9107 = vmatpush.msra.mxu0 0.0
    %9108 = vmatpush.msra.mxu0 0.0
    %9109 = vmatpush.msra.mxu0 0.0
    %9110 = vmatpush.msra.mxu0 0.0
    %9111 = vmatpush.msra.mxu0 0.0
    %9112 = vmatpush.msra.mxu0 0.0
    %9113 = vmatpush.msra.mxu0 0.0
    %9114 = vmatpush.msra.mxu0 0.0
    %v9115 = vand.u32 %v769, 4294901760
    %9116 = vmatpush.msra.mxu0 %v9115
    %v9117 = vand.u32 %v5908, 4294901760
    %9118 = vmatmul.f32.gmra.mxu0 %v9117
    %v9119 = vpop.f32.mrf.mxu0
    %v9120 = vadd.f32 %v9098, %v9119
    %9121 = vdwg.mxu0
    %9122 = vmatpush.msra.mxu0 0.0
    %9123 = vmatpush.msra.mxu0 0.0
    %9124 = vmatpush.msra.mxu0 0.0
    %9125 = vmatpush.msra.mxu0 0.0
    %9126 = vmatpush.msra.mxu0 0.0
    %9127 = vmatpush.msra.mxu0 0.0
    %9128 = vmatpush.msra.mxu0 0.0
    %9129 = vmatpush.msra.mxu0 0.0
    %9130 = vmatpush.msra.mxu0 0.0
    %9131 = vmatpush.msra.mxu0 0.0
    %9132 = vmatpush.msra.mxu0 0.0
    %9133 = vmatpush.msra.mxu0 0.0
    %9134 = vmatpush.msra.mxu0 0.0
    %9135 = vmatpush.msra.mxu0 0.0
    %9136 = vmatpush.msra.mxu0 0.0
    %v9137 = vand.u32 %v770, 4294901760
    %9138 = vmatpush.msra.mxu0 %v9137
    %v9139 = vand.u32 %v5908, 4294901760
    %v9140 = vsub.f32 %v5908, %v9139
    %v9141 = vand.u32 %v9140, 4294901760
    %v9142 = vsub.f32 %v9140, %v9141
    %v9143 = vand.u32 %v9142, 4294901760
    %9144 = vmatmul.f32.gmra.mxu0 %v9143
    %v9145 = vpop.f32.mrf.mxu0
    %v9146 = vadd.f32 0.0, %v9145
    %9147 = vdwg.mxu0
    %9148 = vmatpush.msra.mxu0 0.0
    %9149 = vmatpush.msra.mxu0 0.0
    %9150 = vmatpush.msra.mxu0 0.0
    %9151 = vmatpush.msra.mxu0 0.0
    %9152 = vmatpush.msra.mxu0 0.0
    %9153 = vmatpush.msra.mxu0 0.0
    %9154 = vmatpush.msra.mxu0 0.0
    %9155 = vmatpush.msra.mxu0 0.0
    %9156 = vmatpush.msra.mxu0 0.0
    %9157 = vmatpush.msra.mxu0 0.0
    %9158 = vmatpush.msra.mxu0 0.0
    %9159 = vmatpush.msra.mxu0 0.0
    %9160 = vmatpush.msra.mxu0 0.0
    %9161 = vmatpush.msra.mxu0 0.0
    %9162 = vmatpush.msra.mxu0 0.0
    %v9163 = vand.u32 %v770, 4294901760
    %v9164 = vsub.f32 %v770, %v9163
    %v9165 = vand.u32 %v9164, 4294901760
    %v9166 = vsub.f32 %v9164, %v9165
    %v9167 = vand.u32 %v9166, 4294901760
    %9168 = vmatpush.msra.mxu0 %v9167
    %v9169 = vand.u32 %v5908, 4294901760
    %9170 = vmatmul.f32.gmra.mxu0 %v9169
    %v9171 = vpop.f32.mrf.mxu0
    %v9172 = vadd.f32 %v9146, %v9171
    %9173 = vdwg.mxu0
    %9174 = vmatpush.msra.mxu0 0.0
    %9175 = vmatpush.msra.mxu0 0.0
    %9176 = vmatpush.msra.mxu0 0.0
    %9177 = vmatpush.msra.mxu0 0.0
    %9178 = vmatpush.msra.mxu0 0.0
    %9179 = vmatpush.msra.mxu0 0.0
    %9180 = vmatpush.msra.mxu0 0.0
    %9181 = vmatpush.msra.mxu0 0.0
    %9182 = vmatpush.msra.mxu0 0.0
    %9183 = vmatpush.msra.mxu0 0.0
    %9184 = vmatpush.msra.mxu0 0.0
    %9185 = vmatpush.msra.mxu0 0.0
    %9186 = vmatpush.msra.mxu0 0.0
    %9187 = vmatpush.msra.mxu0 0.0
    %9188 = vmatpush.msra.mxu0 0.0
    %v9189 = vand.u32 %v770, 4294901760
    %v9190 = vsub.f32 %v770, %v9189
    %9191 = vmatpush.msra.mxu0 %v9190
    %v9192 = vand.u32 %v5908, 4294901760
    %v9193 = vsub.f32 %v5908, %v9192
    %9194 = vmatmul.f32.gmra.mxu0 %v9193
    %v9195 = vpop.f32.mrf.mxu0
    %v9196 = vadd.f32 %v9172, %v9195
    %9197 = vdwg.mxu0
    %9198 = vmatpush.msra.mxu0 0.0
    %9199 = vmatpush.msra.mxu0 0.0
    %9200 = vmatpush.msra.mxu0 0.0
    %9201 = vmatpush.msra.mxu0 0.0
    %9202 = vmatpush.msra.mxu0 0.0
    %9203 = vmatpush.msra.mxu0 0.0
    %9204 = vmatpush.msra.mxu0 0.0
    %9205 = vmatpush.msra.mxu0 0.0
    %9206 = vmatpush.msra.mxu0 0.0
    %9207 = vmatpush.msra.mxu0 0.0
    %9208 = vmatpush.msra.mxu0 0.0
    %9209 = vmatpush.msra.mxu0 0.0
    %9210 = vmatpush.msra.mxu0 0.0
    %9211 = vmatpush.msra.mxu0 0.0
    %9212 = vmatpush.msra.mxu0 0.0
    %v9213 = vand.u32 %v770, 4294901760
    %9214 = vmatpush.msra.mxu0 %v9213
    %v9215 = vand.u32 %v5908, 4294901760
    %v9216 = vsub.f32 %v5908, %v9215
    %v9217 = vand.u32 %v9216, 4294901760
    %9218 = vmatmul.f32.gmra.mxu0 %v9217
    %v9219 = vpop.f32.mrf.mxu0
    %v9220 = vadd.f32 %v9196, %v9219
    %9221 = vdwg.mxu0
    %9222 = vmatpush.msra.mxu0 0.0
    %9223 = vmatpush.msra.mxu0 0.0
    %9224 = vmatpush.msra.mxu0 0.0
    %9225 = vmatpush.msra.mxu0 0.0
    %9226 = vmatpush.msra.mxu0 0.0
    %9227 = vmatpush.msra.mxu0 0.0
    %9228 = vmatpush.msra.mxu0 0.0
    %9229 = vmatpush.msra.mxu0 0.0
    %9230 = vmatpush.msra.mxu0 0.0
    %9231 = vmatpush.msra.mxu0 0.0
    %9232 = vmatpush.msra.mxu0 0.0
    %9233 = vmatpush.msra.mxu0 0.0
    %9234 = vmatpush.msra.mxu0 0.0
    %9235 = vmatpush.msra.mxu0 0.0
    %9236 = vmatpush.msra.mxu0 0.0
    %v9237 = vand.u32 %v770, 4294901760
    %v9238 = vsub.f32 %v770, %v9237
    %v9239 = vand.u32 %v9238, 4294901760
    %9240 = vmatpush.msra.mxu0 %v9239
    %v9241 = vand.u32 %v5908, 4294901760
    %9242 = vmatmul.f32.gmra.mxu0 %v9241
    %v9243 = vpop.f32.mrf.mxu0
    %v9244 = vadd.f32 %v9220, %v9243
    %9245 = vdwg.mxu0
    %9246 = vmatpush.msra.mxu0 0.0
    %9247 = vmatpush.msra.mxu0 0.0
    %9248 = vmatpush.msra.mxu0 0.0
    %9249 = vmatpush.msra.mxu0 0.0
    %9250 = vmatpush.msra.mxu0 0.0
    %9251 = vmatpush.msra.mxu0 0.0
    %9252 = vmatpush.msra.mxu0 0.0
    %9253 = vmatpush.msra.mxu0 0.0
    %9254 = vmatpush.msra.mxu0 0.0
    %9255 = vmatpush.msra.mxu0 0.0
    %9256 = vmatpush.msra.mxu0 0.0
    %9257 = vmatpush.msra.mxu0 0.0
    %9258 = vmatpush.msra.mxu0 0.0
    %9259 = vmatpush.msra.mxu0 0.0
    %9260 = vmatpush.msra.mxu0 0.0
    %v9261 = vand.u32 %v770, 4294901760
    %9262 = vmatpush.msra.mxu0 %v9261
    %v9263 = vand.u32 %v5908, 4294901760
    %9264 = vmatmul.f32.gmra.mxu0 %v9263
    %v9265 = vpop.f32.mrf.mxu0
    %v9266 = vadd.f32 %v9244, %v9265
    %9267 = vdwg.mxu0
    %9268 = vmatpush.msra.mxu0 0.0
    %9269 = vmatpush.msra.mxu0 0.0
    %9270 = vmatpush.msra.mxu0 0.0
    %9271 = vmatpush.msra.mxu0 0.0
    %9272 = vmatpush.msra.mxu0 0.0
    %9273 = vmatpush.msra.mxu0 0.0
    %9274 = vmatpush.msra.mxu0 0.0
    %9275 = vmatpush.msra.mxu0 0.0
    %9276 = vmatpush.msra.mxu0 0.0
    %9277 = vmatpush.msra.mxu0 0.0
    %9278 = vmatpush.msra.mxu0 0.0
    %9279 = vmatpush.msra.mxu0 0.0
    %9280 = vmatpush.msra.mxu0 0.0
    %9281 = vmatpush.msra.mxu0 0.0
    %9282 = vmatpush.msra.mxu0 0.0
    %v9283 = vand.u32 %v771, 4294901760
    %9284 = vmatpush.msra.mxu0 %v9283
    %v9285 = vand.u32 %v5908, 4294901760
    %v9286 = vsub.f32 %v5908, %v9285
    %v9287 = vand.u32 %v9286, 4294901760
    %v9288 = vsub.f32 %v9286, %v9287
    %v9289 = vand.u32 %v9288, 4294901760
    %9290 = vmatmul.f32.gmra.mxu0 %v9289
    %v9291 = vpop.f32.mrf.mxu0
    %v9292 = vadd.f32 0.0, %v9291
    %9293 = vdwg.mxu0
    %9294 = vmatpush.msra.mxu0 0.0
    %9295 = vmatpush.msra.mxu0 0.0
    %9296 = vmatpush.msra.mxu0 0.0
    %9297 = vmatpush.msra.mxu0 0.0
    %9298 = vmatpush.msra.mxu0 0.0
    %9299 = vmatpush.msra.mxu0 0.0
    %9300 = vmatpush.msra.mxu0 0.0
    %9301 = vmatpush.msra.mxu0 0.0
    %9302 = vmatpush.msra.mxu0 0.0
    %9303 = vmatpush.msra.mxu0 0.0
    %9304 = vmatpush.msra.mxu0 0.0
    %9305 = vmatpush.msra.mxu0 0.0
    %9306 = vmatpush.msra.mxu0 0.0
    %9307 = vmatpush.msra.mxu0 0.0
    %9308 = vmatpush.msra.mxu0 0.0
    %v9309 = vand.u32 %v771, 4294901760
    %v9310 = vsub.f32 %v771, %v9309
    %v9311 = vand.u32 %v9310, 4294901760
    %v9312 = vsub.f32 %v9310, %v9311
    %v9313 = vand.u32 %v9312, 4294901760
    %9314 = vmatpush.msra.mxu0 %v9313
    %v9315 = vand.u32 %v5908, 4294901760
    %9316 = vmatmul.f32.gmra.mxu0 %v9315
    %v9317 = vpop.f32.mrf.mxu0
    %v9318 = vadd.f32 %v9292, %v9317
    %9319 = vdwg.mxu0
    %9320 = vmatpush.msra.mxu0 0.0
    %9321 = vmatpush.msra.mxu0 0.0
    %9322 = vmatpush.msra.mxu0 0.0
    %9323 = vmatpush.msra.mxu0 0.0
    %9324 = vmatpush.msra.mxu0 0.0
    %9325 = vmatpush.msra.mxu0 0.0
    %9326 = vmatpush.msra.mxu0 0.0
    %9327 = vmatpush.msra.mxu0 0.0
    %9328 = vmatpush.msra.mxu0 0.0
    %9329 = vmatpush.msra.mxu0 0.0
    %9330 = vmatpush.msra.mxu0 0.0
    %9331 = vmatpush.msra.mxu0 0.0
    %9332 = vmatpush.msra.mxu0 0.0
    %9333 = vmatpush.msra.mxu0 0.0
    %9334 = vmatpush.msra.mxu0 0.0
    %v9335 = vand.u32 %v771, 4294901760
    %v9336 = vsub.f32 %v771, %v9335
    %9337 = vmatpush.msra.mxu0 %v9336
    %v9338 = vand.u32 %v5908, 4294901760
    %v9339 = vsub.f32 %v5908, %v9338
    %9340 = vmatmul.f32.gmra.mxu0 %v9339
    %v9341 = vpop.f32.mrf.mxu0
    %v9342 = vadd.f32 %v9318, %v9341
    %9343 = vdwg.mxu0
    %9344 = vmatpush.msra.mxu0 0.0
    %9345 = vmatpush.msra.mxu0 0.0
    %9346 = vmatpush.msra.mxu0 0.0
    %9347 = vmatpush.msra.mxu0 0.0
    %9348 = vmatpush.msra.mxu0 0.0
    %9349 = vmatpush.msra.mxu0 0.0
    %9350 = vmatpush.msra.mxu0 0.0
    %9351 = vmatpush.msra.mxu0 0.0
    %9352 = vmatpush.msra.mxu0 0.0
    %9353 = vmatpush.msra.mxu0 0.0
    %9354 = vmatpush.msra.mxu0 0.0
    %9355 = vmatpush.msra.mxu0 0.0
    %9356 = vmatpush.msra.mxu0 0.0
    %9357 = vmatpush.msra.mxu0 0.0
    %9358 = vmatpush.msra.mxu0 0.0
    %v9359 = vand.u32 %v771, 4294901760
    %9360 = vmatpush.msra.mxu0 %v9359
    %v9361 = vand.u32 %v5908, 4294901760
    %v9362 = vsub.f32 %v5908, %v9361
    %v9363 = vand.u32 %v9362, 4294901760
    %9364 = vmatmul.f32.gmra.mxu0 %v9363
    %v9365 = vpop.f32.mrf.mxu0
    %v9366 = vadd.f32 %v9342, %v9365
    %9367 = vdwg.mxu0
    %9368 = vmatpush.msra.mxu0 0.0
    %9369 = vmatpush.msra.mxu0 0.0
    %9370 = vmatpush.msra.mxu0 0.0
    %9371 = vmatpush.msra.mxu0 0.0
    %9372 = vmatpush.msra.mxu0 0.0
    %9373 = vmatpush.msra.mxu0 0.0
    %9374 = vmatpush.msra.mxu0 0.0
    %9375 = vmatpush.msra.mxu0 0.0
    %9376 = vmatpush.msra.mxu0 0.0
    %9377 = vmatpush.msra.mxu0 0.0
    %9378 = vmatpush.msra.mxu0 0.0
    %9379 = vmatpush.msra.mxu0 0.0
    %9380 = vmatpush.msra.mxu0 0.0
    %9381 = vmatpush.msra.mxu0 0.0
    %9382 = vmatpush.msra.mxu0 0.0
    %v9383 = vand.u32 %v771, 4294901760
    %v9384 = vsub.f32 %v771, %v9383
    %v9385 = vand.u32 %v9384, 4294901760
    %9386 = vmatpush.msra.mxu0 %v9385
    %v9387 = vand.u32 %v5908, 4294901760
    %9388 = vmatmul.f32.gmra.mxu0 %v9387
    %v9389 = vpop.f32.mrf.mxu0
    %v9390 = vadd.f32 %v9366, %v9389
    %9391 = vdwg.mxu0
    %9392 = vmatpush.msra.mxu0 0.0
    %9393 = vmatpush.msra.mxu0 0.0
    %9394 = vmatpush.msra.mxu0 0.0
    %9395 = vmatpush.msra.mxu0 0.0
    %9396 = vmatpush.msra.mxu0 0.0
    %9397 = vmatpush.msra.mxu0 0.0
    %9398 = vmatpush.msra.mxu0 0.0
    %9399 = vmatpush.msra.mxu0 0.0
    %9400 = vmatpush.msra.mxu0 0.0
    %9401 = vmatpush.msra.mxu0 0.0
    %9402 = vmatpush.msra.mxu0 0.0
    %9403 = vmatpush.msra.mxu0 0.0
    %9404 = vmatpush.msra.mxu0 0.0
    %9405 = vmatpush.msra.mxu0 0.0
    %9406 = vmatpush.msra.mxu0 0.0
    %v9407 = vand.u32 %v771, 4294901760
    %9408 = vmatpush.msra.mxu0 %v9407
    %v9409 = vand.u32 %v5908, 4294901760
    %9410 = vmatmul.f32.gmra.mxu0 %v9409
    %v9411 = vpop.f32.mrf.mxu0
    %v9412 = vadd.f32 %v9390, %v9411
    %9413 = vdwg.mxu0
    %9414 = vmatpush.msra.mxu0 0.0
    %9415 = vmatpush.msra.mxu0 0.0
    %9416 = vmatpush.msra.mxu0 0.0
    %9417 = vmatpush.msra.mxu0 0.0
    %9418 = vmatpush.msra.mxu0 0.0
    %9419 = vmatpush.msra.mxu0 0.0
    %9420 = vmatpush.msra.mxu0 0.0
    %9421 = vmatpush.msra.mxu0 0.0
    %9422 = vmatpush.msra.mxu0 0.0
    %9423 = vmatpush.msra.mxu0 0.0
    %9424 = vmatpush.msra.mxu0 0.0
    %9425 = vmatpush.msra.mxu0 0.0
    %9426 = vmatpush.msra.mxu0 0.0
    %9427 = vmatpush.msra.mxu0 0.0
    %9428 = vmatpush.msra.mxu0 0.0
    %v9429 = vand.u32 %v772, 4294901760
    %9430 = vmatpush.msra.mxu0 %v9429
    %v9431 = vand.u32 %v5908, 4294901760
    %v9432 = vsub.f32 %v5908, %v9431
    %v9433 = vand.u32 %v9432, 4294901760
    %v9434 = vsub.f32 %v9432, %v9433
    %v9435 = vand.u32 %v9434, 4294901760
    %9436 = vmatmul.f32.gmra.mxu0 %v9435
    %v9437 = vpop.f32.mrf.mxu0
    %v9438 = vadd.f32 0.0, %v9437
    %9439 = vdwg.mxu0
    %9440 = vmatpush.msra.mxu0 0.0
    %9441 = vmatpush.msra.mxu0 0.0
    %9442 = vmatpush.msra.mxu0 0.0
    %9443 = vmatpush.msra.mxu0 0.0
    %9444 = vmatpush.msra.mxu0 0.0
    %9445 = vmatpush.msra.mxu0 0.0
    %9446 = vmatpush.msra.mxu0 0.0
    %9447 = vmatpush.msra.mxu0 0.0
    %9448 = vmatpush.msra.mxu0 0.0
    %9449 = vmatpush.msra.mxu0 0.0
    %9450 = vmatpush.msra.mxu0 0.0
    %9451 = vmatpush.msra.mxu0 0.0
    %9452 = vmatpush.msra.mxu0 0.0
    %9453 = vmatpush.msra.mxu0 0.0
    %9454 = vmatpush.msra.mxu0 0.0
    %v9455 = vand.u32 %v772, 4294901760
    %v9456 = vsub.f32 %v772, %v9455
    %v9457 = vand.u32 %v9456, 4294901760
    %v9458 = vsub.f32 %v9456, %v9457
    %v9459 = vand.u32 %v9458, 4294901760
    %9460 = vmatpush.msra.mxu0 %v9459
    %v9461 = vand.u32 %v5908, 4294901760
    %9462 = vmatmul.f32.gmra.mxu0 %v9461
    %v9463 = vpop.f32.mrf.mxu0
    %v9464 = vadd.f32 %v9438, %v9463
    %9465 = vdwg.mxu0
    %9466 = vmatpush.msra.mxu0 0.0
    %9467 = vmatpush.msra.mxu0 0.0
    %9468 = vmatpush.msra.mxu0 0.0
    %9469 = vmatpush.msra.mxu0 0.0
    %9470 = vmatpush.msra.mxu0 0.0
    %9471 = vmatpush.msra.mxu0 0.0
    %9472 = vmatpush.msra.mxu0 0.0
    %9473 = vmatpush.msra.mxu0 0.0
    %9474 = vmatpush.msra.mxu0 0.0
    %9475 = vmatpush.msra.mxu0 0.0
    %9476 = vmatpush.msra.mxu0 0.0
    %9477 = vmatpush.msra.mxu0 0.0
    %9478 = vmatpush.msra.mxu0 0.0
    %9479 = vmatpush.msra.mxu0 0.0
    %9480 = vmatpush.msra.mxu0 0.0
    %v9481 = vand.u32 %v772, 4294901760
    %v9482 = vsub.f32 %v772, %v9481
    %9483 = vmatpush.msra.mxu0 %v9482
    %v9484 = vand.u32 %v5908, 4294901760
    %v9485 = vsub.f32 %v5908, %v9484
    %9486 = vmatmul.f32.gmra.mxu0 %v9485
    %v9487 = vpop.f32.mrf.mxu0
    %v9488 = vadd.f32 %v9464, %v9487
    %9489 = vdwg.mxu0
    %9490 = vmatpush.msra.mxu0 0.0
    %9491 = vmatpush.msra.mxu0 0.0
    %9492 = vmatpush.msra.mxu0 0.0
    %9493 = vmatpush.msra.mxu0 0.0
    %9494 = vmatpush.msra.mxu0 0.0
    %9495 = vmatpush.msra.mxu0 0.0
    %9496 = vmatpush.msra.mxu0 0.0
    %9497 = vmatpush.msra.mxu0 0.0
    %9498 = vmatpush.msra.mxu0 0.0
    %9499 = vmatpush.msra.mxu0 0.0
    %9500 = vmatpush.msra.mxu0 0.0
    %9501 = vmatpush.msra.mxu0 0.0
    %9502 = vmatpush.msra.mxu0 0.0
    %9503 = vmatpush.msra.mxu0 0.0
    %9504 = vmatpush.msra.mxu0 0.0
    %v9505 = vand.u32 %v772, 4294901760
    %9506 = vmatpush.msra.mxu0 %v9505
    %v9507 = vand.u32 %v5908, 4294901760
    %v9508 = vsub.f32 %v5908, %v9507
    %v9509 = vand.u32 %v9508, 4294901760
    %9510 = vmatmul.f32.gmra.mxu0 %v9509
    %v9511 = vpop.f32.mrf.mxu0
    %v9512 = vadd.f32 %v9488, %v9511
    %9513 = vdwg.mxu0
    %9514 = vmatpush.msra.mxu0 0.0
    %9515 = vmatpush.msra.mxu0 0.0
    %9516 = vmatpush.msra.mxu0 0.0
    %9517 = vmatpush.msra.mxu0 0.0
    %9518 = vmatpush.msra.mxu0 0.0
    %9519 = vmatpush.msra.mxu0 0.0
    %9520 = vmatpush.msra.mxu0 0.0
    %9521 = vmatpush.msra.mxu0 0.0
    %9522 = vmatpush.msra.mxu0 0.0
    %9523 = vmatpush.msra.mxu0 0.0
    %9524 = vmatpush.msra.mxu0 0.0
    %9525 = vmatpush.msra.mxu0 0.0
    %9526 = vmatpush.msra.mxu0 0.0
    %9527 = vmatpush.msra.mxu0 0.0
    %9528 = vmatpush.msra.mxu0 0.0
    %v9529 = vand.u32 %v772, 4294901760
    %v9530 = vsub.f32 %v772, %v9529
    %v9531 = vand.u32 %v9530, 4294901760
    %9532 = vmatpush.msra.mxu0 %v9531
    %v9533 = vand.u32 %v5908, 4294901760
    %9534 = vmatmul.f32.gmra.mxu0 %v9533
    %v9535 = vpop.f32.mrf.mxu0
    %v9536 = vadd.f32 %v9512, %v9535
    %9537 = vdwg.mxu0
    %9538 = vmatpush.msra.mxu0 0.0
    %9539 = vmatpush.msra.mxu0 0.0
    %9540 = vmatpush.msra.mxu0 0.0
    %9541 = vmatpush.msra.mxu0 0.0
    %9542 = vmatpush.msra.mxu0 0.0
    %9543 = vmatpush.msra.mxu0 0.0
    %9544 = vmatpush.msra.mxu0 0.0
    %9545 = vmatpush.msra.mxu0 0.0
    %9546 = vmatpush.msra.mxu0 0.0
    %9547 = vmatpush.msra.mxu0 0.0
    %9548 = vmatpush.msra.mxu0 0.0
    %9549 = vmatpush.msra.mxu0 0.0
    %9550 = vmatpush.msra.mxu0 0.0
    %9551 = vmatpush.msra.mxu0 0.0
    %9552 = vmatpush.msra.mxu0 0.0
    %v9553 = vand.u32 %v772, 4294901760
    %9554 = vmatpush.msra.mxu0 %v9553
    %v9555 = vand.u32 %v5908, 4294901760
    %9556 = vmatmul.f32.gmra.mxu0 %v9555
    %v9557 = vpop.f32.mrf.mxu0
    %v9558 = vadd.f32 %v9536, %v9557
    %9559 = vdwg.mxu0
    %9560 = vmatpush.msra.mxu0 0.0
    %9561 = vmatpush.msra.mxu0 0.0
    %9562 = vmatpush.msra.mxu0 0.0
    %9563 = vmatpush.msra.mxu0 0.0
    %9564 = vmatpush.msra.mxu0 0.0
    %9565 = vmatpush.msra.mxu0 0.0
    %9566 = vmatpush.msra.mxu0 0.0
    %9567 = vmatpush.msra.mxu0 0.0
    %9568 = vmatpush.msra.mxu0 0.0
    %9569 = vmatpush.msra.mxu0 0.0
    %9570 = vmatpush.msra.mxu0 0.0
    %9571 = vmatpush.msra.mxu0 0.0
    %9572 = vmatpush.msra.mxu0 0.0
    %9573 = vmatpush.msra.mxu0 0.0
    %9574 = vmatpush.msra.mxu0 0.0
    %v9575 = vand.u32 %v773, 4294901760
    %9576 = vmatpush.msra.mxu0 %v9575
    %v9577 = vand.u32 %v5908, 4294901760
    %v9578 = vsub.f32 %v5908, %v9577
    %v9579 = vand.u32 %v9578, 4294901760
    %v9580 = vsub.f32 %v9578, %v9579
    %v9581 = vand.u32 %v9580, 4294901760
    %9582 = vmatmul.f32.gmra.mxu0 %v9581
    %v9583 = vpop.f32.mrf.mxu0
    %v9584 = vadd.f32 0.0, %v9583
    %9585 = vdwg.mxu0
    %9586 = vmatpush.msra.mxu0 0.0
    %9587 = vmatpush.msra.mxu0 0.0
    %9588 = vmatpush.msra.mxu0 0.0
    %9589 = vmatpush.msra.mxu0 0.0
    %9590 = vmatpush.msra.mxu0 0.0
    %9591 = vmatpush.msra.mxu0 0.0
    %9592 = vmatpush.msra.mxu0 0.0
    %9593 = vmatpush.msra.mxu0 0.0
    %9594 = vmatpush.msra.mxu0 0.0
    %9595 = vmatpush.msra.mxu0 0.0
    %9596 = vmatpush.msra.mxu0 0.0
    %9597 = vmatpush.msra.mxu0 0.0
    %9598 = vmatpush.msra.mxu0 0.0
    %9599 = vmatpush.msra.mxu0 0.0
    %9600 = vmatpush.msra.mxu0 0.0
    %v9601 = vand.u32 %v773, 4294901760
    %v9602 = vsub.f32 %v773, %v9601
    %v9603 = vand.u32 %v9602, 4294901760
    %v9604 = vsub.f32 %v9602, %v9603
    %v9605 = vand.u32 %v9604, 4294901760
    %9606 = vmatpush.msra.mxu0 %v9605
    %v9607 = vand.u32 %v5908, 4294901760
    %9608 = vmatmul.f32.gmra.mxu0 %v9607
    %v9609 = vpop.f32.mrf.mxu0
    %v9610 = vadd.f32 %v9584, %v9609
    %9611 = vdwg.mxu0
    %9612 = vmatpush.msra.mxu0 0.0
    %9613 = vmatpush.msra.mxu0 0.0
    %9614 = vmatpush.msra.mxu0 0.0
    %9615 = vmatpush.msra.mxu0 0.0
    %9616 = vmatpush.msra.mxu0 0.0
    %9617 = vmatpush.msra.mxu0 0.0
    %9618 = vmatpush.msra.mxu0 0.0
    %9619 = vmatpush.msra.mxu0 0.0
    %9620 = vmatpush.msra.mxu0 0.0
    %9621 = vmatpush.msra.mxu0 0.0
    %9622 = vmatpush.msra.mxu0 0.0
    %9623 = vmatpush.msra.mxu0 0.0
    %9624 = vmatpush.msra.mxu0 0.0
    %9625 = vmatpush.msra.mxu0 0.0
    %9626 = vmatpush.msra.mxu0 0.0
    %v9627 = vand.u32 %v773, 4294901760
    %v9628 = vsub.f32 %v773, %v9627
    %9629 = vmatpush.msra.mxu0 %v9628
    %v9630 = vand.u32 %v5908, 4294901760
    %v9631 = vsub.f32 %v5908, %v9630
    %9632 = vmatmul.f32.gmra.mxu0 %v9631
    %v9633 = vpop.f32.mrf.mxu0
    %v9634 = vadd.f32 %v9610, %v9633
    %9635 = vdwg.mxu0
    %9636 = vmatpush.msra.mxu0 0.0
    %9637 = vmatpush.msra.mxu0 0.0
    %9638 = vmatpush.msra.mxu0 0.0
    %9639 = vmatpush.msra.mxu0 0.0
    %9640 = vmatpush.msra.mxu0 0.0
    %9641 = vmatpush.msra.mxu0 0.0
    %9642 = vmatpush.msra.mxu0 0.0
    %9643 = vmatpush.msra.mxu0 0.0
    %9644 = vmatpush.msra.mxu0 0.0
    %9645 = vmatpush.msra.mxu0 0.0
    %9646 = vmatpush.msra.mxu0 0.0
    %9647 = vmatpush.msra.mxu0 0.0
    %9648 = vmatpush.msra.mxu0 0.0
    %9649 = vmatpush.msra.mxu0 0.0
    %9650 = vmatpush.msra.mxu0 0.0
    %v9651 = vand.u32 %v773, 4294901760
    %9652 = vmatpush.msra.mxu0 %v9651
    %v9653 = vand.u32 %v5908, 4294901760
    %v9654 = vsub.f32 %v5908, %v9653
    %v9655 = vand.u32 %v9654, 4294901760
    %9656 = vmatmul.f32.gmra.mxu0 %v9655
    %v9657 = vpop.f32.mrf.mxu0
    %v9658 = vadd.f32 %v9634, %v9657
    %9659 = vdwg.mxu0
    %9660 = vmatpush.msra.mxu0 0.0
    %9661 = vmatpush.msra.mxu0 0.0
    %9662 = vmatpush.msra.mxu0 0.0
    %9663 = vmatpush.msra.mxu0 0.0
    %9664 = vmatpush.msra.mxu0 0.0
    %9665 = vmatpush.msra.mxu0 0.0
    %9666 = vmatpush.msra.mxu0 0.0
    %9667 = vmatpush.msra.mxu0 0.0
    %9668 = vmatpush.msra.mxu0 0.0
    %9669 = vmatpush.msra.mxu0 0.0
    %9670 = vmatpush.msra.mxu0 0.0
    %9671 = vmatpush.msra.mxu0 0.0
    %9672 = vmatpush.msra.mxu0 0.0
    %9673 = vmatpush.msra.mxu0 0.0
    %9674 = vmatpush.msra.mxu0 0.0
    %v9675 = vand.u32 %v773, 4294901760
    %v9676 = vsub.f32 %v773, %v9675
    %v9677 = vand.u32 %v9676, 4294901760
    %9678 = vmatpush.msra.mxu0 %v9677
    %v9679 = vand.u32 %v5908, 4294901760
    %9680 = vmatmul.f32.gmra.mxu0 %v9679
    %v9681 = vpop.f32.mrf.mxu0
    %v9682 = vadd.f32 %v9658, %v9681
    %9683 = vdwg.mxu0
    %9684 = vmatpush.msra.mxu0 0.0
    %9685 = vmatpush.msra.mxu0 0.0
    %9686 = vmatpush.msra.mxu0 0.0
    %9687 = vmatpush.msra.mxu0 0.0
    %9688 = vmatpush.msra.mxu0 0.0
    %9689 = vmatpush.msra.mxu0 0.0
    %9690 = vmatpush.msra.mxu0 0.0
    %9691 = vmatpush.msra.mxu0 0.0
    %9692 = vmatpush.msra.mxu0 0.0
    %9693 = vmatpush.msra.mxu0 0.0
    %9694 = vmatpush.msra.mxu0 0.0
    %9695 = vmatpush.msra.mxu0 0.0
    %9696 = vmatpush.msra.mxu0 0.0
    %9697 = vmatpush.msra.mxu0 0.0
    %9698 = vmatpush.msra.mxu0 0.0
    %v9699 = vand.u32 %v773, 4294901760
    %9700 = vmatpush.msra.mxu0 %v9699
    %v9701 = vand.u32 %v5908, 4294901760
    %9702 = vmatmul.f32.gmra.mxu0 %v9701
    %v9703 = vpop.f32.mrf.mxu0
    %v9704 = vadd.f32 %v9682, %v9703
    %9705 = vdwg.mxu0
    %9706 = vmatpush.msra.mxu0 0.0
    %9707 = vmatpush.msra.mxu0 0.0
    %9708 = vmatpush.msra.mxu0 0.0
    %9709 = vmatpush.msra.mxu0 0.0
    %9710 = vmatpush.msra.mxu0 0.0
    %9711 = vmatpush.msra.mxu0 0.0
    %9712 = vmatpush.msra.mxu0 0.0
    %9713 = vmatpush.msra.mxu0 0.0
    %9714 = vmatpush.msra.mxu0 0.0
    %9715 = vmatpush.msra.mxu0 0.0
    %9716 = vmatpush.msra.mxu0 0.0
    %9717 = vmatpush.msra.mxu0 0.0
    %9718 = vmatpush.msra.mxu0 0.0
    %9719 = vmatpush.msra.mxu0 0.0
    %9720 = vmatpush.msra.mxu0 0.0
    %v9721 = vand.u32 %v774, 4294901760
    %9722 = vmatpush.msra.mxu0 %v9721
    %v9723 = vand.u32 %v5908, 4294901760
    %v9724 = vsub.f32 %v5908, %v9723
    %v9725 = vand.u32 %v9724, 4294901760
    %v9726 = vsub.f32 %v9724, %v9725
    %v9727 = vand.u32 %v9726, 4294901760
    %9728 = vmatmul.f32.gmra.mxu0 %v9727
    %v9729 = vpop.f32.mrf.mxu0
    %v9730 = vadd.f32 0.0, %v9729
    %9731 = vdwg.mxu0
    %9732 = vmatpush.msra.mxu0 0.0
    %9733 = vmatpush.msra.mxu0 0.0
    %9734 = vmatpush.msra.mxu0 0.0
    %9735 = vmatpush.msra.mxu0 0.0
    %9736 = vmatpush.msra.mxu0 0.0
    %9737 = vmatpush.msra.mxu0 0.0
    %9738 = vmatpush.msra.mxu0 0.0
    %9739 = vmatpush.msra.mxu0 0.0
    %9740 = vmatpush.msra.mxu0 0.0
    %9741 = vmatpush.msra.mxu0 0.0
    %9742 = vmatpush.msra.mxu0 0.0
    %9743 = vmatpush.msra.mxu0 0.0
    %9744 = vmatpush.msra.mxu0 0.0
    %9745 = vmatpush.msra.mxu0 0.0
    %9746 = vmatpush.msra.mxu0 0.0
    %v9747 = vand.u32 %v774, 4294901760
    %v9748 = vsub.f32 %v774, %v9747
    %v9749 = vand.u32 %v9748, 4294901760
    %v9750 = vsub.f32 %v9748, %v9749
    %v9751 = vand.u32 %v9750, 4294901760
    %9752 = vmatpush.msra.mxu0 %v9751
    %v9753 = vand.u32 %v5908, 4294901760
    %9754 = vmatmul.f32.gmra.mxu0 %v9753
    %v9755 = vpop.f32.mrf.mxu0
    %v9756 = vadd.f32 %v9730, %v9755
    %9757 = vdwg.mxu0
    %9758 = vmatpush.msra.mxu0 0.0
    %9759 = vmatpush.msra.mxu0 0.0
    %9760 = vmatpush.msra.mxu0 0.0
    %9761 = vmatpush.msra.mxu0 0.0
    %9762 = vmatpush.msra.mxu0 0.0
    %9763 = vmatpush.msra.mxu0 0.0
    %9764 = vmatpush.msra.mxu0 0.0
    %9765 = vmatpush.msra.mxu0 0.0
    %9766 = vmatpush.msra.mxu0 0.0
    %9767 = vmatpush.msra.mxu0 0.0
    %9768 = vmatpush.msra.mxu0 0.0
    %9769 = vmatpush.msra.mxu0 0.0
    %9770 = vmatpush.msra.mxu0 0.0
    %9771 = vmatpush.msra.mxu0 0.0
    %9772 = vmatpush.msra.mxu0 0.0
    %v9773 = vand.u32 %v774, 4294901760
    %v9774 = vsub.f32 %v774, %v9773
    %9775 = vmatpush.msra.mxu0 %v9774
    %v9776 = vand.u32 %v5908, 4294901760
    %v9777 = vsub.f32 %v5908, %v9776
    %9778 = vmatmul.f32.gmra.mxu0 %v9777
    %v9779 = vpop.f32.mrf.mxu0
    %v9780 = vadd.f32 %v9756, %v9779
    %9781 = vdwg.mxu0
    %9782 = vmatpush.msra.mxu0 0.0
    %9783 = vmatpush.msra.mxu0 0.0
    %9784 = vmatpush.msra.mxu0 0.0
    %9785 = vmatpush.msra.mxu0 0.0
    %9786 = vmatpush.msra.mxu0 0.0
    %9787 = vmatpush.msra.mxu0 0.0
    %9788 = vmatpush.msra.mxu0 0.0
    %9789 = vmatpush.msra.mxu0 0.0
    %9790 = vmatpush.msra.mxu0 0.0
    %9791 = vmatpush.msra.mxu0 0.0
    %9792 = vmatpush.msra.mxu0 0.0
    %9793 = vmatpush.msra.mxu0 0.0
    %9794 = vmatpush.msra.mxu0 0.0
    %9795 = vmatpush.msra.mxu0 0.0
    %9796 = vmatpush.msra.mxu0 0.0
    %v9797 = vand.u32 %v774, 4294901760
    %9798 = vmatpush.msra.mxu0 %v9797
    %v9799 = vand.u32 %v5908, 4294901760
    %v9800 = vsub.f32 %v5908, %v9799
    %v9801 = vand.u32 %v9800, 4294901760
    %9802 = vmatmul.f32.gmra.mxu0 %v9801
    %v9803 = vpop.f32.mrf.mxu0
    %v9804 = vadd.f32 %v9780, %v9803
    %9805 = vdwg.mxu0
    %9806 = vmatpush.msra.mxu0 0.0
    %9807 = vmatpush.msra.mxu0 0.0
    %9808 = vmatpush.msra.mxu0 0.0
    %9809 = vmatpush.msra.mxu0 0.0
    %9810 = vmatpush.msra.mxu0 0.0
    %9811 = vmatpush.msra.mxu0 0.0
    %9812 = vmatpush.msra.mxu0 0.0
    %9813 = vmatpush.msra.mxu0 0.0
    %9814 = vmatpush.msra.mxu0 0.0
    %9815 = vmatpush.msra.mxu0 0.0
    %9816 = vmatpush.msra.mxu0 0.0
    %9817 = vmatpush.msra.mxu0 0.0
    %9818 = vmatpush.msra.mxu0 0.0
    %9819 = vmatpush.msra.mxu0 0.0
    %9820 = vmatpush.msra.mxu0 0.0
    %v9821 = vand.u32 %v774, 4294901760
    %v9822 = vsub.f32 %v774, %v9821
    %v9823 = vand.u32 %v9822, 4294901760
    %9824 = vmatpush.msra.mxu0 %v9823
    %v9825 = vand.u32 %v5908, 4294901760
    %9826 = vmatmul.f32.gmra.mxu0 %v9825
    %v9827 = vpop.f32.mrf.mxu0
    %v9828 = vadd.f32 %v9804, %v9827
    %9829 = vdwg.mxu0
    %9830 = vmatpush.msra.mxu0 0.0
    %9831 = vmatpush.msra.mxu0 0.0
    %9832 = vmatpush.msra.mxu0 0.0
    %9833 = vmatpush.msra.mxu0 0.0
    %9834 = vmatpush.msra.mxu0 0.0
    %9835 = vmatpush.msra.mxu0 0.0
    %9836 = vmatpush.msra.mxu0 0.0
    %9837 = vmatpush.msra.mxu0 0.0
    %9838 = vmatpush.msra.mxu0 0.0
    %9839 = vmatpush.msra.mxu0 0.0
    %9840 = vmatpush.msra.mxu0 0.0
    %9841 = vmatpush.msra.mxu0 0.0
    %9842 = vmatpush.msra.mxu0 0.0
    %9843 = vmatpush.msra.mxu0 0.0
    %9844 = vmatpush.msra.mxu0 0.0
    %v9845 = vand.u32 %v774, 4294901760
    %9846 = vmatpush.msra.mxu0 %v9845
    %v9847 = vand.u32 %v5908, 4294901760
    %9848 = vmatmul.f32.gmra.mxu0 %v9847
    %v9849 = vpop.f32.mrf.mxu0
    %v9850 = vadd.f32 %v9828, %v9849
    %9851 = vdwg.mxu0
    %9852 = vmatpush.msra.mxu0 0.0
    %9853 = vmatpush.msra.mxu0 0.0
    %9854 = vmatpush.msra.mxu0 0.0
    %9855 = vmatpush.msra.mxu0 0.0
    %9856 = vmatpush.msra.mxu0 0.0
    %9857 = vmatpush.msra.mxu0 0.0
    %9858 = vmatpush.msra.mxu0 0.0
    %9859 = vmatpush.msra.mxu0 0.0
    %9860 = vmatpush.msra.mxu0 0.0
    %9861 = vmatpush.msra.mxu0 0.0
    %9862 = vmatpush.msra.mxu0 0.0
    %9863 = vmatpush.msra.mxu0 0.0
    %9864 = vmatpush.msra.mxu0 0.0
    %9865 = vmatpush.msra.mxu0 0.0
    %9866 = vmatpush.msra.mxu0 0.0
    %v9867 = vand.u32 %v775, 4294901760
    %9868 = vmatpush.msra.mxu0 %v9867
    %v9869 = vand.u32 %v5908, 4294901760
    %v9870 = vsub.f32 %v5908, %v9869
    %v9871 = vand.u32 %v9870, 4294901760
    %v9872 = vsub.f32 %v9870, %v9871
    %v9873 = vand.u32 %v9872, 4294901760
    %9874 = vmatmul.f32.gmra.mxu0 %v9873
    %v9875 = vpop.f32.mrf.mxu0
    %v9876 = vadd.f32 0.0, %v9875
    %9877 = vdwg.mxu0
    %9878 = vmatpush.msra.mxu0 0.0
    %9879 = vmatpush.msra.mxu0 0.0
    %9880 = vmatpush.msra.mxu0 0.0
    %9881 = vmatpush.msra.mxu0 0.0
    %9882 = vmatpush.msra.mxu0 0.0
    %9883 = vmatpush.msra.mxu0 0.0
    %9884 = vmatpush.msra.mxu0 0.0
    %9885 = vmatpush.msra.mxu0 0.0
    %9886 = vmatpush.msra.mxu0 0.0
    %9887 = vmatpush.msra.mxu0 0.0
    %9888 = vmatpush.msra.mxu0 0.0
    %9889 = vmatpush.msra.mxu0 0.0
    %9890 = vmatpush.msra.mxu0 0.0
    %9891 = vmatpush.msra.mxu0 0.0
    %9892 = vmatpush.msra.mxu0 0.0
    %v9893 = vand.u32 %v775, 4294901760
    %v9894 = vsub.f32 %v775, %v9893
    %v9895 = vand.u32 %v9894, 4294901760
    %v9896 = vsub.f32 %v9894, %v9895
    %v9897 = vand.u32 %v9896, 4294901760
    %9898 = vmatpush.msra.mxu0 %v9897
    %v9899 = vand.u32 %v5908, 4294901760
    %9900 = vmatmul.f32.gmra.mxu0 %v9899
    %v9901 = vpop.f32.mrf.mxu0
    %v9902 = vadd.f32 %v9876, %v9901
    %9903 = vdwg.mxu0
    %9904 = vmatpush.msra.mxu0 0.0
    %9905 = vmatpush.msra.mxu0 0.0
    %9906 = vmatpush.msra.mxu0 0.0
    %9907 = vmatpush.msra.mxu0 0.0
    %9908 = vmatpush.msra.mxu0 0.0
    %9909 = vmatpush.msra.mxu0 0.0
    %9910 = vmatpush.msra.mxu0 0.0
    %9911 = vmatpush.msra.mxu0 0.0
    %9912 = vmatpush.msra.mxu0 0.0
    %9913 = vmatpush.msra.mxu0 0.0
    %9914 = vmatpush.msra.mxu0 0.0
    %9915 = vmatpush.msra.mxu0 0.0
    %9916 = vmatpush.msra.mxu0 0.0
    %9917 = vmatpush.msra.mxu0 0.0
    %9918 = vmatpush.msra.mxu0 0.0
    %v9919 = vand.u32 %v775, 4294901760
    %v9920 = vsub.f32 %v775, %v9919
    %9921 = vmatpush.msra.mxu0 %v9920
    %v9922 = vand.u32 %v5908, 4294901760
    %v9923 = vsub.f32 %v5908, %v9922
    %9924 = vmatmul.f32.gmra.mxu0 %v9923
    %v9925 = vpop.f32.mrf.mxu0
    %v9926 = vadd.f32 %v9902, %v9925
    %9927 = vdwg.mxu0
    %9928 = vmatpush.msra.mxu0 0.0
    %9929 = vmatpush.msra.mxu0 0.0
    %9930 = vmatpush.msra.mxu0 0.0
    %9931 = vmatpush.msra.mxu0 0.0
    %9932 = vmatpush.msra.mxu0 0.0
    %9933 = vmatpush.msra.mxu0 0.0
    %9934 = vmatpush.msra.mxu0 0.0
    %9935 = vmatpush.msra.mxu0 0.0
    %9936 = vmatpush.msra.mxu0 0.0
    %9937 = vmatpush.msra.mxu0 0.0
    %9938 = vmatpush.msra.mxu0 0.0
    %9939 = vmatpush.msra.mxu0 0.0
    %9940 = vmatpush.msra.mxu0 0.0
    %9941 = vmatpush.msra.mxu0 0.0
    %9942 = vmatpush.msra.mxu0 0.0
    %v9943 = vand.u32 %v775, 4294901760
    %9944 = vmatpush.msra.mxu0 %v9943
    %v9945 = vand.u32 %v5908, 4294901760
    %v9946 = vsub.f32 %v5908, %v9945
    %v9947 = vand.u32 %v9946, 4294901760
    %9948 = vmatmul.f32.gmra.mxu0 %v9947
    %v9949 = vpop.f32.mrf.mxu0
    %v9950 = vadd.f32 %v9926, %v9949
    %9951 = vdwg.mxu0
    %9952 = vmatpush.msra.mxu0 0.0
    %9953 = vmatpush.msra.mxu0 0.0
    %9954 = vmatpush.msra.mxu0 0.0
    %9955 = vmatpush.msra.mxu0 0.0
    %9956 = vmatpush.msra.mxu0 0.0
    %9957 = vmatpush.msra.mxu0 0.0
    %9958 = vmatpush.msra.mxu0 0.0
    %9959 = vmatpush.msra.mxu0 0.0
    %9960 = vmatpush.msra.mxu0 0.0
    %9961 = vmatpush.msra.mxu0 0.0
    %9962 = vmatpush.msra.mxu0 0.0
    %9963 = vmatpush.msra.mxu0 0.0
    %9964 = vmatpush.msra.mxu0 0.0
    %9965 = vmatpush.msra.mxu0 0.0
    %9966 = vmatpush.msra.mxu0 0.0
    %v9967 = vand.u32 %v775, 4294901760
    %v9968 = vsub.f32 %v775, %v9967
    %v9969 = vand.u32 %v9968, 4294901760
    %9970 = vmatpush.msra.mxu0 %v9969
    %v9971 = vand.u32 %v5908, 4294901760
    %9972 = vmatmul.f32.gmra.mxu0 %v9971
    %v9973 = vpop.f32.mrf.mxu0
    %v9974 = vadd.f32 %v9950, %v9973
    %9975 = vdwg.mxu0
    %9976 = vmatpush.msra.mxu0 0.0
    %9977 = vmatpush.msra.mxu0 0.0
    %9978 = vmatpush.msra.mxu0 0.0
    %9979 = vmatpush.msra.mxu0 0.0
    %9980 = vmatpush.msra.mxu0 0.0
    %9981 = vmatpush.msra.mxu0 0.0
    %9982 = vmatpush.msra.mxu0 0.0
    %9983 = vmatpush.msra.mxu0 0.0
    %9984 = vmatpush.msra.mxu0 0.0
    %9985 = vmatpush.msra.mxu0 0.0
    %9986 = vmatpush.msra.mxu0 0.0
    %9987 = vmatpush.msra.mxu0 0.0
    %9988 = vmatpush.msra.mxu0 0.0
    %9989 = vmatpush.msra.mxu0 0.0
    %9990 = vmatpush.msra.mxu0 0.0
    %v9991 = vand.u32 %v775, 4294901760
    %9992 = vmatpush.msra.mxu0 %v9991
    %v9993 = vand.u32 %v5908, 4294901760
    %9994 = vmatmul.f32.gmra.mxu0 %v9993
    %v9995 = vpop.f32.mrf.mxu0
    %v9996 = vadd.f32 %v9974, %v9995
    %9997 = vdwg.mxu0
    %9998 = vmatpush.msra.mxu0 0.0
    %9999 = vmatpush.msra.mxu0 0.0
    %10000 = vmatpush.msra.mxu0 0.0
    %10001 = vmatpush.msra.mxu0 0.0
    %10002 = vmatpush.msra.mxu0 0.0
    %10003 = vmatpush.msra.mxu0 0.0
    %10004 = vmatpush.msra.mxu0 0.0
    %10005 = vmatpush.msra.mxu0 0.0
    %10006 = vmatpush.msra.mxu0 0.0
    %10007 = vmatpush.msra.mxu0 0.0
    %10008 = vmatpush.msra.mxu0 0.0
    %10009 = vmatpush.msra.mxu0 0.0
    %10010 = vmatpush.msra.mxu0 0.0
    %10011 = vmatpush.msra.mxu0 0.0
    %10012 = vmatpush.msra.mxu0 0.0
    %v10013 = vand.u32 %v776, 4294901760
    %10014 = vmatpush.msra.mxu0 %v10013
    %v10015 = vand.u32 %v5908, 4294901760
    %v10016 = vsub.f32 %v5908, %v10015
    %v10017 = vand.u32 %v10016, 4294901760
    %v10018 = vsub.f32 %v10016, %v10017
    %v10019 = vand.u32 %v10018, 4294901760
    %10020 = vmatmul.f32.gmra.mxu0 %v10019
    %v10021 = vpop.f32.mrf.mxu0
    %v10022 = vadd.f32 0.0, %v10021
    %10023 = vdwg.mxu0
    %10024 = vmatpush.msra.mxu0 0.0
    %10025 = vmatpush.msra.mxu0 0.0
    %10026 = vmatpush.msra.mxu0 0.0
    %10027 = vmatpush.msra.mxu0 0.0
    %10028 = vmatpush.msra.mxu0 0.0
    %10029 = vmatpush.msra.mxu0 0.0
    %10030 = vmatpush.msra.mxu0 0.0
    %10031 = vmatpush.msra.mxu0 0.0
    %10032 = vmatpush.msra.mxu0 0.0
    %10033 = vmatpush.msra.mxu0 0.0
    %10034 = vmatpush.msra.mxu0 0.0
    %10035 = vmatpush.msra.mxu0 0.0
    %10036 = vmatpush.msra.mxu0 0.0
    %10037 = vmatpush.msra.mxu0 0.0
    %10038 = vmatpush.msra.mxu0 0.0
    %v10039 = vand.u32 %v776, 4294901760
    %v10040 = vsub.f32 %v776, %v10039
    %v10041 = vand.u32 %v10040, 4294901760
    %v10042 = vsub.f32 %v10040, %v10041
    %v10043 = vand.u32 %v10042, 4294901760
    %10044 = vmatpush.msra.mxu0 %v10043
    %v10045 = vand.u32 %v5908, 4294901760
    %10046 = vmatmul.f32.gmra.mxu0 %v10045
    %v10047 = vpop.f32.mrf.mxu0
    %v10048 = vadd.f32 %v10022, %v10047
    %10049 = vdwg.mxu0
    %10050 = vmatpush.msra.mxu0 0.0
    %10051 = vmatpush.msra.mxu0 0.0
    %10052 = vmatpush.msra.mxu0 0.0
    %10053 = vmatpush.msra.mxu0 0.0
    %10054 = vmatpush.msra.mxu0 0.0
    %10055 = vmatpush.msra.mxu0 0.0
    %10056 = vmatpush.msra.mxu0 0.0
    %10057 = vmatpush.msra.mxu0 0.0
    %10058 = vmatpush.msra.mxu0 0.0
    %10059 = vmatpush.msra.mxu0 0.0
    %10060 = vmatpush.msra.mxu0 0.0
    %10061 = vmatpush.msra.mxu0 0.0
    %10062 = vmatpush.msra.mxu0 0.0
    %10063 = vmatpush.msra.mxu0 0.0
    %10064 = vmatpush.msra.mxu0 0.0
    %v10065 = vand.u32 %v776, 4294901760
    %v10066 = vsub.f32 %v776, %v10065
    %10067 = vmatpush.msra.mxu0 %v10066
    %v10068 = vand.u32 %v5908, 4294901760
    %v10069 = vsub.f32 %v5908, %v10068
    %10070 = vmatmul.f32.gmra.mxu0 %v10069
    %v10071 = vpop.f32.mrf.mxu0
    %v10072 = vadd.f32 %v10048, %v10071
    %10073 = vdwg.mxu0
    %10074 = vmatpush.msra.mxu0 0.0
    %10075 = vmatpush.msra.mxu0 0.0
    %10076 = vmatpush.msra.mxu0 0.0
    %10077 = vmatpush.msra.mxu0 0.0
    %10078 = vmatpush.msra.mxu0 0.0
    %10079 = vmatpush.msra.mxu0 0.0
    %10080 = vmatpush.msra.mxu0 0.0
    %10081 = vmatpush.msra.mxu0 0.0
    %10082 = vmatpush.msra.mxu0 0.0
    %10083 = vmatpush.msra.mxu0 0.0
    %10084 = vmatpush.msra.mxu0 0.0
    %10085 = vmatpush.msra.mxu0 0.0
    %10086 = vmatpush.msra.mxu0 0.0
    %10087 = vmatpush.msra.mxu0 0.0
    %10088 = vmatpush.msra.mxu0 0.0
    %v10089 = vand.u32 %v776, 4294901760
    %10090 = vmatpush.msra.mxu0 %v10089
    %v10091 = vand.u32 %v5908, 4294901760
    %v10092 = vsub.f32 %v5908, %v10091
    %v10093 = vand.u32 %v10092, 4294901760
    %10094 = vmatmul.f32.gmra.mxu0 %v10093
    %v10095 = vpop.f32.mrf.mxu0
    %v10096 = vadd.f32 %v10072, %v10095
    %10097 = vdwg.mxu0
    %10098 = vmatpush.msra.mxu0 0.0
    %10099 = vmatpush.msra.mxu0 0.0
    %10100 = vmatpush.msra.mxu0 0.0
    %10101 = vmatpush.msra.mxu0 0.0
    %10102 = vmatpush.msra.mxu0 0.0
    %10103 = vmatpush.msra.mxu0 0.0
    %10104 = vmatpush.msra.mxu0 0.0
    %10105 = vmatpush.msra.mxu0 0.0
    %10106 = vmatpush.msra.mxu0 0.0
    %10107 = vmatpush.msra.mxu0 0.0
    %10108 = vmatpush.msra.mxu0 0.0
    %10109 = vmatpush.msra.mxu0 0.0
    %10110 = vmatpush.msra.mxu0 0.0
    %10111 = vmatpush.msra.mxu0 0.0
    %10112 = vmatpush.msra.mxu0 0.0
    %v10113 = vand.u32 %v776, 4294901760
    %v10114 = vsub.f32 %v776, %v10113
    %v10115 = vand.u32 %v10114, 4294901760
    %10116 = vmatpush.msra.mxu0 %v10115
    %v10117 = vand.u32 %v5908, 4294901760
    %10118 = vmatmul.f32.gmra.mxu0 %v10117
    %v10119 = vpop.f32.mrf.mxu0
    %v10120 = vadd.f32 %v10096, %v10119
    %10121 = vdwg.mxu0
    %10122 = vmatpush.msra.mxu0 0.0
    %10123 = vmatpush.msra.mxu0 0.0
    %10124 = vmatpush.msra.mxu0 0.0
    %10125 = vmatpush.msra.mxu0 0.0
    %10126 = vmatpush.msra.mxu0 0.0
    %10127 = vmatpush.msra.mxu0 0.0
    %10128 = vmatpush.msra.mxu0 0.0
    %10129 = vmatpush.msra.mxu0 0.0
    %10130 = vmatpush.msra.mxu0 0.0
    %10131 = vmatpush.msra.mxu0 0.0
    %10132 = vmatpush.msra.mxu0 0.0
    %10133 = vmatpush.msra.mxu0 0.0
    %10134 = vmatpush.msra.mxu0 0.0
    %10135 = vmatpush.msra.mxu0 0.0
    %10136 = vmatpush.msra.mxu0 0.0
    %v10137 = vand.u32 %v776, 4294901760
    %10138 = vmatpush.msra.mxu0 %v10137
    %v10139 = vand.u32 %v5908, 4294901760
    %10140 = vmatmul.f32.gmra.mxu0 %v10139
    %v10141 = vpop.f32.mrf.mxu0
    %v10142 = vadd.f32 %v10120, %v10141
    %10143 = vdwg.mxu0
    %10144 = vmatpush.msra.mxu0 0.0
    %10145 = vmatpush.msra.mxu0 0.0
    %10146 = vmatpush.msra.mxu0 0.0
    %10147 = vmatpush.msra.mxu0 0.0
    %10148 = vmatpush.msra.mxu0 0.0
    %10149 = vmatpush.msra.mxu0 0.0
    %10150 = vmatpush.msra.mxu0 0.0
    %10151 = vmatpush.msra.mxu0 0.0
    %10152 = vmatpush.msra.mxu0 0.0
    %10153 = vmatpush.msra.mxu0 0.0
    %10154 = vmatpush.msra.mxu0 0.0
    %10155 = vmatpush.msra.mxu0 0.0
    %10156 = vmatpush.msra.mxu0 0.0
    %10157 = vmatpush.msra.mxu0 0.0
    %10158 = vmatpush.msra.mxu0 0.0
    %v10159 = vand.u32 %v777, 4294901760
    %10160 = vmatpush.msra.mxu0 %v10159
    %v10161 = vand.u32 %v5908, 4294901760
    %v10162 = vsub.f32 %v5908, %v10161
    %v10163 = vand.u32 %v10162, 4294901760
    %v10164 = vsub.f32 %v10162, %v10163
    %v10165 = vand.u32 %v10164, 4294901760
    %10166 = vmatmul.f32.gmra.mxu0 %v10165
    %v10167 = vpop.f32.mrf.mxu0
    %v10168 = vadd.f32 0.0, %v10167
    %10169 = vdwg.mxu0
    %10170 = vmatpush.msra.mxu0 0.0
    %10171 = vmatpush.msra.mxu0 0.0
    %10172 = vmatpush.msra.mxu0 0.0
    %10173 = vmatpush.msra.mxu0 0.0
    %10174 = vmatpush.msra.mxu0 0.0
    %10175 = vmatpush.msra.mxu0 0.0
    %10176 = vmatpush.msra.mxu0 0.0
    %10177 = vmatpush.msra.mxu0 0.0
    %10178 = vmatpush.msra.mxu0 0.0
    %10179 = vmatpush.msra.mxu0 0.0
    %10180 = vmatpush.msra.mxu0 0.0
    %10181 = vmatpush.msra.mxu0 0.0
    %10182 = vmatpush.msra.mxu0 0.0
    %10183 = vmatpush.msra.mxu0 0.0
    %10184 = vmatpush.msra.mxu0 0.0
    %v10185 = vand.u32 %v777, 4294901760
    %v10186 = vsub.f32 %v777, %v10185
    %v10187 = vand.u32 %v10186, 4294901760
    %v10188 = vsub.f32 %v10186, %v10187
    %v10189 = vand.u32 %v10188, 4294901760
    %10190 = vmatpush.msra.mxu0 %v10189
    %v10191 = vand.u32 %v5908, 4294901760
    %10192 = vmatmul.f32.gmra.mxu0 %v10191
    %v10193 = vpop.f32.mrf.mxu0
    %v10194 = vadd.f32 %v10168, %v10193
    %10195 = vdwg.mxu0
    %10196 = vmatpush.msra.mxu0 0.0
    %10197 = vmatpush.msra.mxu0 0.0
    %10198 = vmatpush.msra.mxu0 0.0
    %10199 = vmatpush.msra.mxu0 0.0
    %10200 = vmatpush.msra.mxu0 0.0
    %10201 = vmatpush.msra.mxu0 0.0
    %10202 = vmatpush.msra.mxu0 0.0
    %10203 = vmatpush.msra.mxu0 0.0
    %10204 = vmatpush.msra.mxu0 0.0
    %10205 = vmatpush.msra.mxu0 0.0
    %10206 = vmatpush.msra.mxu0 0.0
    %10207 = vmatpush.msra.mxu0 0.0
    %10208 = vmatpush.msra.mxu0 0.0
    %10209 = vmatpush.msra.mxu0 0.0
    %10210 = vmatpush.msra.mxu0 0.0
    %v10211 = vand.u32 %v777, 4294901760
    %v10212 = vsub.f32 %v777, %v10211
    %10213 = vmatpush.msra.mxu0 %v10212
    %v10214 = vand.u32 %v5908, 4294901760
    %v10215 = vsub.f32 %v5908, %v10214
    %10216 = vmatmul.f32.gmra.mxu0 %v10215
    %v10217 = vpop.f32.mrf.mxu0
    %v10218 = vadd.f32 %v10194, %v10217
    %10219 = vdwg.mxu0
    %10220 = vmatpush.msra.mxu0 0.0
    %10221 = vmatpush.msra.mxu0 0.0
    %10222 = vmatpush.msra.mxu0 0.0
    %10223 = vmatpush.msra.mxu0 0.0
    %10224 = vmatpush.msra.mxu0 0.0
    %10225 = vmatpush.msra.mxu0 0.0
    %10226 = vmatpush.msra.mxu0 0.0
    %10227 = vmatpush.msra.mxu0 0.0
    %10228 = vmatpush.msra.mxu0 0.0
    %10229 = vmatpush.msra.mxu0 0.0
    %10230 = vmatpush.msra.mxu0 0.0
    %10231 = vmatpush.msra.mxu0 0.0
    %10232 = vmatpush.msra.mxu0 0.0
    %10233 = vmatpush.msra.mxu0 0.0
    %10234 = vmatpush.msra.mxu0 0.0
    %v10235 = vand.u32 %v777, 4294901760
    %10236 = vmatpush.msra.mxu0 %v10235
    %v10237 = vand.u32 %v5908, 4294901760
    %v10238 = vsub.f32 %v5908, %v10237
    %v10239 = vand.u32 %v10238, 4294901760
    %10240 = vmatmul.f32.gmra.mxu0 %v10239
    %v10241 = vpop.f32.mrf.mxu0
    %v10242 = vadd.f32 %v10218, %v10241
    %10243 = vdwg.mxu0
    %10244 = vmatpush.msra.mxu0 0.0
    %10245 = vmatpush.msra.mxu0 0.0
    %10246 = vmatpush.msra.mxu0 0.0
    %10247 = vmatpush.msra.mxu0 0.0
    %10248 = vmatpush.msra.mxu0 0.0
    %10249 = vmatpush.msra.mxu0 0.0
    %10250 = vmatpush.msra.mxu0 0.0
    %10251 = vmatpush.msra.mxu0 0.0
    %10252 = vmatpush.msra.mxu0 0.0
    %10253 = vmatpush.msra.mxu0 0.0
    %10254 = vmatpush.msra.mxu0 0.0
    %10255 = vmatpush.msra.mxu0 0.0
    %10256 = vmatpush.msra.mxu0 0.0
    %10257 = vmatpush.msra.mxu0 0.0
    %10258 = vmatpush.msra.mxu0 0.0
    %v10259 = vand.u32 %v777, 4294901760
    %v10260 = vsub.f32 %v777, %v10259
    %v10261 = vand.u32 %v10260, 4294901760
    %10262 = vmatpush.msra.mxu0 %v10261
    %v10263 = vand.u32 %v5908, 4294901760
    %10264 = vmatmul.f32.gmra.mxu0 %v10263
    %v10265 = vpop.f32.mrf.mxu0
    %v10266 = vadd.f32 %v10242, %v10265
    %10267 = vdwg.mxu0
    %10268 = vmatpush.msra.mxu0 0.0
    %10269 = vmatpush.msra.mxu0 0.0
    %10270 = vmatpush.msra.mxu0 0.0
    %10271 = vmatpush.msra.mxu0 0.0
    %10272 = vmatpush.msra.mxu0 0.0
    %10273 = vmatpush.msra.mxu0 0.0
    %10274 = vmatpush.msra.mxu0 0.0
    %10275 = vmatpush.msra.mxu0 0.0
    %10276 = vmatpush.msra.mxu0 0.0
    %10277 = vmatpush.msra.mxu0 0.0
    %10278 = vmatpush.msra.mxu0 0.0
    %10279 = vmatpush.msra.mxu0 0.0
    %10280 = vmatpush.msra.mxu0 0.0
    %10281 = vmatpush.msra.mxu0 0.0
    %10282 = vmatpush.msra.mxu0 0.0
    %v10283 = vand.u32 %v777, 4294901760
    %10284 = vmatpush.msra.mxu0 %v10283
    %v10285 = vand.u32 %v5908, 4294901760
    %10286 = vmatmul.f32.gmra.mxu0 %v10285
    %v10287 = vpop.f32.mrf.mxu0
    %v10288 = vadd.f32 %v10266, %v10287
    %10289 = vdwg.mxu0
    %10290 = vmatpush.msra.mxu0 0.0
    %10291 = vmatpush.msra.mxu0 0.0
    %10292 = vmatpush.msra.mxu0 0.0
    %10293 = vmatpush.msra.mxu0 0.0
    %10294 = vmatpush.msra.mxu0 0.0
    %10295 = vmatpush.msra.mxu0 0.0
    %10296 = vmatpush.msra.mxu0 0.0
    %10297 = vmatpush.msra.mxu0 0.0
    %10298 = vmatpush.msra.mxu0 0.0
    %10299 = vmatpush.msra.mxu0 0.0
    %10300 = vmatpush.msra.mxu0 0.0
    %10301 = vmatpush.msra.mxu0 0.0
    %10302 = vmatpush.msra.mxu0 0.0
    %10303 = vmatpush.msra.mxu0 0.0
    %10304 = vmatpush.msra.mxu0 0.0
    %v10305 = vand.u32 %v778, 4294901760
    %10306 = vmatpush.msra.mxu0 %v10305
    %v10307 = vand.u32 %v5908, 4294901760
    %v10308 = vsub.f32 %v5908, %v10307
    %v10309 = vand.u32 %v10308, 4294901760
    %v10310 = vsub.f32 %v10308, %v10309
    %v10311 = vand.u32 %v10310, 4294901760
    %10312 = vmatmul.f32.gmra.mxu0 %v10311
    %v10313 = vpop.f32.mrf.mxu0
    %v10314 = vadd.f32 0.0, %v10313
    %10315 = vdwg.mxu0
    %10316 = vmatpush.msra.mxu0 0.0
    %10317 = vmatpush.msra.mxu0 0.0
    %10318 = vmatpush.msra.mxu0 0.0
    %10319 = vmatpush.msra.mxu0 0.0
    %10320 = vmatpush.msra.mxu0 0.0
    %10321 = vmatpush.msra.mxu0 0.0
    %10322 = vmatpush.msra.mxu0 0.0
    %10323 = vmatpush.msra.mxu0 0.0
    %10324 = vmatpush.msra.mxu0 0.0
    %10325 = vmatpush.msra.mxu0 0.0
    %10326 = vmatpush.msra.mxu0 0.0
    %10327 = vmatpush.msra.mxu0 0.0
    %10328 = vmatpush.msra.mxu0 0.0
    %10329 = vmatpush.msra.mxu0 0.0
    %10330 = vmatpush.msra.mxu0 0.0
    %v10331 = vand.u32 %v778, 4294901760
    %v10332 = vsub.f32 %v778, %v10331
    %v10333 = vand.u32 %v10332, 4294901760
    %v10334 = vsub.f32 %v10332, %v10333
    %v10335 = vand.u32 %v10334, 4294901760
    %10336 = vmatpush.msra.mxu0 %v10335
    %v10337 = vand.u32 %v5908, 4294901760
    %10338 = vmatmul.f32.gmra.mxu0 %v10337
    %v10339 = vpop.f32.mrf.mxu0
    %v10340 = vadd.f32 %v10314, %v10339
    %10341 = vdwg.mxu0
    %10342 = vmatpush.msra.mxu0 0.0
    %10343 = vmatpush.msra.mxu0 0.0
    %10344 = vmatpush.msra.mxu0 0.0
    %10345 = vmatpush.msra.mxu0 0.0
    %10346 = vmatpush.msra.mxu0 0.0
    %10347 = vmatpush.msra.mxu0 0.0
    %10348 = vmatpush.msra.mxu0 0.0
    %10349 = vmatpush.msra.mxu0 0.0
    %10350 = vmatpush.msra.mxu0 0.0
    %10351 = vmatpush.msra.mxu0 0.0
    %10352 = vmatpush.msra.mxu0 0.0
    %10353 = vmatpush.msra.mxu0 0.0
    %10354 = vmatpush.msra.mxu0 0.0
    %10355 = vmatpush.msra.mxu0 0.0
    %10356 = vmatpush.msra.mxu0 0.0
    %v10357 = vand.u32 %v778, 4294901760
    %v10358 = vsub.f32 %v778, %v10357
    %10359 = vmatpush.msra.mxu0 %v10358
    %v10360 = vand.u32 %v5908, 4294901760
    %v10361 = vsub.f32 %v5908, %v10360
    %10362 = vmatmul.f32.gmra.mxu0 %v10361
    %v10363 = vpop.f32.mrf.mxu0
    %v10364 = vadd.f32 %v10340, %v10363
    %10365 = vdwg.mxu0
    %10366 = vmatpush.msra.mxu0 0.0
    %10367 = vmatpush.msra.mxu0 0.0
    %10368 = vmatpush.msra.mxu0 0.0
    %10369 = vmatpush.msra.mxu0 0.0
    %10370 = vmatpush.msra.mxu0 0.0
    %10371 = vmatpush.msra.mxu0 0.0
    %10372 = vmatpush.msra.mxu0 0.0
    %10373 = vmatpush.msra.mxu0 0.0
    %10374 = vmatpush.msra.mxu0 0.0
    %10375 = vmatpush.msra.mxu0 0.0
    %10376 = vmatpush.msra.mxu0 0.0
    %10377 = vmatpush.msra.mxu0 0.0
    %10378 = vmatpush.msra.mxu0 0.0
    %10379 = vmatpush.msra.mxu0 0.0
    %10380 = vmatpush.msra.mxu0 0.0
    %v10381 = vand.u32 %v778, 4294901760
    %10382 = vmatpush.msra.mxu0 %v10381
    %v10383 = vand.u32 %v5908, 4294901760
    %v10384 = vsub.f32 %v5908, %v10383
    %v10385 = vand.u32 %v10384, 4294901760
    %10386 = vmatmul.f32.gmra.mxu0 %v10385
    %v10387 = vpop.f32.mrf.mxu0
    %v10388 = vadd.f32 %v10364, %v10387
    %10389 = vdwg.mxu0
    %10390 = vmatpush.msra.mxu0 0.0
    %10391 = vmatpush.msra.mxu0 0.0
    %10392 = vmatpush.msra.mxu0 0.0
    %10393 = vmatpush.msra.mxu0 0.0
    %10394 = vmatpush.msra.mxu0 0.0
    %10395 = vmatpush.msra.mxu0 0.0
    %10396 = vmatpush.msra.mxu0 0.0
    %10397 = vmatpush.msra.mxu0 0.0
    %10398 = vmatpush.msra.mxu0 0.0
    %10399 = vmatpush.msra.mxu0 0.0
    %10400 = vmatpush.msra.mxu0 0.0
    %10401 = vmatpush.msra.mxu0 0.0
    %10402 = vmatpush.msra.mxu0 0.0
    %10403 = vmatpush.msra.mxu0 0.0
    %10404 = vmatpush.msra.mxu0 0.0
    %v10405 = vand.u32 %v778, 4294901760
    %v10406 = vsub.f32 %v778, %v10405
    %v10407 = vand.u32 %v10406, 4294901760
    %10408 = vmatpush.msra.mxu0 %v10407
    %v10409 = vand.u32 %v5908, 4294901760
    %10410 = vmatmul.f32.gmra.mxu0 %v10409
    %v10411 = vpop.f32.mrf.mxu0
    %v10412 = vadd.f32 %v10388, %v10411
    %10413 = vdwg.mxu0
    %10414 = vmatpush.msra.mxu0 0.0
    %10415 = vmatpush.msra.mxu0 0.0
    %10416 = vmatpush.msra.mxu0 0.0
    %10417 = vmatpush.msra.mxu0 0.0
    %10418 = vmatpush.msra.mxu0 0.0
    %10419 = vmatpush.msra.mxu0 0.0
    %10420 = vmatpush.msra.mxu0 0.0
    %10421 = vmatpush.msra.mxu0 0.0
    %10422 = vmatpush.msra.mxu0 0.0
    %10423 = vmatpush.msra.mxu0 0.0
    %10424 = vmatpush.msra.mxu0 0.0
    %10425 = vmatpush.msra.mxu0 0.0
    %10426 = vmatpush.msra.mxu0 0.0
    %10427 = vmatpush.msra.mxu0 0.0
    %10428 = vmatpush.msra.mxu0 0.0
    %v10429 = vand.u32 %v778, 4294901760
    %10430 = vmatpush.msra.mxu0 %v10429
    %v10431 = vand.u32 %v5908, 4294901760
    %10432 = vmatmul.f32.gmra.mxu0 %v10431
    %v10433 = vpop.f32.mrf.mxu0
    %v10434 = vadd.f32 %v10412, %v10433
    %10435 = vdwg.mxu0
    %10436 = vmatpush.msra.mxu0 0.0
    %10437 = vmatpush.msra.mxu0 0.0
    %10438 = vmatpush.msra.mxu0 0.0
    %10439 = vmatpush.msra.mxu0 0.0
    %10440 = vmatpush.msra.mxu0 0.0
    %10441 = vmatpush.msra.mxu0 0.0
    %10442 = vmatpush.msra.mxu0 0.0
    %10443 = vmatpush.msra.mxu0 0.0
    %10444 = vmatpush.msra.mxu0 0.0
    %10445 = vmatpush.msra.mxu0 0.0
    %10446 = vmatpush.msra.mxu0 0.0
    %10447 = vmatpush.msra.mxu0 0.0
    %10448 = vmatpush.msra.mxu0 0.0
    %10449 = vmatpush.msra.mxu0 0.0
    %10450 = vmatpush.msra.mxu0 0.0
    %v10451 = vand.u32 %v779, 4294901760
    %10452 = vmatpush.msra.mxu0 %v10451
    %v10453 = vand.u32 %v5908, 4294901760
    %v10454 = vsub.f32 %v5908, %v10453
    %v10455 = vand.u32 %v10454, 4294901760
    %v10456 = vsub.f32 %v10454, %v10455
    %v10457 = vand.u32 %v10456, 4294901760
    %10458 = vmatmul.f32.gmra.mxu0 %v10457
    %v10459 = vpop.f32.mrf.mxu0
    %v10460 = vadd.f32 0.0, %v10459
    %10461 = vdwg.mxu0
    %10462 = vmatpush.msra.mxu0 0.0
    %10463 = vmatpush.msra.mxu0 0.0
    %10464 = vmatpush.msra.mxu0 0.0
    %10465 = vmatpush.msra.mxu0 0.0
    %10466 = vmatpush.msra.mxu0 0.0
    %10467 = vmatpush.msra.mxu0 0.0
    %10468 = vmatpush.msra.mxu0 0.0
    %10469 = vmatpush.msra.mxu0 0.0
    %10470 = vmatpush.msra.mxu0 0.0
    %10471 = vmatpush.msra.mxu0 0.0
    %10472 = vmatpush.msra.mxu0 0.0
    %10473 = vmatpush.msra.mxu0 0.0
    %10474 = vmatpush.msra.mxu0 0.0
    %10475 = vmatpush.msra.mxu0 0.0
    %10476 = vmatpush.msra.mxu0 0.0
    %v10477 = vand.u32 %v779, 4294901760
    %v10478 = vsub.f32 %v779, %v10477
    %v10479 = vand.u32 %v10478, 4294901760
    %v10480 = vsub.f32 %v10478, %v10479
    %v10481 = vand.u32 %v10480, 4294901760
    %10482 = vmatpush.msra.mxu0 %v10481
    %v10483 = vand.u32 %v5908, 4294901760
    %10484 = vmatmul.f32.gmra.mxu0 %v10483
    %v10485 = vpop.f32.mrf.mxu0
    %v10486 = vadd.f32 %v10460, %v10485
    %10487 = vdwg.mxu0
    %10488 = vmatpush.msra.mxu0 0.0
    %10489 = vmatpush.msra.mxu0 0.0
    %10490 = vmatpush.msra.mxu0 0.0
    %10491 = vmatpush.msra.mxu0 0.0
    %10492 = vmatpush.msra.mxu0 0.0
    %10493 = vmatpush.msra.mxu0 0.0
    %10494 = vmatpush.msra.mxu0 0.0
    %10495 = vmatpush.msra.mxu0 0.0
    %10496 = vmatpush.msra.mxu0 0.0
    %10497 = vmatpush.msra.mxu0 0.0
    %10498 = vmatpush.msra.mxu0 0.0
    %10499 = vmatpush.msra.mxu0 0.0
    %10500 = vmatpush.msra.mxu0 0.0
    %10501 = vmatpush.msra.mxu0 0.0
    %10502 = vmatpush.msra.mxu0 0.0
    %v10503 = vand.u32 %v779, 4294901760
    %v10504 = vsub.f32 %v779, %v10503
    %10505 = vmatpush.msra.mxu0 %v10504
    %v10506 = vand.u32 %v5908, 4294901760
    %v10507 = vsub.f32 %v5908, %v10506
    %10508 = vmatmul.f32.gmra.mxu0 %v10507
    %v10509 = vpop.f32.mrf.mxu0
    %v10510 = vadd.f32 %v10486, %v10509
    %10511 = vdwg.mxu0
    %10512 = vmatpush.msra.mxu0 0.0
    %10513 = vmatpush.msra.mxu0 0.0
    %10514 = vmatpush.msra.mxu0 0.0
    %10515 = vmatpush.msra.mxu0 0.0
    %10516 = vmatpush.msra.mxu0 0.0
    %10517 = vmatpush.msra.mxu0 0.0
    %10518 = vmatpush.msra.mxu0 0.0
    %10519 = vmatpush.msra.mxu0 0.0
    %10520 = vmatpush.msra.mxu0 0.0
    %10521 = vmatpush.msra.mxu0 0.0
    %10522 = vmatpush.msra.mxu0 0.0
    %10523 = vmatpush.msra.mxu0 0.0
    %10524 = vmatpush.msra.mxu0 0.0
    %10525 = vmatpush.msra.mxu0 0.0
    %10526 = vmatpush.msra.mxu0 0.0
    %v10527 = vand.u32 %v779, 4294901760
    %10528 = vmatpush.msra.mxu0 %v10527
    %v10529 = vand.u32 %v5908, 4294901760
    %v10530 = vsub.f32 %v5908, %v10529
    %v10531 = vand.u32 %v10530, 4294901760
    %10532 = vmatmul.f32.gmra.mxu0 %v10531
    %v10533 = vpop.f32.mrf.mxu0
    %v10534 = vadd.f32 %v10510, %v10533
    %10535 = vdwg.mxu0
    %10536 = vmatpush.msra.mxu0 0.0
    %10537 = vmatpush.msra.mxu0 0.0
    %10538 = vmatpush.msra.mxu0 0.0
    %10539 = vmatpush.msra.mxu0 0.0
    %10540 = vmatpush.msra.mxu0 0.0
    %10541 = vmatpush.msra.mxu0 0.0
    %10542 = vmatpush.msra.mxu0 0.0
    %10543 = vmatpush.msra.mxu0 0.0
    %10544 = vmatpush.msra.mxu0 0.0
    %10545 = vmatpush.msra.mxu0 0.0
    %10546 = vmatpush.msra.mxu0 0.0
    %10547 = vmatpush.msra.mxu0 0.0
    %10548 = vmatpush.msra.mxu0 0.0
    %10549 = vmatpush.msra.mxu0 0.0
    %10550 = vmatpush.msra.mxu0 0.0
    %v10551 = vand.u32 %v779, 4294901760
    %v10552 = vsub.f32 %v779, %v10551
    %v10553 = vand.u32 %v10552, 4294901760
    %10554 = vmatpush.msra.mxu0 %v10553
    %v10555 = vand.u32 %v5908, 4294901760
    %10556 = vmatmul.f32.gmra.mxu0 %v10555
    %v10557 = vpop.f32.mrf.mxu0
    %v10558 = vadd.f32 %v10534, %v10557
    %10559 = vdwg.mxu0
    %10560 = vmatpush.msra.mxu0 0.0
    %10561 = vmatpush.msra.mxu0 0.0
    %10562 = vmatpush.msra.mxu0 0.0
    %10563 = vmatpush.msra.mxu0 0.0
    %10564 = vmatpush.msra.mxu0 0.0
    %10565 = vmatpush.msra.mxu0 0.0
    %10566 = vmatpush.msra.mxu0 0.0
    %10567 = vmatpush.msra.mxu0 0.0
    %10568 = vmatpush.msra.mxu0 0.0
    %10569 = vmatpush.msra.mxu0 0.0
    %10570 = vmatpush.msra.mxu0 0.0
    %10571 = vmatpush.msra.mxu0 0.0
    %10572 = vmatpush.msra.mxu0 0.0
    %10573 = vmatpush.msra.mxu0 0.0
    %10574 = vmatpush.msra.mxu0 0.0
    %v10575 = vand.u32 %v779, 4294901760
    %10576 = vmatpush.msra.mxu0 %v10575
    %v10577 = vand.u32 %v5908, 4294901760
    %10578 = vmatmul.f32.gmra.mxu0 %v10577
    %v10579 = vpop.f32.mrf.mxu0
    %v10580 = vadd.f32 %v10558, %v10579
    %10581 = vdwg.mxu0
    %10582 = vmatpush.msra.mxu0 0.0
    %10583 = vmatpush.msra.mxu0 0.0
    %10584 = vmatpush.msra.mxu0 0.0
    %10585 = vmatpush.msra.mxu0 0.0
    %10586 = vmatpush.msra.mxu0 0.0
    %10587 = vmatpush.msra.mxu0 0.0
    %10588 = vmatpush.msra.mxu0 0.0
    %10589 = vmatpush.msra.mxu0 0.0
    %10590 = vmatpush.msra.mxu0 0.0
    %10591 = vmatpush.msra.mxu0 0.0
    %10592 = vmatpush.msra.mxu0 0.0
    %10593 = vmatpush.msra.mxu0 0.0
    %10594 = vmatpush.msra.mxu0 0.0
    %10595 = vmatpush.msra.mxu0 0.0
    %10596 = vmatpush.msra.mxu0 0.0
    %v10597 = vand.u32 %v780, 4294901760
    %10598 = vmatpush.msra.mxu0 %v10597
    %v10599 = vand.u32 %v5908, 4294901760
    %v10600 = vsub.f32 %v5908, %v10599
    %v10601 = vand.u32 %v10600, 4294901760
    %v10602 = vsub.f32 %v10600, %v10601
    %v10603 = vand.u32 %v10602, 4294901760
    %10604 = vmatmul.f32.gmra.mxu0 %v10603
    %v10605 = vpop.f32.mrf.mxu0
    %v10606 = vadd.f32 0.0, %v10605
    %10607 = vdwg.mxu0
    %10608 = vmatpush.msra.mxu0 0.0
    %10609 = vmatpush.msra.mxu0 0.0
    %10610 = vmatpush.msra.mxu0 0.0
    %10611 = vmatpush.msra.mxu0 0.0
    %10612 = vmatpush.msra.mxu0 0.0
    %10613 = vmatpush.msra.mxu0 0.0
    %10614 = vmatpush.msra.mxu0 0.0
    %10615 = vmatpush.msra.mxu0 0.0
    %10616 = vmatpush.msra.mxu0 0.0
    %10617 = vmatpush.msra.mxu0 0.0
    %10618 = vmatpush.msra.mxu0 0.0
    %10619 = vmatpush.msra.mxu0 0.0
    %10620 = vmatpush.msra.mxu0 0.0
    %10621 = vmatpush.msra.mxu0 0.0
    %10622 = vmatpush.msra.mxu0 0.0
    %v10623 = vand.u32 %v780, 4294901760
    %v10624 = vsub.f32 %v780, %v10623
    %v10625 = vand.u32 %v10624, 4294901760
    %v10626 = vsub.f32 %v10624, %v10625
    %v10627 = vand.u32 %v10626, 4294901760
    %10628 = vmatpush.msra.mxu0 %v10627
    %v10629 = vand.u32 %v5908, 4294901760
    %10630 = vmatmul.f32.gmra.mxu0 %v10629
    %v10631 = vpop.f32.mrf.mxu0
    %v10632 = vadd.f32 %v10606, %v10631
    %10633 = vdwg.mxu0
    %10634 = vmatpush.msra.mxu0 0.0
    %10635 = vmatpush.msra.mxu0 0.0
    %10636 = vmatpush.msra.mxu0 0.0
    %10637 = vmatpush.msra.mxu0 0.0
    %10638 = vmatpush.msra.mxu0 0.0
    %10639 = vmatpush.msra.mxu0 0.0
    %10640 = vmatpush.msra.mxu0 0.0
    %10641 = vmatpush.msra.mxu0 0.0
    %10642 = vmatpush.msra.mxu0 0.0
    %10643 = vmatpush.msra.mxu0 0.0
    %10644 = vmatpush.msra.mxu0 0.0
    %10645 = vmatpush.msra.mxu0 0.0
    %10646 = vmatpush.msra.mxu0 0.0
    %10647 = vmatpush.msra.mxu0 0.0
    %10648 = vmatpush.msra.mxu0 0.0
    %v10649 = vand.u32 %v780, 4294901760
    %v10650 = vsub.f32 %v780, %v10649
    %10651 = vmatpush.msra.mxu0 %v10650
    %v10652 = vand.u32 %v5908, 4294901760
    %v10653 = vsub.f32 %v5908, %v10652
    %10654 = vmatmul.f32.gmra.mxu0 %v10653
    %v10655 = vpop.f32.mrf.mxu0
    %v10656 = vadd.f32 %v10632, %v10655
    %10657 = vdwg.mxu0
    %10658 = vmatpush.msra.mxu0 0.0
    %10659 = vmatpush.msra.mxu0 0.0
    %10660 = vmatpush.msra.mxu0 0.0
    %10661 = vmatpush.msra.mxu0 0.0
    %10662 = vmatpush.msra.mxu0 0.0
    %10663 = vmatpush.msra.mxu0 0.0
    %10664 = vmatpush.msra.mxu0 0.0
    %10665 = vmatpush.msra.mxu0 0.0
    %10666 = vmatpush.msra.mxu0 0.0
    %10667 = vmatpush.msra.mxu0 0.0
    %10668 = vmatpush.msra.mxu0 0.0
    %10669 = vmatpush.msra.mxu0 0.0
    %10670 = vmatpush.msra.mxu0 0.0
    %10671 = vmatpush.msra.mxu0 0.0
    %10672 = vmatpush.msra.mxu0 0.0
    %v10673 = vand.u32 %v780, 4294901760
    %10674 = vmatpush.msra.mxu0 %v10673
    %v10675 = vand.u32 %v5908, 4294901760
    %v10676 = vsub.f32 %v5908, %v10675
    %v10677 = vand.u32 %v10676, 4294901760
    %10678 = vmatmul.f32.gmra.mxu0 %v10677
    %v10679 = vpop.f32.mrf.mxu0
    %v10680 = vadd.f32 %v10656, %v10679
    %10681 = vdwg.mxu0
    %10682 = vmatpush.msra.mxu0 0.0
    %10683 = vmatpush.msra.mxu0 0.0
    %10684 = vmatpush.msra.mxu0 0.0
    %10685 = vmatpush.msra.mxu0 0.0
    %10686 = vmatpush.msra.mxu0 0.0
    %10687 = vmatpush.msra.mxu0 0.0
    %10688 = vmatpush.msra.mxu0 0.0
    %10689 = vmatpush.msra.mxu0 0.0
    %10690 = vmatpush.msra.mxu0 0.0
    %10691 = vmatpush.msra.mxu0 0.0
    %10692 = vmatpush.msra.mxu0 0.0
    %10693 = vmatpush.msra.mxu0 0.0
    %10694 = vmatpush.msra.mxu0 0.0
    %10695 = vmatpush.msra.mxu0 0.0
    %10696 = vmatpush.msra.mxu0 0.0
    %v10697 = vand.u32 %v780, 4294901760
    %v10698 = vsub.f32 %v780, %v10697
    %v10699 = vand.u32 %v10698, 4294901760
    %10700 = vmatpush.msra.mxu0 %v10699
    %v10701 = vand.u32 %v5908, 4294901760
    %10702 = vmatmul.f32.gmra.mxu0 %v10701
    %v10703 = vpop.f32.mrf.mxu0
    %v10704 = vadd.f32 %v10680, %v10703
    %10705 = vdwg.mxu0
    %10706 = vmatpush.msra.mxu0 0.0
    %10707 = vmatpush.msra.mxu0 0.0
    %10708 = vmatpush.msra.mxu0 0.0
    %10709 = vmatpush.msra.mxu0 0.0
    %10710 = vmatpush.msra.mxu0 0.0
    %10711 = vmatpush.msra.mxu0 0.0
    %10712 = vmatpush.msra.mxu0 0.0
    %10713 = vmatpush.msra.mxu0 0.0
    %10714 = vmatpush.msra.mxu0 0.0
    %10715 = vmatpush.msra.mxu0 0.0
    %10716 = vmatpush.msra.mxu0 0.0
    %10717 = vmatpush.msra.mxu0 0.0
    %10718 = vmatpush.msra.mxu0 0.0
    %10719 = vmatpush.msra.mxu0 0.0
    %10720 = vmatpush.msra.mxu0 0.0
    %v10721 = vand.u32 %v780, 4294901760
    %10722 = vmatpush.msra.mxu0 %v10721
    %v10723 = vand.u32 %v5908, 4294901760
    %10724 = vmatmul.f32.gmra.mxu0 %v10723
    %v10725 = vpop.f32.mrf.mxu0
    %v10726 = vadd.f32 %v10704, %v10725
    %10727 = vdwg.mxu0
    %10728 = vmatpush.msra.mxu0 0.0
    %10729 = vmatpush.msra.mxu0 0.0
    %10730 = vmatpush.msra.mxu0 0.0
    %10731 = vmatpush.msra.mxu0 0.0
    %10732 = vmatpush.msra.mxu0 0.0
    %10733 = vmatpush.msra.mxu0 0.0
    %10734 = vmatpush.msra.mxu0 0.0
    %10735 = vmatpush.msra.mxu0 0.0
    %10736 = vmatpush.msra.mxu0 0.0
    %10737 = vmatpush.msra.mxu0 0.0
    %10738 = vmatpush.msra.mxu0 0.0
    %10739 = vmatpush.msra.mxu0 0.0
    %10740 = vmatpush.msra.mxu0 0.0
    %10741 = vmatpush.msra.mxu0 0.0
    %10742 = vmatpush.msra.mxu0 0.0
    %v10743 = vand.u32 %v781, 4294901760
    %10744 = vmatpush.msra.mxu0 %v10743
    %v10745 = vand.u32 %v5908, 4294901760
    %v10746 = vsub.f32 %v5908, %v10745
    %v10747 = vand.u32 %v10746, 4294901760
    %v10748 = vsub.f32 %v10746, %v10747
    %v10749 = vand.u32 %v10748, 4294901760
    %10750 = vmatmul.f32.gmra.mxu0 %v10749
    %v10751 = vpop.f32.mrf.mxu0
    %v10752 = vadd.f32 0.0, %v10751
    %10753 = vdwg.mxu0
    %10754 = vmatpush.msra.mxu0 0.0
    %10755 = vmatpush.msra.mxu0 0.0
    %10756 = vmatpush.msra.mxu0 0.0
    %10757 = vmatpush.msra.mxu0 0.0
    %10758 = vmatpush.msra.mxu0 0.0
    %10759 = vmatpush.msra.mxu0 0.0
    %10760 = vmatpush.msra.mxu0 0.0
    %10761 = vmatpush.msra.mxu0 0.0
    %10762 = vmatpush.msra.mxu0 0.0
    %10763 = vmatpush.msra.mxu0 0.0
    %10764 = vmatpush.msra.mxu0 0.0
    %10765 = vmatpush.msra.mxu0 0.0
    %10766 = vmatpush.msra.mxu0 0.0
    %10767 = vmatpush.msra.mxu0 0.0
    %10768 = vmatpush.msra.mxu0 0.0
    %v10769 = vand.u32 %v781, 4294901760
    %v10770 = vsub.f32 %v781, %v10769
    %v10771 = vand.u32 %v10770, 4294901760
    %v10772 = vsub.f32 %v10770, %v10771
    %v10773 = vand.u32 %v10772, 4294901760
    %10774 = vmatpush.msra.mxu0 %v10773
    %v10775 = vand.u32 %v5908, 4294901760
    %10776 = vmatmul.f32.gmra.mxu0 %v10775
    %v10777 = vpop.f32.mrf.mxu0
    %v10778 = vadd.f32 %v10752, %v10777
    %10779 = vdwg.mxu0
    %10780 = vmatpush.msra.mxu0 0.0
    %10781 = vmatpush.msra.mxu0 0.0
    %10782 = vmatpush.msra.mxu0 0.0
    %10783 = vmatpush.msra.mxu0 0.0
    %10784 = vmatpush.msra.mxu0 0.0
    %10785 = vmatpush.msra.mxu0 0.0
    %10786 = vmatpush.msra.mxu0 0.0
    %10787 = vmatpush.msra.mxu0 0.0
    %10788 = vmatpush.msra.mxu0 0.0
    %10789 = vmatpush.msra.mxu0 0.0
    %10790 = vmatpush.msra.mxu0 0.0
    %10791 = vmatpush.msra.mxu0 0.0
    %10792 = vmatpush.msra.mxu0 0.0
    %10793 = vmatpush.msra.mxu0 0.0
    %10794 = vmatpush.msra.mxu0 0.0
    %v10795 = vand.u32 %v781, 4294901760
    %v10796 = vsub.f32 %v781, %v10795
    %10797 = vmatpush.msra.mxu0 %v10796
    %v10798 = vand.u32 %v5908, 4294901760
    %v10799 = vsub.f32 %v5908, %v10798
    %10800 = vmatmul.f32.gmra.mxu0 %v10799
    %v10801 = vpop.f32.mrf.mxu0
    %v10802 = vadd.f32 %v10778, %v10801
    %10803 = vdwg.mxu0
    %10804 = vmatpush.msra.mxu0 0.0
    %10805 = vmatpush.msra.mxu0 0.0
    %10806 = vmatpush.msra.mxu0 0.0
    %10807 = vmatpush.msra.mxu0 0.0
    %10808 = vmatpush.msra.mxu0 0.0
    %10809 = vmatpush.msra.mxu0 0.0
    %10810 = vmatpush.msra.mxu0 0.0
    %10811 = vmatpush.msra.mxu0 0.0
    %10812 = vmatpush.msra.mxu0 0.0
    %10813 = vmatpush.msra.mxu0 0.0
    %10814 = vmatpush.msra.mxu0 0.0
    %10815 = vmatpush.msra.mxu0 0.0
    %10816 = vmatpush.msra.mxu0 0.0
    %10817 = vmatpush.msra.mxu0 0.0
    %10818 = vmatpush.msra.mxu0 0.0
    %v10819 = vand.u32 %v781, 4294901760
    %10820 = vmatpush.msra.mxu0 %v10819
    %v10821 = vand.u32 %v5908, 4294901760
    %v10822 = vsub.f32 %v5908, %v10821
    %v10823 = vand.u32 %v10822, 4294901760
    %10824 = vmatmul.f32.gmra.mxu0 %v10823
    %v10825 = vpop.f32.mrf.mxu0
    %v10826 = vadd.f32 %v10802, %v10825
    %10827 = vdwg.mxu0
    %10828 = vmatpush.msra.mxu0 0.0
    %10829 = vmatpush.msra.mxu0 0.0
    %10830 = vmatpush.msra.mxu0 0.0
    %10831 = vmatpush.msra.mxu0 0.0
    %10832 = vmatpush.msra.mxu0 0.0
    %10833 = vmatpush.msra.mxu0 0.0
    %10834 = vmatpush.msra.mxu0 0.0
    %10835 = vmatpush.msra.mxu0 0.0
    %10836 = vmatpush.msra.mxu0 0.0
    %10837 = vmatpush.msra.mxu0 0.0
    %10838 = vmatpush.msra.mxu0 0.0
    %10839 = vmatpush.msra.mxu0 0.0
    %10840 = vmatpush.msra.mxu0 0.0
    %10841 = vmatpush.msra.mxu0 0.0
    %10842 = vmatpush.msra.mxu0 0.0
    %v10843 = vand.u32 %v781, 4294901760
    %v10844 = vsub.f32 %v781, %v10843
    %v10845 = vand.u32 %v10844, 4294901760
    %10846 = vmatpush.msra.mxu0 %v10845
    %v10847 = vand.u32 %v5908, 4294901760
    %10848 = vmatmul.f32.gmra.mxu0 %v10847
    %v10849 = vpop.f32.mrf.mxu0
    %v10850 = vadd.f32 %v10826, %v10849
    %10851 = vdwg.mxu0
    %10852 = vmatpush.msra.mxu0 0.0
    %10853 = vmatpush.msra.mxu0 0.0
    %10854 = vmatpush.msra.mxu0 0.0
    %10855 = vmatpush.msra.mxu0 0.0
    %10856 = vmatpush.msra.mxu0 0.0
    %10857 = vmatpush.msra.mxu0 0.0
    %10858 = vmatpush.msra.mxu0 0.0
    %10859 = vmatpush.msra.mxu0 0.0
    %10860 = vmatpush.msra.mxu0 0.0
    %10861 = vmatpush.msra.mxu0 0.0
    %10862 = vmatpush.msra.mxu0 0.0
    %10863 = vmatpush.msra.mxu0 0.0
    %10864 = vmatpush.msra.mxu0 0.0
    %10865 = vmatpush.msra.mxu0 0.0
    %10866 = vmatpush.msra.mxu0 0.0
    %v10867 = vand.u32 %v781, 4294901760
    %10868 = vmatpush.msra.mxu0 %v10867
    %v10869 = vand.u32 %v5908, 4294901760
    %10870 = vmatmul.f32.gmra.mxu0 %v10869
    %v10871 = vpop.f32.mrf.mxu0
    %v10872 = vadd.f32 %v10850, %v10871
    %10873 = vdwg.mxu0
    %v10878 = vrot.slane %v6200, 6
    %v10879 = vrot.slane %v6346, 4
    %v10880 = vrot.slane %v6492, 2
    %v10881 = vsel %vm120, %v6054, %v10878
    %v10882 = vsel %vm5785, %v10879, %v10880
    %v10883 = vsel %vm5787, %v10881, %v10882
    %10885 = vst [vmem:[%s8 + $0x8] sm:$0xff] %v10883
    %v10916 = vrot.slane %v6784, 6
    %v10917 = vrot.slane %v6930, 4
    %v10918 = vrot.slane %v7076, 2
    %v10919 = vrot.slane %v7368, 6
    %v10920 = vrot.slane %v7514, 4
    %v10921 = vrot.slane %v7660, 2
    %v10922 = vrot.slane %v7952, 6
    %v10923 = vrot.slane %v8098, 4
    %v10924 = vrot.slane %v8244, 2
    %v10925 = vrot.slane %v8536, 6
    %v10926 = vrot.slane %v8682, 4
    %v10927 = vrot.slane %v8828, 2
    %v10928 = vrot.slane %v9120, 6
    %v10929 = vrot.slane %v9266, 4
    %v10930 = vrot.slane %v9412, 2
    %v10931 = vrot.slane %v9704, 6
    %v10932 = vrot.slane %v9850, 4
    %v10933 = vrot.slane %v9996, 2
    %v10934 = vrot.slane %v10288, 6
    %v10935 = vrot.slane %v10434, 4
    %v10936 = vrot.slane %v10580, 2
    %v10937 = vrot.slane %v10872, 6
    %v10938 = vsel %vm120, %v6638, %v10916
    %v10939 = vsel %vm5785, %v10917, %v10918
    %v10940 = vsel %vm5787, %v10938, %v10939
    %v10941 = vsel %vm120, %v7222, %v10919
    %v10942 = vsel %vm5785, %v10920, %v10921
    %v10943 = vsel %vm5787, %v10941, %v10942
    %v10944 = vsel %vm120, %v7806, %v10922
    %v10945 = vsel %vm5785, %v10923, %v10924
    %v10946 = vsel %vm5787, %v10944, %v10945
    %v10947 = vsel %vm120, %v8390, %v10925
    %v10948 = vsel %vm5785, %v10926, %v10927
    %v10949 = vsel %vm5787, %v10947, %v10948
    %v10950 = vsel %vm120, %v8974, %v10928
    %v10951 = vsel %vm5785, %v10929, %v10930
    %v10952 = vsel %vm5787, %v10950, %v10951
    %v10953 = vsel %vm120, %v9558, %v10931
    %v10954 = vsel %vm5785, %v10932, %v10933
    %v10955 = vsel %vm5787, %v10953, %v10954
    %v10956 = vsel %vm120, %v10142, %v10934
    %v10957 = vsel %vm5785, %v10935, %v10936
    %v10958 = vsel %vm5787, %v10956, %v10957
    %v10959 = vsel %vm120, %v10726, %v10937
    %10968 = vst [vmem:[%s10 + $0x3c] sm:$0xff] %v10940
    %10969 = vst [vmem:[%s10 + $0x44] sm:$0xff] %v10943
    %10970 = vst [vmem:[%s10 + $0x4c] sm:$0xff] %v10946
    %10971 = vst [vmem:[%s10 + $0x54] sm:$0xff] %v10949
    %10972 = vst [vmem:[%s10 + $0x5c] sm:$0xff] %v10952
    %10973 = vst [vmem:[%s10 + $0x64] sm:$0xff] %v10955
    %10974 = vst [vmem:[%s10 + $0x6c] sm:$0xff] %v10958
    %10975 = vst [vmem:[%s10 + $0x74] sm:$0xf] %v10959
    %10976 = vst [vmem:[#allocation10] sm:$0x3] %v5905
    %vm10977 = vcmask 1024
    %v10978 = vsel %vm10977, %v5906, 0.0
    %10979 = vadd.xlane.f32.xlu0 %v10978
    %v10980 = vpop.xlane.xlu0 %10979
    %v10981 = vrot.slane %v10980, 4
    %v10982 = vadd.f32 %v10980, %v10981
    %v10983 = vrot.slane %v10982, 2
    %v10984 = vadd.f32 %v10982, %v10983
    %v10985 = vrot.slane %v10984, 1
    %v10986 = vadd.f32 %v10984, %v10985
    %s10987 = vtos %v10986
    %v10988 = vrcp.pop 2.0
    %v10989 = vmul.f32 2.0, %v10988
    %v10990 = vsub.f32 1.0, %v10989
    %v10991 = vmul.f32 %v10988, %v10990
    %v10992 = vadd.f32 %v10988, %v10991
    %vm10993 = vweird.f32 %v10988
    %v10994 = vsel %vm10993, %v10988, %v10992
    %s10995 = vtos %v10994
    %s10996 = smul.f32 %s10987, %s10995
    %v10997 = vstv %s10996
    %10998 = vst [vmem:[#allocation12] sm:$0x1] %v10997
    %s10999 = smul.u32 2, 1
    %s11000 = smul.u32 %s10999, 48
    %s11001 = sshll.u32 %s11000, 4
    %11002 = dma.done [#allocation2], %s11001
    // Predicated region
    $region37: #{prompt_forward.1} parent=1 // pred_check
      _
    $region38: #{prompt_forward.1} parent=1 // pred_check_branch
      %11004 = sbr.rel (0) target = $region40
    $region39: #{prompt_forward.1} parent=1 // pred_region
      %11006 = vsyncadd [#allocation5], 0
      %s11008 = sshll.u32 [#allocation6], 4
      %s11009 = int_to_ptr.vmem [resolvable:$true] %s11008
      %s11010 = sshll.u32 %s4, 4
      %s11011 = int_to_ptr.hbm [resolvable:$true] %s11010
      %11013 = dma.vmem_to_hbm [thread:$0]  %s11009, 512, %s11011, [#allocation5]
    $region40: #{prompt_forward.1} parent=1 // pred_fallthru
      _
    // Predicated region
    $region41: #{prompt_forward.1} parent=1 // pred_check
      _
    $region42: #{prompt_forward.1} parent=1 // pred_check_branch
      %11015 = sbr.rel (0) target = $region44
    $region43: #{prompt_forward.1} parent=1 // pred_region
      %11017 = vsyncadd [#allocation8], 0
      %s11019 = sshll.u32 [#allocation7], 4
      %s11020 = int_to_ptr.vmem [resolvable:$true] %s11019
      %s11021 = sshll.u32 %s5, 4
      %s11022 = int_to_ptr.hbm [resolvable:$true] %s11021
      %11024 = dma.vmem_to_hbm [thread:$0]  %s11020, 128, %s11022, [#allocation8]
    $region44: #{prompt_forward.1} parent=1 // pred_fallthru
      _
    // Predicated region
    $region45: #{prompt_forward.1} parent=1 // pred_check
      _
    $region46: #{prompt_forward.1} parent=1 // pred_check_branch
      %11026 = sbr.rel (0) target = $region48
    $region47: #{prompt_forward.1} parent=1 // pred_region
      %11028 = vsyncadd [#allocation8], 0
      %s11030 = sshll.u32 [#allocation9], 4
      %s11031 = int_to_ptr.vmem [resolvable:$true] %s11030
      %s11032 = sshll.u32 %s6, 4
      %s11033 = int_to_ptr.hbm [resolvable:$true] %s11032
      %11035 = dma.vmem_to_hbm [thread:$0]  %s11031, 32, %s11033, [#allocation8]
    $region48: #{prompt_forward.1} parent=1 // pred_fallthru
      _
    // Predicated region
    $region49: #{prompt_forward.1} parent=1 // pred_check
      _
    $region50: #{prompt_forward.1} parent=1 // pred_check_branch
      %11037 = sbr.rel (0) target = $region52
    $region51: #{prompt_forward.1} parent=1 // pred_region
      %11039 = vsyncadd [#allocation11], 0
      %s11041 = sshll.u32 [#allocation10], 4
      %s11042 = int_to_ptr.vmem [resolvable:$true] %s11041
      %s11043 = sshll.u32 %s7, 4
      %s11044 = int_to_ptr.hbm [resolvable:$true] %s11043
      %11046 = dma.vmem_to_hbm [thread:$0]  %s11042, 32, %s11044, [#allocation11]
    $region52: #{prompt_forward.1} parent=1 // pred_fallthru
      _
    // Predicated region
    $region53: #{prompt_forward.1} parent=1 // pred_check
      _
    $region54: #{prompt_forward.1} parent=1 // pred_check_branch
      %11048 = sbr.rel (0) target = $region56
    $region55: #{prompt_forward.1} parent=1 // pred_region
      _
    $region56: #{prompt_forward.1} parent=1 // pred_fallthru
      _
    // Predicated region
    $region57: #{prompt_forward.1} parent=1 // pred_check
      _
    $region58: #{prompt_forward.1} parent=1 // pred_check_branch
      %11050 = sbr.rel (0) target = $region60
    $region59: #{prompt_forward.1} parent=1 // pred_region
      %11052 = vsyncadd [#allocation11], 0
      %s11054 = sshll.u32 [#allocation12], 4
      %s11055 = int_to_ptr.vmem [resolvable:$true] %s11054
      %s11056 = sshll.u32 %s9, 4
      %s11057 = int_to_ptr.hbm [resolvable:$true] %s11056
      %11059 = dma.vmem_to_hbm [thread:$0]  %s11055, 16, %s11057, [#allocation11]
    $region60: #{prompt_forward.1} parent=1 // pred_fallthru
      _
    // Predicated region
    $region61: #{prompt_forward.1} parent=1 // pred_check
      _
    $region62: #{prompt_forward.1} parent=1 // pred_check_branch
      %11061 = sbr.rel (0) target = $region64
    $region63: #{prompt_forward.1} parent=1 // pred_region
      _
    $region64: #{prompt_forward.1} parent=1 // pred_fallthru
      _
    // Predicated region
    $region65: #{prompt_forward.1} parent=1 // pred_check
      _
    $region66: #{prompt_forward.1} parent=1 // pred_check_branch
      %11063 = sbr.rel (0) target = $region68
    $region67: #{prompt_forward.1} parent=1 // pred_region
      %11065 = dma.done [#allocation5], 512
    $region68: #{prompt_forward.1} parent=1 // pred_fallthru
      _
    // Predicated region
    $region69: #{prompt_forward.1} parent=1 // pred_check
      _
    $region70: #{prompt_forward.1} parent=1 // pred_check_branch
      %11067 = sbr.rel (0) target = $region72
    $region71: #{prompt_forward.1} parent=1 // pred_region
      %11069 = dma.done [#allocation8], 128
    $region72: #{prompt_forward.1} parent=1 // pred_fallthru
      _
    // Predicated region
    $region73: #{prompt_forward.1} parent=1 // pred_check
      _
    $region74: #{prompt_forward.1} parent=1 // pred_check_branch
      %11071 = sbr.rel (0) target = $region76
    $region75: #{prompt_forward.1} parent=1 // pred_region
      %11073 = dma.done [#allocation8], 32
    $region76: #{prompt_forward.1} parent=1 // pred_fallthru
      _
    // Predicated region
    $region77: #{prompt_forward.1} parent=1 // pred_check
      _
    $region78: #{prompt_forward.1} parent=1 // pred_check_branch
      %11075 = sbr.rel (0) target = $region80
    $region79: #{prompt_forward.1} parent=1 // pred_region
      %11077 = dma.done [#allocation11], 32
    $region80: #{prompt_forward.1} parent=1 // pred_fallthru
      _
    // Predicated region
    $region81: #{prompt_forward.1} parent=1 // pred_check
      _
    $region82: #{prompt_forward.1} parent=1 // pred_check_branch
      %11079 = sbr.rel (0) target = $region84
    $region83: #{prompt_forward.1} parent=1 // pred_region
      _
    $region84: #{prompt_forward.1} parent=1 // pred_fallthru
      _
    // Predicated region
    $region85: #{prompt_forward.1} parent=1 // pred_check
      _
    $region86: #{prompt_forward.1} parent=1 // pred_check_branch
      %11081 = sbr.rel (0) target = $region88
    $region87: #{prompt_forward.1} parent=1 // pred_region
      %11083 = dma.done [#allocation11], 16
    $region88: #{prompt_forward.1} parent=1 // pred_fallthru
      _
    // Predicated region
    $region89: #{prompt_forward.1} parent=1 // pred_check
      _
    $region90: #{prompt_forward.1} parent=1 // pred_check_branch
      %11085 = sbr.rel (0) target = $region92
    $region91: #{prompt_forward.1} parent=1 // pred_region
      _
    $region92: #{prompt_forward.1} parent=1 // pred_fallthru
      _
    %11086 = vsyncpa [#allocation4], 1
    %11087 = vsyncpa [#allocation5], 1
    %11088 = vsyncpa [#allocation8], 1
    %11089 = vsyncpa [#allocation11], 1
  %11090 = vsyncmov [#allocation2]
  %s11091 = vpop.sfrf %11090
  %p11092 = scmp.eq.s32.totalorder %s11091, 0
  %p11093 = pneg %p11092
  %11095 = shalt.err (%p11093)

</llo_original>
